<compile_context>
chip_gen: v7x
topology: tpu7x:2x2x1
jax: 0.10.0
libtpu: 0.0.40
codegen_flags: <defaults>
</compile_context>

<pallas_src>
import numpy as np
import jax
import jax.numpy as jnp
from jax import lax
from jax.experimental import pallas as pl
from jax.experimental.pallas import tpu as pltpu


IMG = 64                         # input spatial size implied by ReesBlock(64, 3, 8)
SIZES = (64, 12, 8, 8)           # ReesBlock "size" (adaptive-pool output) per block
CHANNELS = (3, 8, 8, 8, 1)       # channel chain 3 -> 8 -> 8 -> 8 -> 1
LANES = 128


def adaptive_bins(in_size, out_size):
    """PyTorch AdaptiveAvgPool2d bins: [floor(i*in/out), ceil((i+1)*in/out))."""
    bins = []
    for i in range(out_size):
        s = (i * in_size) // out_size
        e = -((-((i + 1) * in_size)) // out_size)
        bins.append((s, e - s))
    return bins


def _block_geometry():
    geo = []
    hin = win = IMG
    for bi, size in enumerate(SIZES):
        cin, cout = CHANNELS[bi], CHANNELS[bi + 1]
        geo.append(dict(cin=cin, cout=cout, hin=hin, win=win,
                        hout=size, wout=size,
                        hbins=adaptive_bins(hin, size),
                        wbins=adaptive_bins(win, size),
                        identity=(hin == size and win == size)))
        hin = win = size
    return geo


GEO = _block_geometry()

# Flat f32 parameter vector layout: [W1 b1 W2 b2 W3 b3 W4 b4 lin_b]
OFFS = {}
_o = 0
for _bi, _g in enumerate(GEO):
    OFFS[f"w{_bi}"] = _o
    _o += _g["cout"] * _g["cin"] * 9
    OFFS[f"b{_bi}"] = _o
    _o += _g["cout"]
OFFS["linb"] = _o
NPARAMS = _o + 1


# ----------------------------------------------------------------------------
# Fused kernel: 4x (3x3 conv + bias + ReLU + adaptive avg pool) + Linear + sigmoid
# ----------------------------------------------------------------------------
def _disc_kernel(wflat_ref, x_ref, linw_ref, o_ref,
                 pad1_ref, pad2_ref, pad3_ref, pad4_ref):
    pads = (pad1_ref, pad2_ref, pad3_ref, pad4_ref)

    # Zero the halo'd scratch buffers (only the 1-pixel border truly needs to be
    # zero; interiors are fully overwritten each step).  ~130 vreg stores total.
    for pref in pads:
        pref[...] = jnp.zeros(pref.shape, jnp.float32)

    # Current image (3, 64, 64) -> interior of pad1 (zero halo around it).
    pad1_ref[:, 1:IMG + 1, 1:IMG + 1] = x_ref[0]

    def conv_block(bi, in_ref, write_out):
        """3x3 conv (pad=1) + bias + ReLU + adaptive avg pool for ReesBlock bi."""
        g = GEO[bi]
        cin, cout = g["cin"], g["cout"]
        h, w = g["hin"], g["win"]
        woff, boff = OFFS[f"w{bi}"], OFFS[f"b{bi}"]

        def one_channel(co):
            base = woff + co * (cin * 9)
            acc = jnp.zeros((h, w), jnp.float32)
            for ci in range(cin):
                for t in range(9):
                    dy, dx = divmod(t, 3)
                    acc = acc + wflat_ref[base + ci * 9 + t] * \
                        in_ref[ci, dy:dy + h, dx:dx + w]
            acc = jnp.maximum(acc + wflat_ref[boff + co], 0.0)      # bias + ReLU
            if not g["identity"]:
                # H-bin reduction (sublane sums), then W-bin reduction (lane
                # sums); assembled with concatenates so each channel becomes a
                # single dense store instead of Hout*Wout narrow masked stores.
                hp = jnp.concatenate(
                    [jnp.sum(acc[hs:hs + hsz, :], axis=0, keepdims=True)
                     * (1.0 / hsz) for hs, hsz in g["hbins"]], axis=0)
                acc = jnp.concatenate(
                    [jnp.sum(hp[:, ws:ws + wsz], axis=1, keepdims=True)
                     * (1.0 / wsz) for ws, wsz in g["wbins"]], axis=1)
            return acc                                              # (hout, wout)

        if cout == 1:
            write_out(0, one_channel(0))
        else:
            def body(co, carry):
                write_out(co, one_channel(co))
                return carry
            lax.fori_loop(0, cout, body, 0)

    # Blocks 1-3: write each output channel into the interior of the next
    # block's zero-haloed scratch buffer.
    for bi in range(3):
        g = GEO[bi]
        nxt = pads[bi + 1]

        def wr(co, val, _n=nxt, _g=g):
            _n[co, 1:_g["hout"] + 1, 1:_g["wout"] + 1] = val

        conv_block(bi, pads[bi], wr)

    # Block 4 (single output channel, identity pool) fused with the head.
    feat = [None]
    conv_block(3, pads[3], lambda co, val: feat.__setitem__(0, val))

    prod = feat[0] * linw_ref[...]                 # (8, 8): Linear(64 -> 1) weights
    z = jnp.sum(prod, axis=1, keepdims=True)       # (8, 1)  lane reduce
    z = jnp.sum(z, axis=0, keepdims=True)          # (1, 1)  sublane reduce
    z = z + wflat_ref[OFFS["linb"]]
    sig = 1.0 / (1.0 + jnp.exp(-z))                # (1, 1)
    o_ref[...] = jnp.broadcast_to(sig[None], (1, 1, LANES))   # lane-dense write


# ----------------------------------------------------------------------------
# Wrapper
# ----------------------------------------------------------------------------
def discriminator_forward(x, wflat, linw8):
    """x: (B, 3, 64, 64) f32 NCHW.  Returns (B, 1) sigmoid scores."""
    B = x.shape[0]
    assert x.shape[1:] == (3, IMG, IMG)

    out = pl.pallas_call(
        _disc_kernel,
        out_shape=jax.ShapeDtypeStruct((B, 1, LANES), jnp.float32),
        grid_spec=pltpu.PrefetchScalarGridSpec(
            num_scalar_prefetch=0,
            grid=(B,),                                           # one image / step
            in_specs=[
                pl.BlockSpec(memory_space=pltpu.MemorySpace.SMEM),      # wflat
                pl.BlockSpec((1, 3, IMG, IMG), lambda b: (b, 0, 0, 0)),  # x
                pl.BlockSpec((8, 8), lambda b: (0, 0)),                 # lin_w
            ],
            out_specs=pl.BlockSpec((1, 1, LANES), lambda b: (b, 0, 0)),
            scratch_shapes=[
                pltpu.VMEM((CHANNELS[0], IMG + 2, IMG + 2), jnp.float32),
                pltpu.VMEM((CHANNELS[1], IMG + 2, IMG + 2), jnp.float32),
                pltpu.VMEM((CHANNELS[2], SIZES[1] + 2, SIZES[1] + 2), jnp.float32),
                pltpu.VMEM((CHANNELS[3], SIZES[2] + 2, SIZES[2] + 2), jnp.float32),
            ],
        ),
        compiler_params=pltpu.CompilerParams(
            dimension_semantics=("parallel",),      # 2x on v7x's two TensorCores
        ),
    )(wflat, x, linw8)
    return out[:, 0, :1]                            # (B, 1)


def pack_params(raw_blocks, lin_w, lin_b):
    """PyTorch layouts -> flat SMEM parameter vector + (8,8) linear weight."""
    parts = []
    for (W, b) in raw_blocks:
        parts.append(jnp.asarray(W, jnp.float32).reshape(-1))    # OIHW row-major
        parts.append(jnp.asarray(b, jnp.float32).reshape(-1))
    parts.append(jnp.asarray(lin_b, jnp.float32).reshape(-1))
    wflat = jnp.concatenate(parts)
    assert wflat.shape[0] == NPARAMS
    linw8 = jnp.asarray(lin_w, jnp.float32).reshape(8, 8)        # matches Flatten(h,w)
    return wflat, linw8


# ----------------------------------------------------------------------------
# Pure-JAX reference (mirrors the assumed PyTorch forward)
# ----------------------------------------------------------------------------
def adaptive_avg_pool_nchw(x, out_size):
    H, W = x.shape[2], x.shape[3]
    hb = adaptive_bins(H, out_size)
    wb = adaptive_bins(W, out_size)
    rows = jnp.stack([x[:, :, s:s + sz, :].mean(axis=2) for s, sz in hb], axis=2)
    return jnp.stack([rows[:, :, :, s:s + sz].mean(axis=3) for s, sz in wb], axis=3)


def reference_forward(x_nchw, raw_blocks, lin_w, lin_b):
    y = x_nchw
    for (W, b), size in zip(raw_blocks, SIZES):
        y = lax.conv_general_dilated(
            y, W, window_strides=(1, 1), padding=((1, 1), (1, 1)),
            dimension_numbers=("NCHW", "OIHW", "NCHW"),
            precision=lax.Precision.HIGHEST)
        y = jnp.maximum(y + b[None, :, None, None], 0.0)
        y = adaptive_avg_pool_nchw(y, size)
    feats = y.reshape(y.shape[0], -1)
    return jax.nn.sigmoid(feats @ lin_w.T + lin_b[None, :])


if __name__ == "__main__":
    keys = jax.random.split(jax.random.PRNGKey(0), 11)

    def cw(key, cout, cin):
        return 0.2 * jax.random.normal(key, (cout, cin, 3, 3), jnp.float32)

    def cb(key, cout):
        return 0.1 * jax.random.normal(key, (cout,), jnp.float32)

    raw_blocks = [
        (cw(keys[0], 8, 3), cb(keys[1], 8)),    # ReesBlock(64, 3, 8)
        (cw(keys[2], 8, 8), cb(keys[3], 8)),    # ReesBlock(12, 8, 8)
        (cw(keys[4], 8, 8), cb(keys[5], 8)),    # ReesBlock(8, 8, 8)
        (cw(keys[6], 1, 8), cb(keys[7], 1)),    # ReesBlock(8, 8, 1)
    ]
    lin_w = 0.2 * jax.random.normal(keys[8], (1, 64), jnp.float32)
    lin_b = 0.1 * jax.random.normal(keys[9], (1,), jnp.float32)

    x = jax.random.normal(keys[10], (2, 3, IMG, IMG), jnp.float32)   # NCHW input

    wflat, linw8 = pack_params(raw_blocks, lin_w, lin_b)

    fwd = jax.jit(discriminator_forward)
    out = jax.block_until_ready(fwd(x, wflat, linw8))
    assert out.shape == (2, 1) and out.dtype == jnp.float32

    ref = jax.block_until_ready(reference_forward(x, raw_blocks, lin_w, lin_b))
    if not np.allclose(np.asarray(out), np.asarray(ref), rtol=1e-3, atol=2e-3):
        raise AssertionError(
            "mismatch: max |diff| = "
            f"{np.max(np.abs(np.asarray(out) - np.asarray(ref)))}")

    print("KERNEL_OK")
</pallas_src>

<mosaic_0001>
module attributes {stable_mosaic.version = 11 : i64} {
  func.func @_disc_kernel(%arg0: i32, %arg1: memref<1466xf32, #tpu.memory_space<smem>>, %arg2: memref<1x3x64x64xf32, #tpu.memory_space<vmem>>, %arg3: memref<8x8xf32, #tpu.memory_space<vmem>>, %arg4: memref<1x1x128xf32, #tpu.memory_space<vmem>>, %arg5: memref<3x66x66xf32, #tpu.memory_space<vmem>>, %arg6: memref<8x66x66xf32, #tpu.memory_space<vmem>>, %arg7: memref<8x14x14xf32, #tpu.memory_space<vmem>>, %arg8: memref<8x10x10xf32, #tpu.memory_space<vmem>>) attributes {dimension_semantics = [#tpu.dimension_semantics<parallel>], iteration_bounds = array<i64: 2>, scalar_prefetch = 0 : i64, scratch_operands = 4 : i64, tpu.core_type = #tpu.core_type<tc>, window_params = [{transform_indices = @transform_0, window_bounds = array<i64: 1466>}, {transform_indices = @transform_1, window_bounds = array<i64: 1, 3, 64, 64>}, {pipeline_mode = #tpu.pipeline_mode<synchronous>, transform_indices = @transform_2, window_bounds = array<i64: 8, 8>}, {transform_indices = @transform_3, window_bounds = array<i64: 1, 1, 128>}]} {
    %cst = arith.constant 0.000000e+00 : f32
    %0 = vector.broadcast %cst : f32 to vector<3x66x66xf32>
    %c0 = arith.constant 0 : index
    %c0_0 = arith.constant 0 : index
    %c0_1 = arith.constant 0 : index
    %1 = vector.load %arg5[%c0, %c0_0, %c0_1] : memref<3x66x66xf32, #tpu.memory_space<vmem>>, vector<3x66x66xf32>
    tpu.vector_store %arg5[%c0, %c0_0, %c0_1], %0 {strides = array<i32>} : memref<3x66x66xf32, #tpu.memory_space<vmem>>, vector<3x66x66xf32>,
    %cst_2 = arith.constant 0.000000e+00 : f32
    %2 = vector.broadcast %cst_2 : f32 to vector<8x66x66xf32>
    %c0_3 = arith.constant 0 : index
    %c0_4 = arith.constant 0 : index
    %c0_5 = arith.constant 0 : index
    %3 = vector.load %arg6[%c0_3, %c0_4, %c0_5] : memref<8x66x66xf32, #tpu.memory_space<vmem>>, vector<8x66x66xf32>
    tpu.vector_store %arg6[%c0_3, %c0_4, %c0_5], %2 {strides = array<i32>} : memref<8x66x66xf32, #tpu.memory_space<vmem>>, vector<8x66x66xf32>,
    %cst_6 = arith.constant 0.000000e+00 : f32
    %4 = vector.broadcast %cst_6 : f32 to vector<8x14x14xf32>
    %c0_7 = arith.constant 0 : index
    %c0_8 = arith.constant 0 : index
    %c0_9 = arith.constant 0 : index
    %5 = vector.load %arg7[%c0_7, %c0_8, %c0_9] : memref<8x14x14xf32, #tpu.memory_space<vmem>>, vector<8x14x14xf32>
    tpu.vector_store %arg7[%c0_7, %c0_8, %c0_9], %4 {strides = array<i32>} : memref<8x14x14xf32, #tpu.memory_space<vmem>>, vector<8x14x14xf32>,
    %cst_10 = arith.constant 0.000000e+00 : f32
    %6 = vector.broadcast %cst_10 : f32 to vector<8x10x10xf32>
    %c0_11 = arith.constant 0 : index
    %c0_12 = arith.constant 0 : index
    %c0_13 = arith.constant 0 : index
    %7 = vector.load %arg8[%c0_11, %c0_12, %c0_13] : memref<8x10x10xf32, #tpu.memory_space<vmem>>, vector<8x10x10xf32>
    tpu.vector_store %arg8[%c0_11, %c0_12, %c0_13], %6 {strides = array<i32>} : memref<8x10x10xf32, #tpu.memory_space<vmem>>, vector<8x10x10xf32>,
    %c0_14 = arith.constant 0 : index
    %c0_15 = arith.constant 0 : index
    %c0_16 = arith.constant 0 : index
    %c0_17 = arith.constant 0 : index
    %8 = vector.load %arg2[%c0_14, %c0_15, %c0_16, %c0_17] : memref<1x3x64x64xf32, #tpu.memory_space<vmem>>, vector<1x3x64x64xf32>
    %9 = vector.shape_cast %8 : vector<1x3x64x64xf32> to vector<3x64x64xf32>
    %c0_18 = arith.constant 0 : index
    %c1 = arith.constant 1 : index
    %c1_19 = arith.constant 1 : index
    %10 = vector.load %arg5[%c0_18, %c1, %c1_19] : memref<3x66x66xf32, #tpu.memory_space<vmem>>, vector<3x64x64xf32>
    tpu.vector_store %arg5[%c0_18, %c1, %c1_19], %9 {strides = array<i32>} : memref<3x66x66xf32, #tpu.memory_space<vmem>>, vector<3x64x64xf32>,
    %c0_i32 = arith.constant 0 : i32
    %c8_i32 = arith.constant 8 : i32
    %11 = arith.addi %c0_i32, %c8_i32 : i32
    %c1_i32 = arith.constant 1 : i32
    scf.for %arg9 = %c0_i32 to %11 step %c1_i32  : i32 {
      %c27_i32 = arith.constant 27 : i32
      %472 = arith.muli %arg9, %c27_i32 : i32
      %c0_i32_251 = arith.constant 0 : i32
      %473 = arith.addi %c0_i32_251, %472 : i32
      %cst_252 = arith.constant 0.000000e+00 : f32
      %474 = vector.broadcast %cst_252 : f32 to vector<64x64xf32>
      %c0_i32_253 = arith.constant 0 : i32
      %475 = arith.addi %473, %c0_i32_253 : i32
      %c0_i32_254 = arith.constant 0 : i32
      %476 = arith.addi %475, %c0_i32_254 : i32
      %477 = arith.index_cast %476 : i32 to index
      %478 = memref.load %arg1[%477] : memref<1466xf32, #tpu.memory_space<smem>>
      %c0_255 = arith.constant 0 : index
      %c0_256 = arith.constant 0 : index
      %c0_257 = arith.constant 0 : index
      %479 = vector.load %arg5[%c0_255, %c0_256, %c0_257] : memref<3x66x66xf32, #tpu.memory_space<vmem>>, vector<1x64x64xf32>
      %480 = vector.shape_cast %479 : vector<1x64x64xf32> to vector<64x64xf32>
      %481 = vector.broadcast %478 : f32 to vector<64x64xf32>
      %482 = arith.mulf %481, %480 : vector<64x64xf32>
      %483 = arith.addf %474, %482 : vector<64x64xf32>
      %c0_i32_258 = arith.constant 0 : i32
      %484 = arith.addi %473, %c0_i32_258 : i32
      %c1_i32_259 = arith.constant 1 : i32
      %485 = arith.addi %484, %c1_i32_259 : i32
      %486 = arith.index_cast %485 : i32 to index
      %487 = memref.load %arg1[%486] : memref<1466xf32, #tpu.memory_space<smem>>
      %c0_260 = arith.constant 0 : index
      %c0_261 = arith.constant 0 : index
      %c1_262 = arith.constant 1 : index
      %488 = vector.load %arg5[%c0_260, %c0_261, %c1_262] : memref<3x66x66xf32, #tpu.memory_space<vmem>>, vector<1x64x64xf32>
      %489 = vector.shape_cast %488 : vector<1x64x64xf32> to vector<64x64xf32>
      %490 = vector.broadcast %487 : f32 to vector<64x64xf32>
      %491 = arith.mulf %490, %489 : vector<64x64xf32>
      %492 = arith.addf %483, %491 : vector<64x64xf32>
      %c0_i32_263 = arith.constant 0 : i32
      %493 = arith.addi %473, %c0_i32_263 : i32
      %c2_i32 = arith.constant 2 : i32
      %494 = arith.addi %493, %c2_i32 : i32
      %495 = arith.index_cast %494 : i32 to index
      %496 = memref.load %arg1[%495] : memref<1466xf32, #tpu.memory_space<smem>>
      %c0_264 = arith.constant 0 : index
      %c0_265 = arith.constant 0 : index
      %c2_266 = arith.constant 2 : index
      %497 = vector.load %arg5[%c0_264, %c0_265, %c2_266] : memref<3x66x66xf32, #tpu.memory_space<vmem>>, vector<1x64x64xf32>
      %498 = vector.shape_cast %497 : vector<1x64x64xf32> to vector<64x64xf32>
      %499 = vector.broadcast %496 : f32 to vector<64x64xf32>
      %500 = arith.mulf %499, %498 : vector<64x64xf32>
      %501 = arith.addf %492, %500 : vector<64x64xf32>
      %c0_i32_267 = arith.constant 0 : i32
      %502 = arith.addi %473, %c0_i32_267 : i32
      %c3_i32 = arith.constant 3 : i32
      %503 = arith.addi %502, %c3_i32 : i32
      %504 = arith.index_cast %503 : i32 to index
      %505 = memref.load %arg1[%504] : memref<1466xf32, #tpu.memory_space<smem>>
      %c0_268 = arith.constant 0 : index
      %c1_269 = arith.constant 1 : index
      %c0_270 = arith.constant 0 : index
      %506 = vector.load %arg5[%c0_268, %c1_269, %c0_270] : memref<3x66x66xf32, #tpu.memory_space<vmem>>, vector<1x64x64xf32>
      %507 = vector.shape_cast %506 : vector<1x64x64xf32> to vector<64x64xf32>
      %508 = vector.broadcast %505 : f32 to vector<64x64xf32>
      %509 = arith.mulf %508, %507 : vector<64x64xf32>
      %510 = arith.addf %501, %509 : vector<64x64xf32>
      %c0_i32_271 = arith.constant 0 : i32
      %511 = arith.addi %473, %c0_i32_271 : i32
      %c4_i32 = arith.constant 4 : i32
      %512 = arith.addi %511, %c4_i32 : i32
      %513 = arith.index_cast %512 : i32 to index
      %514 = memref.load %arg1[%513] : memref<1466xf32, #tpu.memory_space<smem>>
      %c0_272 = arith.constant 0 : index
      %c1_273 = arith.constant 1 : index
      %c1_274 = arith.constant 1 : index
      %515 = vector.load %arg5[%c0_272, %c1_273, %c1_274] : memref<3x66x66xf32, #tpu.memory_space<vmem>>, vector<1x64x64xf32>
      %516 = vector.shape_cast %515 : vector<1x64x64xf32> to vector<64x64xf32>
      %517 = vector.broadcast %514 : f32 to vector<64x64xf32>
      %518 = arith.mulf %517, %516 : vector<64x64xf32>
      %519 = arith.addf %510, %518 : vector<64x64xf32>
      %c0_i32_275 = arith.constant 0 : i32
      %520 = arith.addi %473, %c0_i32_275 : i32
      %c5_i32 = arith.constant 5 : i32
      %521 = arith.addi %520, %c5_i32 : i32
      %522 = arith.index_cast %521 : i32 to index
      %523 = memref.load %arg1[%522] : memref<1466xf32, #tpu.memory_space<smem>>
      %c0_276 = arith.constant 0 : index
      %c1_277 = arith.constant 1 : index
      %c2_278 = arith.constant 2 : index
      %524 = vector.load %arg5[%c0_276, %c1_277, %c2_278] : memref<3x66x66xf32, #tpu.memory_space<vmem>>, vector<1x64x64xf32>
      %525 = vector.shape_cast %524 : vector<1x64x64xf32> to vector<64x64xf32>
      %526 = vector.broadcast %523 : f32 to vector<64x64xf32>
      %527 = arith.mulf %526, %525 : vector<64x64xf32>
      %528 = arith.addf %519, %527 : vector<64x64xf32>
      %c0_i32_279 = arith.constant 0 : i32
      %529 = arith.addi %473, %c0_i32_279 : i32
      %c6_i32 = arith.constant 6 : i32
      %530 = arith.addi %529, %c6_i32 : i32
      %531 = arith.index_cast %530 : i32 to index
      %532 = memref.load %arg1[%531] : memref<1466xf32, #tpu.memory_space<smem>>
      %c0_280 = arith.constant 0 : index
      %c2_281 = arith.constant 2 : index
      %c0_282 = arith.constant 0 : index
      %533 = vector.load %arg5[%c0_280, %c2_281, %c0_282] : memref<3x66x66xf32, #tpu.memory_space<vmem>>, vector<1x64x64xf32>
      %534 = vector.shape_cast %533 : vector<1x64x64xf32> to vector<64x64xf32>
      %535 = vector.broadcast %532 : f32 to vector<64x64xf32>
      %536 = arith.mulf %535, %534 : vector<64x64xf32>
      %537 = arith.addf %528, %536 : vector<64x64xf32>
      %c0_i32_283 = arith.constant 0 : i32
      %538 = arith.addi %473, %c0_i32_283 : i32
      %c7_i32 = arith.constant 7 : i32
      %539 = arith.addi %538, %c7_i32 : i32
      %540 = arith.index_cast %539 : i32 to index
      %541 = memref.load %arg1[%540] : memref<1466xf32, #tpu.memory_space<smem>>
      %c0_284 = arith.constant 0 : index
      %c2_285 = arith.constant 2 : index
      %c1_286 = arith.constant 1 : index
      %542 = vector.load %arg5[%c0_284, %c2_285, %c1_286] : memref<3x66x66xf32, #tpu.memory_space<vmem>>, vector<1x64x64xf32>
      %543 = vector.shape_cast %542 : vector<1x64x64xf32> to vector<64x64xf32>
      %544 = vector.broadcast %541 : f32 to vector<64x64xf32>
      %545 = arith.mulf %544, %543 : vector<64x64xf32>
      %546 = arith.addf %537, %545 : vector<64x64xf32>
      %c0_i32_287 = arith.constant 0 : i32
      %547 = arith.addi %473, %c0_i32_287 : i32
      %c8_i32_288 = arith.constant 8 : i32
      %548 = arith.addi %547, %c8_i32_288 : i32
      %549 = arith.index_cast %548 : i32 to index
      %550 = memref.load %arg1[%549] : memref<1466xf32, #tpu.memory_space<smem>>
      %c0_289 = arith.constant 0 : index
      %c2_290 = arith.constant 2 : index
      %c2_291 = arith.constant 2 : index
      %551 = vector.load %arg5[%c0_289, %c2_290, %c2_291] : memref<3x66x66xf32, #tpu.memory_space<vmem>>, vector<1x64x64xf32>
      %552 = vector.shape_cast %551 : vector<1x64x64xf32> to vector<64x64xf32>
      %553 = vector.broadcast %550 : f32 to vector<64x64xf32>
      %554 = arith.mulf %553, %552 : vector<64x64xf32>
      %555 = arith.addf %546, %554 : vector<64x64xf32>
      %c9_i32 = arith.constant 9 : i32
      %556 = arith.addi %473, %c9_i32 : i32
      %c0_i32_292 = arith.constant 0 : i32
      %557 = arith.addi %556, %c0_i32_292 : i32
      %558 = arith.index_cast %557 : i32 to index
      %559 = memref.load %arg1[%558] : memref<1466xf32, #tpu.memory_space<smem>>
      %c1_293 = arith.constant 1 : index
      %c0_294 = arith.constant 0 : index
      %c0_295 = arith.constant 0 : index
      %560 = vector.load %arg5[%c1_293, %c0_294, %c0_295] : memref<3x66x66xf32, #tpu.memory_space<vmem>>, vector<1x64x64xf32>
      %561 = vector.shape_cast %560 : vector<1x64x64xf32> to vector<64x64xf32>
      %562 = vector.broadcast %559 : f32 to vector<64x64xf32>
      %563 = arith.mulf %562, %561 : vector<64x64xf32>
      %564 = arith.addf %555, %563 : vector<64x64xf32>
      %c9_i32_296 = arith.constant 9 : i32
      %565 = arith.addi %473, %c9_i32_296 : i32
      %c1_i32_297 = arith.constant 1 : i32
      %566 = arith.addi %565, %c1_i32_297 : i32
      %567 = arith.index_cast %566 : i32 to index
      %568 = memref.load %arg1[%567] : memref<1466xf32, #tpu.memory_space<smem>>
      %c1_298 = arith.constant 1 : index
      %c0_299 = arith.constant 0 : index
      %c1_300 = arith.constant 1 : index
      %569 = vector.load %arg5[%c1_298, %c0_299, %c1_300] : memref<3x66x66xf32, #tpu.memory_space<vmem>>, vector<1x64x64xf32>
      %570 = vector.shape_cast %569 : vector<1x64x64xf32> to vector<64x64xf32>
      %571 = vector.broadcast %568 : f32 to vector<64x64xf32>
      %572 = arith.mulf %571, %570 : vector<64x64xf32>
      %573 = arith.addf %564, %572 : vector<64x64xf32>
      %c9_i32_301 = arith.constant 9 : i32
      %574 = arith.addi %473, %c9_i32_301 : i32
      %c2_i32_302 = arith.constant 2 : i32
      %575 = arith.addi %574, %c2_i32_302 : i32
      %576 = arith.index_cast %575 : i32 to index
      %577 = memref.load %arg1[%576] : memref<1466xf32, #tpu.memory_space<smem>>
      %c1_303 = arith.constant 1 : index
      %c0_304 = arith.constant 0 : index
      %c2_305 = arith.constant 2 : index
      %578 = vector.load %arg5[%c1_303, %c0_304, %c2_305] : memref<3x66x66xf32, #tpu.memory_space<vmem>>, vector<1x64x64xf32>
      %579 = vector.shape_cast %578 : vector<1x64x64xf32> to vector<64x64xf32>
      %580 = vector.broadcast %577 : f32 to vector<64x64xf32>
      %581 = arith.mulf %580, %579 : vector<64x64xf32>
      %582 = arith.addf %573, %581 : vector<64x64xf32>
      %c9_i32_306 = arith.constant 9 : i32
      %583 = arith.addi %473, %c9_i32_306 : i32
      %c3_i32_307 = arith.constant 3 : i32
      %584 = arith.addi %583, %c3_i32_307 : i32
      %585 = arith.index_cast %584 : i32 to index
      %586 = memref.load %arg1[%585] : memref<1466xf32, #tpu.memory_space<smem>>
      %c1_308 = arith.constant 1 : index
      %c1_309 = arith.constant 1 : index
      %c0_310 = arith.constant 0 : index
      %587 = vector.load %arg5[%c1_308, %c1_309, %c0_310] : memref<3x66x66xf32, #tpu.memory_space<vmem>>, vector<1x64x64xf32>
      %588 = vector.shape_cast %587 : vector<1x64x64xf32> to vector<64x64xf32>
      %589 = vector.broadcast %586 : f32 to vector<64x64xf32>
      %590 = arith.mulf %589, %588 : vector<64x64xf32>
      %591 = arith.addf %582, %590 : vector<64x64xf32>
      %c9_i32_311 = arith.constant 9 : i32
      %592 = arith.addi %473, %c9_i32_311 : i32
      %c4_i32_312 = arith.constant 4 : i32
      %593 = arith.addi %592, %c4_i32_312 : i32
      %594 = arith.index_cast %593 : i32 to index
      %595 = memref.load %arg1[%594] : memref<1466xf32, #tpu.memory_space<smem>>
      %c1_313 = arith.constant 1 : index
      %c1_314 = arith.constant 1 : index
      %c1_315 = arith.constant 1 : index
      %596 = vector.load %arg5[%c1_313, %c1_314, %c1_315] : memref<3x66x66xf32, #tpu.memory_space<vmem>>, vector<1x64x64xf32>
      %597 = vector.shape_cast %596 : vector<1x64x64xf32> to vector<64x64xf32>
      %598 = vector.broadcast %595 : f32 to vector<64x64xf32>
      %599 = arith.mulf %598, %597 : vector<64x64xf32>
      %600 = arith.addf %591, %599 : vector<64x64xf32>
      %c9_i32_316 = arith.constant 9 : i32
      %601 = arith.addi %473, %c9_i32_316 : i32
      %c5_i32_317 = arith.constant 5 : i32
      %602 = arith.addi %601, %c5_i32_317 : i32
      %603 = arith.index_cast %602 : i32 to index
      %604 = memref.load %arg1[%603] : memref<1466xf32, #tpu.memory_space<smem>>
      %c1_318 = arith.constant 1 : index
      %c1_319 = arith.constant 1 : index
      %c2_320 = arith.constant 2 : index
      %605 = vector.load %arg5[%c1_318, %c1_319, %c2_320] : memref<3x66x66xf32, #tpu.memory_space<vmem>>, vector<1x64x64xf32>
      %606 = vector.shape_cast %605 : vector<1x64x64xf32> to vector<64x64xf32>
      %607 = vector.broadcast %604 : f32 to vector<64x64xf32>
      %608 = arith.mulf %607, %606 : vector<64x64xf32>
      %609 = arith.addf %600, %608 : vector<64x64xf32>
      %c9_i32_321 = arith.constant 9 : i32
      %610 = arith.addi %473, %c9_i32_321 : i32
      %c6_i32_322 = arith.constant 6 : i32
      %611 = arith.addi %610, %c6_i32_322 : i32
      %612 = arith.index_cast %611 : i32 to index
      %613 = memref.load %arg1[%612] : memref<1466xf32, #tpu.memory_space<smem>>
      %c1_323 = arith.constant 1 : index
      %c2_324 = arith.constant 2 : index
      %c0_325 = arith.constant 0 : index
      %614 = vector.load %arg5[%c1_323, %c2_324, %c0_325] : memref<3x66x66xf32, #tpu.memory_space<vmem>>, vector<1x64x64xf32>
      %615 = vector.shape_cast %614 : vector<1x64x64xf32> to vector<64x64xf32>
      %616 = vector.broadcast %613 : f32 to vector<64x64xf32>
      %617 = arith.mulf %616, %615 : vector<64x64xf32>
      %618 = arith.addf %609, %617 : vector<64x64xf32>
      %c9_i32_326 = arith.constant 9 : i32
      %619 = arith.addi %473, %c9_i32_326 : i32
      %c7_i32_327 = arith.constant 7 : i32
      %620 = arith.addi %619, %c7_i32_327 : i32
      %621 = arith.index_cast %620 : i32 to index
      %622 = memref.load %arg1[%621] : memref<1466xf32, #tpu.memory_space<smem>>
      %c1_328 = arith.constant 1 : index
      %c2_329 = arith.constant 2 : index
      %c1_330 = arith.constant 1 : index
      %623 = vector.load %arg5[%c1_328, %c2_329, %c1_330] : memref<3x66x66xf32, #tpu.memory_space<vmem>>, vector<1x64x64xf32>
      %624 = vector.shape_cast %623 : vector<1x64x64xf32> to vector<64x64xf32>
      %625 = vector.broadcast %622 : f32 to vector<64x64xf32>
      %626 = arith.mulf %625, %624 : vector<64x64xf32>
      %627 = arith.addf %618, %626 : vector<64x64xf32>
      %c9_i32_331 = arith.constant 9 : i32
      %628 = arith.addi %473, %c9_i32_331 : i32
      %c8_i32_332 = arith.constant 8 : i32
      %629 = arith.addi %628, %c8_i32_332 : i32
      %630 = arith.index_cast %629 : i32 to index
      %631 = memref.load %arg1[%630] : memref<1466xf32, #tpu.memory_space<smem>>
      %c1_333 = arith.constant 1 : index
      %c2_334 = arith.constant 2 : index
      %c2_335 = arith.constant 2 : index
      %632 = vector.load %arg5[%c1_333, %c2_334, %c2_335] : memref<3x66x66xf32, #tpu.memory_space<vmem>>, vector<1x64x64xf32>
      %633 = vector.shape_cast %632 : vector<1x64x64xf32> to vector<64x64xf32>
      %634 = vector.broadcast %631 : f32 to vector<64x64xf32>
      %635 = arith.mulf %634, %633 : vector<64x64xf32>
      %636 = arith.addf %627, %635 : vector<64x64xf32>
      %c18_i32 = arith.constant 18 : i32
      %637 = arith.addi %473, %c18_i32 : i32
      %c0_i32_336 = arith.constant 0 : i32
      %638 = arith.addi %637, %c0_i32_336 : i32
      %639 = arith.index_cast %638 : i32 to index
      %640 = memref.load %arg1[%639] : memref<1466xf32, #tpu.memory_space<smem>>
      %c2_337 = arith.constant 2 : index
      %c0_338 = arith.constant 0 : index
      %c0_339 = arith.constant 0 : index
      %641 = vector.load %arg5[%c2_337, %c0_338, %c0_339] : memref<3x66x66xf32, #tpu.memory_space<vmem>>, vector<1x64x64xf32>
      %642 = vector.shape_cast %641 : vector<1x64x64xf32> to vector<64x64xf32>
      %643 = vector.broadcast %640 : f32 to vector<64x64xf32>
      %644 = arith.mulf %643, %642 : vector<64x64xf32>
      %645 = arith.addf %636, %644 : vector<64x64xf32>
      %c18_i32_340 = arith.constant 18 : i32
      %646 = arith.addi %473, %c18_i32_340 : i32
      %c1_i32_341 = arith.constant 1 : i32
      %647 = arith.addi %646, %c1_i32_341 : i32
      %648 = arith.index_cast %647 : i32 to index
      %649 = memref.load %arg1[%648] : memref<1466xf32, #tpu.memory_space<smem>>
      %c2_342 = arith.constant 2 : index
      %c0_343 = arith.constant 0 : index
      %c1_344 = arith.constant 1 : index
      %650 = vector.load %arg5[%c2_342, %c0_343, %c1_344] : memref<3x66x66xf32, #tpu.memory_space<vmem>>, vector<1x64x64xf32>
      %651 = vector.shape_cast %650 : vector<1x64x64xf32> to vector<64x64xf32>
      %652 = vector.broadcast %649 : f32 to vector<64x64xf32>
      %653 = arith.mulf %652, %651 : vector<64x64xf32>
      %654 = arith.addf %645, %653 : vector<64x64xf32>
      %c18_i32_345 = arith.constant 18 : i32
      %655 = arith.addi %473, %c18_i32_345 : i32
      %c2_i32_346 = arith.constant 2 : i32
      %656 = arith.addi %655, %c2_i32_346 : i32
      %657 = arith.index_cast %656 : i32 to index
      %658 = memref.load %arg1[%657] : memref<1466xf32, #tpu.memory_space<smem>>
      %c2_347 = arith.constant 2 : index
      %c0_348 = arith.constant 0 : index
      %c2_349 = arith.constant 2 : index
      %659 = vector.load %arg5[%c2_347, %c0_348, %c2_349] : memref<3x66x66xf32, #tpu.memory_space<vmem>>, vector<1x64x64xf32>
      %660 = vector.shape_cast %659 : vector<1x64x64xf32> to vector<64x64xf32>
      %661 = vector.broadcast %658 : f32 to vector<64x64xf32>
      %662 = arith.mulf %661, %660 : vector<64x64xf32>
      %663 = arith.addf %654, %662 : vector<64x64xf32>
      %c18_i32_350 = arith.constant 18 : i32
      %664 = arith.addi %473, %c18_i32_350 : i32
      %c3_i32_351 = arith.constant 3 : i32
      %665 = arith.addi %664, %c3_i32_351 : i32
      %666 = arith.index_cast %665 : i32 to index
      %667 = memref.load %arg1[%666] : memref<1466xf32, #tpu.memory_space<smem>>
      %c2_352 = arith.constant 2 : index
      %c1_353 = arith.constant 1 : index
      %c0_354 = arith.constant 0 : index
      %668 = vector.load %arg5[%c2_352, %c1_353, %c0_354] : memref<3x66x66xf32, #tpu.memory_space<vmem>>, vector<1x64x64xf32>
      %669 = vector.shape_cast %668 : vector<1x64x64xf32> to vector<64x64xf32>
      %670 = vector.broadcast %667 : f32 to vector<64x64xf32>
      %671 = arith.mulf %670, %669 : vector<64x64xf32>
      %672 = arith.addf %663, %671 : vector<64x64xf32>
      %c18_i32_355 = arith.constant 18 : i32
      %673 = arith.addi %473, %c18_i32_355 : i32
      %c4_i32_356 = arith.constant 4 : i32
      %674 = arith.addi %673, %c4_i32_356 : i32
      %675 = arith.index_cast %674 : i32 to index
      %676 = memref.load %arg1[%675] : memref<1466xf32, #tpu.memory_space<smem>>
      %c2_357 = arith.constant 2 : index
      %c1_358 = arith.constant 1 : index
      %c1_359 = arith.constant 1 : index
      %677 = vector.load %arg5[%c2_357, %c1_358, %c1_359] : memref<3x66x66xf32, #tpu.memory_space<vmem>>, vector<1x64x64xf32>
      %678 = vector.shape_cast %677 : vector<1x64x64xf32> to vector<64x64xf32>
      %679 = vector.broadcast %676 : f32 to vector<64x64xf32>
      %680 = arith.mulf %679, %678 : vector<64x64xf32>
      %681 = arith.addf %672, %680 : vector<64x64xf32>
      %c18_i32_360 = arith.constant 18 : i32
      %682 = arith.addi %473, %c18_i32_360 : i32
      %c5_i32_361 = arith.constant 5 : i32
      %683 = arith.addi %682, %c5_i32_361 : i32
      %684 = arith.index_cast %683 : i32 to index
      %685 = memref.load %arg1[%684] : memref<1466xf32, #tpu.memory_space<smem>>
      %c2_362 = arith.constant 2 : index
      %c1_363 = arith.constant 1 : index
      %c2_364 = arith.constant 2 : index
      %686 = vector.load %arg5[%c2_362, %c1_363, %c2_364] : memref<3x66x66xf32, #tpu.memory_space<vmem>>, vector<1x64x64xf32>
      %687 = vector.shape_cast %686 : vector<1x64x64xf32> to vector<64x64xf32>
      %688 = vector.broadcast %685 : f32 to vector<64x64xf32>
      %689 = arith.mulf %688, %687 : vector<64x64xf32>
      %690 = arith.addf %681, %689 : vector<64x64xf32>
      %c18_i32_365 = arith.constant 18 : i32
      %691 = arith.addi %473, %c18_i32_365 : i32
      %c6_i32_366 = arith.constant 6 : i32
      %692 = arith.addi %691, %c6_i32_366 : i32
      %693 = arith.index_cast %692 : i32 to index
      %694 = memref.load %arg1[%693] : memref<1466xf32, #tpu.memory_space<smem>>
      %c2_367 = arith.constant 2 : index
      %c2_368 = arith.constant 2 : index
      %c0_369 = arith.constant 0 : index
      %695 = vector.load %arg5[%c2_367, %c2_368, %c0_369] : memref<3x66x66xf32, #tpu.memory_space<vmem>>, vector<1x64x64xf32>
      %696 = vector.shape_cast %695 : vector<1x64x64xf32> to vector<64x64xf32>
      %697 = vector.broadcast %694 : f32 to vector<64x64xf32>
      %698 = arith.mulf %697, %696 : vector<64x64xf32>
      %699 = arith.addf %690, %698 : vector<64x64xf32>
      %c18_i32_370 = arith.constant 18 : i32
      %700 = arith.addi %473, %c18_i32_370 : i32
      %c7_i32_371 = arith.constant 7 : i32
      %701 = arith.addi %700, %c7_i32_371 : i32
      %702 = arith.index_cast %701 : i32 to index
      %703 = memref.load %arg1[%702] : memref<1466xf32, #tpu.memory_space<smem>>
      %c2_372 = arith.constant 2 : index
      %c2_373 = arith.constant 2 : index
      %c1_374 = arith.constant 1 : index
      %704 = vector.load %arg5[%c2_372, %c2_373, %c1_374] : memref<3x66x66xf32, #tpu.memory_space<vmem>>, vector<1x64x64xf32>
      %705 = vector.shape_cast %704 : vector<1x64x64xf32> to vector<64x64xf32>
      %706 = vector.broadcast %703 : f32 to vector<64x64xf32>
      %707 = arith.mulf %706, %705 : vector<64x64xf32>
      %708 = arith.addf %699, %707 : vector<64x64xf32>
      %c18_i32_375 = arith.constant 18 : i32
      %709 = arith.addi %473, %c18_i32_375 : i32
      %c8_i32_376 = arith.constant 8 : i32
      %710 = arith.addi %709, %c8_i32_376 : i32
      %711 = arith.index_cast %710 : i32 to index
      %712 = memref.load %arg1[%711] : memref<1466xf32, #tpu.memory_space<smem>>
      %c2_377 = arith.constant 2 : index
      %c2_378 = arith.constant 2 : index
      %c2_379 = arith.constant 2 : index
      %713 = vector.load %arg5[%c2_377, %c2_378, %c2_379] : memref<3x66x66xf32, #tpu.memory_space<vmem>>, vector<1x64x64xf32>
      %714 = vector.shape_cast %713 : vector<1x64x64xf32> to vector<64x64xf32>
      %715 = vector.broadcast %712 : f32 to vector<64x64xf32>
      %716 = arith.mulf %715, %714 : vector<64x64xf32>
      %717 = arith.addf %708, %716 : vector<64x64xf32>
      %c216_i32 = arith.constant 216 : i32
      %718 = arith.addi %c216_i32, %arg9 : i32
      %719 = arith.index_cast %718 : i32 to index
      %720 = memref.load %arg1[%719] : memref<1466xf32, #tpu.memory_space<smem>>
      %721 = vector.broadcast %720 : f32 to vector<64x64xf32>
      %722 = arith.addf %717, %721 : vector<64x64xf32>
      %cst_380 = arith.constant 0.000000e+00 : f32
      %723 = vector.broadcast %cst_380 : f32 to vector<64x64xf32>
      %724 = arith.maximumf %722, %723 : vector<64x64xf32>
      %725 = arith.index_cast %arg9 : i32 to index
      %c1_381 = arith.constant 1 : index
      %c1_382 = arith.constant 1 : index
      %726 = vector.load %arg6[%725, %c1_381, %c1_382] : memref<8x66x66xf32, #tpu.memory_space<vmem>>, vector<1x64x64xf32>
      %727 = vector.shape_cast %726 : vector<1x64x64xf32> to vector<64x64xf32>
      %728 = vector.shape_cast %724 : vector<64x64xf32> to vector<1x64x64xf32>
      tpu.vector_store %arg6[%725, %c1_381, %c1_382], %728 {strides = array<i32>} : memref<8x66x66xf32, #tpu.memory_space<vmem>>, vector<1x64x64xf32>,
    }
    %c8_i32_20 = arith.constant 8 : i32
    %c0_i32_21 = arith.constant 0 : i32
    %c8_i32_22 = arith.constant 8 : i32
    %12 = arith.addi %c0_i32_21, %c8_i32_22 : i32
    %c1_i32_23 = arith.constant 1 : i32
    scf.for %arg9 = %c0_i32_21 to %12 step %c1_i32_23  : i32 {
      %c72_i32 = arith.constant 72 : i32
      %472 = arith.muli %arg9, %c72_i32 : i32
      %c224_i32 = arith.constant 224 : i32
      %473 = arith.addi %c224_i32, %472 : i32
      %cst_251 = arith.constant 0.000000e+00 : f32
      %474 = vector.broadcast %cst_251 : f32 to vector<64x64xf32>
      %c0_i32_252 = arith.constant 0 : i32
      %475 = arith.addi %473, %c0_i32_252 : i32
      %c0_i32_253 = arith.constant 0 : i32
      %476 = arith.addi %475, %c0_i32_253 : i32
      %477 = arith.index_cast %476 : i32 to index
      %478 = memref.load %arg1[%477] : memref<1466xf32, #tpu.memory_space<smem>>
      %c0_254 = arith.constant 0 : index
      %c0_255 = arith.constant 0 : index
      %c0_256 = arith.constant 0 : index
      %479 = vector.load %arg6[%c0_254, %c0_255, %c0_256] : memref<8x66x66xf32, #tpu.memory_space<vmem>>, vector<1x64x64xf32>
      %480 = vector.shape_cast %479 : vector<1x64x64xf32> to vector<64x64xf32>
      %481 = vector.broadcast %478 : f32 to vector<64x64xf32>
      %482 = arith.mulf %481, %480 : vector<64x64xf32>
      %483 = arith.addf %474, %482 : vector<64x64xf32>
      %c0_i32_257 = arith.constant 0 : i32
      %484 = arith.addi %473, %c0_i32_257 : i32
      %c1_i32_258 = arith.constant 1 : i32
      %485 = arith.addi %484, %c1_i32_258 : i32
      %486 = arith.index_cast %485 : i32 to index
      %487 = memref.load %arg1[%486] : memref<1466xf32, #tpu.memory_space<smem>>
      %c0_259 = arith.constant 0 : index
      %c0_260 = arith.constant 0 : index
      %c1_261 = arith.constant 1 : index
      %488 = vector.load %arg6[%c0_259, %c0_260, %c1_261] : memref<8x66x66xf32, #tpu.memory_space<vmem>>, vector<1x64x64xf32>
      %489 = vector.shape_cast %488 : vector<1x64x64xf32> to vector<64x64xf32>
      %490 = vector.broadcast %487 : f32 to vector<64x64xf32>
      %491 = arith.mulf %490, %489 : vector<64x64xf32>
      %492 = arith.addf %483, %491 : vector<64x64xf32>
      %c0_i32_262 = arith.constant 0 : i32
      %493 = arith.addi %473, %c0_i32_262 : i32
      %c2_i32 = arith.constant 2 : i32
      %494 = arith.addi %493, %c2_i32 : i32
      %495 = arith.index_cast %494 : i32 to index
      %496 = memref.load %arg1[%495] : memref<1466xf32, #tpu.memory_space<smem>>
      %c0_263 = arith.constant 0 : index
      %c0_264 = arith.constant 0 : index
      %c2_265 = arith.constant 2 : index
      %497 = vector.load %arg6[%c0_263, %c0_264, %c2_265] : memref<8x66x66xf32, #tpu.memory_space<vmem>>, vector<1x64x64xf32>
      %498 = vector.shape_cast %497 : vector<1x64x64xf32> to vector<64x64xf32>
      %499 = vector.broadcast %496 : f32 to vector<64x64xf32>
      %500 = arith.mulf %499, %498 : vector<64x64xf32>
      %501 = arith.addf %492, %500 : vector<64x64xf32>
      %c0_i32_266 = arith.constant 0 : i32
      %502 = arith.addi %473, %c0_i32_266 : i32
      %c3_i32 = arith.constant 3 : i32
      %503 = arith.addi %502, %c3_i32 : i32
      %504 = arith.index_cast %503 : i32 to index
      %505 = memref.load %arg1[%504] : memref<1466xf32, #tpu.memory_space<smem>>
      %c0_267 = arith.constant 0 : index
      %c1_268 = arith.constant 1 : index
      %c0_269 = arith.constant 0 : index
      %506 = vector.load %arg6[%c0_267, %c1_268, %c0_269] : memref<8x66x66xf32, #tpu.memory_space<vmem>>, vector<1x64x64xf32>
      %507 = vector.shape_cast %506 : vector<1x64x64xf32> to vector<64x64xf32>
      %508 = vector.broadcast %505 : f32 to vector<64x64xf32>
      %509 = arith.mulf %508, %507 : vector<64x64xf32>
      %510 = arith.addf %501, %509 : vector<64x64xf32>
      %c0_i32_270 = arith.constant 0 : i32
      %511 = arith.addi %473, %c0_i32_270 : i32
      %c4_i32 = arith.constant 4 : i32
      %512 = arith.addi %511, %c4_i32 : i32
      %513 = arith.index_cast %512 : i32 to index
      %514 = memref.load %arg1[%513] : memref<1466xf32, #tpu.memory_space<smem>>
      %c0_271 = arith.constant 0 : index
      %c1_272 = arith.constant 1 : index
      %c1_273 = arith.constant 1 : index
      %515 = vector.load %arg6[%c0_271, %c1_272, %c1_273] : memref<8x66x66xf32, #tpu.memory_space<vmem>>, vector<1x64x64xf32>
      %516 = vector.shape_cast %515 : vector<1x64x64xf32> to vector<64x64xf32>
      %517 = vector.broadcast %514 : f32 to vector<64x64xf32>
      %518 = arith.mulf %517, %516 : vector<64x64xf32>
      %519 = arith.addf %510, %518 : vector<64x64xf32>
      %c0_i32_274 = arith.constant 0 : i32
      %520 = arith.addi %473, %c0_i32_274 : i32
      %c5_i32 = arith.constant 5 : i32
      %521 = arith.addi %520, %c5_i32 : i32
      %522 = arith.index_cast %521 : i32 to index
      %523 = memref.load %arg1[%522] : memref<1466xf32, #tpu.memory_space<smem>>
      %c0_275 = arith.constant 0 : index
      %c1_276 = arith.constant 1 : index
      %c2_277 = arith.constant 2 : index
      %524 = vector.load %arg6[%c0_275, %c1_276, %c2_277] : memref<8x66x66xf32, #tpu.memory_space<vmem>>, vector<1x64x64xf32>
      %525 = vector.shape_cast %524 : vector<1x64x64xf32> to vector<64x64xf32>
      %526 = vector.broadcast %523 : f32 to vector<64x64xf32>
      %527 = arith.mulf %526, %525 : vector<64x64xf32>
      %528 = arith.addf %519, %527 : vector<64x64xf32>
      %c0_i32_278 = arith.constant 0 : i32
      %529 = arith.addi %473, %c0_i32_278 : i32
      %c6_i32 = arith.constant 6 : i32
      %530 = arith.addi %529, %c6_i32 : i32
      %531 = arith.index_cast %530 : i32 to index
      %532 = memref.load %arg1[%531] : memref<1466xf32, #tpu.memory_space<smem>>
      %c0_279 = arith.constant 0 : index
      %c2_280 = arith.constant 2 : index
      %c0_281 = arith.constant 0 : index
      %533 = vector.load %arg6[%c0_279, %c2_280, %c0_281] : memref<8x66x66xf32, #tpu.memory_space<vmem>>, vector<1x64x64xf32>
      %534 = vector.shape_cast %533 : vector<1x64x64xf32> to vector<64x64xf32>
      %535 = vector.broadcast %532 : f32 to vector<64x64xf32>
      %536 = arith.mulf %535, %534 : vector<64x64xf32>
      %537 = arith.addf %528, %536 : vector<64x64xf32>
      %c0_i32_282 = arith.constant 0 : i32
      %538 = arith.addi %473, %c0_i32_282 : i32
      %c7_i32 = arith.constant 7 : i32
      %539 = arith.addi %538, %c7_i32 : i32
      %540 = arith.index_cast %539 : i32 to index
      %541 = memref.load %arg1[%540] : memref<1466xf32, #tpu.memory_space<smem>>
      %c0_283 = arith.constant 0 : index
      %c2_284 = arith.constant 2 : index
      %c1_285 = arith.constant 1 : index
      %542 = vector.load %arg6[%c0_283, %c2_284, %c1_285] : memref<8x66x66xf32, #tpu.memory_space<vmem>>, vector<1x64x64xf32>
      %543 = vector.shape_cast %542 : vector<1x64x64xf32> to vector<64x64xf32>
      %544 = vector.broadcast %541 : f32 to vector<64x64xf32>
      %545 = arith.mulf %544, %543 : vector<64x64xf32>
      %546 = arith.addf %537, %545 : vector<64x64xf32>
      %c0_i32_286 = arith.constant 0 : i32
      %547 = arith.addi %473, %c0_i32_286 : i32
      %c8_i32_287 = arith.constant 8 : i32
      %548 = arith.addi %547, %c8_i32_287 : i32
      %549 = arith.index_cast %548 : i32 to index
      %550 = memref.load %arg1[%549] : memref<1466xf32, #tpu.memory_space<smem>>
      %c0_288 = arith.constant 0 : index
      %c2_289 = arith.constant 2 : index
      %c2_290 = arith.constant 2 : index
      %551 = vector.load %arg6[%c0_288, %c2_289, %c2_290] : memref<8x66x66xf32, #tpu.memory_space<vmem>>, vector<1x64x64xf32>
      %552 = vector.shape_cast %551 : vector<1x64x64xf32> to vector<64x64xf32>
      %553 = vector.broadcast %550 : f32 to vector<64x64xf32>
      %554 = arith.mulf %553, %552 : vector<64x64xf32>
      %555 = arith.addf %546, %554 : vector<64x64xf32>
      %c9_i32 = arith.constant 9 : i32
      %556 = arith.addi %473, %c9_i32 : i32
      %c0_i32_291 = arith.constant 0 : i32
      %557 = arith.addi %556, %c0_i32_291 : i32
      %558 = arith.index_cast %557 : i32 to index
      %559 = memref.load %arg1[%558] : memref<1466xf32, #tpu.memory_space<smem>>
      %c1_292 = arith.constant 1 : index
      %c0_293 = arith.constant 0 : index
      %c0_294 = arith.constant 0 : index
      %560 = vector.load %arg6[%c1_292, %c0_293, %c0_294] : memref<8x66x66xf32, #tpu.memory_space<vmem>>, vector<1x64x64xf32>
      %561 = vector.shape_cast %560 : vector<1x64x64xf32> to vector<64x64xf32>
      %562 = vector.broadcast %559 : f32 to vector<64x64xf32>
      %563 = arith.mulf %562, %561 : vector<64x64xf32>
      %564 = arith.addf %555, %563 : vector<64x64xf32>
      %c9_i32_295 = arith.constant 9 : i32
      %565 = arith.addi %473, %c9_i32_295 : i32
      %c1_i32_296 = arith.constant 1 : i32
      %566 = arith.addi %565, %c1_i32_296 : i32
      %567 = arith.index_cast %566 : i32 to index
      %568 = memref.load %arg1[%567] : memref<1466xf32, #tpu.memory_space<smem>>
      %c1_297 = arith.constant 1 : index
      %c0_298 = arith.constant 0 : index
      %c1_299 = arith.constant 1 : index
      %569 = vector.load %arg6[%c1_297, %c0_298, %c1_299] : memref<8x66x66xf32, #tpu.memory_space<vmem>>, vector<1x64x64xf32>
      %570 = vector.shape_cast %569 : vector<1x64x64xf32> to vector<64x64xf32>
      %571 = vector.broadcast %568 : f32 to vector<64x64xf32>
      %572 = arith.mulf %571, %570 : vector<64x64xf32>
      %573 = arith.addf %564, %572 : vector<64x64xf32>
      %c9_i32_300 = arith.constant 9 : i32
      %574 = arith.addi %473, %c9_i32_300 : i32
      %c2_i32_301 = arith.constant 2 : i32
      %575 = arith.addi %574, %c2_i32_301 : i32
      %576 = arith.index_cast %575 : i32 to index
      %577 = memref.load %arg1[%576] : memref<1466xf32, #tpu.memory_space<smem>>
      %c1_302 = arith.constant 1 : index
      %c0_303 = arith.constant 0 : index
      %c2_304 = arith.constant 2 : index
      %578 = vector.load %arg6[%c1_302, %c0_303, %c2_304] : memref<8x66x66xf32, #tpu.memory_space<vmem>>, vector<1x64x64xf32>
      %579 = vector.shape_cast %578 : vector<1x64x64xf32> to vector<64x64xf32>
      %580 = vector.broadcast %577 : f32 to vector<64x64xf32>
      %581 = arith.mulf %580, %579 : vector<64x64xf32>
      %582 = arith.addf %573, %581 : vector<64x64xf32>
      %c9_i32_305 = arith.constant 9 : i32
      %583 = arith.addi %473, %c9_i32_305 : i32
      %c3_i32_306 = arith.constant 3 : i32
      %584 = arith.addi %583, %c3_i32_306 : i32
      %585 = arith.index_cast %584 : i32 to index
      %586 = memref.load %arg1[%585] : memref<1466xf32, #tpu.memory_space<smem>>
      %c1_307 = arith.constant 1 : index
      %c1_308 = arith.constant 1 : index
      %c0_309 = arith.constant 0 : index
      %587 = vector.load %arg6[%c1_307, %c1_308, %c0_309] : memref<8x66x66xf32, #tpu.memory_space<vmem>>, vector<1x64x64xf32>
      %588 = vector.shape_cast %587 : vector<1x64x64xf32> to vector<64x64xf32>
      %589 = vector.broadcast %586 : f32 to vector<64x64xf32>
      %590 = arith.mulf %589, %588 : vector<64x64xf32>
      %591 = arith.addf %582, %590 : vector<64x64xf32>
      %c9_i32_310 = arith.constant 9 : i32
      %592 = arith.addi %473, %c9_i32_310 : i32
      %c4_i32_311 = arith.constant 4 : i32
      %593 = arith.addi %592, %c4_i32_311 : i32
      %594 = arith.index_cast %593 : i32 to index
      %595 = memref.load %arg1[%594] : memref<1466xf32, #tpu.memory_space<smem>>
      %c1_312 = arith.constant 1 : index
      %c1_313 = arith.constant 1 : index
      %c1_314 = arith.constant 1 : index
      %596 = vector.load %arg6[%c1_312, %c1_313, %c1_314] : memref<8x66x66xf32, #tpu.memory_space<vmem>>, vector<1x64x64xf32>
      %597 = vector.shape_cast %596 : vector<1x64x64xf32> to vector<64x64xf32>
      %598 = vector.broadcast %595 : f32 to vector<64x64xf32>
      %599 = arith.mulf %598, %597 : vector<64x64xf32>
      %600 = arith.addf %591, %599 : vector<64x64xf32>
      %c9_i32_315 = arith.constant 9 : i32
      %601 = arith.addi %473, %c9_i32_315 : i32
      %c5_i32_316 = arith.constant 5 : i32
      %602 = arith.addi %601, %c5_i32_316 : i32
      %603 = arith.index_cast %602 : i32 to index
      %604 = memref.load %arg1[%603] : memref<1466xf32, #tpu.memory_space<smem>>
      %c1_317 = arith.constant 1 : index
      %c1_318 = arith.constant 1 : index
      %c2_319 = arith.constant 2 : index
      %605 = vector.load %arg6[%c1_317, %c1_318, %c2_319] : memref<8x66x66xf32, #tpu.memory_space<vmem>>, vector<1x64x64xf32>
      %606 = vector.shape_cast %605 : vector<1x64x64xf32> to vector<64x64xf32>
      %607 = vector.broadcast %604 : f32 to vector<64x64xf32>
      %608 = arith.mulf %607, %606 : vector<64x64xf32>
      %609 = arith.addf %600, %608 : vector<64x64xf32>
      %c9_i32_320 = arith.constant 9 : i32
      %610 = arith.addi %473, %c9_i32_320 : i32
      %c6_i32_321 = arith.constant 6 : i32
      %611 = arith.addi %610, %c6_i32_321 : i32
      %612 = arith.index_cast %611 : i32 to index
      %613 = memref.load %arg1[%612] : memref<1466xf32, #tpu.memory_space<smem>>
      %c1_322 = arith.constant 1 : index
      %c2_323 = arith.constant 2 : index
      %c0_324 = arith.constant 0 : index
      %614 = vector.load %arg6[%c1_322, %c2_323, %c0_324] : memref<8x66x66xf32, #tpu.memory_space<vmem>>, vector<1x64x64xf32>
      %615 = vector.shape_cast %614 : vector<1x64x64xf32> to vector<64x64xf32>
      %616 = vector.broadcast %613 : f32 to vector<64x64xf32>
      %617 = arith.mulf %616, %615 : vector<64x64xf32>
      %618 = arith.addf %609, %617 : vector<64x64xf32>
      %c9_i32_325 = arith.constant 9 : i32
      %619 = arith.addi %473, %c9_i32_325 : i32
      %c7_i32_326 = arith.constant 7 : i32
      %620 = arith.addi %619, %c7_i32_326 : i32
      %621 = arith.index_cast %620 : i32 to index
      %622 = memref.load %arg1[%621] : memref<1466xf32, #tpu.memory_space<smem>>
      %c1_327 = arith.constant 1 : index
      %c2_328 = arith.constant 2 : index
      %c1_329 = arith.constant 1 : index
      %623 = vector.load %arg6[%c1_327, %c2_328, %c1_329] : memref<8x66x66xf32, #tpu.memory_space<vmem>>, vector<1x64x64xf32>
      %624 = vector.shape_cast %623 : vector<1x64x64xf32> to vector<64x64xf32>
      %625 = vector.broadcast %622 : f32 to vector<64x64xf32>
      %626 = arith.mulf %625, %624 : vector<64x64xf32>
      %627 = arith.addf %618, %626 : vector<64x64xf32>
      %c9_i32_330 = arith.constant 9 : i32
      %628 = arith.addi %473, %c9_i32_330 : i32
      %c8_i32_331 = arith.constant 8 : i32
      %629 = arith.addi %628, %c8_i32_331 : i32
      %630 = arith.index_cast %629 : i32 to index
      %631 = memref.load %arg1[%630] : memref<1466xf32, #tpu.memory_space<smem>>
      %c1_332 = arith.constant 1 : index
      %c2_333 = arith.constant 2 : index
      %c2_334 = arith.constant 2 : index
      %632 = vector.load %arg6[%c1_332, %c2_333, %c2_334] : memref<8x66x66xf32, #tpu.memory_space<vmem>>, vector<1x64x64xf32>
      %633 = vector.shape_cast %632 : vector<1x64x64xf32> to vector<64x64xf32>
      %634 = vector.broadcast %631 : f32 to vector<64x64xf32>
      %635 = arith.mulf %634, %633 : vector<64x64xf32>
      %636 = arith.addf %627, %635 : vector<64x64xf32>
      %c18_i32 = arith.constant 18 : i32
      %637 = arith.addi %473, %c18_i32 : i32
      %c0_i32_335 = arith.constant 0 : i32
      %638 = arith.addi %637, %c0_i32_335 : i32
      %639 = arith.index_cast %638 : i32 to index
      %640 = memref.load %arg1[%639] : memref<1466xf32, #tpu.memory_space<smem>>
      %c2_336 = arith.constant 2 : index
      %c0_337 = arith.constant 0 : index
      %c0_338 = arith.constant 0 : index
      %641 = vector.load %arg6[%c2_336, %c0_337, %c0_338] : memref<8x66x66xf32, #tpu.memory_space<vmem>>, vector<1x64x64xf32>
      %642 = vector.shape_cast %641 : vector<1x64x64xf32> to vector<64x64xf32>
      %643 = vector.broadcast %640 : f32 to vector<64x64xf32>
      %644 = arith.mulf %643, %642 : vector<64x64xf32>
      %645 = arith.addf %636, %644 : vector<64x64xf32>
      %c18_i32_339 = arith.constant 18 : i32
      %646 = arith.addi %473, %c18_i32_339 : i32
      %c1_i32_340 = arith.constant 1 : i32
      %647 = arith.addi %646, %c1_i32_340 : i32
      %648 = arith.index_cast %647 : i32 to index
      %649 = memref.load %arg1[%648] : memref<1466xf32, #tpu.memory_space<smem>>
      %c2_341 = arith.constant 2 : index
      %c0_342 = arith.constant 0 : index
      %c1_343 = arith.constant 1 : index
      %650 = vector.load %arg6[%c2_341, %c0_342, %c1_343] : memref<8x66x66xf32, #tpu.memory_space<vmem>>, vector<1x64x64xf32>
      %651 = vector.shape_cast %650 : vector<1x64x64xf32> to vector<64x64xf32>
      %652 = vector.broadcast %649 : f32 to vector<64x64xf32>
      %653 = arith.mulf %652, %651 : vector<64x64xf32>
      %654 = arith.addf %645, %653 : vector<64x64xf32>
      %c18_i32_344 = arith.constant 18 : i32
      %655 = arith.addi %473, %c18_i32_344 : i32
      %c2_i32_345 = arith.constant 2 : i32
      %656 = arith.addi %655, %c2_i32_345 : i32
      %657 = arith.index_cast %656 : i32 to index
      %658 = memref.load %arg1[%657] : memref<1466xf32, #tpu.memory_space<smem>>
      %c2_346 = arith.constant 2 : index
      %c0_347 = arith.constant 0 : index
      %c2_348 = arith.constant 2 : index
      %659 = vector.load %arg6[%c2_346, %c0_347, %c2_348] : memref<8x66x66xf32, #tpu.memory_space<vmem>>, vector<1x64x64xf32>
      %660 = vector.shape_cast %659 : vector<1x64x64xf32> to vector<64x64xf32>
      %661 = vector.broadcast %658 : f32 to vector<64x64xf32>
      %662 = arith.mulf %661, %660 : vector<64x64xf32>
      %663 = arith.addf %654, %662 : vector<64x64xf32>
      %c18_i32_349 = arith.constant 18 : i32
      %664 = arith.addi %473, %c18_i32_349 : i32
      %c3_i32_350 = arith.constant 3 : i32
      %665 = arith.addi %664, %c3_i32_350 : i32
      %666 = arith.index_cast %665 : i32 to index
      %667 = memref.load %arg1[%666] : memref<1466xf32, #tpu.memory_space<smem>>
      %c2_351 = arith.constant 2 : index
      %c1_352 = arith.constant 1 : index
      %c0_353 = arith.constant 0 : index
      %668 = vector.load %arg6[%c2_351, %c1_352, %c0_353] : memref<8x66x66xf32, #tpu.memory_space<vmem>>, vector<1x64x64xf32>
      %669 = vector.shape_cast %668 : vector<1x64x64xf32> to vector<64x64xf32>
      %670 = vector.broadcast %667 : f32 to vector<64x64xf32>
      %671 = arith.mulf %670, %669 : vector<64x64xf32>
      %672 = arith.addf %663, %671 : vector<64x64xf32>
      %c18_i32_354 = arith.constant 18 : i32
      %673 = arith.addi %473, %c18_i32_354 : i32
      %c4_i32_355 = arith.constant 4 : i32
      %674 = arith.addi %673, %c4_i32_355 : i32
      %675 = arith.index_cast %674 : i32 to index
      %676 = memref.load %arg1[%675] : memref<1466xf32, #tpu.memory_space<smem>>
      %c2_356 = arith.constant 2 : index
      %c1_357 = arith.constant 1 : index
      %c1_358 = arith.constant 1 : index
      %677 = vector.load %arg6[%c2_356, %c1_357, %c1_358] : memref<8x66x66xf32, #tpu.memory_space<vmem>>, vector<1x64x64xf32>
      %678 = vector.shape_cast %677 : vector<1x64x64xf32> to vector<64x64xf32>
      %679 = vector.broadcast %676 : f32 to vector<64x64xf32>
      %680 = arith.mulf %679, %678 : vector<64x64xf32>
      %681 = arith.addf %672, %680 : vector<64x64xf32>
      %c18_i32_359 = arith.constant 18 : i32
      %682 = arith.addi %473, %c18_i32_359 : i32
      %c5_i32_360 = arith.constant 5 : i32
      %683 = arith.addi %682, %c5_i32_360 : i32
      %684 = arith.index_cast %683 : i32 to index
      %685 = memref.load %arg1[%684] : memref<1466xf32, #tpu.memory_space<smem>>
      %c2_361 = arith.constant 2 : index
      %c1_362 = arith.constant 1 : index
      %c2_363 = arith.constant 2 : index
      %686 = vector.load %arg6[%c2_361, %c1_362, %c2_363] : memref<8x66x66xf32, #tpu.memory_space<vmem>>, vector<1x64x64xf32>
      %687 = vector.shape_cast %686 : vector<1x64x64xf32> to vector<64x64xf32>
      %688 = vector.broadcast %685 : f32 to vector<64x64xf32>
      %689 = arith.mulf %688, %687 : vector<64x64xf32>
      %690 = arith.addf %681, %689 : vector<64x64xf32>
      %c18_i32_364 = arith.constant 18 : i32
      %691 = arith.addi %473, %c18_i32_364 : i32
      %c6_i32_365 = arith.constant 6 : i32
      %692 = arith.addi %691, %c6_i32_365 : i32
      %693 = arith.index_cast %692 : i32 to index
      %694 = memref.load %arg1[%693] : memref<1466xf32, #tpu.memory_space<smem>>
      %c2_366 = arith.constant 2 : index
      %c2_367 = arith.constant 2 : index
      %c0_368 = arith.constant 0 : index
      %695 = vector.load %arg6[%c2_366, %c2_367, %c0_368] : memref<8x66x66xf32, #tpu.memory_space<vmem>>, vector<1x64x64xf32>
      %696 = vector.shape_cast %695 : vector<1x64x64xf32> to vector<64x64xf32>
      %697 = vector.broadcast %694 : f32 to vector<64x64xf32>
      %698 = arith.mulf %697, %696 : vector<64x64xf32>
      %699 = arith.addf %690, %698 : vector<64x64xf32>
      %c18_i32_369 = arith.constant 18 : i32
      %700 = arith.addi %473, %c18_i32_369 : i32
      %c7_i32_370 = arith.constant 7 : i32
      %701 = arith.addi %700, %c7_i32_370 : i32
      %702 = arith.index_cast %701 : i32 to index
      %703 = memref.load %arg1[%702] : memref<1466xf32, #tpu.memory_space<smem>>
      %c2_371 = arith.constant 2 : index
      %c2_372 = arith.constant 2 : index
      %c1_373 = arith.constant 1 : index
      %704 = vector.load %arg6[%c2_371, %c2_372, %c1_373] : memref<8x66x66xf32, #tpu.memory_space<vmem>>, vector<1x64x64xf32>
      %705 = vector.shape_cast %704 : vector<1x64x64xf32> to vector<64x64xf32>
      %706 = vector.broadcast %703 : f32 to vector<64x64xf32>
      %707 = arith.mulf %706, %705 : vector<64x64xf32>
      %708 = arith.addf %699, %707 : vector<64x64xf32>
      %c18_i32_374 = arith.constant 18 : i32
      %709 = arith.addi %473, %c18_i32_374 : i32
      %c8_i32_375 = arith.constant 8 : i32
      %710 = arith.addi %709, %c8_i32_375 : i32
      %711 = arith.index_cast %710 : i32 to index
      %712 = memref.load %arg1[%711] : memref<1466xf32, #tpu.memory_space<smem>>
      %c2_376 = arith.constant 2 : index
      %c2_377 = arith.constant 2 : index
      %c2_378 = arith.constant 2 : index
      %713 = vector.load %arg6[%c2_376, %c2_377, %c2_378] : memref<8x66x66xf32, #tpu.memory_space<vmem>>, vector<1x64x64xf32>
      %714 = vector.shape_cast %713 : vector<1x64x64xf32> to vector<64x64xf32>
      %715 = vector.broadcast %712 : f32 to vector<64x64xf32>
      %716 = arith.mulf %715, %714 : vector<64x64xf32>
      %717 = arith.addf %708, %716 : vector<64x64xf32>
      %c27_i32 = arith.constant 27 : i32
      %718 = arith.addi %473, %c27_i32 : i32
      %c0_i32_379 = arith.constant 0 : i32
      %719 = arith.addi %718, %c0_i32_379 : i32
      %720 = arith.index_cast %719 : i32 to index
      %721 = memref.load %arg1[%720] : memref<1466xf32, #tpu.memory_space<smem>>
      %c3_380 = arith.constant 3 : index
      %c0_381 = arith.constant 0 : index
      %c0_382 = arith.constant 0 : index
      %722 = vector.load %arg6[%c3_380, %c0_381, %c0_382] : memref<8x66x66xf32, #tpu.memory_space<vmem>>, vector<1x64x64xf32>
      %723 = vector.shape_cast %722 : vector<1x64x64xf32> to vector<64x64xf32>
      %724 = vector.broadcast %721 : f32 to vector<64x64xf32>
      %725 = arith.mulf %724, %723 : vector<64x64xf32>
      %726 = arith.addf %717, %725 : vector<64x64xf32>
      %c27_i32_383 = arith.constant 27 : i32
      %727 = arith.addi %473, %c27_i32_383 : i32
      %c1_i32_384 = arith.constant 1 : i32
      %728 = arith.addi %727, %c1_i32_384 : i32
      %729 = arith.index_cast %728 : i32 to index
      %730 = memref.load %arg1[%729] : memref<1466xf32, #tpu.memory_space<smem>>
      %c3_385 = arith.constant 3 : index
      %c0_386 = arith.constant 0 : index
      %c1_387 = arith.constant 1 : index
      %731 = vector.load %arg6[%c3_385, %c0_386, %c1_387] : memref<8x66x66xf32, #tpu.memory_space<vmem>>, vector<1x64x64xf32>
      %732 = vector.shape_cast %731 : vector<1x64x64xf32> to vector<64x64xf32>
      %733 = vector.broadcast %730 : f32 to vector<64x64xf32>
      %734 = arith.mulf %733, %732 : vector<64x64xf32>
      %735 = arith.addf %726, %734 : vector<64x64xf32>
      %c27_i32_388 = arith.constant 27 : i32
      %736 = arith.addi %473, %c27_i32_388 : i32
      %c2_i32_389 = arith.constant 2 : i32
      %737 = arith.addi %736, %c2_i32_389 : i32
      %738 = arith.index_cast %737 : i32 to index
      %739 = memref.load %arg1[%738] : memref<1466xf32, #tpu.memory_space<smem>>
      %c3_390 = arith.constant 3 : index
      %c0_391 = arith.constant 0 : index
      %c2_392 = arith.constant 2 : index
      %740 = vector.load %arg6[%c3_390, %c0_391, %c2_392] : memref<8x66x66xf32, #tpu.memory_space<vmem>>, vector<1x64x64xf32>
      %741 = vector.shape_cast %740 : vector<1x64x64xf32> to vector<64x64xf32>
      %742 = vector.broadcast %739 : f32 to vector<64x64xf32>
      %743 = arith.mulf %742, %741 : vector<64x64xf32>
      %744 = arith.addf %735, %743 : vector<64x64xf32>
      %c27_i32_393 = arith.constant 27 : i32
      %745 = arith.addi %473, %c27_i32_393 : i32
      %c3_i32_394 = arith.constant 3 : i32
      %746 = arith.addi %745, %c3_i32_394 : i32
      %747 = arith.index_cast %746 : i32 to index
      %748 = memref.load %arg1[%747] : memref<1466xf32, #tpu.memory_space<smem>>
      %c3_395 = arith.constant 3 : index
      %c1_396 = arith.constant 1 : index
      %c0_397 = arith.constant 0 : index
      %749 = vector.load %arg6[%c3_395, %c1_396, %c0_397] : memref<8x66x66xf32, #tpu.memory_space<vmem>>, vector<1x64x64xf32>
      %750 = vector.shape_cast %749 : vector<1x64x64xf32> to vector<64x64xf32>
      %751 = vector.broadcast %748 : f32 to vector<64x64xf32>
      %752 = arith.mulf %751, %750 : vector<64x64xf32>
      %753 = arith.addf %744, %752 : vector<64x64xf32>
      %c27_i32_398 = arith.constant 27 : i32
      %754 = arith.addi %473, %c27_i32_398 : i32
      %c4_i32_399 = arith.constant 4 : i32
      %755 = arith.addi %754, %c4_i32_399 : i32
      %756 = arith.index_cast %755 : i32 to index
      %757 = memref.load %arg1[%756] : memref<1466xf32, #tpu.memory_space<smem>>
      %c3_400 = arith.constant 3 : index
      %c1_401 = arith.constant 1 : index
      %c1_402 = arith.constant 1 : index
      %758 = vector.load %arg6[%c3_400, %c1_401, %c1_402] : memref<8x66x66xf32, #tpu.memory_space<vmem>>, vector<1x64x64xf32>
      %759 = vector.shape_cast %758 : vector<1x64x64xf32> to vector<64x64xf32>
      %760 = vector.broadcast %757 : f32 to vector<64x64xf32>
      %761 = arith.mulf %760, %759 : vector<64x64xf32>
      %762 = arith.addf %753, %761 : vector<64x64xf32>
      %c27_i32_403 = arith.constant 27 : i32
      %763 = arith.addi %473, %c27_i32_403 : i32
      %c5_i32_404 = arith.constant 5 : i32
      %764 = arith.addi %763, %c5_i32_404 : i32
      %765 = arith.index_cast %764 : i32 to index
      %766 = memref.load %arg1[%765] : memref<1466xf32, #tpu.memory_space<smem>>
      %c3_405 = arith.constant 3 : index
      %c1_406 = arith.constant 1 : index
      %c2_407 = arith.constant 2 : index
      %767 = vector.load %arg6[%c3_405, %c1_406, %c2_407] : memref<8x66x66xf32, #tpu.memory_space<vmem>>, vector<1x64x64xf32>
      %768 = vector.shape_cast %767 : vector<1x64x64xf32> to vector<64x64xf32>
      %769 = vector.broadcast %766 : f32 to vector<64x64xf32>
      %770 = arith.mulf %769, %768 : vector<64x64xf32>
      %771 = arith.addf %762, %770 : vector<64x64xf32>
      %c27_i32_408 = arith.constant 27 : i32
      %772 = arith.addi %473, %c27_i32_408 : i32
      %c6_i32_409 = arith.constant 6 : i32
      %773 = arith.addi %772, %c6_i32_409 : i32
      %774 = arith.index_cast %773 : i32 to index
      %775 = memref.load %arg1[%774] : memref<1466xf32, #tpu.memory_space<smem>>
      %c3_410 = arith.constant 3 : index
      %c2_411 = arith.constant 2 : index
      %c0_412 = arith.constant 0 : index
      %776 = vector.load %arg6[%c3_410, %c2_411, %c0_412] : memref<8x66x66xf32, #tpu.memory_space<vmem>>, vector<1x64x64xf32>
      %777 = vector.shape_cast %776 : vector<1x64x64xf32> to vector<64x64xf32>
      %778 = vector.broadcast %775 : f32 to vector<64x64xf32>
      %779 = arith.mulf %778, %777 : vector<64x64xf32>
      %780 = arith.addf %771, %779 : vector<64x64xf32>
      %c27_i32_413 = arith.constant 27 : i32
      %781 = arith.addi %473, %c27_i32_413 : i32
      %c7_i32_414 = arith.constant 7 : i32
      %782 = arith.addi %781, %c7_i32_414 : i32
      %783 = arith.index_cast %782 : i32 to index
      %784 = memref.load %arg1[%783] : memref<1466xf32, #tpu.memory_space<smem>>
      %c3_415 = arith.constant 3 : index
      %c2_416 = arith.constant 2 : index
      %c1_417 = arith.constant 1 : index
      %785 = vector.load %arg6[%c3_415, %c2_416, %c1_417] : memref<8x66x66xf32, #tpu.memory_space<vmem>>, vector<1x64x64xf32>
      %786 = vector.shape_cast %785 : vector<1x64x64xf32> to vector<64x64xf32>
      %787 = vector.broadcast %784 : f32 to vector<64x64xf32>
      %788 = arith.mulf %787, %786 : vector<64x64xf32>
      %789 = arith.addf %780, %788 : vector<64x64xf32>
      %c27_i32_418 = arith.constant 27 : i32
      %790 = arith.addi %473, %c27_i32_418 : i32
      %c8_i32_419 = arith.constant 8 : i32
      %791 = arith.addi %790, %c8_i32_419 : i32
      %792 = arith.index_cast %791 : i32 to index
      %793 = memref.load %arg1[%792] : memref<1466xf32, #tpu.memory_space<smem>>
      %c3_420 = arith.constant 3 : index
      %c2_421 = arith.constant 2 : index
      %c2_422 = arith.constant 2 : index
      %794 = vector.load %arg6[%c3_420, %c2_421, %c2_422] : memref<8x66x66xf32, #tpu.memory_space<vmem>>, vector<1x64x64xf32>
      %795 = vector.shape_cast %794 : vector<1x64x64xf32> to vector<64x64xf32>
      %796 = vector.broadcast %793 : f32 to vector<64x64xf32>
      %797 = arith.mulf %796, %795 : vector<64x64xf32>
      %798 = arith.addf %789, %797 : vector<64x64xf32>
      %c36_i32 = arith.constant 36 : i32
      %799 = arith.addi %473, %c36_i32 : i32
      %c0_i32_423 = arith.constant 0 : i32
      %800 = arith.addi %799, %c0_i32_423 : i32
      %801 = arith.index_cast %800 : i32 to index
      %802 = memref.load %arg1[%801] : memref<1466xf32, #tpu.memory_space<smem>>
      %c4_424 = arith.constant 4 : index
      %c0_425 = arith.constant 0 : index
      %c0_426 = arith.constant 0 : index
      %803 = vector.load %arg6[%c4_424, %c0_425, %c0_426] : memref<8x66x66xf32, #tpu.memory_space<vmem>>, vector<1x64x64xf32>
      %804 = vector.shape_cast %803 : vector<1x64x64xf32> to vector<64x64xf32>
      %805 = vector.broadcast %802 : f32 to vector<64x64xf32>
      %806 = arith.mulf %805, %804 : vector<64x64xf32>
      %807 = arith.addf %798, %806 : vector<64x64xf32>
      %c36_i32_427 = arith.constant 36 : i32
      %808 = arith.addi %473, %c36_i32_427 : i32
      %c1_i32_428 = arith.constant 1 : i32
      %809 = arith.addi %808, %c1_i32_428 : i32
      %810 = arith.index_cast %809 : i32 to index
      %811 = memref.load %arg1[%810] : memref<1466xf32, #tpu.memory_space<smem>>
      %c4_429 = arith.constant 4 : index
      %c0_430 = arith.constant 0 : index
      %c1_431 = arith.constant 1 : index
      %812 = vector.load %arg6[%c4_429, %c0_430, %c1_431] : memref<8x66x66xf32, #tpu.memory_space<vmem>>, vector<1x64x64xf32>
      %813 = vector.shape_cast %812 : vector<1x64x64xf32> to vector<64x64xf32>
      %814 = vector.broadcast %811 : f32 to vector<64x64xf32>
      %815 = arith.mulf %814, %813 : vector<64x64xf32>
      %816 = arith.addf %807, %815 : vector<64x64xf32>
      %c36_i32_432 = arith.constant 36 : i32
      %817 = arith.addi %473, %c36_i32_432 : i32
      %c2_i32_433 = arith.constant 2 : i32
      %818 = arith.addi %817, %c2_i32_433 : i32
      %819 = arith.index_cast %818 : i32 to index
      %820 = memref.load %arg1[%819] : memref<1466xf32, #tpu.memory_space<smem>>
      %c4_434 = arith.constant 4 : index
      %c0_435 = arith.constant 0 : index
      %c2_436 = arith.constant 2 : index
      %821 = vector.load %arg6[%c4_434, %c0_435, %c2_436] : memref<8x66x66xf32, #tpu.memory_space<vmem>>, vector<1x64x64xf32>
      %822 = vector.shape_cast %821 : vector<1x64x64xf32> to vector<64x64xf32>
      %823 = vector.broadcast %820 : f32 to vector<64x64xf32>
      %824 = arith.mulf %823, %822 : vector<64x64xf32>
      %825 = arith.addf %816, %824 : vector<64x64xf32>
      %c36_i32_437 = arith.constant 36 : i32
      %826 = arith.addi %473, %c36_i32_437 : i32
      %c3_i32_438 = arith.constant 3 : i32
      %827 = arith.addi %826, %c3_i32_438 : i32
      %828 = arith.index_cast %827 : i32 to index
      %829 = memref.load %arg1[%828] : memref<1466xf32, #tpu.memory_space<smem>>
      %c4_439 = arith.constant 4 : index
      %c1_440 = arith.constant 1 : index
      %c0_441 = arith.constant 0 : index
      %830 = vector.load %arg6[%c4_439, %c1_440, %c0_441] : memref<8x66x66xf32, #tpu.memory_space<vmem>>, vector<1x64x64xf32>
      %831 = vector.shape_cast %830 : vector<1x64x64xf32> to vector<64x64xf32>
      %832 = vector.broadcast %829 : f32 to vector<64x64xf32>
      %833 = arith.mulf %832, %831 : vector<64x64xf32>
      %834 = arith.addf %825, %833 : vector<64x64xf32>
      %c36_i32_442 = arith.constant 36 : i32
      %835 = arith.addi %473, %c36_i32_442 : i32
      %c4_i32_443 = arith.constant 4 : i32
      %836 = arith.addi %835, %c4_i32_443 : i32
      %837 = arith.index_cast %836 : i32 to index
      %838 = memref.load %arg1[%837] : memref<1466xf32, #tpu.memory_space<smem>>
      %c4_444 = arith.constant 4 : index
      %c1_445 = arith.constant 1 : index
      %c1_446 = arith.constant 1 : index
      %839 = vector.load %arg6[%c4_444, %c1_445, %c1_446] : memref<8x66x66xf32, #tpu.memory_space<vmem>>, vector<1x64x64xf32>
      %840 = vector.shape_cast %839 : vector<1x64x64xf32> to vector<64x64xf32>
      %841 = vector.broadcast %838 : f32 to vector<64x64xf32>
      %842 = arith.mulf %841, %840 : vector<64x64xf32>
      %843 = arith.addf %834, %842 : vector<64x64xf32>
      %c36_i32_447 = arith.constant 36 : i32
      %844 = arith.addi %473, %c36_i32_447 : i32
      %c5_i32_448 = arith.constant 5 : i32
      %845 = arith.addi %844, %c5_i32_448 : i32
      %846 = arith.index_cast %845 : i32 to index
      %847 = memref.load %arg1[%846] : memref<1466xf32, #tpu.memory_space<smem>>
      %c4_449 = arith.constant 4 : index
      %c1_450 = arith.constant 1 : index
      %c2_451 = arith.constant 2 : index
      %848 = vector.load %arg6[%c4_449, %c1_450, %c2_451] : memref<8x66x66xf32, #tpu.memory_space<vmem>>, vector<1x64x64xf32>
      %849 = vector.shape_cast %848 : vector<1x64x64xf32> to vector<64x64xf32>
      %850 = vector.broadcast %847 : f32 to vector<64x64xf32>
      %851 = arith.mulf %850, %849 : vector<64x64xf32>
      %852 = arith.addf %843, %851 : vector<64x64xf32>
      %c36_i32_452 = arith.constant 36 : i32
      %853 = arith.addi %473, %c36_i32_452 : i32
      %c6_i32_453 = arith.constant 6 : i32
      %854 = arith.addi %853, %c6_i32_453 : i32
      %855 = arith.index_cast %854 : i32 to index
      %856 = memref.load %arg1[%855] : memref<1466xf32, #tpu.memory_space<smem>>
      %c4_454 = arith.constant 4 : index
      %c2_455 = arith.constant 2 : index
      %c0_456 = arith.constant 0 : index
      %857 = vector.load %arg6[%c4_454, %c2_455, %c0_456] : memref<8x66x66xf32, #tpu.memory_space<vmem>>, vector<1x64x64xf32>
      %858 = vector.shape_cast %857 : vector<1x64x64xf32> to vector<64x64xf32>
      %859 = vector.broadcast %856 : f32 to vector<64x64xf32>
      %860 = arith.mulf %859, %858 : vector<64x64xf32>
      %861 = arith.addf %852, %860 : vector<64x64xf32>
      %c36_i32_457 = arith.constant 36 : i32
      %862 = arith.addi %473, %c36_i32_457 : i32
      %c7_i32_458 = arith.constant 7 : i32
      %863 = arith.addi %862, %c7_i32_458 : i32
      %864 = arith.index_cast %863 : i32 to index
      %865 = memref.load %arg1[%864] : memref<1466xf32, #tpu.memory_space<smem>>
      %c4_459 = arith.constant 4 : index
      %c2_460 = arith.constant 2 : index
      %c1_461 = arith.constant 1 : index
      %866 = vector.load %arg6[%c4_459, %c2_460, %c1_461] : memref<8x66x66xf32, #tpu.memory_space<vmem>>, vector<1x64x64xf32>
      %867 = vector.shape_cast %866 : vector<1x64x64xf32> to vector<64x64xf32>
      %868 = vector.broadcast %865 : f32 to vector<64x64xf32>
      %869 = arith.mulf %868, %867 : vector<64x64xf32>
      %870 = arith.addf %861, %869 : vector<64x64xf32>
      %c36_i32_462 = arith.constant 36 : i32
      %871 = arith.addi %473, %c36_i32_462 : i32
      %c8_i32_463 = arith.constant 8 : i32
      %872 = arith.addi %871, %c8_i32_463 : i32
      %873 = arith.index_cast %872 : i32 to index
      %874 = memref.load %arg1[%873] : memref<1466xf32, #tpu.memory_space<smem>>
      %c4_464 = arith.constant 4 : index
      %c2_465 = arith.constant 2 : index
      %c2_466 = arith.constant 2 : index
      %875 = vector.load %arg6[%c4_464, %c2_465, %c2_466] : memref<8x66x66xf32, #tpu.memory_space<vmem>>, vector<1x64x64xf32>
      %876 = vector.shape_cast %875 : vector<1x64x64xf32> to vector<64x64xf32>
      %877 = vector.broadcast %874 : f32 to vector<64x64xf32>
      %878 = arith.mulf %877, %876 : vector<64x64xf32>
      %879 = arith.addf %870, %878 : vector<64x64xf32>
      %c45_i32 = arith.constant 45 : i32
      %880 = arith.addi %473, %c45_i32 : i32
      %c0_i32_467 = arith.constant 0 : i32
      %881 = arith.addi %880, %c0_i32_467 : i32
      %882 = arith.index_cast %881 : i32 to index
      %883 = memref.load %arg1[%882] : memref<1466xf32, #tpu.memory_space<smem>>
      %c5_468 = arith.constant 5 : index
      %c0_469 = arith.constant 0 : index
      %c0_470 = arith.constant 0 : index
      %884 = vector.load %arg6[%c5_468, %c0_469, %c0_470] : memref<8x66x66xf32, #tpu.memory_space<vmem>>, vector<1x64x64xf32>
      %885 = vector.shape_cast %884 : vector<1x64x64xf32> to vector<64x64xf32>
      %886 = vector.broadcast %883 : f32 to vector<64x64xf32>
      %887 = arith.mulf %886, %885 : vector<64x64xf32>
      %888 = arith.addf %879, %887 : vector<64x64xf32>
      %c45_i32_471 = arith.constant 45 : i32
      %889 = arith.addi %473, %c45_i32_471 : i32
      %c1_i32_472 = arith.constant 1 : i32
      %890 = arith.addi %889, %c1_i32_472 : i32
      %891 = arith.index_cast %890 : i32 to index
      %892 = memref.load %arg1[%891] : memref<1466xf32, #tpu.memory_space<smem>>
      %c5_473 = arith.constant 5 : index
      %c0_474 = arith.constant 0 : index
      %c1_475 = arith.constant 1 : index
      %893 = vector.load %arg6[%c5_473, %c0_474, %c1_475] : memref<8x66x66xf32, #tpu.memory_space<vmem>>, vector<1x64x64xf32>
      %894 = vector.shape_cast %893 : vector<1x64x64xf32> to vector<64x64xf32>
      %895 = vector.broadcast %892 : f32 to vector<64x64xf32>
      %896 = arith.mulf %895, %894 : vector<64x64xf32>
      %897 = arith.addf %888, %896 : vector<64x64xf32>
      %c45_i32_476 = arith.constant 45 : i32
      %898 = arith.addi %473, %c45_i32_476 : i32
      %c2_i32_477 = arith.constant 2 : i32
      %899 = arith.addi %898, %c2_i32_477 : i32
      %900 = arith.index_cast %899 : i32 to index
      %901 = memref.load %arg1[%900] : memref<1466xf32, #tpu.memory_space<smem>>
      %c5_478 = arith.constant 5 : index
      %c0_479 = arith.constant 0 : index
      %c2_480 = arith.constant 2 : index
      %902 = vector.load %arg6[%c5_478, %c0_479, %c2_480] : memref<8x66x66xf32, #tpu.memory_space<vmem>>, vector<1x64x64xf32>
      %903 = vector.shape_cast %902 : vector<1x64x64xf32> to vector<64x64xf32>
      %904 = vector.broadcast %901 : f32 to vector<64x64xf32>
      %905 = arith.mulf %904, %903 : vector<64x64xf32>
      %906 = arith.addf %897, %905 : vector<64x64xf32>
      %c45_i32_481 = arith.constant 45 : i32
      %907 = arith.addi %473, %c45_i32_481 : i32
      %c3_i32_482 = arith.constant 3 : i32
      %908 = arith.addi %907, %c3_i32_482 : i32
      %909 = arith.index_cast %908 : i32 to index
      %910 = memref.load %arg1[%909] : memref<1466xf32, #tpu.memory_space<smem>>
      %c5_483 = arith.constant 5 : index
      %c1_484 = arith.constant 1 : index
      %c0_485 = arith.constant 0 : index
      %911 = vector.load %arg6[%c5_483, %c1_484, %c0_485] : memref<8x66x66xf32, #tpu.memory_space<vmem>>, vector<1x64x64xf32>
      %912 = vector.shape_cast %911 : vector<1x64x64xf32> to vector<64x64xf32>
      %913 = vector.broadcast %910 : f32 to vector<64x64xf32>
      %914 = arith.mulf %913, %912 : vector<64x64xf32>
      %915 = arith.addf %906, %914 : vector<64x64xf32>
      %c45_i32_486 = arith.constant 45 : i32
      %916 = arith.addi %473, %c45_i32_486 : i32
      %c4_i32_487 = arith.constant 4 : i32
      %917 = arith.addi %916, %c4_i32_487 : i32
      %918 = arith.index_cast %917 : i32 to index
      %919 = memref.load %arg1[%918] : memref<1466xf32, #tpu.memory_space<smem>>
      %c5_488 = arith.constant 5 : index
      %c1_489 = arith.constant 1 : index
      %c1_490 = arith.constant 1 : index
      %920 = vector.load %arg6[%c5_488, %c1_489, %c1_490] : memref<8x66x66xf32, #tpu.memory_space<vmem>>, vector<1x64x64xf32>
      %921 = vector.shape_cast %920 : vector<1x64x64xf32> to vector<64x64xf32>
      %922 = vector.broadcast %919 : f32 to vector<64x64xf32>
      %923 = arith.mulf %922, %921 : vector<64x64xf32>
      %924 = arith.addf %915, %923 : vector<64x64xf32>
      %c45_i32_491 = arith.constant 45 : i32
      %925 = arith.addi %473, %c45_i32_491 : i32
      %c5_i32_492 = arith.constant 5 : i32
      %926 = arith.addi %925, %c5_i32_492 : i32
      %927 = arith.index_cast %926 : i32 to index
      %928 = memref.load %arg1[%927] : memref<1466xf32, #tpu.memory_space<smem>>
      %c5_493 = arith.constant 5 : index
      %c1_494 = arith.constant 1 : index
      %c2_495 = arith.constant 2 : index
      %929 = vector.load %arg6[%c5_493, %c1_494, %c2_495] : memref<8x66x66xf32, #tpu.memory_space<vmem>>, vector<1x64x64xf32>
      %930 = vector.shape_cast %929 : vector<1x64x64xf32> to vector<64x64xf32>
      %931 = vector.broadcast %928 : f32 to vector<64x64xf32>
      %932 = arith.mulf %931, %930 : vector<64x64xf32>
      %933 = arith.addf %924, %932 : vector<64x64xf32>
      %c45_i32_496 = arith.constant 45 : i32
      %934 = arith.addi %473, %c45_i32_496 : i32
      %c6_i32_497 = arith.constant 6 : i32
      %935 = arith.addi %934, %c6_i32_497 : i32
      %936 = arith.index_cast %935 : i32 to index
      %937 = memref.load %arg1[%936] : memref<1466xf32, #tpu.memory_space<smem>>
      %c5_498 = arith.constant 5 : index
      %c2_499 = arith.constant 2 : index
      %c0_500 = arith.constant 0 : index
      %938 = vector.load %arg6[%c5_498, %c2_499, %c0_500] : memref<8x66x66xf32, #tpu.memory_space<vmem>>, vector<1x64x64xf32>
      %939 = vector.shape_cast %938 : vector<1x64x64xf32> to vector<64x64xf32>
      %940 = vector.broadcast %937 : f32 to vector<64x64xf32>
      %941 = arith.mulf %940, %939 : vector<64x64xf32>
      %942 = arith.addf %933, %941 : vector<64x64xf32>
      %c45_i32_501 = arith.constant 45 : i32
      %943 = arith.addi %473, %c45_i32_501 : i32
      %c7_i32_502 = arith.constant 7 : i32
      %944 = arith.addi %943, %c7_i32_502 : i32
      %945 = arith.index_cast %944 : i32 to index
      %946 = memref.load %arg1[%945] : memref<1466xf32, #tpu.memory_space<smem>>
      %c5_503 = arith.constant 5 : index
      %c2_504 = arith.constant 2 : index
      %c1_505 = arith.constant 1 : index
      %947 = vector.load %arg6[%c5_503, %c2_504, %c1_505] : memref<8x66x66xf32, #tpu.memory_space<vmem>>, vector<1x64x64xf32>
      %948 = vector.shape_cast %947 : vector<1x64x64xf32> to vector<64x64xf32>
      %949 = vector.broadcast %946 : f32 to vector<64x64xf32>
      %950 = arith.mulf %949, %948 : vector<64x64xf32>
      %951 = arith.addf %942, %950 : vector<64x64xf32>
      %c45_i32_506 = arith.constant 45 : i32
      %952 = arith.addi %473, %c45_i32_506 : i32
      %c8_i32_507 = arith.constant 8 : i32
      %953 = arith.addi %952, %c8_i32_507 : i32
      %954 = arith.index_cast %953 : i32 to index
      %955 = memref.load %arg1[%954] : memref<1466xf32, #tpu.memory_space<smem>>
      %c5_508 = arith.constant 5 : index
      %c2_509 = arith.constant 2 : index
      %c2_510 = arith.constant 2 : index
      %956 = vector.load %arg6[%c5_508, %c2_509, %c2_510] : memref<8x66x66xf32, #tpu.memory_space<vmem>>, vector<1x64x64xf32>
      %957 = vector.shape_cast %956 : vector<1x64x64xf32> to vector<64x64xf32>
      %958 = vector.broadcast %955 : f32 to vector<64x64xf32>
      %959 = arith.mulf %958, %957 : vector<64x64xf32>
      %960 = arith.addf %951, %959 : vector<64x64xf32>
      %c54_i32 = arith.constant 54 : i32
      %961 = arith.addi %473, %c54_i32 : i32
      %c0_i32_511 = arith.constant 0 : i32
      %962 = arith.addi %961, %c0_i32_511 : i32
      %963 = arith.index_cast %962 : i32 to index
      %964 = memref.load %arg1[%963] : memref<1466xf32, #tpu.memory_space<smem>>
      %c6_512 = arith.constant 6 : index
      %c0_513 = arith.constant 0 : index
      %c0_514 = arith.constant 0 : index
      %965 = vector.load %arg6[%c6_512, %c0_513, %c0_514] : memref<8x66x66xf32, #tpu.memory_space<vmem>>, vector<1x64x64xf32>
      %966 = vector.shape_cast %965 : vector<1x64x64xf32> to vector<64x64xf32>
      %967 = vector.broadcast %964 : f32 to vector<64x64xf32>
      %968 = arith.mulf %967, %966 : vector<64x64xf32>
      %969 = arith.addf %960, %968 : vector<64x64xf32>
      %c54_i32_515 = arith.constant 54 : i32
      %970 = arith.addi %473, %c54_i32_515 : i32
      %c1_i32_516 = arith.constant 1 : i32
      %971 = arith.addi %970, %c1_i32_516 : i32
      %972 = arith.index_cast %971 : i32 to index
      %973 = memref.load %arg1[%972] : memref<1466xf32, #tpu.memory_space<smem>>
      %c6_517 = arith.constant 6 : index
      %c0_518 = arith.constant 0 : index
      %c1_519 = arith.constant 1 : index
      %974 = vector.load %arg6[%c6_517, %c0_518, %c1_519] : memref<8x66x66xf32, #tpu.memory_space<vmem>>, vector<1x64x64xf32>
      %975 = vector.shape_cast %974 : vector<1x64x64xf32> to vector<64x64xf32>
      %976 = vector.broadcast %973 : f32 to vector<64x64xf32>
      %977 = arith.mulf %976, %975 : vector<64x64xf32>
      %978 = arith.addf %969, %977 : vector<64x64xf32>
      %c54_i32_520 = arith.constant 54 : i32
      %979 = arith.addi %473, %c54_i32_520 : i32
      %c2_i32_521 = arith.constant 2 : i32
      %980 = arith.addi %979, %c2_i32_521 : i32
      %981 = arith.index_cast %980 : i32 to index
      %982 = memref.load %arg1[%981] : memref<1466xf32, #tpu.memory_space<smem>>
      %c6_522 = arith.constant 6 : index
      %c0_523 = arith.constant 0 : index
      %c2_524 = arith.constant 2 : index
      %983 = vector.load %arg6[%c6_522, %c0_523, %c2_524] : memref<8x66x66xf32, #tpu.memory_space<vmem>>, vector<1x64x64xf32>
      %984 = vector.shape_cast %983 : vector<1x64x64xf32> to vector<64x64xf32>
      %985 = vector.broadcast %982 : f32 to vector<64x64xf32>
      %986 = arith.mulf %985, %984 : vector<64x64xf32>
      %987 = arith.addf %978, %986 : vector<64x64xf32>
      %c54_i32_525 = arith.constant 54 : i32
      %988 = arith.addi %473, %c54_i32_525 : i32
      %c3_i32_526 = arith.constant 3 : i32
      %989 = arith.addi %988, %c3_i32_526 : i32
      %990 = arith.index_cast %989 : i32 to index
      %991 = memref.load %arg1[%990] : memref<1466xf32, #tpu.memory_space<smem>>
      %c6_527 = arith.constant 6 : index
      %c1_528 = arith.constant 1 : index
      %c0_529 = arith.constant 0 : index
      %992 = vector.load %arg6[%c6_527, %c1_528, %c0_529] : memref<8x66x66xf32, #tpu.memory_space<vmem>>, vector<1x64x64xf32>
      %993 = vector.shape_cast %992 : vector<1x64x64xf32> to vector<64x64xf32>
      %994 = vector.broadcast %991 : f32 to vector<64x64xf32>
      %995 = arith.mulf %994, %993 : vector<64x64xf32>
      %996 = arith.addf %987, %995 : vector<64x64xf32>
      %c54_i32_530 = arith.constant 54 : i32
      %997 = arith.addi %473, %c54_i32_530 : i32
      %c4_i32_531 = arith.constant 4 : i32
      %998 = arith.addi %997, %c4_i32_531 : i32
      %999 = arith.index_cast %998 : i32 to index
      %1000 = memref.load %arg1[%999] : memref<1466xf32, #tpu.memory_space<smem>>
      %c6_532 = arith.constant 6 : index
      %c1_533 = arith.constant 1 : index
      %c1_534 = arith.constant 1 : index
      %1001 = vector.load %arg6[%c6_532, %c1_533, %c1_534] : memref<8x66x66xf32, #tpu.memory_space<vmem>>, vector<1x64x64xf32>
      %1002 = vector.shape_cast %1001 : vector<1x64x64xf32> to vector<64x64xf32>
      %1003 = vector.broadcast %1000 : f32 to vector<64x64xf32>
      %1004 = arith.mulf %1003, %1002 : vector<64x64xf32>
      %1005 = arith.addf %996, %1004 : vector<64x64xf32>
      %c54_i32_535 = arith.constant 54 : i32
      %1006 = arith.addi %473, %c54_i32_535 : i32
      %c5_i32_536 = arith.constant 5 : i32
      %1007 = arith.addi %1006, %c5_i32_536 : i32
      %1008 = arith.index_cast %1007 : i32 to index
      %1009 = memref.load %arg1[%1008] : memref<1466xf32, #tpu.memory_space<smem>>
      %c6_537 = arith.constant 6 : index
      %c1_538 = arith.constant 1 : index
      %c2_539 = arith.constant 2 : index
      %1010 = vector.load %arg6[%c6_537, %c1_538, %c2_539] : memref<8x66x66xf32, #tpu.memory_space<vmem>>, vector<1x64x64xf32>
      %1011 = vector.shape_cast %1010 : vector<1x64x64xf32> to vector<64x64xf32>
      %1012 = vector.broadcast %1009 : f32 to vector<64x64xf32>
      %1013 = arith.mulf %1012, %1011 : vector<64x64xf32>
      %1014 = arith.addf %1005, %1013 : vector<64x64xf32>
      %c54_i32_540 = arith.constant 54 : i32
      %1015 = arith.addi %473, %c54_i32_540 : i32
      %c6_i32_541 = arith.constant 6 : i32
      %1016 = arith.addi %1015, %c6_i32_541 : i32
      %1017 = arith.index_cast %1016 : i32 to index
      %1018 = memref.load %arg1[%1017] : memref<1466xf32, #tpu.memory_space<smem>>
      %c6_542 = arith.constant 6 : index
      %c2_543 = arith.constant 2 : index
      %c0_544 = arith.constant 0 : index
      %1019 = vector.load %arg6[%c6_542, %c2_543, %c0_544] : memref<8x66x66xf32, #tpu.memory_space<vmem>>, vector<1x64x64xf32>
      %1020 = vector.shape_cast %1019 : vector<1x64x64xf32> to vector<64x64xf32>
      %1021 = vector.broadcast %1018 : f32 to vector<64x64xf32>
      %1022 = arith.mulf %1021, %1020 : vector<64x64xf32>
      %1023 = arith.addf %1014, %1022 : vector<64x64xf32>
      %c54_i32_545 = arith.constant 54 : i32
      %1024 = arith.addi %473, %c54_i32_545 : i32
      %c7_i32_546 = arith.constant 7 : i32
      %1025 = arith.addi %1024, %c7_i32_546 : i32
      %1026 = arith.index_cast %1025 : i32 to index
      %1027 = memref.load %arg1[%1026] : memref<1466xf32, #tpu.memory_space<smem>>
      %c6_547 = arith.constant 6 : index
      %c2_548 = arith.constant 2 : index
      %c1_549 = arith.constant 1 : index
      %1028 = vector.load %arg6[%c6_547, %c2_548, %c1_549] : memref<8x66x66xf32, #tpu.memory_space<vmem>>, vector<1x64x64xf32>
      %1029 = vector.shape_cast %1028 : vector<1x64x64xf32> to vector<64x64xf32>
      %1030 = vector.broadcast %1027 : f32 to vector<64x64xf32>
      %1031 = arith.mulf %1030, %1029 : vector<64x64xf32>
      %1032 = arith.addf %1023, %1031 : vector<64x64xf32>
      %c54_i32_550 = arith.constant 54 : i32
      %1033 = arith.addi %473, %c54_i32_550 : i32
      %c8_i32_551 = arith.constant 8 : i32
      %1034 = arith.addi %1033, %c8_i32_551 : i32
      %1035 = arith.index_cast %1034 : i32 to index
      %1036 = memref.load %arg1[%1035] : memref<1466xf32, #tpu.memory_space<smem>>
      %c6_552 = arith.constant 6 : index
      %c2_553 = arith.constant 2 : index
      %c2_554 = arith.constant 2 : index
      %1037 = vector.load %arg6[%c6_552, %c2_553, %c2_554] : memref<8x66x66xf32, #tpu.memory_space<vmem>>, vector<1x64x64xf32>
      %1038 = vector.shape_cast %1037 : vector<1x64x64xf32> to vector<64x64xf32>
      %1039 = vector.broadcast %1036 : f32 to vector<64x64xf32>
      %1040 = arith.mulf %1039, %1038 : vector<64x64xf32>
      %1041 = arith.addf %1032, %1040 : vector<64x64xf32>
      %c63_i32 = arith.constant 63 : i32
      %1042 = arith.addi %473, %c63_i32 : i32
      %c0_i32_555 = arith.constant 0 : i32
      %1043 = arith.addi %1042, %c0_i32_555 : i32
      %1044 = arith.index_cast %1043 : i32 to index
      %1045 = memref.load %arg1[%1044] : memref<1466xf32, #tpu.memory_space<smem>>
      %c7_556 = arith.constant 7 : index
      %c0_557 = arith.constant 0 : index
      %c0_558 = arith.constant 0 : index
      %1046 = vector.load %arg6[%c7_556, %c0_557, %c0_558] : memref<8x66x66xf32, #tpu.memory_space<vmem>>, vector<1x64x64xf32>
      %1047 = vector.shape_cast %1046 : vector<1x64x64xf32> to vector<64x64xf32>
      %1048 = vector.broadcast %1045 : f32 to vector<64x64xf32>
      %1049 = arith.mulf %1048, %1047 : vector<64x64xf32>
      %1050 = arith.addf %1041, %1049 : vector<64x64xf32>
      %c63_i32_559 = arith.constant 63 : i32
      %1051 = arith.addi %473, %c63_i32_559 : i32
      %c1_i32_560 = arith.constant 1 : i32
      %1052 = arith.addi %1051, %c1_i32_560 : i32
      %1053 = arith.index_cast %1052 : i32 to index
      %1054 = memref.load %arg1[%1053] : memref<1466xf32, #tpu.memory_space<smem>>
      %c7_561 = arith.constant 7 : index
      %c0_562 = arith.constant 0 : index
      %c1_563 = arith.constant 1 : index
      %1055 = vector.load %arg6[%c7_561, %c0_562, %c1_563] : memref<8x66x66xf32, #tpu.memory_space<vmem>>, vector<1x64x64xf32>
      %1056 = vector.shape_cast %1055 : vector<1x64x64xf32> to vector<64x64xf32>
      %1057 = vector.broadcast %1054 : f32 to vector<64x64xf32>
      %1058 = arith.mulf %1057, %1056 : vector<64x64xf32>
      %1059 = arith.addf %1050, %1058 : vector<64x64xf32>
      %c63_i32_564 = arith.constant 63 : i32
      %1060 = arith.addi %473, %c63_i32_564 : i32
      %c2_i32_565 = arith.constant 2 : i32
      %1061 = arith.addi %1060, %c2_i32_565 : i32
      %1062 = arith.index_cast %1061 : i32 to index
      %1063 = memref.load %arg1[%1062] : memref<1466xf32, #tpu.memory_space<smem>>
      %c7_566 = arith.constant 7 : index
      %c0_567 = arith.constant 0 : index
      %c2_568 = arith.constant 2 : index
      %1064 = vector.load %arg6[%c7_566, %c0_567, %c2_568] : memref<8x66x66xf32, #tpu.memory_space<vmem>>, vector<1x64x64xf32>
      %1065 = vector.shape_cast %1064 : vector<1x64x64xf32> to vector<64x64xf32>
      %1066 = vector.broadcast %1063 : f32 to vector<64x64xf32>
      %1067 = arith.mulf %1066, %1065 : vector<64x64xf32>
      %1068 = arith.addf %1059, %1067 : vector<64x64xf32>
      %c63_i32_569 = arith.constant 63 : i32
      %1069 = arith.addi %473, %c63_i32_569 : i32
      %c3_i32_570 = arith.constant 3 : i32
      %1070 = arith.addi %1069, %c3_i32_570 : i32
      %1071 = arith.index_cast %1070 : i32 to index
      %1072 = memref.load %arg1[%1071] : memref<1466xf32, #tpu.memory_space<smem>>
      %c7_571 = arith.constant 7 : index
      %c1_572 = arith.constant 1 : index
      %c0_573 = arith.constant 0 : index
      %1073 = vector.load %arg6[%c7_571, %c1_572, %c0_573] : memref<8x66x66xf32, #tpu.memory_space<vmem>>, vector<1x64x64xf32>
      %1074 = vector.shape_cast %1073 : vector<1x64x64xf32> to vector<64x64xf32>
      %1075 = vector.broadcast %1072 : f32 to vector<64x64xf32>
      %1076 = arith.mulf %1075, %1074 : vector<64x64xf32>
      %1077 = arith.addf %1068, %1076 : vector<64x64xf32>
      %c63_i32_574 = arith.constant 63 : i32
      %1078 = arith.addi %473, %c63_i32_574 : i32
      %c4_i32_575 = arith.constant 4 : i32
      %1079 = arith.addi %1078, %c4_i32_575 : i32
      %1080 = arith.index_cast %1079 : i32 to index
      %1081 = memref.load %arg1[%1080] : memref<1466xf32, #tpu.memory_space<smem>>
      %c7_576 = arith.constant 7 : index
      %c1_577 = arith.constant 1 : index
      %c1_578 = arith.constant 1 : index
      %1082 = vector.load %arg6[%c7_576, %c1_577, %c1_578] : memref<8x66x66xf32, #tpu.memory_space<vmem>>, vector<1x64x64xf32>
      %1083 = vector.shape_cast %1082 : vector<1x64x64xf32> to vector<64x64xf32>
      %1084 = vector.broadcast %1081 : f32 to vector<64x64xf32>
      %1085 = arith.mulf %1084, %1083 : vector<64x64xf32>
      %1086 = arith.addf %1077, %1085 : vector<64x64xf32>
      %c63_i32_579 = arith.constant 63 : i32
      %1087 = arith.addi %473, %c63_i32_579 : i32
      %c5_i32_580 = arith.constant 5 : i32
      %1088 = arith.addi %1087, %c5_i32_580 : i32
      %1089 = arith.index_cast %1088 : i32 to index
      %1090 = memref.load %arg1[%1089] : memref<1466xf32, #tpu.memory_space<smem>>
      %c7_581 = arith.constant 7 : index
      %c1_582 = arith.constant 1 : index
      %c2_583 = arith.constant 2 : index
      %1091 = vector.load %arg6[%c7_581, %c1_582, %c2_583] : memref<8x66x66xf32, #tpu.memory_space<vmem>>, vector<1x64x64xf32>
      %1092 = vector.shape_cast %1091 : vector<1x64x64xf32> to vector<64x64xf32>
      %1093 = vector.broadcast %1090 : f32 to vector<64x64xf32>
      %1094 = arith.mulf %1093, %1092 : vector<64x64xf32>
      %1095 = arith.addf %1086, %1094 : vector<64x64xf32>
      %c63_i32_584 = arith.constant 63 : i32
      %1096 = arith.addi %473, %c63_i32_584 : i32
      %c6_i32_585 = arith.constant 6 : i32
      %1097 = arith.addi %1096, %c6_i32_585 : i32
      %1098 = arith.index_cast %1097 : i32 to index
      %1099 = memref.load %arg1[%1098] : memref<1466xf32, #tpu.memory_space<smem>>
      %c7_586 = arith.constant 7 : index
      %c2_587 = arith.constant 2 : index
      %c0_588 = arith.constant 0 : index
      %1100 = vector.load %arg6[%c7_586, %c2_587, %c0_588] : memref<8x66x66xf32, #tpu.memory_space<vmem>>, vector<1x64x64xf32>
      %1101 = vector.shape_cast %1100 : vector<1x64x64xf32> to vector<64x64xf32>
      %1102 = vector.broadcast %1099 : f32 to vector<64x64xf32>
      %1103 = arith.mulf %1102, %1101 : vector<64x64xf32>
      %1104 = arith.addf %1095, %1103 : vector<64x64xf32>
      %c63_i32_589 = arith.constant 63 : i32
      %1105 = arith.addi %473, %c63_i32_589 : i32
      %c7_i32_590 = arith.constant 7 : i32
      %1106 = arith.addi %1105, %c7_i32_590 : i32
      %1107 = arith.index_cast %1106 : i32 to index
      %1108 = memref.load %arg1[%1107] : memref<1466xf32, #tpu.memory_space<smem>>
      %c7_591 = arith.constant 7 : index
      %c2_592 = arith.constant 2 : index
      %c1_593 = arith.constant 1 : index
      %1109 = vector.load %arg6[%c7_591, %c2_592, %c1_593] : memref<8x66x66xf32, #tpu.memory_space<vmem>>, vector<1x64x64xf32>
      %1110 = vector.shape_cast %1109 : vector<1x64x64xf32> to vector<64x64xf32>
      %1111 = vector.broadcast %1108 : f32 to vector<64x64xf32>
      %1112 = arith.mulf %1111, %1110 : vector<64x64xf32>
      %1113 = arith.addf %1104, %1112 : vector<64x64xf32>
      %c63_i32_594 = arith.constant 63 : i32
      %1114 = arith.addi %473, %c63_i32_594 : i32
      %c8_i32_595 = arith.constant 8 : i32
      %1115 = arith.addi %1114, %c8_i32_595 : i32
      %1116 = arith.index_cast %1115 : i32 to index
      %1117 = memref.load %arg1[%1116] : memref<1466xf32, #tpu.memory_space<smem>>
      %c7_596 = arith.constant 7 : index
      %c2_597 = arith.constant 2 : index
      %c2_598 = arith.constant 2 : index
      %1118 = vector.load %arg6[%c7_596, %c2_597, %c2_598] : memref<8x66x66xf32, #tpu.memory_space<vmem>>, vector<1x64x64xf32>
      %1119 = vector.shape_cast %1118 : vector<1x64x64xf32> to vector<64x64xf32>
      %1120 = vector.broadcast %1117 : f32 to vector<64x64xf32>
      %1121 = arith.mulf %1120, %1119 : vector<64x64xf32>
      %1122 = arith.addf %1113, %1121 : vector<64x64xf32>
      %c800_i32 = arith.constant 800 : i32
      %1123 = arith.addi %c800_i32, %arg9 : i32
      %1124 = arith.index_cast %1123 : i32 to index
      %1125 = memref.load %arg1[%1124] : memref<1466xf32, #tpu.memory_space<smem>>
      %1126 = vector.broadcast %1125 : f32 to vector<64x64xf32>
      %1127 = arith.addf %1122, %1126 : vector<64x64xf32>
      %cst_599 = arith.constant 0.000000e+00 : f32
      %1128 = vector.broadcast %cst_599 : f32 to vector<64x64xf32>
      %1129 = arith.maximumf %1127, %1128 : vector<64x64xf32>
      %1130 = vector.extract_strided_slice %1129 {offsets = [0, 0], sizes = [6, 64], strides = [1, 1]} : vector<64x64xf32> to vector<6x64xf32>
      %cst_600 = arith.constant dense<0.000000e+00> : vector<64xf32>
      %1131 = vector.multi_reduction <add>, %1130, %cst_600 [0] : vector<6x64xf32> to vector<64xf32>
      %1132 = vector.shape_cast %1131 : vector<64xf32> to vector<1x64xf32>
      %cst_601 = arith.constant 0.166666672 : f32
      %1133 = vector.broadcast %cst_601 : f32 to vector<1x64xf32>
      %1134 = arith.mulf %1132, %1133 : vector<1x64xf32>
      %1135 = vector.extract_strided_slice %1129 {offsets = [5, 0], sizes = [6, 64], strides = [1, 1]} : vector<64x64xf32> to vector<6x64xf32>
      %cst_602 = arith.constant dense<0.000000e+00> : vector<64xf32>
      %1136 = vector.multi_reduction <add>, %1135, %cst_602 [0] : vector<6x64xf32> to vector<64xf32>
      %1137 = vector.shape_cast %1136 : vector<64xf32> to vector<1x64xf32>
      %cst_603 = arith.constant 0.166666672 : f32
      %1138 = vector.broadcast %cst_603 : f32 to vector<1x64xf32>
      %1139 = arith.mulf %1137, %1138 : vector<1x64xf32>
      %1140 = vector.extract_strided_slice %1129 {offsets = [10, 0], sizes = [6, 64], strides = [1, 1]} : vector<64x64xf32> to vector<6x64xf32>
      %cst_604 = arith.constant dense<0.000000e+00> : vector<64xf32>
      %1141 = vector.multi_reduction <add>, %1140, %cst_604 [0] : vector<6x64xf32> to vector<64xf32>
      %1142 = vector.shape_cast %1141 : vector<64xf32> to vector<1x64xf32>
      %cst_605 = arith.constant 0.166666672 : f32
      %1143 = vector.broadcast %cst_605 : f32 to vector<1x64xf32>
      %1144 = arith.mulf %1142, %1143 : vector<1x64xf32>
      %1145 = vector.extract_strided_slice %1129 {offsets = [16, 0], sizes = [6, 64], strides = [1, 1]} : vector<64x64xf32> to vector<6x64xf32>
      %cst_606 = arith.constant dense<0.000000e+00> : vector<64xf32>
      %1146 = vector.multi_reduction <add>, %1145, %cst_606 [0] : vector<6x64xf32> to vector<64xf32>
      %1147 = vector.shape_cast %1146 : vector<64xf32> to vector<1x64xf32>
      %cst_607 = arith.constant 0.166666672 : f32
      %1148 = vector.broadcast %cst_607 : f32 to vector<1x64xf32>
      %1149 = arith.mulf %1147, %1148 : vector<1x64xf32>
      %1150 = vector.extract_strided_slice %1129 {offsets = [21, 0], sizes = [6, 64], strides = [1, 1]} : vector<64x64xf32> to vector<6x64xf32>
      %cst_608 = arith.constant dense<0.000000e+00> : vector<64xf32>
      %1151 = vector.multi_reduction <add>, %1150, %cst_608 [0] : vector<6x64xf32> to vector<64xf32>
      %1152 = vector.shape_cast %1151 : vector<64xf32> to vector<1x64xf32>
      %cst_609 = arith.constant 0.166666672 : f32
      %1153 = vector.broadcast %cst_609 : f32 to vector<1x64xf32>
      %1154 = arith.mulf %1152, %1153 : vector<1x64xf32>
      %1155 = vector.extract_strided_slice %1129 {offsets = [26, 0], sizes = [6, 64], strides = [1, 1]} : vector<64x64xf32> to vector<6x64xf32>
      %cst_610 = arith.constant dense<0.000000e+00> : vector<64xf32>
      %1156 = vector.multi_reduction <add>, %1155, %cst_610 [0] : vector<6x64xf32> to vector<64xf32>
      %1157 = vector.shape_cast %1156 : vector<64xf32> to vector<1x64xf32>
      %cst_611 = arith.constant 0.166666672 : f32
      %1158 = vector.broadcast %cst_611 : f32 to vector<1x64xf32>
      %1159 = arith.mulf %1157, %1158 : vector<1x64xf32>
      %1160 = vector.extract_strided_slice %1129 {offsets = [32, 0], sizes = [6, 64], strides = [1, 1]} : vector<64x64xf32> to vector<6x64xf32>
      %cst_612 = arith.constant dense<0.000000e+00> : vector<64xf32>
      %1161 = vector.multi_reduction <add>, %1160, %cst_612 [0] : vector<6x64xf32> to vector<64xf32>
      %1162 = vector.shape_cast %1161 : vector<64xf32> to vector<1x64xf32>
      %cst_613 = arith.constant 0.166666672 : f32
      %1163 = vector.broadcast %cst_613 : f32 to vector<1x64xf32>
      %1164 = arith.mulf %1162, %1163 : vector<1x64xf32>
      %1165 = vector.extract_strided_slice %1129 {offsets = [37, 0], sizes = [6, 64], strides = [1, 1]} : vector<64x64xf32> to vector<6x64xf32>
      %cst_614 = arith.constant dense<0.000000e+00> : vector<64xf32>
      %1166 = vector.multi_reduction <add>, %1165, %cst_614 [0] : vector<6x64xf32> to vector<64xf32>
      %1167 = vector.shape_cast %1166 : vector<64xf32> to vector<1x64xf32>
      %cst_615 = arith.constant 0.166666672 : f32
      %1168 = vector.broadcast %cst_615 : f32 to vector<1x64xf32>
      %1169 = arith.mulf %1167, %1168 : vector<1x64xf32>
      %1170 = vector.extract_strided_slice %1129 {offsets = [42, 0], sizes = [6, 64], strides = [1, 1]} : vector<64x64xf32> to vector<6x64xf32>
      %cst_616 = arith.constant dense<0.000000e+00> : vector<64xf32>
      %1171 = vector.multi_reduction <add>, %1170, %cst_616 [0] : vector<6x64xf32> to vector<64xf32>
      %1172 = vector.shape_cast %1171 : vector<64xf32> to vector<1x64xf32>
      %cst_617 = arith.constant 0.166666672 : f32
      %1173 = vector.broadcast %cst_617 : f32 to vector<1x64xf32>
      %1174 = arith.mulf %1172, %1173 : vector<1x64xf32>
      %1175 = vector.extract_strided_slice %1129 {offsets = [48, 0], sizes = [6, 64], strides = [1, 1]} : vector<64x64xf32> to vector<6x64xf32>
      %cst_618 = arith.constant dense<0.000000e+00> : vector<64xf32>
      %1176 = vector.multi_reduction <add>, %1175, %cst_618 [0] : vector<6x64xf32> to vector<64xf32>
      %1177 = vector.shape_cast %1176 : vector<64xf32> to vector<1x64xf32>
      %cst_619 = arith.constant 0.166666672 : f32
      %1178 = vector.broadcast %cst_619 : f32 to vector<1x64xf32>
      %1179 = arith.mulf %1177, %1178 : vector<1x64xf32>
      %1180 = vector.extract_strided_slice %1129 {offsets = [53, 0], sizes = [6, 64], strides = [1, 1]} : vector<64x64xf32> to vector<6x64xf32>
      %cst_620 = arith.constant dense<0.000000e+00> : vector<64xf32>
      %1181 = vector.multi_reduction <add>, %1180, %cst_620 [0] : vector<6x64xf32> to vector<64xf32>
      %1182 = vector.shape_cast %1181 : vector<64xf32> to vector<1x64xf32>
      %cst_621 = arith.constant 0.166666672 : f32
      %1183 = vector.broadcast %cst_621 : f32 to vector<1x64xf32>
      %1184 = arith.mulf %1182, %1183 : vector<1x64xf32>
      %1185 = vector.extract_strided_slice %1129 {offsets = [58, 0], sizes = [6, 64], strides = [1, 1]} : vector<64x64xf32> to vector<6x64xf32>
      %cst_622 = arith.constant dense<0.000000e+00> : vector<64xf32>
      %1186 = vector.multi_reduction <add>, %1185, %cst_622 [0] : vector<6x64xf32> to vector<64xf32>
      %1187 = vector.shape_cast %1186 : vector<64xf32> to vector<1x64xf32>
      %cst_623 = arith.constant 0.166666672 : f32
      %1188 = vector.broadcast %cst_623 : f32 to vector<1x64xf32>
      %1189 = arith.mulf %1187, %1188 : vector<1x64xf32>
      %1190 = tpu.concatenate %1134, %1139, %1144, %1149, %1154, %1159, %1164, %1169, %1174, %1179, %1184, %1189 in 0 : vector<1x64xf32>, vector<1x64xf32>, vector<1x64xf32>, vector<1x64xf32>, vector<1x64xf32>, vector<1x64xf32>, vector<1x64xf32>, vector<1x64xf32>, vector<1x64xf32>, vector<1x64xf32>, vector<1x64xf32>, vector<1x64xf32> -> vector<12x64xf32>
      %1191 = vector.extract_strided_slice %1190 {offsets = [0, 0], sizes = [12, 6], strides = [1, 1]} : vector<12x64xf32> to vector<12x6xf32>
      %cst_624 = arith.constant dense<0.000000e+00> : vector<12xf32>
      %1192 = vector.multi_reduction <add>, %1191, %cst_624 [1] : vector<12x6xf32> to vector<12xf32>
      %1193 = vector.shape_cast %1192 : vector<12xf32> to vector<12x1xf32>
      %cst_625 = arith.constant 0.166666672 : f32
      %1194 = vector.broadcast %cst_625 : f32 to vector<12x1xf32>
      %1195 = arith.mulf %1193, %1194 : vector<12x1xf32>
      %1196 = vector.extract_strided_slice %1190 {offsets = [0, 5], sizes = [12, 6], strides = [1, 1]} : vector<12x64xf32> to vector<12x6xf32>
      %cst_626 = arith.constant dense<0.000000e+00> : vector<12xf32>
      %1197 = vector.multi_reduction <add>, %1196, %cst_626 [1] : vector<12x6xf32> to vector<12xf32>
      %1198 = vector.shape_cast %1197 : vector<12xf32> to vector<12x1xf32>
      %cst_627 = arith.constant 0.166666672 : f32
      %1199 = vector.broadcast %cst_627 : f32 to vector<12x1xf32>
      %1200 = arith.mulf %1198, %1199 : vector<12x1xf32>
      %1201 = vector.extract_strided_slice %1190 {offsets = [0, 10], sizes = [12, 6], strides = [1, 1]} : vector<12x64xf32> to vector<12x6xf32>
      %cst_628 = arith.constant dense<0.000000e+00> : vector<12xf32>
      %1202 = vector.multi_reduction <add>, %1201, %cst_628 [1] : vector<12x6xf32> to vector<12xf32>
      %1203 = vector.shape_cast %1202 : vector<12xf32> to vector<12x1xf32>
      %cst_629 = arith.constant 0.166666672 : f32
      %1204 = vector.broadcast %cst_629 : f32 to vector<12x1xf32>
      %1205 = arith.mulf %1203, %1204 : vector<12x1xf32>
      %1206 = vector.extract_strided_slice %1190 {offsets = [0, 16], sizes = [12, 6], strides = [1, 1]} : vector<12x64xf32> to vector<12x6xf32>
      %cst_630 = arith.constant dense<0.000000e+00> : vector<12xf32>
      %1207 = vector.multi_reduction <add>, %1206, %cst_630 [1] : vector<12x6xf32> to vector<12xf32>
      %1208 = vector.shape_cast %1207 : vector<12xf32> to vector<12x1xf32>
      %cst_631 = arith.constant 0.166666672 : f32
      %1209 = vector.broadcast %cst_631 : f32 to vector<12x1xf32>
      %1210 = arith.mulf %1208, %1209 : vector<12x1xf32>
      %1211 = vector.extract_strided_slice %1190 {offsets = [0, 21], sizes = [12, 6], strides = [1, 1]} : vector<12x64xf32> to vector<12x6xf32>
      %cst_632 = arith.constant dense<0.000000e+00> : vector<12xf32>
      %1212 = vector.multi_reduction <add>, %1211, %cst_632 [1] : vector<12x6xf32> to vector<12xf32>
      %1213 = vector.shape_cast %1212 : vector<12xf32> to vector<12x1xf32>
      %cst_633 = arith.constant 0.166666672 : f32
      %1214 = vector.broadcast %cst_633 : f32 to vector<12x1xf32>
      %1215 = arith.mulf %1213, %1214 : vector<12x1xf32>
      %1216 = vector.extract_strided_slice %1190 {offsets = [0, 26], sizes = [12, 6], strides = [1, 1]} : vector<12x64xf32> to vector<12x6xf32>
      %cst_634 = arith.constant dense<0.000000e+00> : vector<12xf32>
      %1217 = vector.multi_reduction <add>, %1216, %cst_634 [1] : vector<12x6xf32> to vector<12xf32>
      %1218 = vector.shape_cast %1217 : vector<12xf32> to vector<12x1xf32>
      %cst_635 = arith.constant 0.166666672 : f32
      %1219 = vector.broadcast %cst_635 : f32 to vector<12x1xf32>
      %1220 = arith.mulf %1218, %1219 : vector<12x1xf32>
      %1221 = vector.extract_strided_slice %1190 {offsets = [0, 32], sizes = [12, 6], strides = [1, 1]} : vector<12x64xf32> to vector<12x6xf32>
      %cst_636 = arith.constant dense<0.000000e+00> : vector<12xf32>
      %1222 = vector.multi_reduction <add>, %1221, %cst_636 [1] : vector<12x6xf32> to vector<12xf32>
      %1223 = vector.shape_cast %1222 : vector<12xf32> to vector<12x1xf32>
      %cst_637 = arith.constant 0.166666672 : f32
      %1224 = vector.broadcast %cst_637 : f32 to vector<12x1xf32>
      %1225 = arith.mulf %1223, %1224 : vector<12x1xf32>
      %1226 = vector.extract_strided_slice %1190 {offsets = [0, 37], sizes = [12, 6], strides = [1, 1]} : vector<12x64xf32> to vector<12x6xf32>
      %cst_638 = arith.constant dense<0.000000e+00> : vector<12xf32>
      %1227 = vector.multi_reduction <add>, %1226, %cst_638 [1] : vector<12x6xf32> to vector<12xf32>
      %1228 = vector.shape_cast %1227 : vector<12xf32> to vector<12x1xf32>
      %cst_639 = arith.constant 0.166666672 : f32
      %1229 = vector.broadcast %cst_639 : f32 to vector<12x1xf32>
      %1230 = arith.mulf %1228, %1229 : vector<12x1xf32>
      %1231 = vector.extract_strided_slice %1190 {offsets = [0, 42], sizes = [12, 6], strides = [1, 1]} : vector<12x64xf32> to vector<12x6xf32>
      %cst_640 = arith.constant dense<0.000000e+00> : vector<12xf32>
      %1232 = vector.multi_reduction <add>, %1231, %cst_640 [1] : vector<12x6xf32> to vector<12xf32>
      %1233 = vector.shape_cast %1232 : vector<12xf32> to vector<12x1xf32>
      %cst_641 = arith.constant 0.166666672 : f32
      %1234 = vector.broadcast %cst_641 : f32 to vector<12x1xf32>
      %1235 = arith.mulf %1233, %1234 : vector<12x1xf32>
      %1236 = vector.extract_strided_slice %1190 {offsets = [0, 48], sizes = [12, 6], strides = [1, 1]} : vector<12x64xf32> to vector<12x6xf32>
      %cst_642 = arith.constant dense<0.000000e+00> : vector<12xf32>
      %1237 = vector.multi_reduction <add>, %1236, %cst_642 [1] : vector<12x6xf32> to vector<12xf32>
      %1238 = vector.shape_cast %1237 : vector<12xf32> to vector<12x1xf32>
      %cst_643 = arith.constant 0.166666672 : f32
      %1239 = vector.broadcast %cst_643 : f32 to vector<12x1xf32>
      %1240 = arith.mulf %1238, %1239 : vector<12x1xf32>
      %1241 = vector.extract_strided_slice %1190 {offsets = [0, 53], sizes = [12, 6], strides = [1, 1]} : vector<12x64xf32> to vector<12x6xf32>
      %cst_644 = arith.constant dense<0.000000e+00> : vector<12xf32>
      %1242 = vector.multi_reduction <add>, %1241, %cst_644 [1] : vector<12x6xf32> to vector<12xf32>
      %1243 = vector.shape_cast %1242 : vector<12xf32> to vector<12x1xf32>
      %cst_645 = arith.constant 0.166666672 : f32
      %1244 = vector.broadcast %cst_645 : f32 to vector<12x1xf32>
      %1245 = arith.mulf %1243, %1244 : vector<12x1xf32>
      %1246 = vector.extract_strided_slice %1190 {offsets = [0, 58], sizes = [12, 6], strides = [1, 1]} : vector<12x64xf32> to vector<12x6xf32>
      %cst_646 = arith.constant dense<0.000000e+00> : vector<12xf32>
      %1247 = vector.multi_reduction <add>, %1246, %cst_646 [1] : vector<12x6xf32> to vector<12xf32>
      %1248 = vector.shape_cast %1247 : vector<12xf32> to vector<12x1xf32>
      %cst_647 = arith.constant 0.166666672 : f32
      %1249 = vector.broadcast %cst_647 : f32 to vector<12x1xf32>
      %1250 = arith.mulf %1248, %1249 : vector<12x1xf32>
      %1251 = tpu.concatenate %1195, %1200, %1205, %1210, %1215, %1220, %1225, %1230, %1235, %1240, %1245, %1250 in 1 : vector<12x1xf32>, vector<12x1xf32>, vector<12x1xf32>, vector<12x1xf32>, vector<12x1xf32>, vector<12x1xf32>, vector<12x1xf32>, vector<12x1xf32>, vector<12x1xf32>, vector<12x1xf32>, vector<12x1xf32>, vector<12x1xf32> -> vector<12x12xf32>
      %1252 = arith.index_cast %arg9 : i32 to index
      %c1_648 = arith.constant 1 : index
      %c1_649 = arith.constant 1 : index
      %1253 = vector.load %arg7[%1252, %c1_648, %c1_649] : memref<8x14x14xf32, #tpu.memory_space<vmem>>, vector<1x12x12xf32>
      %1254 = vector.shape_cast %1253 : vector<1x12x12xf32> to vector<12x12xf32>
      %1255 = vector.shape_cast %1251 : vector<12x12xf32> to vector<1x12x12xf32>
      tpu.vector_store %arg7[%1252, %c1_648, %c1_649], %1255 {strides = array<i32>} : memref<8x14x14xf32, #tpu.memory_space<vmem>>, vector<1x12x12xf32>,
    }
    %c8_i32_24 = arith.constant 8 : i32
    %c0_i32_25 = arith.constant 0 : i32
    %c8_i32_26 = arith.constant 8 : i32
    %13 = arith.addi %c0_i32_25, %c8_i32_26 : i32
    %c1_i32_27 = arith.constant 1 : i32
    scf.for %arg9 = %c0_i32_25 to %13 step %c1_i32_27  : i32 {
      %c72_i32 = arith.constant 72 : i32
      %472 = arith.muli %arg9, %c72_i32 : i32
      %c808_i32 = arith.constant 808 : i32
      %473 = arith.addi %c808_i32, %472 : i32
      %cst_251 = arith.constant 0.000000e+00 : f32
      %474 = vector.broadcast %cst_251 : f32 to vector<12x12xf32>
      %c0_i32_252 = arith.constant 0 : i32
      %475 = arith.addi %473, %c0_i32_252 : i32
      %c0_i32_253 = arith.constant 0 : i32
      %476 = arith.addi %475, %c0_i32_253 : i32
      %477 = arith.index_cast %476 : i32 to index
      %478 = memref.load %arg1[%477] : memref<1466xf32, #tpu.memory_space<smem>>
      %c0_254 = arith.constant 0 : index
      %c0_255 = arith.constant 0 : index
      %c0_256 = arith.constant 0 : index
      %479 = vector.load %arg7[%c0_254, %c0_255, %c0_256] : memref<8x14x14xf32, #tpu.memory_space<vmem>>, vector<1x12x12xf32>
      %480 = vector.shape_cast %479 : vector<1x12x12xf32> to vector<12x12xf32>
      %481 = vector.broadcast %478 : f32 to vector<12x12xf32>
      %482 = arith.mulf %481, %480 : vector<12x12xf32>
      %483 = arith.addf %474, %482 : vector<12x12xf32>
      %c0_i32_257 = arith.constant 0 : i32
      %484 = arith.addi %473, %c0_i32_257 : i32
      %c1_i32_258 = arith.constant 1 : i32
      %485 = arith.addi %484, %c1_i32_258 : i32
      %486 = arith.index_cast %485 : i32 to index
      %487 = memref.load %arg1[%486] : memref<1466xf32, #tpu.memory_space<smem>>
      %c0_259 = arith.constant 0 : index
      %c0_260 = arith.constant 0 : index
      %c1_261 = arith.constant 1 : index
      %488 = vector.load %arg7[%c0_259, %c0_260, %c1_261] : memref<8x14x14xf32, #tpu.memory_space<vmem>>, vector<1x12x12xf32>
      %489 = vector.shape_cast %488 : vector<1x12x12xf32> to vector<12x12xf32>
      %490 = vector.broadcast %487 : f32 to vector<12x12xf32>
      %491 = arith.mulf %490, %489 : vector<12x12xf32>
      %492 = arith.addf %483, %491 : vector<12x12xf32>
      %c0_i32_262 = arith.constant 0 : i32
      %493 = arith.addi %473, %c0_i32_262 : i32
      %c2_i32 = arith.constant 2 : i32
      %494 = arith.addi %493, %c2_i32 : i32
      %495 = arith.index_cast %494 : i32 to index
      %496 = memref.load %arg1[%495] : memref<1466xf32, #tpu.memory_space<smem>>
      %c0_263 = arith.constant 0 : index
      %c0_264 = arith.constant 0 : index
      %c2_265 = arith.constant 2 : index
      %497 = vector.load %arg7[%c0_263, %c0_264, %c2_265] : memref<8x14x14xf32, #tpu.memory_space<vmem>>, vector<1x12x12xf32>
      %498 = vector.shape_cast %497 : vector<1x12x12xf32> to vector<12x12xf32>
      %499 = vector.broadcast %496 : f32 to vector<12x12xf32>
      %500 = arith.mulf %499, %498 : vector<12x12xf32>
      %501 = arith.addf %492, %500 : vector<12x12xf32>
      %c0_i32_266 = arith.constant 0 : i32
      %502 = arith.addi %473, %c0_i32_266 : i32
      %c3_i32 = arith.constant 3 : i32
      %503 = arith.addi %502, %c3_i32 : i32
      %504 = arith.index_cast %503 : i32 to index
      %505 = memref.load %arg1[%504] : memref<1466xf32, #tpu.memory_space<smem>>
      %c0_267 = arith.constant 0 : index
      %c1_268 = arith.constant 1 : index
      %c0_269 = arith.constant 0 : index
      %506 = vector.load %arg7[%c0_267, %c1_268, %c0_269] : memref<8x14x14xf32, #tpu.memory_space<vmem>>, vector<1x12x12xf32>
      %507 = vector.shape_cast %506 : vector<1x12x12xf32> to vector<12x12xf32>
      %508 = vector.broadcast %505 : f32 to vector<12x12xf32>
      %509 = arith.mulf %508, %507 : vector<12x12xf32>
      %510 = arith.addf %501, %509 : vector<12x12xf32>
      %c0_i32_270 = arith.constant 0 : i32
      %511 = arith.addi %473, %c0_i32_270 : i32
      %c4_i32 = arith.constant 4 : i32
      %512 = arith.addi %511, %c4_i32 : i32
      %513 = arith.index_cast %512 : i32 to index
      %514 = memref.load %arg1[%513] : memref<1466xf32, #tpu.memory_space<smem>>
      %c0_271 = arith.constant 0 : index
      %c1_272 = arith.constant 1 : index
      %c1_273 = arith.constant 1 : index
      %515 = vector.load %arg7[%c0_271, %c1_272, %c1_273] : memref<8x14x14xf32, #tpu.memory_space<vmem>>, vector<1x12x12xf32>
      %516 = vector.shape_cast %515 : vector<1x12x12xf32> to vector<12x12xf32>
      %517 = vector.broadcast %514 : f32 to vector<12x12xf32>
      %518 = arith.mulf %517, %516 : vector<12x12xf32>
      %519 = arith.addf %510, %518 : vector<12x12xf32>
      %c0_i32_274 = arith.constant 0 : i32
      %520 = arith.addi %473, %c0_i32_274 : i32
      %c5_i32 = arith.constant 5 : i32
      %521 = arith.addi %520, %c5_i32 : i32
      %522 = arith.index_cast %521 : i32 to index
      %523 = memref.load %arg1[%522] : memref<1466xf32, #tpu.memory_space<smem>>
      %c0_275 = arith.constant 0 : index
      %c1_276 = arith.constant 1 : index
      %c2_277 = arith.constant 2 : index
      %524 = vector.load %arg7[%c0_275, %c1_276, %c2_277] : memref<8x14x14xf32, #tpu.memory_space<vmem>>, vector<1x12x12xf32>
      %525 = vector.shape_cast %524 : vector<1x12x12xf32> to vector<12x12xf32>
      %526 = vector.broadcast %523 : f32 to vector<12x12xf32>
      %527 = arith.mulf %526, %525 : vector<12x12xf32>
      %528 = arith.addf %519, %527 : vector<12x12xf32>
      %c0_i32_278 = arith.constant 0 : i32
      %529 = arith.addi %473, %c0_i32_278 : i32
      %c6_i32 = arith.constant 6 : i32
      %530 = arith.addi %529, %c6_i32 : i32
      %531 = arith.index_cast %530 : i32 to index
      %532 = memref.load %arg1[%531] : memref<1466xf32, #tpu.memory_space<smem>>
      %c0_279 = arith.constant 0 : index
      %c2_280 = arith.constant 2 : index
      %c0_281 = arith.constant 0 : index
      %533 = vector.load %arg7[%c0_279, %c2_280, %c0_281] : memref<8x14x14xf32, #tpu.memory_space<vmem>>, vector<1x12x12xf32>
      %534 = vector.shape_cast %533 : vector<1x12x12xf32> to vector<12x12xf32>
      %535 = vector.broadcast %532 : f32 to vector<12x12xf32>
      %536 = arith.mulf %535, %534 : vector<12x12xf32>
      %537 = arith.addf %528, %536 : vector<12x12xf32>
      %c0_i32_282 = arith.constant 0 : i32
      %538 = arith.addi %473, %c0_i32_282 : i32
      %c7_i32 = arith.constant 7 : i32
      %539 = arith.addi %538, %c7_i32 : i32
      %540 = arith.index_cast %539 : i32 to index
      %541 = memref.load %arg1[%540] : memref<1466xf32, #tpu.memory_space<smem>>
      %c0_283 = arith.constant 0 : index
      %c2_284 = arith.constant 2 : index
      %c1_285 = arith.constant 1 : index
      %542 = vector.load %arg7[%c0_283, %c2_284, %c1_285] : memref<8x14x14xf32, #tpu.memory_space<vmem>>, vector<1x12x12xf32>
      %543 = vector.shape_cast %542 : vector<1x12x12xf32> to vector<12x12xf32>
      %544 = vector.broadcast %541 : f32 to vector<12x12xf32>
      %545 = arith.mulf %544, %543 : vector<12x12xf32>
      %546 = arith.addf %537, %545 : vector<12x12xf32>
      %c0_i32_286 = arith.constant 0 : i32
      %547 = arith.addi %473, %c0_i32_286 : i32
      %c8_i32_287 = arith.constant 8 : i32
      %548 = arith.addi %547, %c8_i32_287 : i32
      %549 = arith.index_cast %548 : i32 to index
      %550 = memref.load %arg1[%549] : memref<1466xf32, #tpu.memory_space<smem>>
      %c0_288 = arith.constant 0 : index
      %c2_289 = arith.constant 2 : index
      %c2_290 = arith.constant 2 : index
      %551 = vector.load %arg7[%c0_288, %c2_289, %c2_290] : memref<8x14x14xf32, #tpu.memory_space<vmem>>, vector<1x12x12xf32>
      %552 = vector.shape_cast %551 : vector<1x12x12xf32> to vector<12x12xf32>
      %553 = vector.broadcast %550 : f32 to vector<12x12xf32>
      %554 = arith.mulf %553, %552 : vector<12x12xf32>
      %555 = arith.addf %546, %554 : vector<12x12xf32>
      %c9_i32 = arith.constant 9 : i32
      %556 = arith.addi %473, %c9_i32 : i32
      %c0_i32_291 = arith.constant 0 : i32
      %557 = arith.addi %556, %c0_i32_291 : i32
      %558 = arith.index_cast %557 : i32 to index
      %559 = memref.load %arg1[%558] : memref<1466xf32, #tpu.memory_space<smem>>
      %c1_292 = arith.constant 1 : index
      %c0_293 = arith.constant 0 : index
      %c0_294 = arith.constant 0 : index
      %560 = vector.load %arg7[%c1_292, %c0_293, %c0_294] : memref<8x14x14xf32, #tpu.memory_space<vmem>>, vector<1x12x12xf32>
      %561 = vector.shape_cast %560 : vector<1x12x12xf32> to vector<12x12xf32>
      %562 = vector.broadcast %559 : f32 to vector<12x12xf32>
      %563 = arith.mulf %562, %561 : vector<12x12xf32>
      %564 = arith.addf %555, %563 : vector<12x12xf32>
      %c9_i32_295 = arith.constant 9 : i32
      %565 = arith.addi %473, %c9_i32_295 : i32
      %c1_i32_296 = arith.constant 1 : i32
      %566 = arith.addi %565, %c1_i32_296 : i32
      %567 = arith.index_cast %566 : i32 to index
      %568 = memref.load %arg1[%567] : memref<1466xf32, #tpu.memory_space<smem>>
      %c1_297 = arith.constant 1 : index
      %c0_298 = arith.constant 0 : index
      %c1_299 = arith.constant 1 : index
      %569 = vector.load %arg7[%c1_297, %c0_298, %c1_299] : memref<8x14x14xf32, #tpu.memory_space<vmem>>, vector<1x12x12xf32>
      %570 = vector.shape_cast %569 : vector<1x12x12xf32> to vector<12x12xf32>
      %571 = vector.broadcast %568 : f32 to vector<12x12xf32>
      %572 = arith.mulf %571, %570 : vector<12x12xf32>
      %573 = arith.addf %564, %572 : vector<12x12xf32>
      %c9_i32_300 = arith.constant 9 : i32
      %574 = arith.addi %473, %c9_i32_300 : i32
      %c2_i32_301 = arith.constant 2 : i32
      %575 = arith.addi %574, %c2_i32_301 : i32
      %576 = arith.index_cast %575 : i32 to index
      %577 = memref.load %arg1[%576] : memref<1466xf32, #tpu.memory_space<smem>>
      %c1_302 = arith.constant 1 : index
      %c0_303 = arith.constant 0 : index
      %c2_304 = arith.constant 2 : index
      %578 = vector.load %arg7[%c1_302, %c0_303, %c2_304] : memref<8x14x14xf32, #tpu.memory_space<vmem>>, vector<1x12x12xf32>
      %579 = vector.shape_cast %578 : vector<1x12x12xf32> to vector<12x12xf32>
      %580 = vector.broadcast %577 : f32 to vector<12x12xf32>
      %581 = arith.mulf %580, %579 : vector<12x12xf32>
      %582 = arith.addf %573, %581 : vector<12x12xf32>
      %c9_i32_305 = arith.constant 9 : i32
      %583 = arith.addi %473, %c9_i32_305 : i32
      %c3_i32_306 = arith.constant 3 : i32
      %584 = arith.addi %583, %c3_i32_306 : i32
      %585 = arith.index_cast %584 : i32 to index
      %586 = memref.load %arg1[%585] : memref<1466xf32, #tpu.memory_space<smem>>
      %c1_307 = arith.constant 1 : index
      %c1_308 = arith.constant 1 : index
      %c0_309 = arith.constant 0 : index
      %587 = vector.load %arg7[%c1_307, %c1_308, %c0_309] : memref<8x14x14xf32, #tpu.memory_space<vmem>>, vector<1x12x12xf32>
      %588 = vector.shape_cast %587 : vector<1x12x12xf32> to vector<12x12xf32>
      %589 = vector.broadcast %586 : f32 to vector<12x12xf32>
      %590 = arith.mulf %589, %588 : vector<12x12xf32>
      %591 = arith.addf %582, %590 : vector<12x12xf32>
      %c9_i32_310 = arith.constant 9 : i32
      %592 = arith.addi %473, %c9_i32_310 : i32
      %c4_i32_311 = arith.constant 4 : i32
      %593 = arith.addi %592, %c4_i32_311 : i32
      %594 = arith.index_cast %593 : i32 to index
      %595 = memref.load %arg1[%594] : memref<1466xf32, #tpu.memory_space<smem>>
      %c1_312 = arith.constant 1 : index
      %c1_313 = arith.constant 1 : index
      %c1_314 = arith.constant 1 : index
      %596 = vector.load %arg7[%c1_312, %c1_313, %c1_314] : memref<8x14x14xf32, #tpu.memory_space<vmem>>, vector<1x12x12xf32>
      %597 = vector.shape_cast %596 : vector<1x12x12xf32> to vector<12x12xf32>
      %598 = vector.broadcast %595 : f32 to vector<12x12xf32>
      %599 = arith.mulf %598, %597 : vector<12x12xf32>
      %600 = arith.addf %591, %599 : vector<12x12xf32>
      %c9_i32_315 = arith.constant 9 : i32
      %601 = arith.addi %473, %c9_i32_315 : i32
      %c5_i32_316 = arith.constant 5 : i32
      %602 = arith.addi %601, %c5_i32_316 : i32
      %603 = arith.index_cast %602 : i32 to index
      %604 = memref.load %arg1[%603] : memref<1466xf32, #tpu.memory_space<smem>>
      %c1_317 = arith.constant 1 : index
      %c1_318 = arith.constant 1 : index
      %c2_319 = arith.constant 2 : index
      %605 = vector.load %arg7[%c1_317, %c1_318, %c2_319] : memref<8x14x14xf32, #tpu.memory_space<vmem>>, vector<1x12x12xf32>
      %606 = vector.shape_cast %605 : vector<1x12x12xf32> to vector<12x12xf32>
      %607 = vector.broadcast %604 : f32 to vector<12x12xf32>
      %608 = arith.mulf %607, %606 : vector<12x12xf32>
      %609 = arith.addf %600, %608 : vector<12x12xf32>
      %c9_i32_320 = arith.constant 9 : i32
      %610 = arith.addi %473, %c9_i32_320 : i32
      %c6_i32_321 = arith.constant 6 : i32
      %611 = arith.addi %610, %c6_i32_321 : i32
      %612 = arith.index_cast %611 : i32 to index
      %613 = memref.load %arg1[%612] : memref<1466xf32, #tpu.memory_space<smem>>
      %c1_322 = arith.constant 1 : index
      %c2_323 = arith.constant 2 : index
      %c0_324 = arith.constant 0 : index
      %614 = vector.load %arg7[%c1_322, %c2_323, %c0_324] : memref<8x14x14xf32, #tpu.memory_space<vmem>>, vector<1x12x12xf32>
      %615 = vector.shape_cast %614 : vector<1x12x12xf32> to vector<12x12xf32>
      %616 = vector.broadcast %613 : f32 to vector<12x12xf32>
      %617 = arith.mulf %616, %615 : vector<12x12xf32>
      %618 = arith.addf %609, %617 : vector<12x12xf32>
      %c9_i32_325 = arith.constant 9 : i32
      %619 = arith.addi %473, %c9_i32_325 : i32
      %c7_i32_326 = arith.constant 7 : i32
      %620 = arith.addi %619, %c7_i32_326 : i32
      %621 = arith.index_cast %620 : i32 to index
      %622 = memref.load %arg1[%621] : memref<1466xf32, #tpu.memory_space<smem>>
      %c1_327 = arith.constant 1 : index
      %c2_328 = arith.constant 2 : index
      %c1_329 = arith.constant 1 : index
      %623 = vector.load %arg7[%c1_327, %c2_328, %c1_329] : memref<8x14x14xf32, #tpu.memory_space<vmem>>, vector<1x12x12xf32>
      %624 = vector.shape_cast %623 : vector<1x12x12xf32> to vector<12x12xf32>
      %625 = vector.broadcast %622 : f32 to vector<12x12xf32>
      %626 = arith.mulf %625, %624 : vector<12x12xf32>
      %627 = arith.addf %618, %626 : vector<12x12xf32>
      %c9_i32_330 = arith.constant 9 : i32
      %628 = arith.addi %473, %c9_i32_330 : i32
      %c8_i32_331 = arith.constant 8 : i32
      %629 = arith.addi %628, %c8_i32_331 : i32
      %630 = arith.index_cast %629 : i32 to index
      %631 = memref.load %arg1[%630] : memref<1466xf32, #tpu.memory_space<smem>>
      %c1_332 = arith.constant 1 : index
      %c2_333 = arith.constant 2 : index
      %c2_334 = arith.constant 2 : index
      %632 = vector.load %arg7[%c1_332, %c2_333, %c2_334] : memref<8x14x14xf32, #tpu.memory_space<vmem>>, vector<1x12x12xf32>
      %633 = vector.shape_cast %632 : vector<1x12x12xf32> to vector<12x12xf32>
      %634 = vector.broadcast %631 : f32 to vector<12x12xf32>
      %635 = arith.mulf %634, %633 : vector<12x12xf32>
      %636 = arith.addf %627, %635 : vector<12x12xf32>
      %c18_i32 = arith.constant 18 : i32
      %637 = arith.addi %473, %c18_i32 : i32
      %c0_i32_335 = arith.constant 0 : i32
      %638 = arith.addi %637, %c0_i32_335 : i32
      %639 = arith.index_cast %638 : i32 to index
      %640 = memref.load %arg1[%639] : memref<1466xf32, #tpu.memory_space<smem>>
      %c2_336 = arith.constant 2 : index
      %c0_337 = arith.constant 0 : index
      %c0_338 = arith.constant 0 : index
      %641 = vector.load %arg7[%c2_336, %c0_337, %c0_338] : memref<8x14x14xf32, #tpu.memory_space<vmem>>, vector<1x12x12xf32>
      %642 = vector.shape_cast %641 : vector<1x12x12xf32> to vector<12x12xf32>
      %643 = vector.broadcast %640 : f32 to vector<12x12xf32>
      %644 = arith.mulf %643, %642 : vector<12x12xf32>
      %645 = arith.addf %636, %644 : vector<12x12xf32>
      %c18_i32_339 = arith.constant 18 : i32
      %646 = arith.addi %473, %c18_i32_339 : i32
      %c1_i32_340 = arith.constant 1 : i32
      %647 = arith.addi %646, %c1_i32_340 : i32
      %648 = arith.index_cast %647 : i32 to index
      %649 = memref.load %arg1[%648] : memref<1466xf32, #tpu.memory_space<smem>>
      %c2_341 = arith.constant 2 : index
      %c0_342 = arith.constant 0 : index
      %c1_343 = arith.constant 1 : index
      %650 = vector.load %arg7[%c2_341, %c0_342, %c1_343] : memref<8x14x14xf32, #tpu.memory_space<vmem>>, vector<1x12x12xf32>
      %651 = vector.shape_cast %650 : vector<1x12x12xf32> to vector<12x12xf32>
      %652 = vector.broadcast %649 : f32 to vector<12x12xf32>
      %653 = arith.mulf %652, %651 : vector<12x12xf32>
      %654 = arith.addf %645, %653 : vector<12x12xf32>
      %c18_i32_344 = arith.constant 18 : i32
      %655 = arith.addi %473, %c18_i32_344 : i32
      %c2_i32_345 = arith.constant 2 : i32
      %656 = arith.addi %655, %c2_i32_345 : i32
      %657 = arith.index_cast %656 : i32 to index
      %658 = memref.load %arg1[%657] : memref<1466xf32, #tpu.memory_space<smem>>
      %c2_346 = arith.constant 2 : index
      %c0_347 = arith.constant 0 : index
      %c2_348 = arith.constant 2 : index
      %659 = vector.load %arg7[%c2_346, %c0_347, %c2_348] : memref<8x14x14xf32, #tpu.memory_space<vmem>>, vector<1x12x12xf32>
      %660 = vector.shape_cast %659 : vector<1x12x12xf32> to vector<12x12xf32>
      %661 = vector.broadcast %658 : f32 to vector<12x12xf32>
      %662 = arith.mulf %661, %660 : vector<12x12xf32>
      %663 = arith.addf %654, %662 : vector<12x12xf32>
      %c18_i32_349 = arith.constant 18 : i32
      %664 = arith.addi %473, %c18_i32_349 : i32
      %c3_i32_350 = arith.constant 3 : i32
      %665 = arith.addi %664, %c3_i32_350 : i32
      %666 = arith.index_cast %665 : i32 to index
      %667 = memref.load %arg1[%666] : memref<1466xf32, #tpu.memory_space<smem>>
      %c2_351 = arith.constant 2 : index
      %c1_352 = arith.constant 1 : index
      %c0_353 = arith.constant 0 : index
      %668 = vector.load %arg7[%c2_351, %c1_352, %c0_353] : memref<8x14x14xf32, #tpu.memory_space<vmem>>, vector<1x12x12xf32>
      %669 = vector.shape_cast %668 : vector<1x12x12xf32> to vector<12x12xf32>
      %670 = vector.broadcast %667 : f32 to vector<12x12xf32>
      %671 = arith.mulf %670, %669 : vector<12x12xf32>
      %672 = arith.addf %663, %671 : vector<12x12xf32>
      %c18_i32_354 = arith.constant 18 : i32
      %673 = arith.addi %473, %c18_i32_354 : i32
      %c4_i32_355 = arith.constant 4 : i32
      %674 = arith.addi %673, %c4_i32_355 : i32
      %675 = arith.index_cast %674 : i32 to index
      %676 = memref.load %arg1[%675] : memref<1466xf32, #tpu.memory_space<smem>>
      %c2_356 = arith.constant 2 : index
      %c1_357 = arith.constant 1 : index
      %c1_358 = arith.constant 1 : index
      %677 = vector.load %arg7[%c2_356, %c1_357, %c1_358] : memref<8x14x14xf32, #tpu.memory_space<vmem>>, vector<1x12x12xf32>
      %678 = vector.shape_cast %677 : vector<1x12x12xf32> to vector<12x12xf32>
      %679 = vector.broadcast %676 : f32 to vector<12x12xf32>
      %680 = arith.mulf %679, %678 : vector<12x12xf32>
      %681 = arith.addf %672, %680 : vector<12x12xf32>
      %c18_i32_359 = arith.constant 18 : i32
      %682 = arith.addi %473, %c18_i32_359 : i32
      %c5_i32_360 = arith.constant 5 : i32
      %683 = arith.addi %682, %c5_i32_360 : i32
      %684 = arith.index_cast %683 : i32 to index
      %685 = memref.load %arg1[%684] : memref<1466xf32, #tpu.memory_space<smem>>
      %c2_361 = arith.constant 2 : index
      %c1_362 = arith.constant 1 : index
      %c2_363 = arith.constant 2 : index
      %686 = vector.load %arg7[%c2_361, %c1_362, %c2_363] : memref<8x14x14xf32, #tpu.memory_space<vmem>>, vector<1x12x12xf32>
      %687 = vector.shape_cast %686 : vector<1x12x12xf32> to vector<12x12xf32>
      %688 = vector.broadcast %685 : f32 to vector<12x12xf32>
      %689 = arith.mulf %688, %687 : vector<12x12xf32>
      %690 = arith.addf %681, %689 : vector<12x12xf32>
      %c18_i32_364 = arith.constant 18 : i32
      %691 = arith.addi %473, %c18_i32_364 : i32
      %c6_i32_365 = arith.constant 6 : i32
      %692 = arith.addi %691, %c6_i32_365 : i32
      %693 = arith.index_cast %692 : i32 to index
      %694 = memref.load %arg1[%693] : memref<1466xf32, #tpu.memory_space<smem>>
      %c2_366 = arith.constant 2 : index
      %c2_367 = arith.constant 2 : index
      %c0_368 = arith.constant 0 : index
      %695 = vector.load %arg7[%c2_366, %c2_367, %c0_368] : memref<8x14x14xf32, #tpu.memory_space<vmem>>, vector<1x12x12xf32>
      %696 = vector.shape_cast %695 : vector<1x12x12xf32> to vector<12x12xf32>
      %697 = vector.broadcast %694 : f32 to vector<12x12xf32>
      %698 = arith.mulf %697, %696 : vector<12x12xf32>
      %699 = arith.addf %690, %698 : vector<12x12xf32>
      %c18_i32_369 = arith.constant 18 : i32
      %700 = arith.addi %473, %c18_i32_369 : i32
      %c7_i32_370 = arith.constant 7 : i32
      %701 = arith.addi %700, %c7_i32_370 : i32
      %702 = arith.index_cast %701 : i32 to index
      %703 = memref.load %arg1[%702] : memref<1466xf32, #tpu.memory_space<smem>>
      %c2_371 = arith.constant 2 : index
      %c2_372 = arith.constant 2 : index
      %c1_373 = arith.constant 1 : index
      %704 = vector.load %arg7[%c2_371, %c2_372, %c1_373] : memref<8x14x14xf32, #tpu.memory_space<vmem>>, vector<1x12x12xf32>
      %705 = vector.shape_cast %704 : vector<1x12x12xf32> to vector<12x12xf32>
      %706 = vector.broadcast %703 : f32 to vector<12x12xf32>
      %707 = arith.mulf %706, %705 : vector<12x12xf32>
      %708 = arith.addf %699, %707 : vector<12x12xf32>
      %c18_i32_374 = arith.constant 18 : i32
      %709 = arith.addi %473, %c18_i32_374 : i32
      %c8_i32_375 = arith.constant 8 : i32
      %710 = arith.addi %709, %c8_i32_375 : i32
      %711 = arith.index_cast %710 : i32 to index
      %712 = memref.load %arg1[%711] : memref<1466xf32, #tpu.memory_space<smem>>
      %c2_376 = arith.constant 2 : index
      %c2_377 = arith.constant 2 : index
      %c2_378 = arith.constant 2 : index
      %713 = vector.load %arg7[%c2_376, %c2_377, %c2_378] : memref<8x14x14xf32, #tpu.memory_space<vmem>>, vector<1x12x12xf32>
      %714 = vector.shape_cast %713 : vector<1x12x12xf32> to vector<12x12xf32>
      %715 = vector.broadcast %712 : f32 to vector<12x12xf32>
      %716 = arith.mulf %715, %714 : vector<12x12xf32>
      %717 = arith.addf %708, %716 : vector<12x12xf32>
      %c27_i32 = arith.constant 27 : i32
      %718 = arith.addi %473, %c27_i32 : i32
      %c0_i32_379 = arith.constant 0 : i32
      %719 = arith.addi %718, %c0_i32_379 : i32
      %720 = arith.index_cast %719 : i32 to index
      %721 = memref.load %arg1[%720] : memref<1466xf32, #tpu.memory_space<smem>>
      %c3_380 = arith.constant 3 : index
      %c0_381 = arith.constant 0 : index
      %c0_382 = arith.constant 0 : index
      %722 = vector.load %arg7[%c3_380, %c0_381, %c0_382] : memref<8x14x14xf32, #tpu.memory_space<vmem>>, vector<1x12x12xf32>
      %723 = vector.shape_cast %722 : vector<1x12x12xf32> to vector<12x12xf32>
      %724 = vector.broadcast %721 : f32 to vector<12x12xf32>
      %725 = arith.mulf %724, %723 : vector<12x12xf32>
      %726 = arith.addf %717, %725 : vector<12x12xf32>
      %c27_i32_383 = arith.constant 27 : i32
      %727 = arith.addi %473, %c27_i32_383 : i32
      %c1_i32_384 = arith.constant 1 : i32
      %728 = arith.addi %727, %c1_i32_384 : i32
      %729 = arith.index_cast %728 : i32 to index
      %730 = memref.load %arg1[%729] : memref<1466xf32, #tpu.memory_space<smem>>
      %c3_385 = arith.constant 3 : index
      %c0_386 = arith.constant 0 : index
      %c1_387 = arith.constant 1 : index
      %731 = vector.load %arg7[%c3_385, %c0_386, %c1_387] : memref<8x14x14xf32, #tpu.memory_space<vmem>>, vector<1x12x12xf32>
      %732 = vector.shape_cast %731 : vector<1x12x12xf32> to vector<12x12xf32>
      %733 = vector.broadcast %730 : f32 to vector<12x12xf32>
      %734 = arith.mulf %733, %732 : vector<12x12xf32>
      %735 = arith.addf %726, %734 : vector<12x12xf32>
      %c27_i32_388 = arith.constant 27 : i32
      %736 = arith.addi %473, %c27_i32_388 : i32
      %c2_i32_389 = arith.constant 2 : i32
      %737 = arith.addi %736, %c2_i32_389 : i32
      %738 = arith.index_cast %737 : i32 to index
      %739 = memref.load %arg1[%738] : memref<1466xf32, #tpu.memory_space<smem>>
      %c3_390 = arith.constant 3 : index
      %c0_391 = arith.constant 0 : index
      %c2_392 = arith.constant 2 : index
      %740 = vector.load %arg7[%c3_390, %c0_391, %c2_392] : memref<8x14x14xf32, #tpu.memory_space<vmem>>, vector<1x12x12xf32>
      %741 = vector.shape_cast %740 : vector<1x12x12xf32> to vector<12x12xf32>
      %742 = vector.broadcast %739 : f32 to vector<12x12xf32>
      %743 = arith.mulf %742, %741 : vector<12x12xf32>
      %744 = arith.addf %735, %743 : vector<12x12xf32>
      %c27_i32_393 = arith.constant 27 : i32
      %745 = arith.addi %473, %c27_i32_393 : i32
      %c3_i32_394 = arith.constant 3 : i32
      %746 = arith.addi %745, %c3_i32_394 : i32
      %747 = arith.index_cast %746 : i32 to index
      %748 = memref.load %arg1[%747] : memref<1466xf32, #tpu.memory_space<smem>>
      %c3_395 = arith.constant 3 : index
      %c1_396 = arith.constant 1 : index
      %c0_397 = arith.constant 0 : index
      %749 = vector.load %arg7[%c3_395, %c1_396, %c0_397] : memref<8x14x14xf32, #tpu.memory_space<vmem>>, vector<1x12x12xf32>
      %750 = vector.shape_cast %749 : vector<1x12x12xf32> to vector<12x12xf32>
      %751 = vector.broadcast %748 : f32 to vector<12x12xf32>
      %752 = arith.mulf %751, %750 : vector<12x12xf32>
      %753 = arith.addf %744, %752 : vector<12x12xf32>
      %c27_i32_398 = arith.constant 27 : i32
      %754 = arith.addi %473, %c27_i32_398 : i32
      %c4_i32_399 = arith.constant 4 : i32
      %755 = arith.addi %754, %c4_i32_399 : i32
      %756 = arith.index_cast %755 : i32 to index
      %757 = memref.load %arg1[%756] : memref<1466xf32, #tpu.memory_space<smem>>
      %c3_400 = arith.constant 3 : index
      %c1_401 = arith.constant 1 : index
      %c1_402 = arith.constant 1 : index
      %758 = vector.load %arg7[%c3_400, %c1_401, %c1_402] : memref<8x14x14xf32, #tpu.memory_space<vmem>>, vector<1x12x12xf32>
      %759 = vector.shape_cast %758 : vector<1x12x12xf32> to vector<12x12xf32>
      %760 = vector.broadcast %757 : f32 to vector<12x12xf32>
      %761 = arith.mulf %760, %759 : vector<12x12xf32>
      %762 = arith.addf %753, %761 : vector<12x12xf32>
      %c27_i32_403 = arith.constant 27 : i32
      %763 = arith.addi %473, %c27_i32_403 : i32
      %c5_i32_404 = arith.constant 5 : i32
      %764 = arith.addi %763, %c5_i32_404 : i32
      %765 = arith.index_cast %764 : i32 to index
      %766 = memref.load %arg1[%765] : memref<1466xf32, #tpu.memory_space<smem>>
      %c3_405 = arith.constant 3 : index
      %c1_406 = arith.constant 1 : index
      %c2_407 = arith.constant 2 : index
      %767 = vector.load %arg7[%c3_405, %c1_406, %c2_407] : memref<8x14x14xf32, #tpu.memory_space<vmem>>, vector<1x12x12xf32>
      %768 = vector.shape_cast %767 : vector<1x12x12xf32> to vector<12x12xf32>
      %769 = vector.broadcast %766 : f32 to vector<12x12xf32>
      %770 = arith.mulf %769, %768 : vector<12x12xf32>
      %771 = arith.addf %762, %770 : vector<12x12xf32>
      %c27_i32_408 = arith.constant 27 : i32
      %772 = arith.addi %473, %c27_i32_408 : i32
      %c6_i32_409 = arith.constant 6 : i32
      %773 = arith.addi %772, %c6_i32_409 : i32
      %774 = arith.index_cast %773 : i32 to index
      %775 = memref.load %arg1[%774] : memref<1466xf32, #tpu.memory_space<smem>>
      %c3_410 = arith.constant 3 : index
      %c2_411 = arith.constant 2 : index
      %c0_412 = arith.constant 0 : index
      %776 = vector.load %arg7[%c3_410, %c2_411, %c0_412] : memref<8x14x14xf32, #tpu.memory_space<vmem>>, vector<1x12x12xf32>
      %777 = vector.shape_cast %776 : vector<1x12x12xf32> to vector<12x12xf32>
      %778 = vector.broadcast %775 : f32 to vector<12x12xf32>
      %779 = arith.mulf %778, %777 : vector<12x12xf32>
      %780 = arith.addf %771, %779 : vector<12x12xf32>
      %c27_i32_413 = arith.constant 27 : i32
      %781 = arith.addi %473, %c27_i32_413 : i32
      %c7_i32_414 = arith.constant 7 : i32
      %782 = arith.addi %781, %c7_i32_414 : i32
      %783 = arith.index_cast %782 : i32 to index
      %784 = memref.load %arg1[%783] : memref<1466xf32, #tpu.memory_space<smem>>
      %c3_415 = arith.constant 3 : index
      %c2_416 = arith.constant 2 : index
      %c1_417 = arith.constant 1 : index
      %785 = vector.load %arg7[%c3_415, %c2_416, %c1_417] : memref<8x14x14xf32, #tpu.memory_space<vmem>>, vector<1x12x12xf32>
      %786 = vector.shape_cast %785 : vector<1x12x12xf32> to vector<12x12xf32>
      %787 = vector.broadcast %784 : f32 to vector<12x12xf32>
      %788 = arith.mulf %787, %786 : vector<12x12xf32>
      %789 = arith.addf %780, %788 : vector<12x12xf32>
      %c27_i32_418 = arith.constant 27 : i32
      %790 = arith.addi %473, %c27_i32_418 : i32
      %c8_i32_419 = arith.constant 8 : i32
      %791 = arith.addi %790, %c8_i32_419 : i32
      %792 = arith.index_cast %791 : i32 to index
      %793 = memref.load %arg1[%792] : memref<1466xf32, #tpu.memory_space<smem>>
      %c3_420 = arith.constant 3 : index
      %c2_421 = arith.constant 2 : index
      %c2_422 = arith.constant 2 : index
      %794 = vector.load %arg7[%c3_420, %c2_421, %c2_422] : memref<8x14x14xf32, #tpu.memory_space<vmem>>, vector<1x12x12xf32>
      %795 = vector.shape_cast %794 : vector<1x12x12xf32> to vector<12x12xf32>
      %796 = vector.broadcast %793 : f32 to vector<12x12xf32>
      %797 = arith.mulf %796, %795 : vector<12x12xf32>
      %798 = arith.addf %789, %797 : vector<12x12xf32>
      %c36_i32 = arith.constant 36 : i32
      %799 = arith.addi %473, %c36_i32 : i32
      %c0_i32_423 = arith.constant 0 : i32
      %800 = arith.addi %799, %c0_i32_423 : i32
      %801 = arith.index_cast %800 : i32 to index
      %802 = memref.load %arg1[%801] : memref<1466xf32, #tpu.memory_space<smem>>
      %c4_424 = arith.constant 4 : index
      %c0_425 = arith.constant 0 : index
      %c0_426 = arith.constant 0 : index
      %803 = vector.load %arg7[%c4_424, %c0_425, %c0_426] : memref<8x14x14xf32, #tpu.memory_space<vmem>>, vector<1x12x12xf32>
      %804 = vector.shape_cast %803 : vector<1x12x12xf32> to vector<12x12xf32>
      %805 = vector.broadcast %802 : f32 to vector<12x12xf32>
      %806 = arith.mulf %805, %804 : vector<12x12xf32>
      %807 = arith.addf %798, %806 : vector<12x12xf32>
      %c36_i32_427 = arith.constant 36 : i32
      %808 = arith.addi %473, %c36_i32_427 : i32
      %c1_i32_428 = arith.constant 1 : i32
      %809 = arith.addi %808, %c1_i32_428 : i32
      %810 = arith.index_cast %809 : i32 to index
      %811 = memref.load %arg1[%810] : memref<1466xf32, #tpu.memory_space<smem>>
      %c4_429 = arith.constant 4 : index
      %c0_430 = arith.constant 0 : index
      %c1_431 = arith.constant 1 : index
      %812 = vector.load %arg7[%c4_429, %c0_430, %c1_431] : memref<8x14x14xf32, #tpu.memory_space<vmem>>, vector<1x12x12xf32>
      %813 = vector.shape_cast %812 : vector<1x12x12xf32> to vector<12x12xf32>
      %814 = vector.broadcast %811 : f32 to vector<12x12xf32>
      %815 = arith.mulf %814, %813 : vector<12x12xf32>
      %816 = arith.addf %807, %815 : vector<12x12xf32>
      %c36_i32_432 = arith.constant 36 : i32
      %817 = arith.addi %473, %c36_i32_432 : i32
      %c2_i32_433 = arith.constant 2 : i32
      %818 = arith.addi %817, %c2_i32_433 : i32
      %819 = arith.index_cast %818 : i32 to index
      %820 = memref.load %arg1[%819] : memref<1466xf32, #tpu.memory_space<smem>>
      %c4_434 = arith.constant 4 : index
      %c0_435 = arith.constant 0 : index
      %c2_436 = arith.constant 2 : index
      %821 = vector.load %arg7[%c4_434, %c0_435, %c2_436] : memref<8x14x14xf32, #tpu.memory_space<vmem>>, vector<1x12x12xf32>
      %822 = vector.shape_cast %821 : vector<1x12x12xf32> to vector<12x12xf32>
      %823 = vector.broadcast %820 : f32 to vector<12x12xf32>
      %824 = arith.mulf %823, %822 : vector<12x12xf32>
      %825 = arith.addf %816, %824 : vector<12x12xf32>
      %c36_i32_437 = arith.constant 36 : i32
      %826 = arith.addi %473, %c36_i32_437 : i32
      %c3_i32_438 = arith.constant 3 : i32
      %827 = arith.addi %826, %c3_i32_438 : i32
      %828 = arith.index_cast %827 : i32 to index
      %829 = memref.load %arg1[%828] : memref<1466xf32, #tpu.memory_space<smem>>
      %c4_439 = arith.constant 4 : index
      %c1_440 = arith.constant 1 : index
      %c0_441 = arith.constant 0 : index
      %830 = vector.load %arg7[%c4_439, %c1_440, %c0_441] : memref<8x14x14xf32, #tpu.memory_space<vmem>>, vector<1x12x12xf32>
      %831 = vector.shape_cast %830 : vector<1x12x12xf32> to vector<12x12xf32>
      %832 = vector.broadcast %829 : f32 to vector<12x12xf32>
      %833 = arith.mulf %832, %831 : vector<12x12xf32>
      %834 = arith.addf %825, %833 : vector<12x12xf32>
      %c36_i32_442 = arith.constant 36 : i32
      %835 = arith.addi %473, %c36_i32_442 : i32
      %c4_i32_443 = arith.constant 4 : i32
      %836 = arith.addi %835, %c4_i32_443 : i32
      %837 = arith.index_cast %836 : i32 to index
      %838 = memref.load %arg1[%837] : memref<1466xf32, #tpu.memory_space<smem>>
      %c4_444 = arith.constant 4 : index
      %c1_445 = arith.constant 1 : index
      %c1_446 = arith.constant 1 : index
      %839 = vector.load %arg7[%c4_444, %c1_445, %c1_446] : memref<8x14x14xf32, #tpu.memory_space<vmem>>, vector<1x12x12xf32>
      %840 = vector.shape_cast %839 : vector<1x12x12xf32> to vector<12x12xf32>
      %841 = vector.broadcast %838 : f32 to vector<12x12xf32>
      %842 = arith.mulf %841, %840 : vector<12x12xf32>
      %843 = arith.addf %834, %842 : vector<12x12xf32>
      %c36_i32_447 = arith.constant 36 : i32
      %844 = arith.addi %473, %c36_i32_447 : i32
      %c5_i32_448 = arith.constant 5 : i32
      %845 = arith.addi %844, %c5_i32_448 : i32
      %846 = arith.index_cast %845 : i32 to index
      %847 = memref.load %arg1[%846] : memref<1466xf32, #tpu.memory_space<smem>>
      %c4_449 = arith.constant 4 : index
      %c1_450 = arith.constant 1 : index
      %c2_451 = arith.constant 2 : index
      %848 = vector.load %arg7[%c4_449, %c1_450, %c2_451] : memref<8x14x14xf32, #tpu.memory_space<vmem>>, vector<1x12x12xf32>
      %849 = vector.shape_cast %848 : vector<1x12x12xf32> to vector<12x12xf32>
      %850 = vector.broadcast %847 : f32 to vector<12x12xf32>
      %851 = arith.mulf %850, %849 : vector<12x12xf32>
      %852 = arith.addf %843, %851 : vector<12x12xf32>
      %c36_i32_452 = arith.constant 36 : i32
      %853 = arith.addi %473, %c36_i32_452 : i32
      %c6_i32_453 = arith.constant 6 : i32
      %854 = arith.addi %853, %c6_i32_453 : i32
      %855 = arith.index_cast %854 : i32 to index
      %856 = memref.load %arg1[%855] : memref<1466xf32, #tpu.memory_space<smem>>
      %c4_454 = arith.constant 4 : index
      %c2_455 = arith.constant 2 : index
      %c0_456 = arith.constant 0 : index
      %857 = vector.load %arg7[%c4_454, %c2_455, %c0_456] : memref<8x14x14xf32, #tpu.memory_space<vmem>>, vector<1x12x12xf32>
      %858 = vector.shape_cast %857 : vector<1x12x12xf32> to vector<12x12xf32>
      %859 = vector.broadcast %856 : f32 to vector<12x12xf32>
      %860 = arith.mulf %859, %858 : vector<12x12xf32>
      %861 = arith.addf %852, %860 : vector<12x12xf32>
      %c36_i32_457 = arith.constant 36 : i32
      %862 = arith.addi %473, %c36_i32_457 : i32
      %c7_i32_458 = arith.constant 7 : i32
      %863 = arith.addi %862, %c7_i32_458 : i32
      %864 = arith.index_cast %863 : i32 to index
      %865 = memref.load %arg1[%864] : memref<1466xf32, #tpu.memory_space<smem>>
      %c4_459 = arith.constant 4 : index
      %c2_460 = arith.constant 2 : index
      %c1_461 = arith.constant 1 : index
      %866 = vector.load %arg7[%c4_459, %c2_460, %c1_461] : memref<8x14x14xf32, #tpu.memory_space<vmem>>, vector<1x12x12xf32>
      %867 = vector.shape_cast %866 : vector<1x12x12xf32> to vector<12x12xf32>
      %868 = vector.broadcast %865 : f32 to vector<12x12xf32>
      %869 = arith.mulf %868, %867 : vector<12x12xf32>
      %870 = arith.addf %861, %869 : vector<12x12xf32>
      %c36_i32_462 = arith.constant 36 : i32
      %871 = arith.addi %473, %c36_i32_462 : i32
      %c8_i32_463 = arith.constant 8 : i32
      %872 = arith.addi %871, %c8_i32_463 : i32
      %873 = arith.index_cast %872 : i32 to index
      %874 = memref.load %arg1[%873] : memref<1466xf32, #tpu.memory_space<smem>>
      %c4_464 = arith.constant 4 : index
      %c2_465 = arith.constant 2 : index
      %c2_466 = arith.constant 2 : index
      %875 = vector.load %arg7[%c4_464, %c2_465, %c2_466] : memref<8x14x14xf32, #tpu.memory_space<vmem>>, vector<1x12x12xf32>
      %876 = vector.shape_cast %875 : vector<1x12x12xf32> to vector<12x12xf32>
      %877 = vector.broadcast %874 : f32 to vector<12x12xf32>
      %878 = arith.mulf %877, %876 : vector<12x12xf32>
      %879 = arith.addf %870, %878 : vector<12x12xf32>
      %c45_i32 = arith.constant 45 : i32
      %880 = arith.addi %473, %c45_i32 : i32
      %c0_i32_467 = arith.constant 0 : i32
      %881 = arith.addi %880, %c0_i32_467 : i32
      %882 = arith.index_cast %881 : i32 to index
      %883 = memref.load %arg1[%882] : memref<1466xf32, #tpu.memory_space<smem>>
      %c5_468 = arith.constant 5 : index
      %c0_469 = arith.constant 0 : index
      %c0_470 = arith.constant 0 : index
      %884 = vector.load %arg7[%c5_468, %c0_469, %c0_470] : memref<8x14x14xf32, #tpu.memory_space<vmem>>, vector<1x12x12xf32>
      %885 = vector.shape_cast %884 : vector<1x12x12xf32> to vector<12x12xf32>
      %886 = vector.broadcast %883 : f32 to vector<12x12xf32>
      %887 = arith.mulf %886, %885 : vector<12x12xf32>
      %888 = arith.addf %879, %887 : vector<12x12xf32>
      %c45_i32_471 = arith.constant 45 : i32
      %889 = arith.addi %473, %c45_i32_471 : i32
      %c1_i32_472 = arith.constant 1 : i32
      %890 = arith.addi %889, %c1_i32_472 : i32
      %891 = arith.index_cast %890 : i32 to index
      %892 = memref.load %arg1[%891] : memref<1466xf32, #tpu.memory_space<smem>>
      %c5_473 = arith.constant 5 : index
      %c0_474 = arith.constant 0 : index
      %c1_475 = arith.constant 1 : index
      %893 = vector.load %arg7[%c5_473, %c0_474, %c1_475] : memref<8x14x14xf32, #tpu.memory_space<vmem>>, vector<1x12x12xf32>
      %894 = vector.shape_cast %893 : vector<1x12x12xf32> to vector<12x12xf32>
      %895 = vector.broadcast %892 : f32 to vector<12x12xf32>
      %896 = arith.mulf %895, %894 : vector<12x12xf32>
      %897 = arith.addf %888, %896 : vector<12x12xf32>
      %c45_i32_476 = arith.constant 45 : i32
      %898 = arith.addi %473, %c45_i32_476 : i32
      %c2_i32_477 = arith.constant 2 : i32
      %899 = arith.addi %898, %c2_i32_477 : i32
      %900 = arith.index_cast %899 : i32 to index
      %901 = memref.load %arg1[%900] : memref<1466xf32, #tpu.memory_space<smem>>
      %c5_478 = arith.constant 5 : index
      %c0_479 = arith.constant 0 : index
      %c2_480 = arith.constant 2 : index
      %902 = vector.load %arg7[%c5_478, %c0_479, %c2_480] : memref<8x14x14xf32, #tpu.memory_space<vmem>>, vector<1x12x12xf32>
      %903 = vector.shape_cast %902 : vector<1x12x12xf32> to vector<12x12xf32>
      %904 = vector.broadcast %901 : f32 to vector<12x12xf32>
      %905 = arith.mulf %904, %903 : vector<12x12xf32>
      %906 = arith.addf %897, %905 : vector<12x12xf32>
      %c45_i32_481 = arith.constant 45 : i32
      %907 = arith.addi %473, %c45_i32_481 : i32
      %c3_i32_482 = arith.constant 3 : i32
      %908 = arith.addi %907, %c3_i32_482 : i32
      %909 = arith.index_cast %908 : i32 to index
      %910 = memref.load %arg1[%909] : memref<1466xf32, #tpu.memory_space<smem>>
      %c5_483 = arith.constant 5 : index
      %c1_484 = arith.constant 1 : index
      %c0_485 = arith.constant 0 : index
      %911 = vector.load %arg7[%c5_483, %c1_484, %c0_485] : memref<8x14x14xf32, #tpu.memory_space<vmem>>, vector<1x12x12xf32>
      %912 = vector.shape_cast %911 : vector<1x12x12xf32> to vector<12x12xf32>
      %913 = vector.broadcast %910 : f32 to vector<12x12xf32>
      %914 = arith.mulf %913, %912 : vector<12x12xf32>
      %915 = arith.addf %906, %914 : vector<12x12xf32>
      %c45_i32_486 = arith.constant 45 : i32
      %916 = arith.addi %473, %c45_i32_486 : i32
      %c4_i32_487 = arith.constant 4 : i32
      %917 = arith.addi %916, %c4_i32_487 : i32
      %918 = arith.index_cast %917 : i32 to index
      %919 = memref.load %arg1[%918] : memref<1466xf32, #tpu.memory_space<smem>>
      %c5_488 = arith.constant 5 : index
      %c1_489 = arith.constant 1 : index
      %c1_490 = arith.constant 1 : index
      %920 = vector.load %arg7[%c5_488, %c1_489, %c1_490] : memref<8x14x14xf32, #tpu.memory_space<vmem>>, vector<1x12x12xf32>
      %921 = vector.shape_cast %920 : vector<1x12x12xf32> to vector<12x12xf32>
      %922 = vector.broadcast %919 : f32 to vector<12x12xf32>
      %923 = arith.mulf %922, %921 : vector<12x12xf32>
      %924 = arith.addf %915, %923 : vector<12x12xf32>
      %c45_i32_491 = arith.constant 45 : i32
      %925 = arith.addi %473, %c45_i32_491 : i32
      %c5_i32_492 = arith.constant 5 : i32
      %926 = arith.addi %925, %c5_i32_492 : i32
      %927 = arith.index_cast %926 : i32 to index
      %928 = memref.load %arg1[%927] : memref<1466xf32, #tpu.memory_space<smem>>
      %c5_493 = arith.constant 5 : index
      %c1_494 = arith.constant 1 : index
      %c2_495 = arith.constant 2 : index
      %929 = vector.load %arg7[%c5_493, %c1_494, %c2_495] : memref<8x14x14xf32, #tpu.memory_space<vmem>>, vector<1x12x12xf32>
      %930 = vector.shape_cast %929 : vector<1x12x12xf32> to vector<12x12xf32>
      %931 = vector.broadcast %928 : f32 to vector<12x12xf32>
      %932 = arith.mulf %931, %930 : vector<12x12xf32>
      %933 = arith.addf %924, %932 : vector<12x12xf32>
      %c45_i32_496 = arith.constant 45 : i32
      %934 = arith.addi %473, %c45_i32_496 : i32
      %c6_i32_497 = arith.constant 6 : i32
      %935 = arith.addi %934, %c6_i32_497 : i32
      %936 = arith.index_cast %935 : i32 to index
      %937 = memref.load %arg1[%936] : memref<1466xf32, #tpu.memory_space<smem>>
      %c5_498 = arith.constant 5 : index
      %c2_499 = arith.constant 2 : index
      %c0_500 = arith.constant 0 : index
      %938 = vector.load %arg7[%c5_498, %c2_499, %c0_500] : memref<8x14x14xf32, #tpu.memory_space<vmem>>, vector<1x12x12xf32>
      %939 = vector.shape_cast %938 : vector<1x12x12xf32> to vector<12x12xf32>
      %940 = vector.broadcast %937 : f32 to vector<12x12xf32>
      %941 = arith.mulf %940, %939 : vector<12x12xf32>
      %942 = arith.addf %933, %941 : vector<12x12xf32>
      %c45_i32_501 = arith.constant 45 : i32
      %943 = arith.addi %473, %c45_i32_501 : i32
      %c7_i32_502 = arith.constant 7 : i32
      %944 = arith.addi %943, %c7_i32_502 : i32
      %945 = arith.index_cast %944 : i32 to index
      %946 = memref.load %arg1[%945] : memref<1466xf32, #tpu.memory_space<smem>>
      %c5_503 = arith.constant 5 : index
      %c2_504 = arith.constant 2 : index
      %c1_505 = arith.constant 1 : index
      %947 = vector.load %arg7[%c5_503, %c2_504, %c1_505] : memref<8x14x14xf32, #tpu.memory_space<vmem>>, vector<1x12x12xf32>
      %948 = vector.shape_cast %947 : vector<1x12x12xf32> to vector<12x12xf32>
      %949 = vector.broadcast %946 : f32 to vector<12x12xf32>
      %950 = arith.mulf %949, %948 : vector<12x12xf32>
      %951 = arith.addf %942, %950 : vector<12x12xf32>
      %c45_i32_506 = arith.constant 45 : i32
      %952 = arith.addi %473, %c45_i32_506 : i32
      %c8_i32_507 = arith.constant 8 : i32
      %953 = arith.addi %952, %c8_i32_507 : i32
      %954 = arith.index_cast %953 : i32 to index
      %955 = memref.load %arg1[%954] : memref<1466xf32, #tpu.memory_space<smem>>
      %c5_508 = arith.constant 5 : index
      %c2_509 = arith.constant 2 : index
      %c2_510 = arith.constant 2 : index
      %956 = vector.load %arg7[%c5_508, %c2_509, %c2_510] : memref<8x14x14xf32, #tpu.memory_space<vmem>>, vector<1x12x12xf32>
      %957 = vector.shape_cast %956 : vector<1x12x12xf32> to vector<12x12xf32>
      %958 = vector.broadcast %955 : f32 to vector<12x12xf32>
      %959 = arith.mulf %958, %957 : vector<12x12xf32>
      %960 = arith.addf %951, %959 : vector<12x12xf32>
      %c54_i32 = arith.constant 54 : i32
      %961 = arith.addi %473, %c54_i32 : i32
      %c0_i32_511 = arith.constant 0 : i32
      %962 = arith.addi %961, %c0_i32_511 : i32
      %963 = arith.index_cast %962 : i32 to index
      %964 = memref.load %arg1[%963] : memref<1466xf32, #tpu.memory_space<smem>>
      %c6_512 = arith.constant 6 : index
      %c0_513 = arith.constant 0 : index
      %c0_514 = arith.constant 0 : index
      %965 = vector.load %arg7[%c6_512, %c0_513, %c0_514] : memref<8x14x14xf32, #tpu.memory_space<vmem>>, vector<1x12x12xf32>
      %966 = vector.shape_cast %965 : vector<1x12x12xf32> to vector<12x12xf32>
      %967 = vector.broadcast %964 : f32 to vector<12x12xf32>
      %968 = arith.mulf %967, %966 : vector<12x12xf32>
      %969 = arith.addf %960, %968 : vector<12x12xf32>
      %c54_i32_515 = arith.constant 54 : i32
      %970 = arith.addi %473, %c54_i32_515 : i32
      %c1_i32_516 = arith.constant 1 : i32
      %971 = arith.addi %970, %c1_i32_516 : i32
      %972 = arith.index_cast %971 : i32 to index
      %973 = memref.load %arg1[%972] : memref<1466xf32, #tpu.memory_space<smem>>
      %c6_517 = arith.constant 6 : index
      %c0_518 = arith.constant 0 : index
      %c1_519 = arith.constant 1 : index
      %974 = vector.load %arg7[%c6_517, %c0_518, %c1_519] : memref<8x14x14xf32, #tpu.memory_space<vmem>>, vector<1x12x12xf32>
      %975 = vector.shape_cast %974 : vector<1x12x12xf32> to vector<12x12xf32>
      %976 = vector.broadcast %973 : f32 to vector<12x12xf32>
      %977 = arith.mulf %976, %975 : vector<12x12xf32>
      %978 = arith.addf %969, %977 : vector<12x12xf32>
      %c54_i32_520 = arith.constant 54 : i32
      %979 = arith.addi %473, %c54_i32_520 : i32
      %c2_i32_521 = arith.constant 2 : i32
      %980 = arith.addi %979, %c2_i32_521 : i32
      %981 = arith.index_cast %980 : i32 to index
      %982 = memref.load %arg1[%981] : memref<1466xf32, #tpu.memory_space<smem>>
      %c6_522 = arith.constant 6 : index
      %c0_523 = arith.constant 0 : index
      %c2_524 = arith.constant 2 : index
      %983 = vector.load %arg7[%c6_522, %c0_523, %c2_524] : memref<8x14x14xf32, #tpu.memory_space<vmem>>, vector<1x12x12xf32>
      %984 = vector.shape_cast %983 : vector<1x12x12xf32> to vector<12x12xf32>
      %985 = vector.broadcast %982 : f32 to vector<12x12xf32>
      %986 = arith.mulf %985, %984 : vector<12x12xf32>
      %987 = arith.addf %978, %986 : vector<12x12xf32>
      %c54_i32_525 = arith.constant 54 : i32
      %988 = arith.addi %473, %c54_i32_525 : i32
      %c3_i32_526 = arith.constant 3 : i32
      %989 = arith.addi %988, %c3_i32_526 : i32
      %990 = arith.index_cast %989 : i32 to index
      %991 = memref.load %arg1[%990] : memref<1466xf32, #tpu.memory_space<smem>>
      %c6_527 = arith.constant 6 : index
      %c1_528 = arith.constant 1 : index
      %c0_529 = arith.constant 0 : index
      %992 = vector.load %arg7[%c6_527, %c1_528, %c0_529] : memref<8x14x14xf32, #tpu.memory_space<vmem>>, vector<1x12x12xf32>
      %993 = vector.shape_cast %992 : vector<1x12x12xf32> to vector<12x12xf32>
      %994 = vector.broadcast %991 : f32 to vector<12x12xf32>
      %995 = arith.mulf %994, %993 : vector<12x12xf32>
      %996 = arith.addf %987, %995 : vector<12x12xf32>
      %c54_i32_530 = arith.constant 54 : i32
      %997 = arith.addi %473, %c54_i32_530 : i32
      %c4_i32_531 = arith.constant 4 : i32
      %998 = arith.addi %997, %c4_i32_531 : i32
      %999 = arith.index_cast %998 : i32 to index
      %1000 = memref.load %arg1[%999] : memref<1466xf32, #tpu.memory_space<smem>>
      %c6_532 = arith.constant 6 : index
      %c1_533 = arith.constant 1 : index
      %c1_534 = arith.constant 1 : index
      %1001 = vector.load %arg7[%c6_532, %c1_533, %c1_534] : memref<8x14x14xf32, #tpu.memory_space<vmem>>, vector<1x12x12xf32>
      %1002 = vector.shape_cast %1001 : vector<1x12x12xf32> to vector<12x12xf32>
      %1003 = vector.broadcast %1000 : f32 to vector<12x12xf32>
      %1004 = arith.mulf %1003, %1002 : vector<12x12xf32>
      %1005 = arith.addf %996, %1004 : vector<12x12xf32>
      %c54_i32_535 = arith.constant 54 : i32
      %1006 = arith.addi %473, %c54_i32_535 : i32
      %c5_i32_536 = arith.constant 5 : i32
      %1007 = arith.addi %1006, %c5_i32_536 : i32
      %1008 = arith.index_cast %1007 : i32 to index
      %1009 = memref.load %arg1[%1008] : memref<1466xf32, #tpu.memory_space<smem>>
      %c6_537 = arith.constant 6 : index
      %c1_538 = arith.constant 1 : index
      %c2_539 = arith.constant 2 : index
      %1010 = vector.load %arg7[%c6_537, %c1_538, %c2_539] : memref<8x14x14xf32, #tpu.memory_space<vmem>>, vector<1x12x12xf32>
      %1011 = vector.shape_cast %1010 : vector<1x12x12xf32> to vector<12x12xf32>
      %1012 = vector.broadcast %1009 : f32 to vector<12x12xf32>
      %1013 = arith.mulf %1012, %1011 : vector<12x12xf32>
      %1014 = arith.addf %1005, %1013 : vector<12x12xf32>
      %c54_i32_540 = arith.constant 54 : i32
      %1015 = arith.addi %473, %c54_i32_540 : i32
      %c6_i32_541 = arith.constant 6 : i32
      %1016 = arith.addi %1015, %c6_i32_541 : i32
      %1017 = arith.index_cast %1016 : i32 to index
      %1018 = memref.load %arg1[%1017] : memref<1466xf32, #tpu.memory_space<smem>>
      %c6_542 = arith.constant 6 : index
      %c2_543 = arith.constant 2 : index
      %c0_544 = arith.constant 0 : index
      %1019 = vector.load %arg7[%c6_542, %c2_543, %c0_544] : memref<8x14x14xf32, #tpu.memory_space<vmem>>, vector<1x12x12xf32>
      %1020 = vector.shape_cast %1019 : vector<1x12x12xf32> to vector<12x12xf32>
      %1021 = vector.broadcast %1018 : f32 to vector<12x12xf32>
      %1022 = arith.mulf %1021, %1020 : vector<12x12xf32>
      %1023 = arith.addf %1014, %1022 : vector<12x12xf32>
      %c54_i32_545 = arith.constant 54 : i32
      %1024 = arith.addi %473, %c54_i32_545 : i32
      %c7_i32_546 = arith.constant 7 : i32
      %1025 = arith.addi %1024, %c7_i32_546 : i32
      %1026 = arith.index_cast %1025 : i32 to index
      %1027 = memref.load %arg1[%1026] : memref<1466xf32, #tpu.memory_space<smem>>
      %c6_547 = arith.constant 6 : index
      %c2_548 = arith.constant 2 : index
      %c1_549 = arith.constant 1 : index
      %1028 = vector.load %arg7[%c6_547, %c2_548, %c1_549] : memref<8x14x14xf32, #tpu.memory_space<vmem>>, vector<1x12x12xf32>
      %1029 = vector.shape_cast %1028 : vector<1x12x12xf32> to vector<12x12xf32>
      %1030 = vector.broadcast %1027 : f32 to vector<12x12xf32>
      %1031 = arith.mulf %1030, %1029 : vector<12x12xf32>
      %1032 = arith.addf %1023, %1031 : vector<12x12xf32>
      %c54_i32_550 = arith.constant 54 : i32
      %1033 = arith.addi %473, %c54_i32_550 : i32
      %c8_i32_551 = arith.constant 8 : i32
      %1034 = arith.addi %1033, %c8_i32_551 : i32
      %1035 = arith.index_cast %1034 : i32 to index
      %1036 = memref.load %arg1[%1035] : memref<1466xf32, #tpu.memory_space<smem>>
      %c6_552 = arith.constant 6 : index
      %c2_553 = arith.constant 2 : index
      %c2_554 = arith.constant 2 : index
      %1037 = vector.load %arg7[%c6_552, %c2_553, %c2_554] : memref<8x14x14xf32, #tpu.memory_space<vmem>>, vector<1x12x12xf32>
      %1038 = vector.shape_cast %1037 : vector<1x12x12xf32> to vector<12x12xf32>
      %1039 = vector.broadcast %1036 : f32 to vector<12x12xf32>
      %1040 = arith.mulf %1039, %1038 : vector<12x12xf32>
      %1041 = arith.addf %1032, %1040 : vector<12x12xf32>
      %c63_i32 = arith.constant 63 : i32
      %1042 = arith.addi %473, %c63_i32 : i32
      %c0_i32_555 = arith.constant 0 : i32
      %1043 = arith.addi %1042, %c0_i32_555 : i32
      %1044 = arith.index_cast %1043 : i32 to index
      %1045 = memref.load %arg1[%1044] : memref<1466xf32, #tpu.memory_space<smem>>
      %c7_556 = arith.constant 7 : index
      %c0_557 = arith.constant 0 : index
      %c0_558 = arith.constant 0 : index
      %1046 = vector.load %arg7[%c7_556, %c0_557, %c0_558] : memref<8x14x14xf32, #tpu.memory_space<vmem>>, vector<1x12x12xf32>
      %1047 = vector.shape_cast %1046 : vector<1x12x12xf32> to vector<12x12xf32>
      %1048 = vector.broadcast %1045 : f32 to vector<12x12xf32>
      %1049 = arith.mulf %1048, %1047 : vector<12x12xf32>
      %1050 = arith.addf %1041, %1049 : vector<12x12xf32>
      %c63_i32_559 = arith.constant 63 : i32
      %1051 = arith.addi %473, %c63_i32_559 : i32
      %c1_i32_560 = arith.constant 1 : i32
      %1052 = arith.addi %1051, %c1_i32_560 : i32
      %1053 = arith.index_cast %1052 : i32 to index
      %1054 = memref.load %arg1[%1053] : memref<1466xf32, #tpu.memory_space<smem>>
      %c7_561 = arith.constant 7 : index
      %c0_562 = arith.constant 0 : index
      %c1_563 = arith.constant 1 : index
      %1055 = vector.load %arg7[%c7_561, %c0_562, %c1_563] : memref<8x14x14xf32, #tpu.memory_space<vmem>>, vector<1x12x12xf32>
      %1056 = vector.shape_cast %1055 : vector<1x12x12xf32> to vector<12x12xf32>
      %1057 = vector.broadcast %1054 : f32 to vector<12x12xf32>
      %1058 = arith.mulf %1057, %1056 : vector<12x12xf32>
      %1059 = arith.addf %1050, %1058 : vector<12x12xf32>
      %c63_i32_564 = arith.constant 63 : i32
      %1060 = arith.addi %473, %c63_i32_564 : i32
      %c2_i32_565 = arith.constant 2 : i32
      %1061 = arith.addi %1060, %c2_i32_565 : i32
      %1062 = arith.index_cast %1061 : i32 to index
      %1063 = memref.load %arg1[%1062] : memref<1466xf32, #tpu.memory_space<smem>>
      %c7_566 = arith.constant 7 : index
      %c0_567 = arith.constant 0 : index
      %c2_568 = arith.constant 2 : index
      %1064 = vector.load %arg7[%c7_566, %c0_567, %c2_568] : memref<8x14x14xf32, #tpu.memory_space<vmem>>, vector<1x12x12xf32>
      %1065 = vector.shape_cast %1064 : vector<1x12x12xf32> to vector<12x12xf32>
      %1066 = vector.broadcast %1063 : f32 to vector<12x12xf32>
      %1067 = arith.mulf %1066, %1065 : vector<12x12xf32>
      %1068 = arith.addf %1059, %1067 : vector<12x12xf32>
      %c63_i32_569 = arith.constant 63 : i32
      %1069 = arith.addi %473, %c63_i32_569 : i32
      %c3_i32_570 = arith.constant 3 : i32
      %1070 = arith.addi %1069, %c3_i32_570 : i32
      %1071 = arith.index_cast %1070 : i32 to index
      %1072 = memref.load %arg1[%1071] : memref<1466xf32, #tpu.memory_space<smem>>
      %c7_571 = arith.constant 7 : index
      %c1_572 = arith.constant 1 : index
      %c0_573 = arith.constant 0 : index
      %1073 = vector.load %arg7[%c7_571, %c1_572, %c0_573] : memref<8x14x14xf32, #tpu.memory_space<vmem>>, vector<1x12x12xf32>
      %1074 = vector.shape_cast %1073 : vector<1x12x12xf32> to vector<12x12xf32>
      %1075 = vector.broadcast %1072 : f32 to vector<12x12xf32>
      %1076 = arith.mulf %1075, %1074 : vector<12x12xf32>
      %1077 = arith.addf %1068, %1076 : vector<12x12xf32>
      %c63_i32_574 = arith.constant 63 : i32
      %1078 = arith.addi %473, %c63_i32_574 : i32
      %c4_i32_575 = arith.constant 4 : i32
      %1079 = arith.addi %1078, %c4_i32_575 : i32
      %1080 = arith.index_cast %1079 : i32 to index
      %1081 = memref.load %arg1[%1080] : memref<1466xf32, #tpu.memory_space<smem>>
      %c7_576 = arith.constant 7 : index
      %c1_577 = arith.constant 1 : index
      %c1_578 = arith.constant 1 : index
      %1082 = vector.load %arg7[%c7_576, %c1_577, %c1_578] : memref<8x14x14xf32, #tpu.memory_space<vmem>>, vector<1x12x12xf32>
      %1083 = vector.shape_cast %1082 : vector<1x12x12xf32> to vector<12x12xf32>
      %1084 = vector.broadcast %1081 : f32 to vector<12x12xf32>
      %1085 = arith.mulf %1084, %1083 : vector<12x12xf32>
      %1086 = arith.addf %1077, %1085 : vector<12x12xf32>
      %c63_i32_579 = arith.constant 63 : i32
      %1087 = arith.addi %473, %c63_i32_579 : i32
      %c5_i32_580 = arith.constant 5 : i32
      %1088 = arith.addi %1087, %c5_i32_580 : i32
      %1089 = arith.index_cast %1088 : i32 to index
      %1090 = memref.load %arg1[%1089] : memref<1466xf32, #tpu.memory_space<smem>>
      %c7_581 = arith.constant 7 : index
      %c1_582 = arith.constant 1 : index
      %c2_583 = arith.constant 2 : index
      %1091 = vector.load %arg7[%c7_581, %c1_582, %c2_583] : memref<8x14x14xf32, #tpu.memory_space<vmem>>, vector<1x12x12xf32>
      %1092 = vector.shape_cast %1091 : vector<1x12x12xf32> to vector<12x12xf32>
      %1093 = vector.broadcast %1090 : f32 to vector<12x12xf32>
      %1094 = arith.mulf %1093, %1092 : vector<12x12xf32>
      %1095 = arith.addf %1086, %1094 : vector<12x12xf32>
      %c63_i32_584 = arith.constant 63 : i32
      %1096 = arith.addi %473, %c63_i32_584 : i32
      %c6_i32_585 = arith.constant 6 : i32
      %1097 = arith.addi %1096, %c6_i32_585 : i32
      %1098 = arith.index_cast %1097 : i32 to index
      %1099 = memref.load %arg1[%1098] : memref<1466xf32, #tpu.memory_space<smem>>
      %c7_586 = arith.constant 7 : index
      %c2_587 = arith.constant 2 : index
      %c0_588 = arith.constant 0 : index
      %1100 = vector.load %arg7[%c7_586, %c2_587, %c0_588] : memref<8x14x14xf32, #tpu.memory_space<vmem>>, vector<1x12x12xf32>
      %1101 = vector.shape_cast %1100 : vector<1x12x12xf32> to vector<12x12xf32>
      %1102 = vector.broadcast %1099 : f32 to vector<12x12xf32>
      %1103 = arith.mulf %1102, %1101 : vector<12x12xf32>
      %1104 = arith.addf %1095, %1103 : vector<12x12xf32>
      %c63_i32_589 = arith.constant 63 : i32
      %1105 = arith.addi %473, %c63_i32_589 : i32
      %c7_i32_590 = arith.constant 7 : i32
      %1106 = arith.addi %1105, %c7_i32_590 : i32
      %1107 = arith.index_cast %1106 : i32 to index
      %1108 = memref.load %arg1[%1107] : memref<1466xf32, #tpu.memory_space<smem>>
      %c7_591 = arith.constant 7 : index
      %c2_592 = arith.constant 2 : index
      %c1_593 = arith.constant 1 : index
      %1109 = vector.load %arg7[%c7_591, %c2_592, %c1_593] : memref<8x14x14xf32, #tpu.memory_space<vmem>>, vector<1x12x12xf32>
      %1110 = vector.shape_cast %1109 : vector<1x12x12xf32> to vector<12x12xf32>
      %1111 = vector.broadcast %1108 : f32 to vector<12x12xf32>
      %1112 = arith.mulf %1111, %1110 : vector<12x12xf32>
      %1113 = arith.addf %1104, %1112 : vector<12x12xf32>
      %c63_i32_594 = arith.constant 63 : i32
      %1114 = arith.addi %473, %c63_i32_594 : i32
      %c8_i32_595 = arith.constant 8 : i32
      %1115 = arith.addi %1114, %c8_i32_595 : i32
      %1116 = arith.index_cast %1115 : i32 to index
      %1117 = memref.load %arg1[%1116] : memref<1466xf32, #tpu.memory_space<smem>>
      %c7_596 = arith.constant 7 : index
      %c2_597 = arith.constant 2 : index
      %c2_598 = arith.constant 2 : index
      %1118 = vector.load %arg7[%c7_596, %c2_597, %c2_598] : memref<8x14x14xf32, #tpu.memory_space<vmem>>, vector<1x12x12xf32>
      %1119 = vector.shape_cast %1118 : vector<1x12x12xf32> to vector<12x12xf32>
      %1120 = vector.broadcast %1117 : f32 to vector<12x12xf32>
      %1121 = arith.mulf %1120, %1119 : vector<12x12xf32>
      %1122 = arith.addf %1113, %1121 : vector<12x12xf32>
      %c1384_i32 = arith.constant 1384 : i32
      %1123 = arith.addi %c1384_i32, %arg9 : i32
      %1124 = arith.index_cast %1123 : i32 to index
      %1125 = memref.load %arg1[%1124] : memref<1466xf32, #tpu.memory_space<smem>>
      %1126 = vector.broadcast %1125 : f32 to vector<12x12xf32>
      %1127 = arith.addf %1122, %1126 : vector<12x12xf32>
      %cst_599 = arith.constant 0.000000e+00 : f32
      %1128 = vector.broadcast %cst_599 : f32 to vector<12x12xf32>
      %1129 = arith.maximumf %1127, %1128 : vector<12x12xf32>
      %1130 = vector.extract_strided_slice %1129 {offsets = [0, 0], sizes = [2, 12], strides = [1, 1]} : vector<12x12xf32> to vector<2x12xf32>
      %cst_600 = arith.constant dense<0.000000e+00> : vector<12xf32>
      %1131 = vector.multi_reduction <add>, %1130, %cst_600 [0] : vector<2x12xf32> to vector<12xf32>
      %1132 = vector.shape_cast %1131 : vector<12xf32> to vector<1x12xf32>
      %cst_601 = arith.constant 5.000000e-01 : f32
      %1133 = vector.broadcast %cst_601 : f32 to vector<1x12xf32>
      %1134 = arith.mulf %1132, %1133 : vector<1x12xf32>
      %1135 = vector.extract_strided_slice %1129 {offsets = [1, 0], sizes = [2, 12], strides = [1, 1]} : vector<12x12xf32> to vector<2x12xf32>
      %cst_602 = arith.constant dense<0.000000e+00> : vector<12xf32>
      %1136 = vector.multi_reduction <add>, %1135, %cst_602 [0] : vector<2x12xf32> to vector<12xf32>
      %1137 = vector.shape_cast %1136 : vector<12xf32> to vector<1x12xf32>
      %cst_603 = arith.constant 5.000000e-01 : f32
      %1138 = vector.broadcast %cst_603 : f32 to vector<1x12xf32>
      %1139 = arith.mulf %1137, %1138 : vector<1x12xf32>
      %1140 = vector.extract_strided_slice %1129 {offsets = [3, 0], sizes = [2, 12], strides = [1, 1]} : vector<12x12xf32> to vector<2x12xf32>
      %cst_604 = arith.constant dense<0.000000e+00> : vector<12xf32>
      %1141 = vector.multi_reduction <add>, %1140, %cst_604 [0] : vector<2x12xf32> to vector<12xf32>
      %1142 = vector.shape_cast %1141 : vector<12xf32> to vector<1x12xf32>
      %cst_605 = arith.constant 5.000000e-01 : f32
      %1143 = vector.broadcast %cst_605 : f32 to vector<1x12xf32>
      %1144 = arith.mulf %1142, %1143 : vector<1x12xf32>
      %1145 = vector.extract_strided_slice %1129 {offsets = [4, 0], sizes = [2, 12], strides = [1, 1]} : vector<12x12xf32> to vector<2x12xf32>
      %cst_606 = arith.constant dense<0.000000e+00> : vector<12xf32>
      %1146 = vector.multi_reduction <add>, %1145, %cst_606 [0] : vector<2x12xf32> to vector<12xf32>
      %1147 = vector.shape_cast %1146 : vector<12xf32> to vector<1x12xf32>
      %cst_607 = arith.constant 5.000000e-01 : f32
      %1148 = vector.broadcast %cst_607 : f32 to vector<1x12xf32>
      %1149 = arith.mulf %1147, %1148 : vector<1x12xf32>
      %1150 = vector.extract_strided_slice %1129 {offsets = [6, 0], sizes = [2, 12], strides = [1, 1]} : vector<12x12xf32> to vector<2x12xf32>
      %cst_608 = arith.constant dense<0.000000e+00> : vector<12xf32>
      %1151 = vector.multi_reduction <add>, %1150, %cst_608 [0] : vector<2x12xf32> to vector<12xf32>
      %1152 = vector.shape_cast %1151 : vector<12xf32> to vector<1x12xf32>
      %cst_609 = arith.constant 5.000000e-01 : f32
      %1153 = vector.broadcast %cst_609 : f32 to vector<1x12xf32>
      %1154 = arith.mulf %1152, %1153 : vector<1x12xf32>
      %1155 = vector.extract_strided_slice %1129 {offsets = [7, 0], sizes = [2, 12], strides = [1, 1]} : vector<12x12xf32> to vector<2x12xf32>
      %cst_610 = arith.constant dense<0.000000e+00> : vector<12xf32>
      %1156 = vector.multi_reduction <add>, %1155, %cst_610 [0] : vector<2x12xf32> to vector<12xf32>
      %1157 = vector.shape_cast %1156 : vector<12xf32> to vector<1x12xf32>
      %cst_611 = arith.constant 5.000000e-01 : f32
      %1158 = vector.broadcast %cst_611 : f32 to vector<1x12xf32>
      %1159 = arith.mulf %1157, %1158 : vector<1x12xf32>
      %1160 = vector.extract_strided_slice %1129 {offsets = [9, 0], sizes = [2, 12], strides = [1, 1]} : vector<12x12xf32> to vector<2x12xf32>
      %cst_612 = arith.constant dense<0.000000e+00> : vector<12xf32>
      %1161 = vector.multi_reduction <add>, %1160, %cst_612 [0] : vector<2x12xf32> to vector<12xf32>
      %1162 = vector.shape_cast %1161 : vector<12xf32> to vector<1x12xf32>
      %cst_613 = arith.constant 5.000000e-01 : f32
      %1163 = vector.broadcast %cst_613 : f32 to vector<1x12xf32>
      %1164 = arith.mulf %1162, %1163 : vector<1x12xf32>
      %1165 = vector.extract_strided_slice %1129 {offsets = [10, 0], sizes = [2, 12], strides = [1, 1]} : vector<12x12xf32> to vector<2x12xf32>
      %cst_614 = arith.constant dense<0.000000e+00> : vector<12xf32>
      %1166 = vector.multi_reduction <add>, %1165, %cst_614 [0] : vector<2x12xf32> to vector<12xf32>
      %1167 = vector.shape_cast %1166 : vector<12xf32> to vector<1x12xf32>
      %cst_615 = arith.constant 5.000000e-01 : f32
      %1168 = vector.broadcast %cst_615 : f32 to vector<1x12xf32>
      %1169 = arith.mulf %1167, %1168 : vector<1x12xf32>
      %1170 = tpu.concatenate %1134, %1139, %1144, %1149, %1154, %1159, %1164, %1169 in 0 : vector<1x12xf32>, vector<1x12xf32>, vector<1x12xf32>, vector<1x12xf32>, vector<1x12xf32>, vector<1x12xf32>, vector<1x12xf32>, vector<1x12xf32> -> vector<8x12xf32>
      %1171 = vector.extract_strided_slice %1170 {offsets = [0, 0], sizes = [8, 2], strides = [1, 1]} : vector<8x12xf32> to vector<8x2xf32>
      %cst_616 = arith.constant dense<0.000000e+00> : vector<8xf32>
      %1172 = vector.multi_reduction <add>, %1171, %cst_616 [1] : vector<8x2xf32> to vector<8xf32>
      %1173 = vector.shape_cast %1172 : vector<8xf32> to vector<8x1xf32>
      %cst_617 = arith.constant 5.000000e-01 : f32
      %1174 = vector.broadcast %cst_617 : f32 to vector<8x1xf32>
      %1175 = arith.mulf %1173, %1174 : vector<8x1xf32>
      %1176 = vector.extract_strided_slice %1170 {offsets = [0, 1], sizes = [8, 2], strides = [1, 1]} : vector<8x12xf32> to vector<8x2xf32>
      %cst_618 = arith.constant dense<0.000000e+00> : vector<8xf32>
      %1177 = vector.multi_reduction <add>, %1176, %cst_618 [1] : vector<8x2xf32> to vector<8xf32>
      %1178 = vector.shape_cast %1177 : vector<8xf32> to vector<8x1xf32>
      %cst_619 = arith.constant 5.000000e-01 : f32
      %1179 = vector.broadcast %cst_619 : f32 to vector<8x1xf32>
      %1180 = arith.mulf %1178, %1179 : vector<8x1xf32>
      %1181 = vector.extract_strided_slice %1170 {offsets = [0, 3], sizes = [8, 2], strides = [1, 1]} : vector<8x12xf32> to vector<8x2xf32>
      %cst_620 = arith.constant dense<0.000000e+00> : vector<8xf32>
      %1182 = vector.multi_reduction <add>, %1181, %cst_620 [1] : vector<8x2xf32> to vector<8xf32>
      %1183 = vector.shape_cast %1182 : vector<8xf32> to vector<8x1xf32>
      %cst_621 = arith.constant 5.000000e-01 : f32
      %1184 = vector.broadcast %cst_621 : f32 to vector<8x1xf32>
      %1185 = arith.mulf %1183, %1184 : vector<8x1xf32>
      %1186 = vector.extract_strided_slice %1170 {offsets = [0, 4], sizes = [8, 2], strides = [1, 1]} : vector<8x12xf32> to vector<8x2xf32>
      %cst_622 = arith.constant dense<0.000000e+00> : vector<8xf32>
      %1187 = vector.multi_reduction <add>, %1186, %cst_622 [1] : vector<8x2xf32> to vector<8xf32>
      %1188 = vector.shape_cast %1187 : vector<8xf32> to vector<8x1xf32>
      %cst_623 = arith.constant 5.000000e-01 : f32
      %1189 = vector.broadcast %cst_623 : f32 to vector<8x1xf32>
      %1190 = arith.mulf %1188, %1189 : vector<8x1xf32>
      %1191 = vector.extract_strided_slice %1170 {offsets = [0, 6], sizes = [8, 2], strides = [1, 1]} : vector<8x12xf32> to vector<8x2xf32>
      %cst_624 = arith.constant dense<0.000000e+00> : vector<8xf32>
      %1192 = vector.multi_reduction <add>, %1191, %cst_624 [1] : vector<8x2xf32> to vector<8xf32>
      %1193 = vector.shape_cast %1192 : vector<8xf32> to vector<8x1xf32>
      %cst_625 = arith.constant 5.000000e-01 : f32
      %1194 = vector.broadcast %cst_625 : f32 to vector<8x1xf32>
      %1195 = arith.mulf %1193, %1194 : vector<8x1xf32>
      %1196 = vector.extract_strided_slice %1170 {offsets = [0, 7], sizes = [8, 2], strides = [1, 1]} : vector<8x12xf32> to vector<8x2xf32>
      %cst_626 = arith.constant dense<0.000000e+00> : vector<8xf32>
      %1197 = vector.multi_reduction <add>, %1196, %cst_626 [1] : vector<8x2xf32> to vector<8xf32>
      %1198 = vector.shape_cast %1197 : vector<8xf32> to vector<8x1xf32>
      %cst_627 = arith.constant 5.000000e-01 : f32
      %1199 = vector.broadcast %cst_627 : f32 to vector<8x1xf32>
      %1200 = arith.mulf %1198, %1199 : vector<8x1xf32>
      %1201 = vector.extract_strided_slice %1170 {offsets = [0, 9], sizes = [8, 2], strides = [1, 1]} : vector<8x12xf32> to vector<8x2xf32>
      %cst_628 = arith.constant dense<0.000000e+00> : vector<8xf32>
      %1202 = vector.multi_reduction <add>, %1201, %cst_628 [1] : vector<8x2xf32> to vector<8xf32>
      %1203 = vector.shape_cast %1202 : vector<8xf32> to vector<8x1xf32>
      %cst_629 = arith.constant 5.000000e-01 : f32
      %1204 = vector.broadcast %cst_629 : f32 to vector<8x1xf32>
      %1205 = arith.mulf %1203, %1204 : vector<8x1xf32>
      %1206 = vector.extract_strided_slice %1170 {offsets = [0, 10], sizes = [8, 2], strides = [1, 1]} : vector<8x12xf32> to vector<8x2xf32>
      %cst_630 = arith.constant dense<0.000000e+00> : vector<8xf32>
      %1207 = vector.multi_reduction <add>, %1206, %cst_630 [1] : vector<8x2xf32> to vector<8xf32>
      %1208 = vector.shape_cast %1207 : vector<8xf32> to vector<8x1xf32>
      %cst_631 = arith.constant 5.000000e-01 : f32
      %1209 = vector.broadcast %cst_631 : f32 to vector<8x1xf32>
      %1210 = arith.mulf %1208, %1209 : vector<8x1xf32>
      %1211 = tpu.concatenate %1175, %1180, %1185, %1190, %1195, %1200, %1205, %1210 in 1 : vector<8x1xf32>, vector<8x1xf32>, vector<8x1xf32>, vector<8x1xf32>, vector<8x1xf32>, vector<8x1xf32>, vector<8x1xf32>, vector<8x1xf32> -> vector<8x8xf32>
      %1212 = arith.index_cast %arg9 : i32 to index
      %c1_632 = arith.constant 1 : index
      %c1_633 = arith.constant 1 : index
      %1213 = vector.load %arg8[%1212, %c1_632, %c1_633] : memref<8x10x10xf32, #tpu.memory_space<vmem>>, vector<1x8x8xf32>
      %1214 = vector.shape_cast %1213 : vector<1x8x8xf32> to vector<8x8xf32>
      %1215 = vector.shape_cast %1211 : vector<8x8xf32> to vector<1x8x8xf32>
      tpu.vector_store %arg8[%1212, %c1_632, %c1_633], %1215 {strides = array<i32>} : memref<8x10x10xf32, #tpu.memory_space<vmem>>, vector<1x8x8xf32>,
    }
    %c8_i32_28 = arith.constant 8 : i32
    %cst_29 = arith.constant 0.000000e+00 : f32
    %14 = vector.broadcast %cst_29 : f32 to vector<8x8xf32>
    %c1392 = arith.constant 1392 : index
    %15 = memref.load %arg1[%c1392] : memref<1466xf32, #tpu.memory_space<smem>>
    %c0_30 = arith.constant 0 : index
    %c0_31 = arith.constant 0 : index
    %c0_32 = arith.constant 0 : index
    %16 = vector.load %arg8[%c0_30, %c0_31, %c0_32] : memref<8x10x10xf32, #tpu.memory_space<vmem>>, vector<1x8x8xf32>
    %17 = vector.shape_cast %16 : vector<1x8x8xf32> to vector<8x8xf32>
    %18 = vector.broadcast %15 : f32 to vector<8x8xf32>
    %19 = arith.mulf %18, %17 : vector<8x8xf32>
    %20 = arith.addf %14, %19 : vector<8x8xf32>
    %c1393 = arith.constant 1393 : index
    %21 = memref.load %arg1[%c1393] : memref<1466xf32, #tpu.memory_space<smem>>
    %c0_33 = arith.constant 0 : index
    %c0_34 = arith.constant 0 : index
    %c1_35 = arith.constant 1 : index
    %22 = vector.load %arg8[%c0_33, %c0_34, %c1_35] : memref<8x10x10xf32, #tpu.memory_space<vmem>>, vector<1x8x8xf32>
    %23 = vector.shape_cast %22 : vector<1x8x8xf32> to vector<8x8xf32>
    %24 = vector.broadcast %21 : f32 to vector<8x8xf32>
    %25 = arith.mulf %24, %23 : vector<8x8xf32>
    %26 = arith.addf %20, %25 : vector<8x8xf32>
    %c1394 = arith.constant 1394 : index
    %27 = memref.load %arg1[%c1394] : memref<1466xf32, #tpu.memory_space<smem>>
    %c0_36 = arith.constant 0 : index
    %c0_37 = arith.constant 0 : index
    %c2 = arith.constant 2 : index
    %28 = vector.load %arg8[%c0_36, %c0_37, %c2] : memref<8x10x10xf32, #tpu.memory_space<vmem>>, vector<1x8x8xf32>
    %29 = vector.shape_cast %28 : vector<1x8x8xf32> to vector<8x8xf32>
    %30 = vector.broadcast %27 : f32 to vector<8x8xf32>
    %31 = arith.mulf %30, %29 : vector<8x8xf32>
    %32 = arith.addf %26, %31 : vector<8x8xf32>
    %c1395 = arith.constant 1395 : index
    %33 = memref.load %arg1[%c1395] : memref<1466xf32, #tpu.memory_space<smem>>
    %c0_38 = arith.constant 0 : index
    %c1_39 = arith.constant 1 : index
    %c0_40 = arith.constant 0 : index
    %34 = vector.load %arg8[%c0_38, %c1_39, %c0_40] : memref<8x10x10xf32, #tpu.memory_space<vmem>>, vector<1x8x8xf32>
    %35 = vector.shape_cast %34 : vector<1x8x8xf32> to vector<8x8xf32>
    %36 = vector.broadcast %33 : f32 to vector<8x8xf32>
    %37 = arith.mulf %36, %35 : vector<8x8xf32>
    %38 = arith.addf %32, %37 : vector<8x8xf32>
    %c1396 = arith.constant 1396 : index
    %39 = memref.load %arg1[%c1396] : memref<1466xf32, #tpu.memory_space<smem>>
    %c0_41 = arith.constant 0 : index
    %c1_42 = arith.constant 1 : index
    %c1_43 = arith.constant 1 : index
    %40 = vector.load %arg8[%c0_41, %c1_42, %c1_43] : memref<8x10x10xf32, #tpu.memory_space<vmem>>, vector<1x8x8xf32>
    %41 = vector.shape_cast %40 : vector<1x8x8xf32> to vector<8x8xf32>
    %42 = vector.broadcast %39 : f32 to vector<8x8xf32>
    %43 = arith.mulf %42, %41 : vector<8x8xf32>
    %44 = arith.addf %38, %43 : vector<8x8xf32>
    %c1397 = arith.constant 1397 : index
    %45 = memref.load %arg1[%c1397] : memref<1466xf32, #tpu.memory_space<smem>>
    %c0_44 = arith.constant 0 : index
    %c1_45 = arith.constant 1 : index
    %c2_46 = arith.constant 2 : index
    %46 = vector.load %arg8[%c0_44, %c1_45, %c2_46] : memref<8x10x10xf32, #tpu.memory_space<vmem>>, vector<1x8x8xf32>
    %47 = vector.shape_cast %46 : vector<1x8x8xf32> to vector<8x8xf32>
    %48 = vector.broadcast %45 : f32 to vector<8x8xf32>
    %49 = arith.mulf %48, %47 : vector<8x8xf32>
    %50 = arith.addf %44, %49 : vector<8x8xf32>
    %c1398 = arith.constant 1398 : index
    %51 = memref.load %arg1[%c1398] : memref<1466xf32, #tpu.memory_space<smem>>
    %c0_47 = arith.constant 0 : index
    %c2_48 = arith.constant 2 : index
    %c0_49 = arith.constant 0 : index
    %52 = vector.load %arg8[%c0_47, %c2_48, %c0_49] : memref<8x10x10xf32, #tpu.memory_space<vmem>>, vector<1x8x8xf32>
    %53 = vector.shape_cast %52 : vector<1x8x8xf32> to vector<8x8xf32>
    %54 = vector.broadcast %51 : f32 to vector<8x8xf32>
    %55 = arith.mulf %54, %53 : vector<8x8xf32>
    %56 = arith.addf %50, %55 : vector<8x8xf32>
    %c1399 = arith.constant 1399 : index
    %57 = memref.load %arg1[%c1399] : memref<1466xf32, #tpu.memory_space<smem>>
    %c0_50 = arith.constant 0 : index
    %c2_51 = arith.constant 2 : index
    %c1_52 = arith.constant 1 : index
    %58 = vector.load %arg8[%c0_50, %c2_51, %c1_52] : memref<8x10x10xf32, #tpu.memory_space<vmem>>, vector<1x8x8xf32>
    %59 = vector.shape_cast %58 : vector<1x8x8xf32> to vector<8x8xf32>
    %60 = vector.broadcast %57 : f32 to vector<8x8xf32>
    %61 = arith.mulf %60, %59 : vector<8x8xf32>
    %62 = arith.addf %56, %61 : vector<8x8xf32>
    %c1400 = arith.constant 1400 : index
    %63 = memref.load %arg1[%c1400] : memref<1466xf32, #tpu.memory_space<smem>>
    %c0_53 = arith.constant 0 : index
    %c2_54 = arith.constant 2 : index
    %c2_55 = arith.constant 2 : index
    %64 = vector.load %arg8[%c0_53, %c2_54, %c2_55] : memref<8x10x10xf32, #tpu.memory_space<vmem>>, vector<1x8x8xf32>
    %65 = vector.shape_cast %64 : vector<1x8x8xf32> to vector<8x8xf32>
    %66 = vector.broadcast %63 : f32 to vector<8x8xf32>
    %67 = arith.mulf %66, %65 : vector<8x8xf32>
    %68 = arith.addf %62, %67 : vector<8x8xf32>
    %c1401 = arith.constant 1401 : index
    %69 = memref.load %arg1[%c1401] : memref<1466xf32, #tpu.memory_space<smem>>
    %c1_56 = arith.constant 1 : index
    %c0_57 = arith.constant 0 : index
    %c0_58 = arith.constant 0 : index
    %70 = vector.load %arg8[%c1_56, %c0_57, %c0_58] : memref<8x10x10xf32, #tpu.memory_space<vmem>>, vector<1x8x8xf32>
    %71 = vector.shape_cast %70 : vector<1x8x8xf32> to vector<8x8xf32>
    %72 = vector.broadcast %69 : f32 to vector<8x8xf32>
    %73 = arith.mulf %72, %71 : vector<8x8xf32>
    %74 = arith.addf %68, %73 : vector<8x8xf32>
    %c1402 = arith.constant 1402 : index
    %75 = memref.load %arg1[%c1402] : memref<1466xf32, #tpu.memory_space<smem>>
    %c1_59 = arith.constant 1 : index
    %c0_60 = arith.constant 0 : index
    %c1_61 = arith.constant 1 : index
    %76 = vector.load %arg8[%c1_59, %c0_60, %c1_61] : memref<8x10x10xf32, #tpu.memory_space<vmem>>, vector<1x8x8xf32>
    %77 = vector.shape_cast %76 : vector<1x8x8xf32> to vector<8x8xf32>
    %78 = vector.broadcast %75 : f32 to vector<8x8xf32>
    %79 = arith.mulf %78, %77 : vector<8x8xf32>
    %80 = arith.addf %74, %79 : vector<8x8xf32>
    %c1403 = arith.constant 1403 : index
    %81 = memref.load %arg1[%c1403] : memref<1466xf32, #tpu.memory_space<smem>>
    %c1_62 = arith.constant 1 : index
    %c0_63 = arith.constant 0 : index
    %c2_64 = arith.constant 2 : index
    %82 = vector.load %arg8[%c1_62, %c0_63, %c2_64] : memref<8x10x10xf32, #tpu.memory_space<vmem>>, vector<1x8x8xf32>
    %83 = vector.shape_cast %82 : vector<1x8x8xf32> to vector<8x8xf32>
    %84 = vector.broadcast %81 : f32 to vector<8x8xf32>
    %85 = arith.mulf %84, %83 : vector<8x8xf32>
    %86 = arith.addf %80, %85 : vector<8x8xf32>
    %c1404 = arith.constant 1404 : index
    %87 = memref.load %arg1[%c1404] : memref<1466xf32, #tpu.memory_space<smem>>
    %c1_65 = arith.constant 1 : index
    %c1_66 = arith.constant 1 : index
    %c0_67 = arith.constant 0 : index
    %88 = vector.load %arg8[%c1_65, %c1_66, %c0_67] : memref<8x10x10xf32, #tpu.memory_space<vmem>>, vector<1x8x8xf32>
    %89 = vector.shape_cast %88 : vector<1x8x8xf32> to vector<8x8xf32>
    %90 = vector.broadcast %87 : f32 to vector<8x8xf32>
    %91 = arith.mulf %90, %89 : vector<8x8xf32>
    %92 = arith.addf %86, %91 : vector<8x8xf32>
    %c1405 = arith.constant 1405 : index
    %93 = memref.load %arg1[%c1405] : memref<1466xf32, #tpu.memory_space<smem>>
    %c1_68 = arith.constant 1 : index
    %c1_69 = arith.constant 1 : index
    %c1_70 = arith.constant 1 : index
    %94 = vector.load %arg8[%c1_68, %c1_69, %c1_70] : memref<8x10x10xf32, #tpu.memory_space<vmem>>, vector<1x8x8xf32>
    %95 = vector.shape_cast %94 : vector<1x8x8xf32> to vector<8x8xf32>
    %96 = vector.broadcast %93 : f32 to vector<8x8xf32>
    %97 = arith.mulf %96, %95 : vector<8x8xf32>
    %98 = arith.addf %92, %97 : vector<8x8xf32>
    %c1406 = arith.constant 1406 : index
    %99 = memref.load %arg1[%c1406] : memref<1466xf32, #tpu.memory_space<smem>>
    %c1_71 = arith.constant 1 : index
    %c1_72 = arith.constant 1 : index
    %c2_73 = arith.constant 2 : index
    %100 = vector.load %arg8[%c1_71, %c1_72, %c2_73] : memref<8x10x10xf32, #tpu.memory_space<vmem>>, vector<1x8x8xf32>
    %101 = vector.shape_cast %100 : vector<1x8x8xf32> to vector<8x8xf32>
    %102 = vector.broadcast %99 : f32 to vector<8x8xf32>
    %103 = arith.mulf %102, %101 : vector<8x8xf32>
    %104 = arith.addf %98, %103 : vector<8x8xf32>
    %c1407 = arith.constant 1407 : index
    %105 = memref.load %arg1[%c1407] : memref<1466xf32, #tpu.memory_space<smem>>
    %c1_74 = arith.constant 1 : index
    %c2_75 = arith.constant 2 : index
    %c0_76 = arith.constant 0 : index
    %106 = vector.load %arg8[%c1_74, %c2_75, %c0_76] : memref<8x10x10xf32, #tpu.memory_space<vmem>>, vector<1x8x8xf32>
    %107 = vector.shape_cast %106 : vector<1x8x8xf32> to vector<8x8xf32>
    %108 = vector.broadcast %105 : f32 to vector<8x8xf32>
    %109 = arith.mulf %108, %107 : vector<8x8xf32>
    %110 = arith.addf %104, %109 : vector<8x8xf32>
    %c1408 = arith.constant 1408 : index
    %111 = memref.load %arg1[%c1408] : memref<1466xf32, #tpu.memory_space<smem>>
    %c1_77 = arith.constant 1 : index
    %c2_78 = arith.constant 2 : index
    %c1_79 = arith.constant 1 : index
    %112 = vector.load %arg8[%c1_77, %c2_78, %c1_79] : memref<8x10x10xf32, #tpu.memory_space<vmem>>, vector<1x8x8xf32>
    %113 = vector.shape_cast %112 : vector<1x8x8xf32> to vector<8x8xf32>
    %114 = vector.broadcast %111 : f32 to vector<8x8xf32>
    %115 = arith.mulf %114, %113 : vector<8x8xf32>
    %116 = arith.addf %110, %115 : vector<8x8xf32>
    %c1409 = arith.constant 1409 : index
    %117 = memref.load %arg1[%c1409] : memref<1466xf32, #tpu.memory_space<smem>>
    %c1_80 = arith.constant 1 : index
    %c2_81 = arith.constant 2 : index
    %c2_82 = arith.constant 2 : index
    %118 = vector.load %arg8[%c1_80, %c2_81, %c2_82] : memref<8x10x10xf32, #tpu.memory_space<vmem>>, vector<1x8x8xf32>
    %119 = vector.shape_cast %118 : vector<1x8x8xf32> to vector<8x8xf32>
    %120 = vector.broadcast %117 : f32 to vector<8x8xf32>
    %121 = arith.mulf %120, %119 : vector<8x8xf32>
    %122 = arith.addf %116, %121 : vector<8x8xf32>
    %c1410 = arith.constant 1410 : index
    %123 = memref.load %arg1[%c1410] : memref<1466xf32, #tpu.memory_space<smem>>
    %c2_83 = arith.constant 2 : index
    %c0_84 = arith.constant 0 : index
    %c0_85 = arith.constant 0 : index
    %124 = vector.load %arg8[%c2_83, %c0_84, %c0_85] : memref<8x10x10xf32, #tpu.memory_space<vmem>>, vector<1x8x8xf32>
    %125 = vector.shape_cast %124 : vector<1x8x8xf32> to vector<8x8xf32>
    %126 = vector.broadcast %123 : f32 to vector<8x8xf32>
    %127 = arith.mulf %126, %125 : vector<8x8xf32>
    %128 = arith.addf %122, %127 : vector<8x8xf32>
    %c1411 = arith.constant 1411 : index
    %129 = memref.load %arg1[%c1411] : memref<1466xf32, #tpu.memory_space<smem>>
    %c2_86 = arith.constant 2 : index
    %c0_87 = arith.constant 0 : index
    %c1_88 = arith.constant 1 : index
    %130 = vector.load %arg8[%c2_86, %c0_87, %c1_88] : memref<8x10x10xf32, #tpu.memory_space<vmem>>, vector<1x8x8xf32>
    %131 = vector.shape_cast %130 : vector<1x8x8xf32> to vector<8x8xf32>
    %132 = vector.broadcast %129 : f32 to vector<8x8xf32>
    %133 = arith.mulf %132, %131 : vector<8x8xf32>
    %134 = arith.addf %128, %133 : vector<8x8xf32>
    %c1412 = arith.constant 1412 : index
    %135 = memref.load %arg1[%c1412] : memref<1466xf32, #tpu.memory_space<smem>>
    %c2_89 = arith.constant 2 : index
    %c0_90 = arith.constant 0 : index
    %c2_91 = arith.constant 2 : index
    %136 = vector.load %arg8[%c2_89, %c0_90, %c2_91] : memref<8x10x10xf32, #tpu.memory_space<vmem>>, vector<1x8x8xf32>
    %137 = vector.shape_cast %136 : vector<1x8x8xf32> to vector<8x8xf32>
    %138 = vector.broadcast %135 : f32 to vector<8x8xf32>
    %139 = arith.mulf %138, %137 : vector<8x8xf32>
    %140 = arith.addf %134, %139 : vector<8x8xf32>
    %c1413 = arith.constant 1413 : index
    %141 = memref.load %arg1[%c1413] : memref<1466xf32, #tpu.memory_space<smem>>
    %c2_92 = arith.constant 2 : index
    %c1_93 = arith.constant 1 : index
    %c0_94 = arith.constant 0 : index
    %142 = vector.load %arg8[%c2_92, %c1_93, %c0_94] : memref<8x10x10xf32, #tpu.memory_space<vmem>>, vector<1x8x8xf32>
    %143 = vector.shape_cast %142 : vector<1x8x8xf32> to vector<8x8xf32>
    %144 = vector.broadcast %141 : f32 to vector<8x8xf32>
    %145 = arith.mulf %144, %143 : vector<8x8xf32>
    %146 = arith.addf %140, %145 : vector<8x8xf32>
    %c1414 = arith.constant 1414 : index
    %147 = memref.load %arg1[%c1414] : memref<1466xf32, #tpu.memory_space<smem>>
    %c2_95 = arith.constant 2 : index
    %c1_96 = arith.constant 1 : index
    %c1_97 = arith.constant 1 : index
    %148 = vector.load %arg8[%c2_95, %c1_96, %c1_97] : memref<8x10x10xf32, #tpu.memory_space<vmem>>, vector<1x8x8xf32>
    %149 = vector.shape_cast %148 : vector<1x8x8xf32> to vector<8x8xf32>
    %150 = vector.broadcast %147 : f32 to vector<8x8xf32>
    %151 = arith.mulf %150, %149 : vector<8x8xf32>
    %152 = arith.addf %146, %151 : vector<8x8xf32>
    %c1415 = arith.constant 1415 : index
    %153 = memref.load %arg1[%c1415] : memref<1466xf32, #tpu.memory_space<smem>>
    %c2_98 = arith.constant 2 : index
    %c1_99 = arith.constant 1 : index
    %c2_100 = arith.constant 2 : index
    %154 = vector.load %arg8[%c2_98, %c1_99, %c2_100] : memref<8x10x10xf32, #tpu.memory_space<vmem>>, vector<1x8x8xf32>
    %155 = vector.shape_cast %154 : vector<1x8x8xf32> to vector<8x8xf32>
    %156 = vector.broadcast %153 : f32 to vector<8x8xf32>
    %157 = arith.mulf %156, %155 : vector<8x8xf32>
    %158 = arith.addf %152, %157 : vector<8x8xf32>
    %c1416 = arith.constant 1416 : index
    %159 = memref.load %arg1[%c1416] : memref<1466xf32, #tpu.memory_space<smem>>
    %c2_101 = arith.constant 2 : index
    %c2_102 = arith.constant 2 : index
    %c0_103 = arith.constant 0 : index
    %160 = vector.load %arg8[%c2_101, %c2_102, %c0_103] : memref<8x10x10xf32, #tpu.memory_space<vmem>>, vector<1x8x8xf32>
    %161 = vector.shape_cast %160 : vector<1x8x8xf32> to vector<8x8xf32>
    %162 = vector.broadcast %159 : f32 to vector<8x8xf32>
    %163 = arith.mulf %162, %161 : vector<8x8xf32>
    %164 = arith.addf %158, %163 : vector<8x8xf32>
    %c1417 = arith.constant 1417 : index
    %165 = memref.load %arg1[%c1417] : memref<1466xf32, #tpu.memory_space<smem>>
    %c2_104 = arith.constant 2 : index
    %c2_105 = arith.constant 2 : index
    %c1_106 = arith.constant 1 : index
    %166 = vector.load %arg8[%c2_104, %c2_105, %c1_106] : memref<8x10x10xf32, #tpu.memory_space<vmem>>, vector<1x8x8xf32>
    %167 = vector.shape_cast %166 : vector<1x8x8xf32> to vector<8x8xf32>
    %168 = vector.broadcast %165 : f32 to vector<8x8xf32>
    %169 = arith.mulf %168, %167 : vector<8x8xf32>
    %170 = arith.addf %164, %169 : vector<8x8xf32>
    %c1418 = arith.constant 1418 : index
    %171 = memref.load %arg1[%c1418] : memref<1466xf32, #tpu.memory_space<smem>>
    %c2_107 = arith.constant 2 : index
    %c2_108 = arith.constant 2 : index
    %c2_109 = arith.constant 2 : index
    %172 = vector.load %arg8[%c2_107, %c2_108, %c2_109] : memref<8x10x10xf32, #tpu.memory_space<vmem>>, vector<1x8x8xf32>
    %173 = vector.shape_cast %172 : vector<1x8x8xf32> to vector<8x8xf32>
    %174 = vector.broadcast %171 : f32 to vector<8x8xf32>
    %175 = arith.mulf %174, %173 : vector<8x8xf32>
    %176 = arith.addf %170, %175 : vector<8x8xf32>
    %c1419 = arith.constant 1419 : index
    %177 = memref.load %arg1[%c1419] : memref<1466xf32, #tpu.memory_space<smem>>
    %c3 = arith.constant 3 : index
    %c0_110 = arith.constant 0 : index
    %c0_111 = arith.constant 0 : index
    %178 = vector.load %arg8[%c3, %c0_110, %c0_111] : memref<8x10x10xf32, #tpu.memory_space<vmem>>, vector<1x8x8xf32>
    %179 = vector.shape_cast %178 : vector<1x8x8xf32> to vector<8x8xf32>
    %180 = vector.broadcast %177 : f32 to vector<8x8xf32>
    %181 = arith.mulf %180, %179 : vector<8x8xf32>
    %182 = arith.addf %176, %181 : vector<8x8xf32>
    %c1420 = arith.constant 1420 : index
    %183 = memref.load %arg1[%c1420] : memref<1466xf32, #tpu.memory_space<smem>>
    %c3_112 = arith.constant 3 : index
    %c0_113 = arith.constant 0 : index
    %c1_114 = arith.constant 1 : index
    %184 = vector.load %arg8[%c3_112, %c0_113, %c1_114] : memref<8x10x10xf32, #tpu.memory_space<vmem>>, vector<1x8x8xf32>
    %185 = vector.shape_cast %184 : vector<1x8x8xf32> to vector<8x8xf32>
    %186 = vector.broadcast %183 : f32 to vector<8x8xf32>
    %187 = arith.mulf %186, %185 : vector<8x8xf32>
    %188 = arith.addf %182, %187 : vector<8x8xf32>
    %c1421 = arith.constant 1421 : index
    %189 = memref.load %arg1[%c1421] : memref<1466xf32, #tpu.memory_space<smem>>
    %c3_115 = arith.constant 3 : index
    %c0_116 = arith.constant 0 : index
    %c2_117 = arith.constant 2 : index
    %190 = vector.load %arg8[%c3_115, %c0_116, %c2_117] : memref<8x10x10xf32, #tpu.memory_space<vmem>>, vector<1x8x8xf32>
    %191 = vector.shape_cast %190 : vector<1x8x8xf32> to vector<8x8xf32>
    %192 = vector.broadcast %189 : f32 to vector<8x8xf32>
    %193 = arith.mulf %192, %191 : vector<8x8xf32>
    %194 = arith.addf %188, %193 : vector<8x8xf32>
    %c1422 = arith.constant 1422 : index
    %195 = memref.load %arg1[%c1422] : memref<1466xf32, #tpu.memory_space<smem>>
    %c3_118 = arith.constant 3 : index
    %c1_119 = arith.constant 1 : index
    %c0_120 = arith.constant 0 : index
    %196 = vector.load %arg8[%c3_118, %c1_119, %c0_120] : memref<8x10x10xf32, #tpu.memory_space<vmem>>, vector<1x8x8xf32>
    %197 = vector.shape_cast %196 : vector<1x8x8xf32> to vector<8x8xf32>
    %198 = vector.broadcast %195 : f32 to vector<8x8xf32>
    %199 = arith.mulf %198, %197 : vector<8x8xf32>
    %200 = arith.addf %194, %199 : vector<8x8xf32>
    %c1423 = arith.constant 1423 : index
    %201 = memref.load %arg1[%c1423] : memref<1466xf32, #tpu.memory_space<smem>>
    %c3_121 = arith.constant 3 : index
    %c1_122 = arith.constant 1 : index
    %c1_123 = arith.constant 1 : index
    %202 = vector.load %arg8[%c3_121, %c1_122, %c1_123] : memref<8x10x10xf32, #tpu.memory_space<vmem>>, vector<1x8x8xf32>
    %203 = vector.shape_cast %202 : vector<1x8x8xf32> to vector<8x8xf32>
    %204 = vector.broadcast %201 : f32 to vector<8x8xf32>
    %205 = arith.mulf %204, %203 : vector<8x8xf32>
    %206 = arith.addf %200, %205 : vector<8x8xf32>
    %c1424 = arith.constant 1424 : index
    %207 = memref.load %arg1[%c1424] : memref<1466xf32, #tpu.memory_space<smem>>
    %c3_124 = arith.constant 3 : index
    %c1_125 = arith.constant 1 : index
    %c2_126 = arith.constant 2 : index
    %208 = vector.load %arg8[%c3_124, %c1_125, %c2_126] : memref<8x10x10xf32, #tpu.memory_space<vmem>>, vector<1x8x8xf32>
    %209 = vector.shape_cast %208 : vector<1x8x8xf32> to vector<8x8xf32>
    %210 = vector.broadcast %207 : f32 to vector<8x8xf32>
    %211 = arith.mulf %210, %209 : vector<8x8xf32>
    %212 = arith.addf %206, %211 : vector<8x8xf32>
    %c1425 = arith.constant 1425 : index
    %213 = memref.load %arg1[%c1425] : memref<1466xf32, #tpu.memory_space<smem>>
    %c3_127 = arith.constant 3 : index
    %c2_128 = arith.constant 2 : index
    %c0_129 = arith.constant 0 : index
    %214 = vector.load %arg8[%c3_127, %c2_128, %c0_129] : memref<8x10x10xf32, #tpu.memory_space<vmem>>, vector<1x8x8xf32>
    %215 = vector.shape_cast %214 : vector<1x8x8xf32> to vector<8x8xf32>
    %216 = vector.broadcast %213 : f32 to vector<8x8xf32>
    %217 = arith.mulf %216, %215 : vector<8x8xf32>
    %218 = arith.addf %212, %217 : vector<8x8xf32>
    %c1426 = arith.constant 1426 : index
    %219 = memref.load %arg1[%c1426] : memref<1466xf32, #tpu.memory_space<smem>>
    %c3_130 = arith.constant 3 : index
    %c2_131 = arith.constant 2 : index
    %c1_132 = arith.constant 1 : index
    %220 = vector.load %arg8[%c3_130, %c2_131, %c1_132] : memref<8x10x10xf32, #tpu.memory_space<vmem>>, vector<1x8x8xf32>
    %221 = vector.shape_cast %220 : vector<1x8x8xf32> to vector<8x8xf32>
    %222 = vector.broadcast %219 : f32 to vector<8x8xf32>
    %223 = arith.mulf %222, %221 : vector<8x8xf32>
    %224 = arith.addf %218, %223 : vector<8x8xf32>
    %c1427 = arith.constant 1427 : index
    %225 = memref.load %arg1[%c1427] : memref<1466xf32, #tpu.memory_space<smem>>
    %c3_133 = arith.constant 3 : index
    %c2_134 = arith.constant 2 : index
    %c2_135 = arith.constant 2 : index
    %226 = vector.load %arg8[%c3_133, %c2_134, %c2_135] : memref<8x10x10xf32, #tpu.memory_space<vmem>>, vector<1x8x8xf32>
    %227 = vector.shape_cast %226 : vector<1x8x8xf32> to vector<8x8xf32>
    %228 = vector.broadcast %225 : f32 to vector<8x8xf32>
    %229 = arith.mulf %228, %227 : vector<8x8xf32>
    %230 = arith.addf %224, %229 : vector<8x8xf32>
    %c1428 = arith.constant 1428 : index
    %231 = memref.load %arg1[%c1428] : memref<1466xf32, #tpu.memory_space<smem>>
    %c4 = arith.constant 4 : index
    %c0_136 = arith.constant 0 : index
    %c0_137 = arith.constant 0 : index
    %232 = vector.load %arg8[%c4, %c0_136, %c0_137] : memref<8x10x10xf32, #tpu.memory_space<vmem>>, vector<1x8x8xf32>
    %233 = vector.shape_cast %232 : vector<1x8x8xf32> to vector<8x8xf32>
    %234 = vector.broadcast %231 : f32 to vector<8x8xf32>
    %235 = arith.mulf %234, %233 : vector<8x8xf32>
    %236 = arith.addf %230, %235 : vector<8x8xf32>
    %c1429 = arith.constant 1429 : index
    %237 = memref.load %arg1[%c1429] : memref<1466xf32, #tpu.memory_space<smem>>
    %c4_138 = arith.constant 4 : index
    %c0_139 = arith.constant 0 : index
    %c1_140 = arith.constant 1 : index
    %238 = vector.load %arg8[%c4_138, %c0_139, %c1_140] : memref<8x10x10xf32, #tpu.memory_space<vmem>>, vector<1x8x8xf32>
    %239 = vector.shape_cast %238 : vector<1x8x8xf32> to vector<8x8xf32>
    %240 = vector.broadcast %237 : f32 to vector<8x8xf32>
    %241 = arith.mulf %240, %239 : vector<8x8xf32>
    %242 = arith.addf %236, %241 : vector<8x8xf32>
    %c1430 = arith.constant 1430 : index
    %243 = memref.load %arg1[%c1430] : memref<1466xf32, #tpu.memory_space<smem>>
    %c4_141 = arith.constant 4 : index
    %c0_142 = arith.constant 0 : index
    %c2_143 = arith.constant 2 : index
    %244 = vector.load %arg8[%c4_141, %c0_142, %c2_143] : memref<8x10x10xf32, #tpu.memory_space<vmem>>, vector<1x8x8xf32>
    %245 = vector.shape_cast %244 : vector<1x8x8xf32> to vector<8x8xf32>
    %246 = vector.broadcast %243 : f32 to vector<8x8xf32>
    %247 = arith.mulf %246, %245 : vector<8x8xf32>
    %248 = arith.addf %242, %247 : vector<8x8xf32>
    %c1431 = arith.constant 1431 : index
    %249 = memref.load %arg1[%c1431] : memref<1466xf32, #tpu.memory_space<smem>>
    %c4_144 = arith.constant 4 : index
    %c1_145 = arith.constant 1 : index
    %c0_146 = arith.constant 0 : index
    %250 = vector.load %arg8[%c4_144, %c1_145, %c0_146] : memref<8x10x10xf32, #tpu.memory_space<vmem>>, vector<1x8x8xf32>
    %251 = vector.shape_cast %250 : vector<1x8x8xf32> to vector<8x8xf32>
    %252 = vector.broadcast %249 : f32 to vector<8x8xf32>
    %253 = arith.mulf %252, %251 : vector<8x8xf32>
    %254 = arith.addf %248, %253 : vector<8x8xf32>
    %c1432 = arith.constant 1432 : index
    %255 = memref.load %arg1[%c1432] : memref<1466xf32, #tpu.memory_space<smem>>
    %c4_147 = arith.constant 4 : index
    %c1_148 = arith.constant 1 : index
    %c1_149 = arith.constant 1 : index
    %256 = vector.load %arg8[%c4_147, %c1_148, %c1_149] : memref<8x10x10xf32, #tpu.memory_space<vmem>>, vector<1x8x8xf32>
    %257 = vector.shape_cast %256 : vector<1x8x8xf32> to vector<8x8xf32>
    %258 = vector.broadcast %255 : f32 to vector<8x8xf32>
    %259 = arith.mulf %258, %257 : vector<8x8xf32>
    %260 = arith.addf %254, %259 : vector<8x8xf32>
    %c1433 = arith.constant 1433 : index
    %261 = memref.load %arg1[%c1433] : memref<1466xf32, #tpu.memory_space<smem>>
    %c4_150 = arith.constant 4 : index
    %c1_151 = arith.constant 1 : index
    %c2_152 = arith.constant 2 : index
    %262 = vector.load %arg8[%c4_150, %c1_151, %c2_152] : memref<8x10x10xf32, #tpu.memory_space<vmem>>, vector<1x8x8xf32>
    %263 = vector.shape_cast %262 : vector<1x8x8xf32> to vector<8x8xf32>
    %264 = vector.broadcast %261 : f32 to vector<8x8xf32>
    %265 = arith.mulf %264, %263 : vector<8x8xf32>
    %266 = arith.addf %260, %265 : vector<8x8xf32>
    %c1434 = arith.constant 1434 : index
    %267 = memref.load %arg1[%c1434] : memref<1466xf32, #tpu.memory_space<smem>>
    %c4_153 = arith.constant 4 : index
    %c2_154 = arith.constant 2 : index
    %c0_155 = arith.constant 0 : index
    %268 = vector.load %arg8[%c4_153, %c2_154, %c0_155] : memref<8x10x10xf32, #tpu.memory_space<vmem>>, vector<1x8x8xf32>
    %269 = vector.shape_cast %268 : vector<1x8x8xf32> to vector<8x8xf32>
    %270 = vector.broadcast %267 : f32 to vector<8x8xf32>
    %271 = arith.mulf %270, %269 : vector<8x8xf32>
    %272 = arith.addf %266, %271 : vector<8x8xf32>
    %c1435 = arith.constant 1435 : index
    %273 = memref.load %arg1[%c1435] : memref<1466xf32, #tpu.memory_space<smem>>
    %c4_156 = arith.constant 4 : index
    %c2_157 = arith.constant 2 : index
    %c1_158 = arith.constant 1 : index
    %274 = vector.load %arg8[%c4_156, %c2_157, %c1_158] : memref<8x10x10xf32, #tpu.memory_space<vmem>>, vector<1x8x8xf32>
    %275 = vector.shape_cast %274 : vector<1x8x8xf32> to vector<8x8xf32>
    %276 = vector.broadcast %273 : f32 to vector<8x8xf32>
    %277 = arith.mulf %276, %275 : vector<8x8xf32>
    %278 = arith.addf %272, %277 : vector<8x8xf32>
    %c1436 = arith.constant 1436 : index
    %279 = memref.load %arg1[%c1436] : memref<1466xf32, #tpu.memory_space<smem>>
    %c4_159 = arith.constant 4 : index
    %c2_160 = arith.constant 2 : index
    %c2_161 = arith.constant 2 : index
    %280 = vector.load %arg8[%c4_159, %c2_160, %c2_161] : memref<8x10x10xf32, #tpu.memory_space<vmem>>, vector<1x8x8xf32>
    %281 = vector.shape_cast %280 : vector<1x8x8xf32> to vector<8x8xf32>
    %282 = vector.broadcast %279 : f32 to vector<8x8xf32>
    %283 = arith.mulf %282, %281 : vector<8x8xf32>
    %284 = arith.addf %278, %283 : vector<8x8xf32>
    %c1437 = arith.constant 1437 : index
    %285 = memref.load %arg1[%c1437] : memref<1466xf32, #tpu.memory_space<smem>>
    %c5 = arith.constant 5 : index
    %c0_162 = arith.constant 0 : index
    %c0_163 = arith.constant 0 : index
    %286 = vector.load %arg8[%c5, %c0_162, %c0_163] : memref<8x10x10xf32, #tpu.memory_space<vmem>>, vector<1x8x8xf32>
    %287 = vector.shape_cast %286 : vector<1x8x8xf32> to vector<8x8xf32>
    %288 = vector.broadcast %285 : f32 to vector<8x8xf32>
    %289 = arith.mulf %288, %287 : vector<8x8xf32>
    %290 = arith.addf %284, %289 : vector<8x8xf32>
    %c1438 = arith.constant 1438 : index
    %291 = memref.load %arg1[%c1438] : memref<1466xf32, #tpu.memory_space<smem>>
    %c5_164 = arith.constant 5 : index
    %c0_165 = arith.constant 0 : index
    %c1_166 = arith.constant 1 : index
    %292 = vector.load %arg8[%c5_164, %c0_165, %c1_166] : memref<8x10x10xf32, #tpu.memory_space<vmem>>, vector<1x8x8xf32>
    %293 = vector.shape_cast %292 : vector<1x8x8xf32> to vector<8x8xf32>
    %294 = vector.broadcast %291 : f32 to vector<8x8xf32>
    %295 = arith.mulf %294, %293 : vector<8x8xf32>
    %296 = arith.addf %290, %295 : vector<8x8xf32>
    %c1439 = arith.constant 1439 : index
    %297 = memref.load %arg1[%c1439] : memref<1466xf32, #tpu.memory_space<smem>>
    %c5_167 = arith.constant 5 : index
    %c0_168 = arith.constant 0 : index
    %c2_169 = arith.constant 2 : index
    %298 = vector.load %arg8[%c5_167, %c0_168, %c2_169] : memref<8x10x10xf32, #tpu.memory_space<vmem>>, vector<1x8x8xf32>
    %299 = vector.shape_cast %298 : vector<1x8x8xf32> to vector<8x8xf32>
    %300 = vector.broadcast %297 : f32 to vector<8x8xf32>
    %301 = arith.mulf %300, %299 : vector<8x8xf32>
    %302 = arith.addf %296, %301 : vector<8x8xf32>
    %c1440 = arith.constant 1440 : index
    %303 = memref.load %arg1[%c1440] : memref<1466xf32, #tpu.memory_space<smem>>
    %c5_170 = arith.constant 5 : index
    %c1_171 = arith.constant 1 : index
    %c0_172 = arith.constant 0 : index
    %304 = vector.load %arg8[%c5_170, %c1_171, %c0_172] : memref<8x10x10xf32, #tpu.memory_space<vmem>>, vector<1x8x8xf32>
    %305 = vector.shape_cast %304 : vector<1x8x8xf32> to vector<8x8xf32>
    %306 = vector.broadcast %303 : f32 to vector<8x8xf32>
    %307 = arith.mulf %306, %305 : vector<8x8xf32>
    %308 = arith.addf %302, %307 : vector<8x8xf32>
    %c1441 = arith.constant 1441 : index
    %309 = memref.load %arg1[%c1441] : memref<1466xf32, #tpu.memory_space<smem>>
    %c5_173 = arith.constant 5 : index
    %c1_174 = arith.constant 1 : index
    %c1_175 = arith.constant 1 : index
    %310 = vector.load %arg8[%c5_173, %c1_174, %c1_175] : memref<8x10x10xf32, #tpu.memory_space<vmem>>, vector<1x8x8xf32>
    %311 = vector.shape_cast %310 : vector<1x8x8xf32> to vector<8x8xf32>
    %312 = vector.broadcast %309 : f32 to vector<8x8xf32>
    %313 = arith.mulf %312, %311 : vector<8x8xf32>
    %314 = arith.addf %308, %313 : vector<8x8xf32>
    %c1442 = arith.constant 1442 : index
    %315 = memref.load %arg1[%c1442] : memref<1466xf32, #tpu.memory_space<smem>>
    %c5_176 = arith.constant 5 : index
    %c1_177 = arith.constant 1 : index
    %c2_178 = arith.constant 2 : index
    %316 = vector.load %arg8[%c5_176, %c1_177, %c2_178] : memref<8x10x10xf32, #tpu.memory_space<vmem>>, vector<1x8x8xf32>
    %317 = vector.shape_cast %316 : vector<1x8x8xf32> to vector<8x8xf32>
    %318 = vector.broadcast %315 : f32 to vector<8x8xf32>
    %319 = arith.mulf %318, %317 : vector<8x8xf32>
    %320 = arith.addf %314, %319 : vector<8x8xf32>
    %c1443 = arith.constant 1443 : index
    %321 = memref.load %arg1[%c1443] : memref<1466xf32, #tpu.memory_space<smem>>
    %c5_179 = arith.constant 5 : index
    %c2_180 = arith.constant 2 : index
    %c0_181 = arith.constant 0 : index
    %322 = vector.load %arg8[%c5_179, %c2_180, %c0_181] : memref<8x10x10xf32, #tpu.memory_space<vmem>>, vector<1x8x8xf32>
    %323 = vector.shape_cast %322 : vector<1x8x8xf32> to vector<8x8xf32>
    %324 = vector.broadcast %321 : f32 to vector<8x8xf32>
    %325 = arith.mulf %324, %323 : vector<8x8xf32>
    %326 = arith.addf %320, %325 : vector<8x8xf32>
    %c1444 = arith.constant 1444 : index
    %327 = memref.load %arg1[%c1444] : memref<1466xf32, #tpu.memory_space<smem>>
    %c5_182 = arith.constant 5 : index
    %c2_183 = arith.constant 2 : index
    %c1_184 = arith.constant 1 : index
    %328 = vector.load %arg8[%c5_182, %c2_183, %c1_184] : memref<8x10x10xf32, #tpu.memory_space<vmem>>, vector<1x8x8xf32>
    %329 = vector.shape_cast %328 : vector<1x8x8xf32> to vector<8x8xf32>
    %330 = vector.broadcast %327 : f32 to vector<8x8xf32>
    %331 = arith.mulf %330, %329 : vector<8x8xf32>
    %332 = arith.addf %326, %331 : vector<8x8xf32>
    %c1445 = arith.constant 1445 : index
    %333 = memref.load %arg1[%c1445] : memref<1466xf32, #tpu.memory_space<smem>>
    %c5_185 = arith.constant 5 : index
    %c2_186 = arith.constant 2 : index
    %c2_187 = arith.constant 2 : index
    %334 = vector.load %arg8[%c5_185, %c2_186, %c2_187] : memref<8x10x10xf32, #tpu.memory_space<vmem>>, vector<1x8x8xf32>
    %335 = vector.shape_cast %334 : vector<1x8x8xf32> to vector<8x8xf32>
    %336 = vector.broadcast %333 : f32 to vector<8x8xf32>
    %337 = arith.mulf %336, %335 : vector<8x8xf32>
    %338 = arith.addf %332, %337 : vector<8x8xf32>
    %c1446 = arith.constant 1446 : index
    %339 = memref.load %arg1[%c1446] : memref<1466xf32, #tpu.memory_space<smem>>
    %c6 = arith.constant 6 : index
    %c0_188 = arith.constant 0 : index
    %c0_189 = arith.constant 0 : index
    %340 = vector.load %arg8[%c6, %c0_188, %c0_189] : memref<8x10x10xf32, #tpu.memory_space<vmem>>, vector<1x8x8xf32>
    %341 = vector.shape_cast %340 : vector<1x8x8xf32> to vector<8x8xf32>
    %342 = vector.broadcast %339 : f32 to vector<8x8xf32>
    %343 = arith.mulf %342, %341 : vector<8x8xf32>
    %344 = arith.addf %338, %343 : vector<8x8xf32>
    %c1447 = arith.constant 1447 : index
    %345 = memref.load %arg1[%c1447] : memref<1466xf32, #tpu.memory_space<smem>>
    %c6_190 = arith.constant 6 : index
    %c0_191 = arith.constant 0 : index
    %c1_192 = arith.constant 1 : index
    %346 = vector.load %arg8[%c6_190, %c0_191, %c1_192] : memref<8x10x10xf32, #tpu.memory_space<vmem>>, vector<1x8x8xf32>
    %347 = vector.shape_cast %346 : vector<1x8x8xf32> to vector<8x8xf32>
    %348 = vector.broadcast %345 : f32 to vector<8x8xf32>
    %349 = arith.mulf %348, %347 : vector<8x8xf32>
    %350 = arith.addf %344, %349 : vector<8x8xf32>
    %c1448 = arith.constant 1448 : index
    %351 = memref.load %arg1[%c1448] : memref<1466xf32, #tpu.memory_space<smem>>
    %c6_193 = arith.constant 6 : index
    %c0_194 = arith.constant 0 : index
    %c2_195 = arith.constant 2 : index
    %352 = vector.load %arg8[%c6_193, %c0_194, %c2_195] : memref<8x10x10xf32, #tpu.memory_space<vmem>>, vector<1x8x8xf32>
    %353 = vector.shape_cast %352 : vector<1x8x8xf32> to vector<8x8xf32>
    %354 = vector.broadcast %351 : f32 to vector<8x8xf32>
    %355 = arith.mulf %354, %353 : vector<8x8xf32>
    %356 = arith.addf %350, %355 : vector<8x8xf32>
    %c1449 = arith.constant 1449 : index
    %357 = memref.load %arg1[%c1449] : memref<1466xf32, #tpu.memory_space<smem>>
    %c6_196 = arith.constant 6 : index
    %c1_197 = arith.constant 1 : index
    %c0_198 = arith.constant 0 : index
    %358 = vector.load %arg8[%c6_196, %c1_197, %c0_198] : memref<8x10x10xf32, #tpu.memory_space<vmem>>, vector<1x8x8xf32>
    %359 = vector.shape_cast %358 : vector<1x8x8xf32> to vector<8x8xf32>
    %360 = vector.broadcast %357 : f32 to vector<8x8xf32>
    %361 = arith.mulf %360, %359 : vector<8x8xf32>
    %362 = arith.addf %356, %361 : vector<8x8xf32>
    %c1450 = arith.constant 1450 : index
    %363 = memref.load %arg1[%c1450] : memref<1466xf32, #tpu.memory_space<smem>>
    %c6_199 = arith.constant 6 : index
    %c1_200 = arith.constant 1 : index
    %c1_201 = arith.constant 1 : index
    %364 = vector.load %arg8[%c6_199, %c1_200, %c1_201] : memref<8x10x10xf32, #tpu.memory_space<vmem>>, vector<1x8x8xf32>
    %365 = vector.shape_cast %364 : vector<1x8x8xf32> to vector<8x8xf32>
    %366 = vector.broadcast %363 : f32 to vector<8x8xf32>
    %367 = arith.mulf %366, %365 : vector<8x8xf32>
    %368 = arith.addf %362, %367 : vector<8x8xf32>
    %c1451 = arith.constant 1451 : index
    %369 = memref.load %arg1[%c1451] : memref<1466xf32, #tpu.memory_space<smem>>
    %c6_202 = arith.constant 6 : index
    %c1_203 = arith.constant 1 : index
    %c2_204 = arith.constant 2 : index
    %370 = vector.load %arg8[%c6_202, %c1_203, %c2_204] : memref<8x10x10xf32, #tpu.memory_space<vmem>>, vector<1x8x8xf32>
    %371 = vector.shape_cast %370 : vector<1x8x8xf32> to vector<8x8xf32>
    %372 = vector.broadcast %369 : f32 to vector<8x8xf32>
    %373 = arith.mulf %372, %371 : vector<8x8xf32>
    %374 = arith.addf %368, %373 : vector<8x8xf32>
    %c1452 = arith.constant 1452 : index
    %375 = memref.load %arg1[%c1452] : memref<1466xf32, #tpu.memory_space<smem>>
    %c6_205 = arith.constant 6 : index
    %c2_206 = arith.constant 2 : index
    %c0_207 = arith.constant 0 : index
    %376 = vector.load %arg8[%c6_205, %c2_206, %c0_207] : memref<8x10x10xf32, #tpu.memory_space<vmem>>, vector<1x8x8xf32>
    %377 = vector.shape_cast %376 : vector<1x8x8xf32> to vector<8x8xf32>
    %378 = vector.broadcast %375 : f32 to vector<8x8xf32>
    %379 = arith.mulf %378, %377 : vector<8x8xf32>
    %380 = arith.addf %374, %379 : vector<8x8xf32>
    %c1453 = arith.constant 1453 : index
    %381 = memref.load %arg1[%c1453] : memref<1466xf32, #tpu.memory_space<smem>>
    %c6_208 = arith.constant 6 : index
    %c2_209 = arith.constant 2 : index
    %c1_210 = arith.constant 1 : index
    %382 = vector.load %arg8[%c6_208, %c2_209, %c1_210] : memref<8x10x10xf32, #tpu.memory_space<vmem>>, vector<1x8x8xf32>
    %383 = vector.shape_cast %382 : vector<1x8x8xf32> to vector<8x8xf32>
    %384 = vector.broadcast %381 : f32 to vector<8x8xf32>
    %385 = arith.mulf %384, %383 : vector<8x8xf32>
    %386 = arith.addf %380, %385 : vector<8x8xf32>
    %c1454 = arith.constant 1454 : index
    %387 = memref.load %arg1[%c1454] : memref<1466xf32, #tpu.memory_space<smem>>
    %c6_211 = arith.constant 6 : index
    %c2_212 = arith.constant 2 : index
    %c2_213 = arith.constant 2 : index
    %388 = vector.load %arg8[%c6_211, %c2_212, %c2_213] : memref<8x10x10xf32, #tpu.memory_space<vmem>>, vector<1x8x8xf32>
    %389 = vector.shape_cast %388 : vector<1x8x8xf32> to vector<8x8xf32>
    %390 = vector.broadcast %387 : f32 to vector<8x8xf32>
    %391 = arith.mulf %390, %389 : vector<8x8xf32>
    %392 = arith.addf %386, %391 : vector<8x8xf32>
    %c1455 = arith.constant 1455 : index
    %393 = memref.load %arg1[%c1455] : memref<1466xf32, #tpu.memory_space<smem>>
    %c7 = arith.constant 7 : index
    %c0_214 = arith.constant 0 : index
    %c0_215 = arith.constant 0 : index
    %394 = vector.load %arg8[%c7, %c0_214, %c0_215] : memref<8x10x10xf32, #tpu.memory_space<vmem>>, vector<1x8x8xf32>
    %395 = vector.shape_cast %394 : vector<1x8x8xf32> to vector<8x8xf32>
    %396 = vector.broadcast %393 : f32 to vector<8x8xf32>
    %397 = arith.mulf %396, %395 : vector<8x8xf32>
    %398 = arith.addf %392, %397 : vector<8x8xf32>
    %c1456 = arith.constant 1456 : index
    %399 = memref.load %arg1[%c1456] : memref<1466xf32, #tpu.memory_space<smem>>
    %c7_216 = arith.constant 7 : index
    %c0_217 = arith.constant 0 : index
    %c1_218 = arith.constant 1 : index
    %400 = vector.load %arg8[%c7_216, %c0_217, %c1_218] : memref<8x10x10xf32, #tpu.memory_space<vmem>>, vector<1x8x8xf32>
    %401 = vector.shape_cast %400 : vector<1x8x8xf32> to vector<8x8xf32>
    %402 = vector.broadcast %399 : f32 to vector<8x8xf32>
    %403 = arith.mulf %402, %401 : vector<8x8xf32>
    %404 = arith.addf %398, %403 : vector<8x8xf32>
    %c1457 = arith.constant 1457 : index
    %405 = memref.load %arg1[%c1457] : memref<1466xf32, #tpu.memory_space<smem>>
    %c7_219 = arith.constant 7 : index
    %c0_220 = arith.constant 0 : index
    %c2_221 = arith.constant 2 : index
    %406 = vector.load %arg8[%c7_219, %c0_220, %c2_221] : memref<8x10x10xf32, #tpu.memory_space<vmem>>, vector<1x8x8xf32>
    %407 = vector.shape_cast %406 : vector<1x8x8xf32> to vector<8x8xf32>
    %408 = vector.broadcast %405 : f32 to vector<8x8xf32>
    %409 = arith.mulf %408, %407 : vector<8x8xf32>
    %410 = arith.addf %404, %409 : vector<8x8xf32>
    %c1458 = arith.constant 1458 : index
    %411 = memref.load %arg1[%c1458] : memref<1466xf32, #tpu.memory_space<smem>>
    %c7_222 = arith.constant 7 : index
    %c1_223 = arith.constant 1 : index
    %c0_224 = arith.constant 0 : index
    %412 = vector.load %arg8[%c7_222, %c1_223, %c0_224] : memref<8x10x10xf32, #tpu.memory_space<vmem>>, vector<1x8x8xf32>
    %413 = vector.shape_cast %412 : vector<1x8x8xf32> to vector<8x8xf32>
    %414 = vector.broadcast %411 : f32 to vector<8x8xf32>
    %415 = arith.mulf %414, %413 : vector<8x8xf32>
    %416 = arith.addf %410, %415 : vector<8x8xf32>
    %c1459 = arith.constant 1459 : index
    %417 = memref.load %arg1[%c1459] : memref<1466xf32, #tpu.memory_space<smem>>
    %c7_225 = arith.constant 7 : index
    %c1_226 = arith.constant 1 : index
    %c1_227 = arith.constant 1 : index
    %418 = vector.load %arg8[%c7_225, %c1_226, %c1_227] : memref<8x10x10xf32, #tpu.memory_space<vmem>>, vector<1x8x8xf32>
    %419 = vector.shape_cast %418 : vector<1x8x8xf32> to vector<8x8xf32>
    %420 = vector.broadcast %417 : f32 to vector<8x8xf32>
    %421 = arith.mulf %420, %419 : vector<8x8xf32>
    %422 = arith.addf %416, %421 : vector<8x8xf32>
    %c1460 = arith.constant 1460 : index
    %423 = memref.load %arg1[%c1460] : memref<1466xf32, #tpu.memory_space<smem>>
    %c7_228 = arith.constant 7 : index
    %c1_229 = arith.constant 1 : index
    %c2_230 = arith.constant 2 : index
    %424 = vector.load %arg8[%c7_228, %c1_229, %c2_230] : memref<8x10x10xf32, #tpu.memory_space<vmem>>, vector<1x8x8xf32>
    %425 = vector.shape_cast %424 : vector<1x8x8xf32> to vector<8x8xf32>
    %426 = vector.broadcast %423 : f32 to vector<8x8xf32>
    %427 = arith.mulf %426, %425 : vector<8x8xf32>
    %428 = arith.addf %422, %427 : vector<8x8xf32>
    %c1461 = arith.constant 1461 : index
    %429 = memref.load %arg1[%c1461] : memref<1466xf32, #tpu.memory_space<smem>>
    %c7_231 = arith.constant 7 : index
    %c2_232 = arith.constant 2 : index
    %c0_233 = arith.constant 0 : index
    %430 = vector.load %arg8[%c7_231, %c2_232, %c0_233] : memref<8x10x10xf32, #tpu.memory_space<vmem>>, vector<1x8x8xf32>
    %431 = vector.shape_cast %430 : vector<1x8x8xf32> to vector<8x8xf32>
    %432 = vector.broadcast %429 : f32 to vector<8x8xf32>
    %433 = arith.mulf %432, %431 : vector<8x8xf32>
    %434 = arith.addf %428, %433 : vector<8x8xf32>
    %c1462 = arith.constant 1462 : index
    %435 = memref.load %arg1[%c1462] : memref<1466xf32, #tpu.memory_space<smem>>
    %c7_234 = arith.constant 7 : index
    %c2_235 = arith.constant 2 : index
    %c1_236 = arith.constant 1 : index
    %436 = vector.load %arg8[%c7_234, %c2_235, %c1_236] : memref<8x10x10xf32, #tpu.memory_space<vmem>>, vector<1x8x8xf32>
    %437 = vector.shape_cast %436 : vector<1x8x8xf32> to vector<8x8xf32>
    %438 = vector.broadcast %435 : f32 to vector<8x8xf32>
    %439 = arith.mulf %438, %437 : vector<8x8xf32>
    %440 = arith.addf %434, %439 : vector<8x8xf32>
    %c1463 = arith.constant 1463 : index
    %441 = memref.load %arg1[%c1463] : memref<1466xf32, #tpu.memory_space<smem>>
    %c7_237 = arith.constant 7 : index
    %c2_238 = arith.constant 2 : index
    %c2_239 = arith.constant 2 : index
    %442 = vector.load %arg8[%c7_237, %c2_238, %c2_239] : memref<8x10x10xf32, #tpu.memory_space<vmem>>, vector<1x8x8xf32>
    %443 = vector.shape_cast %442 : vector<1x8x8xf32> to vector<8x8xf32>
    %444 = vector.broadcast %441 : f32 to vector<8x8xf32>
    %445 = arith.mulf %444, %443 : vector<8x8xf32>
    %446 = arith.addf %440, %445 : vector<8x8xf32>
    %c1464 = arith.constant 1464 : index
    %447 = memref.load %arg1[%c1464] : memref<1466xf32, #tpu.memory_space<smem>>
    %448 = vector.broadcast %447 : f32 to vector<8x8xf32>
    %449 = arith.addf %446, %448 : vector<8x8xf32>
    %cst_240 = arith.constant 0.000000e+00 : f32
    %450 = vector.broadcast %cst_240 : f32 to vector<8x8xf32>
    %451 = arith.maximumf %449, %450 : vector<8x8xf32>
    %c0_241 = arith.constant 0 : index
    %c0_242 = arith.constant 0 : index
    %452 = vector.load %arg3[%c0_241, %c0_242] : memref<8x8xf32, #tpu.memory_space<vmem>>, vector<8x8xf32>
    %453 = arith.mulf %451, %452 : vector<8x8xf32>
    %cst_243 = arith.constant dense<0.000000e+00> : vector<8xf32>
    %454 = vector.multi_reduction <add>, %453, %cst_243 [1] : vector<8x8xf32> to vector<8xf32>
    %455 = vector.shape_cast %454 : vector<8xf32> to vector<8x1xf32>
    %cst_244 = arith.constant dense<0.000000e+00> : vector<1xf32>
    %456 = vector.multi_reduction <add>, %455, %cst_244 [0] : vector<8x1xf32> to vector<1xf32>
    %457 = vector.shape_cast %456 : vector<1xf32> to vector<1x1xf32>
    %c1465 = arith.constant 1465 : index
    %458 = memref.load %arg1[%c1465] : memref<1466xf32, #tpu.memory_space<smem>>
    %459 = vector.broadcast %458 : f32 to vector<1x1xf32>
    %460 = arith.addf %457, %459 : vector<1x1xf32>
    %cst_245 = arith.constant 0.000000e+00 : f32
    %461 = vector.broadcast %cst_245 : f32 to vector<1x1xf32>
    %462 = arith.subf %461, %460 : vector<1x1xf32>
    %463 = math.exp %462 : vector<1x1xf32>
    %cst_246 = arith.constant 1.000000e+00 : f32
    %464 = vector.broadcast %cst_246 : f32 to vector<1x1xf32>
    %465 = arith.addf %464, %463 : vector<1x1xf32>
    %cst_247 = arith.constant 1.000000e+00 : f32
    %466 = vector.broadcast %cst_247 : f32 to vector<1x1xf32>
    %467 = arith.divf %466, %465 : vector<1x1xf32>
    %468 = vector.shape_cast %467 : vector<1x1xf32> to vector<1x1x1xf32>
    %469 = vector.shape_cast %468 : vector<1x1x1xf32> to vector<1x1x1xf32>
    %470 = vector.broadcast %469 : vector<1x1x1xf32> to vector<1x1x128xf32>
    %c0_248 = arith.constant 0 : index
    %c0_249 = arith.constant 0 : index
    %c0_250 = arith.constant 0 : index
    %471 = vector.load %arg4[%c0_248, %c0_249, %c0_250] : memref<1x1x128xf32, #tpu.memory_space<vmem>>, vector<1x1x128xf32>
    tpu.vector_store %arg4[%c0_248, %c0_249, %c0_250], %470 {strides = array<i32>} : memref<1x1x128xf32, #tpu.memory_space<vmem>>, vector<1x1x128xf32>,
    return
  }
  func.func @transform_0(%arg0: i32) -> i32 {
    %c0_i32 = arith.constant 0 : i32
    %c0_i32_0 = arith.constant 0 : i32
    return %c0_i32 : i32
  }
  func.func @transform_1(%arg0: i32) -> (i32, i32, i32, i32) {
    %c0_i32 = arith.constant 0 : i32
    %c0_i32_0 = arith.constant 0 : i32
    %c0_i32_1 = arith.constant 0 : i32
    %c0_i32_2 = arith.constant 0 : i32
    return %arg0, %c0_i32, %c0_i32_0, %c0_i32_1 : i32, i32, i32, i32
  }
  func.func @transform_2(%arg0: i32) -> (i32, i32) {
    %c0_i32 = arith.constant 0 : i32
    %c0_i32_0 = arith.constant 0 : i32
    %c0_i32_1 = arith.constant 0 : i32
    return %c0_i32, %c0_i32_0 : i32, i32
  }
  func.func @transform_3(%arg0: i32) -> (i32, i32, i32) {
    %c0_i32 = arith.constant 0 : i32
    %c0_i32_0 = arith.constant 0 : i32
    %c0_i32_1 = arith.constant 0 : i32
    return %arg0, %c0_i32, %c0_i32_0 : i32, i32, i32
  }
}

</mosaic_0001>

<llo_original>
// kernel: discriminator_forward.1
$region0: #{discriminator_forward.1}
  #allocation0 [shape = 'u32[]', space=smem, size = 0x4, offset = 0x4, fixed_abs, tag = 'smem constant byte address 0x4 - core index']
  #allocation1 [shape = 'u32[144,128]{1,0:T(1,128)}', space=vmem, size = 0x12000, scoped, tag = 'internal scratch']
  #allocation2 [shape = 'f32[3,66,66]{2,1,0:T(8,128)}', space=vmem, size = 0x1b000, scoped, tag = 'scratch operand']
  #allocation3 [shape = 'f32[8,66,66]{2,1,0:T(8,128)}', space=vmem, size = 0x48000, scoped, tag = 'scratch operand']
  #allocation4 [shape = 'f32[8,14,14]{2,1,0:T(8,128)}', space=vmem, size = 0x10000, scoped, tag = 'scratch operand']
  #allocation5 [shape = 'f32[8,10,10]{2,1,0:T(8,128)}', space=vmem, size = 0x10000, scoped, tag = 'scratch operand']
  %s0 = inlined_call_operand.hbm [shape: f32[1466], index: 0, kind: input, shape index: {}]
  %s1 = inlined_call_operand.hbm [shape: f32[2,3,64,64], index: 1, kind: input, shape index: {}]
  %s2 = inlined_call_operand.hbm [shape: f32[8,8], index: 2, kind: input, shape index: {}]
  %s3 = inlined_call_operand.vmem [shape: f32[2,1,128], index: 3, kind: output, shape index: {}]
  %s4 = sld [smem:[#allocation0]]
  $region78: #{discriminator_forward.1} parent=0
    _
  %s6 = ssub.s32 1, %s4
  %s7 = scalar_select 0, %s6, %s4
  $region1: #{discriminator_forward.1} parent=0
    #allocation6 [shape = 'u8[6144]{0}', space=smem, size = 0x1800, scoped, tag = 'input window, operand 0, single buffered']
    #allocation7 [shape = 's32[2]{0}', space=sflag, size = 0x8, scoped, tag = 'scoped memory for discriminator_forward.1']
    #allocation8 [shape = 's32[2]{0}', space=sflag, size = 0x8, scoped, tag = 'scoped memory for discriminator_forward.1']
    #allocation9 [shape = 'u8[196608]{0}', space=vmem, size = 0x30000, scoped, tag = 'input window, operand 1']
    #allocation10 [shape = 'u8[4096]{0}', space=vmem, size = 0x1000, scoped, tag = 'input window, operand 2, single buffered']
    #allocation11 [shape = 's32[1]{0}', space=sflag, size = 0x4, scoped, tag = 'scoped memory for discriminator_forward.1']
    %8 = vsyncpa [#allocation8], 0
    %9 = vsyncpa [#allocation7], 0
    %s10 = scalar_lea.sflag [#allocation7], 1
    %11 = vsyncpa %s10, 0
    %12 = vsyncpa [#allocation11], 0
    loop: start=0, step=1, limit=4
    $region2: #{discriminator_forward.1} parent=1 // loop_pre_header
      _
    $region3: #{discriminator_forward.1} parent=1 // loop_header
      %s14 = sphi 0, %s18
      %p15 = scmp.ge.s32.totalorder %s14, 4
      %s22 = sphi 0, %s22
      %s24 = sphi 0, %s22
      %s25 = sphi 0, %s24
      %s39 = sphi 0, %s25
      %s45 = sphi 0, %s47
      %s48 = sphi 0, %s45
      %s49 = sphi 0, %s48
      %s65 = sphi 0, %s49
      %s69 = sphi 0, %s69
      %s71 = sphi 0, %s69
      %s72 = sphi 0, %s71
      %s86 = sphi 0, %s72
      %s92 = sphi 0, %s94
      %s95 = sphi 0, %s92
      %s96 = sphi 0, %s95
      %s112 = sphi 0, %s96
    $region4: #{discriminator_forward.1} parent=1 // loop_header_branch
      %17 = sbr.rel (%p15) target = $region8
    $region5: #{discriminator_forward.1} parent=1 // loop_body
      %s19 = ssub.s32 %s14, 1
      %s20 = ssub.s32 %s14, 2
      %s21 = sadd.s32 %s14, 1
      %s23 = sadd.s32 %s22, 1
      %p26 = scmp.eq.s32.totalorder %s14, 1
      %p27 = scmp.ne.s32.totalorder %s22, %s24
      %p28 = scmp.eq.s32.totalorder %s14, 0
      %p29 = por %p27, %p28
      %p30 = scmp.ne.s32.totalorder %s22, %s24
      %p31 = scmp.eq.s32.totalorder %s19, 1
      %p32 = por %p30, %p31
      %p33 = scmp.ne.s32.totalorder %s24, %s25
      %p34 = scmp.eq.s32.totalorder %s19, 0
      %p35 = por %p33, %p34
      %p36 = scmp.ne.s32.totalorder %s24, %s25
      %p37 = scmp.eq.s32.totalorder %s20, 1
      %p38 = por %p36, %p37
      %p40 = scmp.ne.s32.totalorder %s25, %s39
      %p41 = scmp.eq.s32.totalorder %s20, 0
      %p42 = por %p40, %p41
      %s43 = ssub.s32 %s14, %s21
      %p44 = scmp.eq.s32.totalorder %s43, 0
      %s46 = sadd.s32 %s45, 1
      %s47 = scalar_select %p44, %s45, %s46
      %p50 = pneg %p44
      %p51 = scmp.eq.s32.totalorder %s14, 1
      %p52 = por %p50, %p51
      %p53 = scmp.ne.s32.totalorder %s45, %s48
      %p54 = scmp.eq.s32.totalorder %s14, 0
      %p55 = por %p53, %p54
      %p56 = scmp.ne.s32.totalorder %s45, %s48
      %p57 = scmp.eq.s32.totalorder %s19, 1
      %p58 = por %p56, %p57
      %p59 = scmp.ne.s32.totalorder %s48, %s49
      %p60 = scmp.eq.s32.totalorder %s19, 0
      %p61 = por %p59, %p60
      %p62 = scmp.ne.s32.totalorder %s48, %s49
      %p63 = scmp.eq.s32.totalorder %s20, 1
      %p64 = por %p62, %p63
      %p66 = scmp.ne.s32.totalorder %s49, %s65
      %p67 = scmp.eq.s32.totalorder %s20, 0
      %p68 = por %p66, %p67
      %s70 = sadd.s32 %s69, 1
      %p73 = scmp.eq.s32.totalorder %s14, 1
      %p74 = scmp.ne.s32.totalorder %s69, %s71
      %p75 = scmp.eq.s32.totalorder %s14, 0
      %p76 = por %p74, %p75
      %p77 = scmp.ne.s32.totalorder %s69, %s71
      %p78 = scmp.eq.s32.totalorder %s19, 1
      %p79 = por %p77, %p78
      %p80 = scmp.ne.s32.totalorder %s71, %s72
      %p81 = scmp.eq.s32.totalorder %s19, 0
      %p82 = por %p80, %p81
      %p83 = scmp.ne.s32.totalorder %s71, %s72
      %p84 = scmp.eq.s32.totalorder %s20, 1
      %p85 = por %p83, %p84
      %p87 = scmp.ne.s32.totalorder %s72, %s86
      %p88 = scmp.eq.s32.totalorder %s20, 0
      %p89 = por %p87, %p88
      %s90 = ssub.s32 %s14, %s21
      %p91 = scmp.eq.s32.totalorder %s90, 0
      %s93 = sadd.s32 %s92, 1
      %s94 = scalar_select %p91, %s92, %s93
      %p97 = pneg %p91
      %p98 = scmp.eq.s32.totalorder %s14, 1
      %p99 = por %p97, %p98
      %p100 = scmp.ne.s32.totalorder %s92, %s95
      %p101 = scmp.eq.s32.totalorder %s14, 0
      %p102 = por %p100, %p101
      %p103 = scmp.ne.s32.totalorder %s92, %s95
      %p104 = scmp.eq.s32.totalorder %s19, 1
      %p105 = por %p103, %p104
      %p106 = scmp.ne.s32.totalorder %s95, %s96
      %p107 = scmp.eq.s32.totalorder %s19, 0
      %p108 = por %p106, %p107
      %p109 = scmp.ne.s32.totalorder %s95, %s96
      %p110 = scmp.eq.s32.totalorder %s20, 1
      %p111 = por %p109, %p110
      %p113 = scmp.ne.s32.totalorder %s96, %s112
      %p114 = scmp.eq.s32.totalorder %s20, 0
      %p115 = por %p113, %p114
      %p116 = scmp.le.s32.totalorder 1, %s14
      %p117 = scmp.lt.s32.totalorder %s14, 3
      %p118 = pnand %p116, %p117
      %p119 = pneg %p118
      // Predicated region
      $region9: #{discriminator_forward.1} parent=5 // pred_check
        _
      $region10: #{discriminator_forward.1} parent=5 // pred_check_branch
        %121 = sbr.rel (%p118) target = $region12
      $region11: #{discriminator_forward.1} parent=5 // pred_region
        %s122 = ssub.s32 %s14, 1
        // Predicated region
        $region13: #{discriminator_forward.1} parent=11 // pred_check
          %p123 = pneg %p35
        $region14: #{discriminator_forward.1} parent=11 // pred_check_branch
          %125 = sbr.rel (%p123) target = $region16
        $region15: #{discriminator_forward.1} parent=11 // pred_region
          %s127 = ssub.s32 192, 192
          %128 = vsyncadd [#allocation8], %s127
          %131 = dma.hbm_to_smem %s0, 192, [#allocation6], [#allocation8]
        $region16: #{discriminator_forward.1} parent=11 // pred_fallthru
          _
        // Predicated region
        $region17: #{discriminator_forward.1} parent=11 // pred_check
          %p132 = pneg %p82
        $region18: #{discriminator_forward.1} parent=11 // pred_check_branch
          %134 = sbr.rel (%p132) target = $region20
        $region19: #{discriminator_forward.1} parent=11 // pred_region
          %s136 = ssub.s32 128, 128
          %137 = vsyncadd [#allocation11], %s136
          %s139 = sshll.u32 [#allocation10], 4
          %s140 = int_to_ptr.vmem [resolvable:$true] %s139
          %142 = dma.hbm_to_vmem [thread:$0]  %s2, 128, %s140, [#allocation11]
        $region20: #{discriminator_forward.1} parent=11 // pred_fallthru
          _
      $region12: #{discriminator_forward.1} parent=5 // pred_fallthru
        _
      %p143 = scmp.lt.s32.totalorder %s14, 2
      // Predicated region
      $region21: #{discriminator_forward.1} parent=5 // pred_check
        %p144 = pneg %p143
      $region22: #{discriminator_forward.1} parent=5 // pred_check_branch
        %146 = sbr.rel (%p144) target = $region24
      $region23: #{discriminator_forward.1} parent=5 // pred_region
        // Predicated region
        $region25: #{discriminator_forward.1} parent=23 // pred_check
          %p147 = pneg %p55
        $region26: #{discriminator_forward.1} parent=23 // pred_check_branch
          %149 = sbr.rel (%p147) target = $region28
        $region27: #{discriminator_forward.1} parent=23 // pred_region
          %s150 = sand.u32 %s45, 1
          %s151 = scalar_lea.sflag [#allocation7], %s150
          %s152 = sand.u32 %s45, 1
          %s153 = smul.addr %s152, 192
          %s154 = scalar_lea.vmem [#allocation9], %s153
          %s156 = ssub.s32 3072, 3072
          %157 = vsyncadd %s151, %s156
          %s158 = smul.addr %s14, 24
          %s159 = smul.addr %s158, 128
          %s160 = scalar_lea.hbm %s1, %s159
          %s161 = sshll.u32 %s154, 4
          %s162 = int_to_ptr.vmem [resolvable:$true] %s161
          %167 = dma.hbm_to_vmem [thread:$0]  %s160, 3072, %s162, %s151, 128, 128, 8
        $region28: #{discriminator_forward.1} parent=23 // pred_fallthru
          _
      $region24: #{discriminator_forward.1} parent=5 // pred_fallthru
        _
      %p168 = scmp.le.s32.totalorder 1, %s14
      %p169 = scmp.lt.s32.totalorder %s14, 3
      %p170 = pnand %p168, %p169
      %p171 = pneg %p170
      // Predicated region
      $region29: #{discriminator_forward.1} parent=5 // pred_check
        _
      $region30: #{discriminator_forward.1} parent=5 // pred_check_branch
        %173 = sbr.rel (%p170) target = $region32
      $region31: #{discriminator_forward.1} parent=5 // pred_region
        %s174 = ssub.s32 %s14, 1
        // Predicated region
        $region33: #{discriminator_forward.1} parent=31 // pred_check
          %p175 = pneg %p35
        $region34: #{discriminator_forward.1} parent=31 // pred_check_branch
          %177 = sbr.rel (%p175) target = $region36
        $region35: #{discriminator_forward.1} parent=31 // pred_region
          %178 = dma.done [#allocation8], 192
        $region36: #{discriminator_forward.1} parent=31 // pred_fallthru
          _
        %s179 = sand.u32 %s48, 1
        %s180 = scalar_lea.sflag [#allocation7], %s179
        %s181 = sand.u32 %s48, 1
        %s182 = smul.addr %s181, 192
        %s183 = scalar_lea.vmem [#allocation9], %s182
        // Predicated region
        $region37: #{discriminator_forward.1} parent=31 // pred_check
          %p184 = pneg %p61
        $region38: #{discriminator_forward.1} parent=31 // pred_check_branch
          %186 = sbr.rel (%p184) target = $region40
        $region39: #{discriminator_forward.1} parent=31 // pred_region
          %187 = dma.done %s180, 3072
        $region40: #{discriminator_forward.1} parent=31 // pred_fallthru
          _
        // Predicated region
        $region41: #{discriminator_forward.1} parent=31 // pred_check
          %p188 = pneg %p82
        $region42: #{discriminator_forward.1} parent=31 // pred_check_branch
          %190 = sbr.rel (%p188) target = $region44
        $region43: #{discriminator_forward.1} parent=31 // pred_region
          %191 = dma.done [#allocation11], 128
        $region44: #{discriminator_forward.1} parent=31 // pred_fallthru
          _
        %192 = sfence
        %p193 = pneg %p35
        %p194 = pneg %p32
        %s195 = sand.u32 %s48, 1
        %s196 = scalar_lea.sflag [#allocation7], %s195
        %s197 = sand.u32 %s48, 1
        %s198 = smul.addr %s197, 192
        %s199 = scalar_lea.vmem [#allocation9], %s198
        %p200 = pneg %p61
        %p201 = pneg %p58
        %p202 = pneg %p82
        %p203 = pneg %p79
        %p204 = pneg %p108
        %p205 = pneg %p105
        %p206 = scmp.lt.s32.totalorder %s19, 1
        %s207 = scalar_select %p206, %s19, 1
        %s208 = scalar_lea.vmem %s3, %s207
        %p209 = scmp.lt.s32.totalorder %s19, 1
        %s210 = scalar_select %p209, %s19, 1
        %s211 = scalar_lea.vmem %s3, %s210
        %vm212 = vcmask 539648
        %213 = vst.msk [vmem:[#allocation2] sm:$0xff] %vm212, 0.0
        %214 = vst.msk [vmem:[#allocation2 + $0x8] sm:$0xff] %vm212, 0.0
        %215 = vst.msk [vmem:[#allocation2 + $0x10] sm:$0xff] %vm212, 0.0
        %216 = vst.msk [vmem:[#allocation2 + $0x18] sm:$0xff] %vm212, 0.0
        %217 = vst.msk [vmem:[#allocation2 + $0x20] sm:$0xff] %vm212, 0.0
        %218 = vst.msk [vmem:[#allocation2 + $0x28] sm:$0xff] %vm212, 0.0
        %219 = vst.msk [vmem:[#allocation2 + $0x30] sm:$0xff] %vm212, 0.0
        %220 = vst.msk [vmem:[#allocation2 + $0x38] sm:$0xff] %vm212, 0.0
        %vm221 = vcmask 533504
        %222 = vst.msk [vmem:[#allocation2 + $0x40] sm:$0x3] %vm221, 0.0
        %223 = vst.msk [vmem:[#allocation2 + $0x48] sm:$0xff] %vm212, 0.0
        %224 = vst.msk [vmem:[#allocation2 + $0x50] sm:$0xff] %vm212, 0.0
        %225 = vst.msk [vmem:[#allocation2 + $0x58] sm:$0xff] %vm212, 0.0
        %226 = vst.msk [vmem:[#allocation2 + $0x60] sm:$0xff] %vm212, 0.0
        %227 = vst.msk [vmem:[#allocation2 + $0x68] sm:$0xff] %vm212, 0.0
        %228 = vst.msk [vmem:[#allocation2 + $0x70] sm:$0xff] %vm212, 0.0
        %229 = vst.msk [vmem:[#allocation2 + $0x78] sm:$0xff] %vm212, 0.0
        %230 = vst.msk [vmem:[#allocation2 + $0x80] sm:$0xff] %vm212, 0.0
        %231 = vst.msk [vmem:[#allocation2 + $0x88] sm:$0x3] %vm221, 0.0
        %232 = vst.msk [vmem:[#allocation2 + $0x90] sm:$0xff] %vm212, 0.0
        %233 = vst.msk [vmem:[#allocation2 + $0x98] sm:$0xff] %vm212, 0.0
        %234 = vst.msk [vmem:[#allocation2 + $0xa0] sm:$0xff] %vm212, 0.0
        %235 = vst.msk [vmem:[#allocation2 + $0xa8] sm:$0xff] %vm212, 0.0
        %236 = vst.msk [vmem:[#allocation2 + $0xb0] sm:$0xff] %vm212, 0.0
        %237 = vst.msk [vmem:[#allocation2 + $0xb8] sm:$0xff] %vm212, 0.0
        %238 = vst.msk [vmem:[#allocation2 + $0xc0] sm:$0xff] %vm212, 0.0
        %239 = vst.msk [vmem:[#allocation2 + $0xc8] sm:$0xff] %vm212, 0.0
        %240 = vst.msk [vmem:[#allocation2 + $0xd0] sm:$0x3] %vm221, 0.0
        %241 = vst.msk [vmem:[#allocation3] sm:$0xff] %vm212, 0.0
        %242 = vst.msk [vmem:[#allocation3 + $0x8] sm:$0xff] %vm212, 0.0
        %243 = vst.msk [vmem:[#allocation3 + $0x10] sm:$0xff] %vm212, 0.0
        %244 = vst.msk [vmem:[#allocation3 + $0x18] sm:$0xff] %vm212, 0.0
        %245 = vst.msk [vmem:[#allocation3 + $0x20] sm:$0xff] %vm212, 0.0
        %246 = vst.msk [vmem:[#allocation3 + $0x28] sm:$0xff] %vm212, 0.0
        %247 = vst.msk [vmem:[#allocation3 + $0x30] sm:$0xff] %vm212, 0.0
        %248 = vst.msk [vmem:[#allocation3 + $0x38] sm:$0xff] %vm212, 0.0
        %249 = vst.msk [vmem:[#allocation3 + $0x40] sm:$0x3] %vm221, 0.0
        %250 = vst.msk [vmem:[#allocation3 + $0x48] sm:$0xff] %vm212, 0.0
        %251 = vst.msk [vmem:[#allocation3 + $0x50] sm:$0xff] %vm212, 0.0
        %252 = vst.msk [vmem:[#allocation3 + $0x58] sm:$0xff] %vm212, 0.0
        %253 = vst.msk [vmem:[#allocation3 + $0x60] sm:$0xff] %vm212, 0.0
        %254 = vst.msk [vmem:[#allocation3 + $0x68] sm:$0xff] %vm212, 0.0
        %255 = vst.msk [vmem:[#allocation3 + $0x70] sm:$0xff] %vm212, 0.0
        %256 = vst.msk [vmem:[#allocation3 + $0x78] sm:$0xff] %vm212, 0.0
        %257 = vst.msk [vmem:[#allocation3 + $0x80] sm:$0xff] %vm212, 0.0
        %258 = vst.msk [vmem:[#allocation3 + $0x88] sm:$0x3] %vm221, 0.0
        %259 = vst.msk [vmem:[#allocation3 + $0x90] sm:$0xff] %vm212, 0.0
        %260 = vst.msk [vmem:[#allocation3 + $0x98] sm:$0xff] %vm212, 0.0
        %261 = vst.msk [vmem:[#allocation3 + $0xa0] sm:$0xff] %vm212, 0.0
        %262 = vst.msk [vmem:[#allocation3 + $0xa8] sm:$0xff] %vm212, 0.0
        %263 = vst.msk [vmem:[#allocation3 + $0xb0] sm:$0xff] %vm212, 0.0
        %264 = vst.msk [vmem:[#allocation3 + $0xb8] sm:$0xff] %vm212, 0.0
        %265 = vst.msk [vmem:[#allocation3 + $0xc0] sm:$0xff] %vm212, 0.0
        %266 = vst.msk [vmem:[#allocation3 + $0xc8] sm:$0xff] %vm212, 0.0
        %267 = vst.msk [vmem:[#allocation3 + $0xd0] sm:$0x3] %vm221, 0.0
        %268 = vst.msk [vmem:[#allocation3 + $0xd8] sm:$0xff] %vm212, 0.0
        %269 = vst.msk [vmem:[#allocation3 + $0xe0] sm:$0xff] %vm212, 0.0
        %270 = vst.msk [vmem:[#allocation3 + $0xe8] sm:$0xff] %vm212, 0.0
        %271 = vst.msk [vmem:[#allocation3 + $0xf0] sm:$0xff] %vm212, 0.0
        %272 = vst.msk [vmem:[#allocation3 + $0xf8] sm:$0xff] %vm212, 0.0
        %273 = vst.msk [vmem:[#allocation3 + $0x100] sm:$0xff] %vm212, 0.0
        %274 = vst.msk [vmem:[#allocation3 + $0x108] sm:$0xff] %vm212, 0.0
        %275 = vst.msk [vmem:[#allocation3 + $0x110] sm:$0xff] %vm212, 0.0
        %276 = vst.msk [vmem:[#allocation3 + $0x118] sm:$0x3] %vm221, 0.0
        %277 = vst.msk [vmem:[#allocation3 + $0x120] sm:$0xff] %vm212, 0.0
        %278 = vst.msk [vmem:[#allocation3 + $0x128] sm:$0xff] %vm212, 0.0
        %279 = vst.msk [vmem:[#allocation3 + $0x130] sm:$0xff] %vm212, 0.0
        %280 = vst.msk [vmem:[#allocation3 + $0x138] sm:$0xff] %vm212, 0.0
        %281 = vst.msk [vmem:[#allocation3 + $0x140] sm:$0xff] %vm212, 0.0
        %282 = vst.msk [vmem:[#allocation3 + $0x148] sm:$0xff] %vm212, 0.0
        %283 = vst.msk [vmem:[#allocation3 + $0x150] sm:$0xff] %vm212, 0.0
        %284 = vst.msk [vmem:[#allocation3 + $0x158] sm:$0xff] %vm212, 0.0
        %285 = vst.msk [vmem:[#allocation3 + $0x160] sm:$0x3] %vm221, 0.0
        %286 = vst.msk [vmem:[#allocation3 + $0x168] sm:$0xff] %vm212, 0.0
        %287 = vst.msk [vmem:[#allocation3 + $0x170] sm:$0xff] %vm212, 0.0
        %288 = vst.msk [vmem:[#allocation3 + $0x178] sm:$0xff] %vm212, 0.0
        %289 = vst.msk [vmem:[#allocation3 + $0x180] sm:$0xff] %vm212, 0.0
        %290 = vst.msk [vmem:[#allocation3 + $0x188] sm:$0xff] %vm212, 0.0
        %291 = vst.msk [vmem:[#allocation3 + $0x190] sm:$0xff] %vm212, 0.0
        %292 = vst.msk [vmem:[#allocation3 + $0x198] sm:$0xff] %vm212, 0.0
        %293 = vst.msk [vmem:[#allocation3 + $0x1a0] sm:$0xff] %vm212, 0.0
        %294 = vst.msk [vmem:[#allocation3 + $0x1a8] sm:$0x3] %vm221, 0.0
        %295 = vst.msk [vmem:[#allocation3 + $0x1b0] sm:$0xff] %vm212, 0.0
        %296 = vst.msk [vmem:[#allocation3 + $0x1b8] sm:$0xff] %vm212, 0.0
        %297 = vst.msk [vmem:[#allocation3 + $0x1c0] sm:$0xff] %vm212, 0.0
        %298 = vst.msk [vmem:[#allocation3 + $0x1c8] sm:$0xff] %vm212, 0.0
        %299 = vst.msk [vmem:[#allocation3 + $0x1d0] sm:$0xff] %vm212, 0.0
        %300 = vst.msk [vmem:[#allocation3 + $0x1d8] sm:$0xff] %vm212, 0.0
        %301 = vst.msk [vmem:[#allocation3 + $0x1e0] sm:$0xff] %vm212, 0.0
        %302 = vst.msk [vmem:[#allocation3 + $0x1e8] sm:$0xff] %vm212, 0.0
        %303 = vst.msk [vmem:[#allocation3 + $0x1f0] sm:$0x3] %vm221, 0.0
        %304 = vst.msk [vmem:[#allocation3 + $0x1f8] sm:$0xff] %vm212, 0.0
        %305 = vst.msk [vmem:[#allocation3 + $0x200] sm:$0xff] %vm212, 0.0
        %306 = vst.msk [vmem:[#allocation3 + $0x208] sm:$0xff] %vm212, 0.0
        %307 = vst.msk [vmem:[#allocation3 + $0x210] sm:$0xff] %vm212, 0.0
        %308 = vst.msk [vmem:[#allocation3 + $0x218] sm:$0xff] %vm212, 0.0
        %309 = vst.msk [vmem:[#allocation3 + $0x220] sm:$0xff] %vm212, 0.0
        %310 = vst.msk [vmem:[#allocation3 + $0x228] sm:$0xff] %vm212, 0.0
        %311 = vst.msk [vmem:[#allocation3 + $0x230] sm:$0xff] %vm212, 0.0
        %312 = vst.msk [vmem:[#allocation3 + $0x238] sm:$0x3] %vm221, 0.0
        %vm313 = vcmask 113664
        %314 = vst.msk [vmem:[#allocation4] sm:$0xff] %vm313, 0.0
        %vm315 = vcmask 111616
        %316 = vst.msk [vmem:[#allocation4 + $0x8] sm:$0x3f] %vm315, 0.0
        %317 = vst.msk [vmem:[#allocation4 + $0x10] sm:$0xff] %vm313, 0.0
        %318 = vst.msk [vmem:[#allocation4 + $0x18] sm:$0x3f] %vm315, 0.0
        %319 = vst.msk [vmem:[#allocation4 + $0x20] sm:$0xff] %vm313, 0.0
        %320 = vst.msk [vmem:[#allocation4 + $0x28] sm:$0x3f] %vm315, 0.0
        %321 = vst.msk [vmem:[#allocation4 + $0x30] sm:$0xff] %vm313, 0.0
        %322 = vst.msk [vmem:[#allocation4 + $0x38] sm:$0x3f] %vm315, 0.0
        %323 = vst.msk [vmem:[#allocation4 + $0x40] sm:$0xff] %vm313, 0.0
        %324 = vst.msk [vmem:[#allocation4 + $0x48] sm:$0x3f] %vm315, 0.0
        %325 = vst.msk [vmem:[#allocation4 + $0x50] sm:$0xff] %vm313, 0.0
        %326 = vst.msk [vmem:[#allocation4 + $0x58] sm:$0x3f] %vm315, 0.0
        %327 = vst.msk [vmem:[#allocation4 + $0x60] sm:$0xff] %vm313, 0.0
        %328 = vst.msk [vmem:[#allocation4 + $0x68] sm:$0x3f] %vm315, 0.0
        %329 = vst.msk [vmem:[#allocation4 + $0x70] sm:$0xff] %vm313, 0.0
        %330 = vst.msk [vmem:[#allocation4 + $0x78] sm:$0x3f] %vm315, 0.0
        %vm331 = vcmask 80896
        %332 = vst.msk [vmem:[#allocation5] sm:$0xff] %vm331, 0.0
        %vm333 = vcmask 74752
        %334 = vst.msk [vmem:[#allocation5 + $0x8] sm:$0x3] %vm333, 0.0
        %335 = vst.msk [vmem:[#allocation5 + $0x10] sm:$0xff] %vm331, 0.0
        %336 = vst.msk [vmem:[#allocation5 + $0x18] sm:$0x3] %vm333, 0.0
        %337 = vst.msk [vmem:[#allocation5 + $0x20] sm:$0xff] %vm331, 0.0
        %338 = vst.msk [vmem:[#allocation5 + $0x28] sm:$0x3] %vm333, 0.0
        %339 = vst.msk [vmem:[#allocation5 + $0x30] sm:$0xff] %vm331, 0.0
        %340 = vst.msk [vmem:[#allocation5 + $0x38] sm:$0x3] %vm333, 0.0
        %341 = vst.msk [vmem:[#allocation5 + $0x40] sm:$0xff] %vm331, 0.0
        %342 = vst.msk [vmem:[#allocation5 + $0x48] sm:$0x3] %vm333, 0.0
        %343 = vst.msk [vmem:[#allocation5 + $0x50] sm:$0xff] %vm331, 0.0
        %344 = vst.msk [vmem:[#allocation5 + $0x58] sm:$0x3] %vm333, 0.0
        %345 = vst.msk [vmem:[#allocation5 + $0x60] sm:$0xff] %vm331, 0.0
        %346 = vst.msk [vmem:[#allocation5 + $0x68] sm:$0x3] %vm333, 0.0
        %347 = vst.msk [vmem:[#allocation5 + $0x70] sm:$0xff] %vm331, 0.0
        %348 = vst.msk [vmem:[#allocation5 + $0x78] sm:$0x3] %vm333, 0.0
        %v349 = vld [vmem:[%s183] sm:$0xff]
        %v350 = vld [vmem:[%s183 + $0x8] sm:$0xff]
        %v351 = vld [vmem:[%s183 + $0x10] sm:$0xff]
        %v352 = vld [vmem:[%s183 + $0x18] sm:$0xff]
        %v353 = vld [vmem:[%s183 + $0x20] sm:$0xff]
        %v354 = vld [vmem:[%s183 + $0x28] sm:$0xff]
        %v355 = vld [vmem:[%s183 + $0x30] sm:$0xff]
        %v356 = vld [vmem:[%s183 + $0x38] sm:$0xff]
        %v357 = vld [vmem:[%s183 + $0x40] sm:$0xff]
        %v358 = vld [vmem:[%s183 + $0x48] sm:$0xff]
        %v359 = vld [vmem:[%s183 + $0x50] sm:$0xff]
        %v360 = vld [vmem:[%s183 + $0x58] sm:$0xff]
        %v361 = vld [vmem:[%s183 + $0x60] sm:$0xff]
        %v362 = vld [vmem:[%s183 + $0x68] sm:$0xff]
        %v363 = vld [vmem:[%s183 + $0x70] sm:$0xff]
        %v364 = vld [vmem:[%s183 + $0x78] sm:$0xff]
        %v365 = vld [vmem:[%s183 + $0x80] sm:$0xff]
        %v366 = vld [vmem:[%s183 + $0x88] sm:$0xff]
        %v367 = vld [vmem:[%s183 + $0x90] sm:$0xff]
        %v368 = vld [vmem:[%s183 + $0x98] sm:$0xff]
        %v369 = vld [vmem:[%s183 + $0xa0] sm:$0xff]
        %v370 = vld [vmem:[%s183 + $0xa8] sm:$0xff]
        %v371 = vld [vmem:[%s183 + $0xb0] sm:$0xff]
        %v372 = vld [vmem:[%s183 + $0xb8] sm:$0xff]
        %397 = vrot.lane.b32.xlu0 %v349, 1
        %v398 = vpop.permute.xlu0 %397
        %399 = vrot.lane.b32.xlu0 %v350, 1
        %v400 = vpop.permute.xlu0 %399
        %401 = vrot.lane.b32.xlu0 %v351, 1
        %v402 = vpop.permute.xlu0 %401
        %403 = vrot.lane.b32.xlu0 %v352, 1
        %v404 = vpop.permute.xlu0 %403
        %405 = vrot.lane.b32.xlu0 %v353, 1
        %v406 = vpop.permute.xlu0 %405
        %407 = vrot.lane.b32.xlu0 %v354, 1
        %v408 = vpop.permute.xlu0 %407
        %409 = vrot.lane.b32.xlu0 %v355, 1
        %v410 = vpop.permute.xlu0 %409
        %411 = vrot.lane.b32.xlu0 %v356, 1
        %v412 = vpop.permute.xlu0 %411
        %413 = vrot.lane.b32.xlu0 %v357, 1
        %v414 = vpop.permute.xlu0 %413
        %415 = vrot.lane.b32.xlu0 %v358, 1
        %v416 = vpop.permute.xlu0 %415
        %417 = vrot.lane.b32.xlu0 %v359, 1
        %v418 = vpop.permute.xlu0 %417
        %419 = vrot.lane.b32.xlu0 %v360, 1
        %v420 = vpop.permute.xlu0 %419
        %421 = vrot.lane.b32.xlu0 %v361, 1
        %v422 = vpop.permute.xlu0 %421
        %423 = vrot.lane.b32.xlu0 %v362, 1
        %v424 = vpop.permute.xlu0 %423
        %425 = vrot.lane.b32.xlu0 %v363, 1
        %v426 = vpop.permute.xlu0 %425
        %427 = vrot.lane.b32.xlu0 %v364, 1
        %v428 = vpop.permute.xlu0 %427
        %429 = vrot.lane.b32.xlu0 %v365, 1
        %v430 = vpop.permute.xlu0 %429
        %431 = vrot.lane.b32.xlu0 %v366, 1
        %v432 = vpop.permute.xlu0 %431
        %433 = vrot.lane.b32.xlu0 %v367, 1
        %v434 = vpop.permute.xlu0 %433
        %435 = vrot.lane.b32.xlu0 %v368, 1
        %v436 = vpop.permute.xlu0 %435
        %437 = vrot.lane.b32.xlu0 %v369, 1
        %v438 = vpop.permute.xlu0 %437
        %439 = vrot.lane.b32.xlu0 %v370, 1
        %v440 = vpop.permute.xlu0 %439
        %441 = vrot.lane.b32.xlu0 %v371, 1
        %v442 = vpop.permute.xlu0 %441
        %443 = vrot.lane.b32.xlu0 %v372, 1
        %v444 = vpop.permute.xlu0 %443
        %vm469 = vcmask 531464
        %470 = vst.msk [vmem:[#allocation2 + $0x1] sm:$0xff] %vm469, %v398
        %471 = vst.msk [vmem:[#allocation2 + $0x9] sm:$0xff] %vm469, %v400
        %472 = vst.msk [vmem:[#allocation2 + $0x11] sm:$0xff] %vm469, %v402
        %473 = vst.msk [vmem:[#allocation2 + $0x19] sm:$0xff] %vm469, %v404
        %474 = vst.msk [vmem:[#allocation2 + $0x21] sm:$0xff] %vm469, %v406
        %475 = vst.msk [vmem:[#allocation2 + $0x29] sm:$0xff] %vm469, %v408
        %476 = vst.msk [vmem:[#allocation2 + $0x31] sm:$0xff] %vm469, %v410
        %477 = vst.msk [vmem:[#allocation2 + $0x39] sm:$0xff] %vm469, %v412
        %478 = vst.msk [vmem:[#allocation2 + $0x49] sm:$0xff] %vm469, %v414
        %479 = vst.msk [vmem:[#allocation2 + $0x51] sm:$0xff] %vm469, %v416
        %480 = vst.msk [vmem:[#allocation2 + $0x59] sm:$0xff] %vm469, %v418
        %481 = vst.msk [vmem:[#allocation2 + $0x61] sm:$0xff] %vm469, %v420
        %482 = vst.msk [vmem:[#allocation2 + $0x69] sm:$0xff] %vm469, %v422
        %483 = vst.msk [vmem:[#allocation2 + $0x71] sm:$0xff] %vm469, %v424
        %484 = vst.msk [vmem:[#allocation2 + $0x79] sm:$0xff] %vm469, %v426
        %485 = vst.msk [vmem:[#allocation2 + $0x81] sm:$0xff] %vm469, %v428
        %486 = vst.msk [vmem:[#allocation2 + $0x91] sm:$0xff] %vm469, %v430
        %487 = vst.msk [vmem:[#allocation2 + $0x99] sm:$0xff] %vm469, %v432
        %488 = vst.msk [vmem:[#allocation2 + $0xa1] sm:$0xff] %vm469, %v434
        %489 = vst.msk [vmem:[#allocation2 + $0xa9] sm:$0xff] %vm469, %v436
        %490 = vst.msk [vmem:[#allocation2 + $0xb1] sm:$0xff] %vm469, %v438
        %491 = vst.msk [vmem:[#allocation2 + $0xb9] sm:$0xff] %vm469, %v440
        %492 = vst.msk [vmem:[#allocation2 + $0xc1] sm:$0xff] %vm469, %v442
        %493 = vst.msk [vmem:[#allocation2 + $0xc9] sm:$0xff] %vm469, %v444
        loop: start=0, step=1, limit=8
        $region45: #{discriminator_forward.1} parent=31 // loop_pre_header
          _
        $region46: #{discriminator_forward.1} parent=31 // loop_header
          %s495 = sphi 0, %s499
          %p496 = scmp.ge.s32.totalorder %s495, 8
        $region47: #{discriminator_forward.1} parent=31 // loop_header_branch
          %498 = sbr.rel (%p496) target = $region51
        $region48: #{discriminator_forward.1} parent=31 // loop_body
          %s500 = smul.u32 %s495, 27
          %s501 = sld [smem:[#allocation6 + %s500]]
          %v502 = vld [vmem:[#allocation2] sm:$0xff]
          %v503 = vld [vmem:[#allocation2 + $0x8] sm:$0xff]
          %v504 = vld [vmem:[#allocation2 + $0x10] sm:$0xff]
          %v505 = vld [vmem:[#allocation2 + $0x18] sm:$0xff]
          %v506 = vld [vmem:[#allocation2 + $0x20] sm:$0xff]
          %v507 = vld [vmem:[#allocation2 + $0x28] sm:$0xff]
          %v508 = vld [vmem:[#allocation2 + $0x30] sm:$0xff]
          %v509 = vld [vmem:[#allocation2 + $0x38] sm:$0xff]
          %v510 = vstv %s501
          %v511 = vmul.f32 %v510, %v502
          %v512 = vmul.f32 %v510, %v503
          %v513 = vmul.f32 %v510, %v504
          %v514 = vmul.f32 %v510, %v505
          %v515 = vmul.f32 %v510, %v506
          %v516 = vmul.f32 %v510, %v507
          %v517 = vmul.f32 %v510, %v508
          %v518 = vmul.f32 %v510, %v509
          %v519 = vadd.f32 %v511, 0.0
          %v520 = vadd.f32 %v512, 0.0
          %v521 = vadd.f32 %v513, 0.0
          %v522 = vadd.f32 %v514, 0.0
          %v523 = vadd.f32 %v515, 0.0
          %v524 = vadd.f32 %v516, 0.0
          %v525 = vadd.f32 %v517, 0.0
          %v526 = vadd.f32 %v518, 0.0
          %s527 = sadd.s32 %s500, 1
          %s528 = sld [smem:[#allocation6 + %s527]]
          %v529 = vstv %s528
          %v530 = vmul.f32 %v529, %v502
          %v531 = vmul.f32 %v529, %v503
          %v532 = vmul.f32 %v529, %v504
          %v533 = vmul.f32 %v529, %v505
          %v534 = vmul.f32 %v529, %v506
          %v535 = vmul.f32 %v529, %v507
          %v536 = vmul.f32 %v529, %v508
          %v537 = vmul.f32 %v529, %v509
          %546 = vrot.lane.b32.xlu0 %v530, 127
          %v547 = vpop.permute.xlu0 %546
          %548 = vrot.lane.b32.xlu0 %v531, 127
          %v549 = vpop.permute.xlu0 %548
          %550 = vrot.lane.b32.xlu0 %v532, 127
          %v551 = vpop.permute.xlu0 %550
          %552 = vrot.lane.b32.xlu0 %v533, 127
          %v553 = vpop.permute.xlu0 %552
          %554 = vrot.lane.b32.xlu0 %v534, 127
          %v555 = vpop.permute.xlu0 %554
          %556 = vrot.lane.b32.xlu0 %v535, 127
          %v557 = vpop.permute.xlu0 %556
          %558 = vrot.lane.b32.xlu0 %v536, 127
          %v559 = vpop.permute.xlu0 %558
          %560 = vrot.lane.b32.xlu0 %v537, 127
          %v561 = vpop.permute.xlu0 %560
          %v570 = vadd.f32 %v519, %v547
          %v571 = vadd.f32 %v520, %v549
          %v572 = vadd.f32 %v521, %v551
          %v573 = vadd.f32 %v522, %v553
          %v574 = vadd.f32 %v523, %v555
          %v575 = vadd.f32 %v524, %v557
          %v576 = vadd.f32 %v525, %v559
          %v577 = vadd.f32 %v526, %v561
          %s578 = sadd.s32 %s500, 2
          %s579 = sld [smem:[#allocation6 + %s578]]
          %v580 = vstv %s579
          %v581 = vmul.f32 %v580, %v502
          %v582 = vmul.f32 %v580, %v503
          %v583 = vmul.f32 %v580, %v504
          %v584 = vmul.f32 %v580, %v505
          %v585 = vmul.f32 %v580, %v506
          %v586 = vmul.f32 %v580, %v507
          %v587 = vmul.f32 %v580, %v508
          %v588 = vmul.f32 %v580, %v509
          %597 = vrot.lane.b32.xlu0 %v581, 126
          %v598 = vpop.permute.xlu0 %597
          %599 = vrot.lane.b32.xlu0 %v582, 126
          %v600 = vpop.permute.xlu0 %599
          %601 = vrot.lane.b32.xlu0 %v583, 126
          %v602 = vpop.permute.xlu0 %601
          %603 = vrot.lane.b32.xlu0 %v584, 126
          %v604 = vpop.permute.xlu0 %603
          %605 = vrot.lane.b32.xlu0 %v585, 126
          %v606 = vpop.permute.xlu0 %605
          %607 = vrot.lane.b32.xlu0 %v586, 126
          %v608 = vpop.permute.xlu0 %607
          %609 = vrot.lane.b32.xlu0 %v587, 126
          %v610 = vpop.permute.xlu0 %609
          %611 = vrot.lane.b32.xlu0 %v588, 126
          %v612 = vpop.permute.xlu0 %611
          %v621 = vadd.f32 %v570, %v598
          %v622 = vadd.f32 %v571, %v600
          %v623 = vadd.f32 %v572, %v602
          %v624 = vadd.f32 %v573, %v604
          %v625 = vadd.f32 %v574, %v606
          %v626 = vadd.f32 %v575, %v608
          %v627 = vadd.f32 %v576, %v610
          %v628 = vadd.f32 %v577, %v612
          %s629 = sadd.s32 %s500, 3
          %s630 = sld [smem:[#allocation6 + %s629]]
          %v631 = vld [vmem:[#allocation2 + $0x1] sm:$0xff]
          %v632 = vld [vmem:[#allocation2 + $0x9] sm:$0xff]
          %v633 = vld [vmem:[#allocation2 + $0x11] sm:$0xff]
          %v634 = vld [vmem:[#allocation2 + $0x19] sm:$0xff]
          %v635 = vld [vmem:[#allocation2 + $0x21] sm:$0xff]
          %v636 = vld [vmem:[#allocation2 + $0x29] sm:$0xff]
          %v637 = vld [vmem:[#allocation2 + $0x31] sm:$0xff]
          %v638 = vld [vmem:[#allocation2 + $0x39] sm:$0xff]
          %v639 = vstv %s630
          %v640 = vmul.f32 %v639, %v631
          %v641 = vmul.f32 %v639, %v632
          %v642 = vmul.f32 %v639, %v633
          %v643 = vmul.f32 %v639, %v634
          %v644 = vmul.f32 %v639, %v635
          %v645 = vmul.f32 %v639, %v636
          %v646 = vmul.f32 %v639, %v637
          %v647 = vmul.f32 %v639, %v638
          %v648 = vadd.f32 %v621, %v640
          %v649 = vadd.f32 %v622, %v641
          %v650 = vadd.f32 %v623, %v642
          %v651 = vadd.f32 %v624, %v643
          %v652 = vadd.f32 %v625, %v644
          %v653 = vadd.f32 %v626, %v645
          %v654 = vadd.f32 %v627, %v646
          %v655 = vadd.f32 %v628, %v647
          %s656 = sadd.s32 %s500, 4
          %s657 = sld [smem:[#allocation6 + %s656]]
          %v658 = vstv %s657
          %v659 = vmul.f32 %v658, %v631
          %v660 = vmul.f32 %v658, %v632
          %v661 = vmul.f32 %v658, %v633
          %v662 = vmul.f32 %v658, %v634
          %v663 = vmul.f32 %v658, %v635
          %v664 = vmul.f32 %v658, %v636
          %v665 = vmul.f32 %v658, %v637
          %v666 = vmul.f32 %v658, %v638
          %675 = vrot.lane.b32.xlu0 %v659, 127
          %v676 = vpop.permute.xlu0 %675
          %677 = vrot.lane.b32.xlu0 %v660, 127
          %v678 = vpop.permute.xlu0 %677
          %679 = vrot.lane.b32.xlu0 %v661, 127
          %v680 = vpop.permute.xlu0 %679
          %681 = vrot.lane.b32.xlu0 %v662, 127
          %v682 = vpop.permute.xlu0 %681
          %683 = vrot.lane.b32.xlu0 %v663, 127
          %v684 = vpop.permute.xlu0 %683
          %685 = vrot.lane.b32.xlu0 %v664, 127
          %v686 = vpop.permute.xlu0 %685
          %687 = vrot.lane.b32.xlu0 %v665, 127
          %v688 = vpop.permute.xlu0 %687
          %689 = vrot.lane.b32.xlu0 %v666, 127
          %v690 = vpop.permute.xlu0 %689
          %v699 = vadd.f32 %v648, %v676
          %v700 = vadd.f32 %v649, %v678
          %v701 = vadd.f32 %v650, %v680
          %v702 = vadd.f32 %v651, %v682
          %v703 = vadd.f32 %v652, %v684
          %v704 = vadd.f32 %v653, %v686
          %v705 = vadd.f32 %v654, %v688
          %v706 = vadd.f32 %v655, %v690
          %s707 = sadd.s32 %s500, 5
          %s708 = sld [smem:[#allocation6 + %s707]]
          %v709 = vstv %s708
          %v710 = vmul.f32 %v709, %v631
          %v711 = vmul.f32 %v709, %v632
          %v712 = vmul.f32 %v709, %v633
          %v713 = vmul.f32 %v709, %v634
          %v714 = vmul.f32 %v709, %v635
          %v715 = vmul.f32 %v709, %v636
          %v716 = vmul.f32 %v709, %v637
          %v717 = vmul.f32 %v709, %v638
          %726 = vrot.lane.b32.xlu0 %v710, 126
          %v727 = vpop.permute.xlu0 %726
          %728 = vrot.lane.b32.xlu0 %v711, 126
          %v729 = vpop.permute.xlu0 %728
          %730 = vrot.lane.b32.xlu0 %v712, 126
          %v731 = vpop.permute.xlu0 %730
          %732 = vrot.lane.b32.xlu0 %v713, 126
          %v733 = vpop.permute.xlu0 %732
          %734 = vrot.lane.b32.xlu0 %v714, 126
          %v735 = vpop.permute.xlu0 %734
          %736 = vrot.lane.b32.xlu0 %v715, 126
          %v737 = vpop.permute.xlu0 %736
          %738 = vrot.lane.b32.xlu0 %v716, 126
          %v739 = vpop.permute.xlu0 %738
          %740 = vrot.lane.b32.xlu0 %v717, 126
          %v741 = vpop.permute.xlu0 %740
          %v750 = vadd.f32 %v699, %v727
          %v751 = vadd.f32 %v700, %v729
          %v752 = vadd.f32 %v701, %v731
          %v753 = vadd.f32 %v702, %v733
          %v754 = vadd.f32 %v703, %v735
          %v755 = vadd.f32 %v704, %v737
          %v756 = vadd.f32 %v705, %v739
          %v757 = vadd.f32 %v706, %v741
          %s758 = sadd.s32 %s500, 6
          %s759 = sld [smem:[#allocation6 + %s758]]
          %v760 = vld [vmem:[#allocation2 + $0x2] sm:$0xff]
          %v761 = vld [vmem:[#allocation2 + $0xa] sm:$0xff]
          %v762 = vld [vmem:[#allocation2 + $0x12] sm:$0xff]
          %v763 = vld [vmem:[#allocation2 + $0x1a] sm:$0xff]
          %v764 = vld [vmem:[#allocation2 + $0x22] sm:$0xff]
          %v765 = vld [vmem:[#allocation2 + $0x2a] sm:$0xff]
          %v766 = vld [vmem:[#allocation2 + $0x32] sm:$0xff]
          %v767 = vld [vmem:[#allocation2 + $0x3a] sm:$0xff]
          %v768 = vstv %s759
          %v769 = vmul.f32 %v768, %v760
          %v770 = vmul.f32 %v768, %v761
          %v771 = vmul.f32 %v768, %v762
          %v772 = vmul.f32 %v768, %v763
          %v773 = vmul.f32 %v768, %v764
          %v774 = vmul.f32 %v768, %v765
          %v775 = vmul.f32 %v768, %v766
          %v776 = vmul.f32 %v768, %v767
          %v777 = vadd.f32 %v750, %v769
          %v778 = vadd.f32 %v751, %v770
          %v779 = vadd.f32 %v752, %v771
          %v780 = vadd.f32 %v753, %v772
          %v781 = vadd.f32 %v754, %v773
          %v782 = vadd.f32 %v755, %v774
          %v783 = vadd.f32 %v756, %v775
          %v784 = vadd.f32 %v757, %v776
          %s785 = sadd.s32 %s500, 7
          %s786 = sld [smem:[#allocation6 + %s785]]
          %v787 = vstv %s786
          %v788 = vmul.f32 %v787, %v760
          %v789 = vmul.f32 %v787, %v761
          %v790 = vmul.f32 %v787, %v762
          %v791 = vmul.f32 %v787, %v763
          %v792 = vmul.f32 %v787, %v764
          %v793 = vmul.f32 %v787, %v765
          %v794 = vmul.f32 %v787, %v766
          %v795 = vmul.f32 %v787, %v767
          %804 = vrot.lane.b32.xlu0 %v788, 127
          %v805 = vpop.permute.xlu0 %804
          %806 = vrot.lane.b32.xlu0 %v789, 127
          %v807 = vpop.permute.xlu0 %806
          %808 = vrot.lane.b32.xlu0 %v790, 127
          %v809 = vpop.permute.xlu0 %808
          %810 = vrot.lane.b32.xlu0 %v791, 127
          %v811 = vpop.permute.xlu0 %810
          %812 = vrot.lane.b32.xlu0 %v792, 127
          %v813 = vpop.permute.xlu0 %812
          %814 = vrot.lane.b32.xlu0 %v793, 127
          %v815 = vpop.permute.xlu0 %814
          %816 = vrot.lane.b32.xlu0 %v794, 127
          %v817 = vpop.permute.xlu0 %816
          %818 = vrot.lane.b32.xlu0 %v795, 127
          %v819 = vpop.permute.xlu0 %818
          %v828 = vadd.f32 %v777, %v805
          %v829 = vadd.f32 %v778, %v807
          %v830 = vadd.f32 %v779, %v809
          %v831 = vadd.f32 %v780, %v811
          %v832 = vadd.f32 %v781, %v813
          %v833 = vadd.f32 %v782, %v815
          %v834 = vadd.f32 %v783, %v817
          %v835 = vadd.f32 %v784, %v819
          %s836 = sadd.s32 %s500, 8
          %s837 = sld [smem:[#allocation6 + %s836]]
          %v838 = vstv %s837
          %v839 = vmul.f32 %v838, %v760
          %v840 = vmul.f32 %v838, %v761
          %v841 = vmul.f32 %v838, %v762
          %v842 = vmul.f32 %v838, %v763
          %v843 = vmul.f32 %v838, %v764
          %v844 = vmul.f32 %v838, %v765
          %v845 = vmul.f32 %v838, %v766
          %v846 = vmul.f32 %v838, %v767
          %855 = vrot.lane.b32.xlu0 %v839, 126
          %v856 = vpop.permute.xlu0 %855
          %857 = vrot.lane.b32.xlu0 %v840, 126
          %v858 = vpop.permute.xlu0 %857
          %859 = vrot.lane.b32.xlu0 %v841, 126
          %v860 = vpop.permute.xlu0 %859
          %861 = vrot.lane.b32.xlu0 %v842, 126
          %v862 = vpop.permute.xlu0 %861
          %863 = vrot.lane.b32.xlu0 %v843, 126
          %v864 = vpop.permute.xlu0 %863
          %865 = vrot.lane.b32.xlu0 %v844, 126
          %v866 = vpop.permute.xlu0 %865
          %867 = vrot.lane.b32.xlu0 %v845, 126
          %v868 = vpop.permute.xlu0 %867
          %869 = vrot.lane.b32.xlu0 %v846, 126
          %v870 = vpop.permute.xlu0 %869
          %v879 = vadd.f32 %v828, %v856
          %v880 = vadd.f32 %v829, %v858
          %v881 = vadd.f32 %v830, %v860
          %v882 = vadd.f32 %v831, %v862
          %v883 = vadd.f32 %v832, %v864
          %v884 = vadd.f32 %v833, %v866
          %v885 = vadd.f32 %v834, %v868
          %v886 = vadd.f32 %v835, %v870
          %s887 = sadd.s32 %s500, 9
          %s888 = sld [smem:[#allocation6 + %s887]]
          %s889 = scalar_lea.vmem [#allocation2], 72
          %v890 = vld [vmem:[%s889] sm:$0xff]
          %v891 = vld [vmem:[%s889 + $0x8] sm:$0xff]
          %v892 = vld [vmem:[%s889 + $0x10] sm:$0xff]
          %v893 = vld [vmem:[%s889 + $0x18] sm:$0xff]
          %v894 = vld [vmem:[%s889 + $0x20] sm:$0xff]
          %v895 = vld [vmem:[%s889 + $0x28] sm:$0xff]
          %v896 = vld [vmem:[%s889 + $0x30] sm:$0xff]
          %v897 = vld [vmem:[%s889 + $0x38] sm:$0xff]
          %v898 = vstv %s888
          %v899 = vmul.f32 %v898, %v890
          %v900 = vmul.f32 %v898, %v891
          %v901 = vmul.f32 %v898, %v892
          %v902 = vmul.f32 %v898, %v893
          %v903 = vmul.f32 %v898, %v894
          %v904 = vmul.f32 %v898, %v895
          %v905 = vmul.f32 %v898, %v896
          %v906 = vmul.f32 %v898, %v897
          %v907 = vadd.f32 %v879, %v899
          %v908 = vadd.f32 %v880, %v900
          %v909 = vadd.f32 %v881, %v901
          %v910 = vadd.f32 %v882, %v902
          %v911 = vadd.f32 %v883, %v903
          %v912 = vadd.f32 %v884, %v904
          %v913 = vadd.f32 %v885, %v905
          %v914 = vadd.f32 %v886, %v906
          %s915 = sadd.s32 %s500, 10
          %s916 = sld [smem:[#allocation6 + %s915]]
          %v917 = vstv %s916
          %v918 = vmul.f32 %v917, %v890
          %v919 = vmul.f32 %v917, %v891
          %v920 = vmul.f32 %v917, %v892
          %v921 = vmul.f32 %v917, %v893
          %v922 = vmul.f32 %v917, %v894
          %v923 = vmul.f32 %v917, %v895
          %v924 = vmul.f32 %v917, %v896
          %v925 = vmul.f32 %v917, %v897
          %934 = vrot.lane.b32.xlu0 %v918, 127
          %v935 = vpop.permute.xlu0 %934
          %936 = vrot.lane.b32.xlu0 %v919, 127
          %v937 = vpop.permute.xlu0 %936
          %938 = vrot.lane.b32.xlu0 %v920, 127
          %v939 = vpop.permute.xlu0 %938
          %940 = vrot.lane.b32.xlu0 %v921, 127
          %v941 = vpop.permute.xlu0 %940
          %942 = vrot.lane.b32.xlu0 %v922, 127
          %v943 = vpop.permute.xlu0 %942
          %944 = vrot.lane.b32.xlu0 %v923, 127
          %v945 = vpop.permute.xlu0 %944
          %946 = vrot.lane.b32.xlu0 %v924, 127
          %v947 = vpop.permute.xlu0 %946
          %948 = vrot.lane.b32.xlu0 %v925, 127
          %v949 = vpop.permute.xlu0 %948
          %v958 = vadd.f32 %v907, %v935
          %v959 = vadd.f32 %v908, %v937
          %v960 = vadd.f32 %v909, %v939
          %v961 = vadd.f32 %v910, %v941
          %v962 = vadd.f32 %v911, %v943
          %v963 = vadd.f32 %v912, %v945
          %v964 = vadd.f32 %v913, %v947
          %v965 = vadd.f32 %v914, %v949
          %s966 = sadd.s32 %s500, 11
          %s967 = sld [smem:[#allocation6 + %s966]]
          %v968 = vstv %s967
          %v969 = vmul.f32 %v968, %v890
          %v970 = vmul.f32 %v968, %v891
          %v971 = vmul.f32 %v968, %v892
          %v972 = vmul.f32 %v968, %v893
          %v973 = vmul.f32 %v968, %v894
          %v974 = vmul.f32 %v968, %v895
          %v975 = vmul.f32 %v968, %v896
          %v976 = vmul.f32 %v968, %v897
          %985 = vrot.lane.b32.xlu0 %v969, 126
          %v986 = vpop.permute.xlu0 %985
          %987 = vrot.lane.b32.xlu0 %v970, 126
          %v988 = vpop.permute.xlu0 %987
          %989 = vrot.lane.b32.xlu0 %v971, 126
          %v990 = vpop.permute.xlu0 %989
          %991 = vrot.lane.b32.xlu0 %v972, 126
          %v992 = vpop.permute.xlu0 %991
          %993 = vrot.lane.b32.xlu0 %v973, 126
          %v994 = vpop.permute.xlu0 %993
          %995 = vrot.lane.b32.xlu0 %v974, 126
          %v996 = vpop.permute.xlu0 %995
          %997 = vrot.lane.b32.xlu0 %v975, 126
          %v998 = vpop.permute.xlu0 %997
          %999 = vrot.lane.b32.xlu0 %v976, 126
          %v1000 = vpop.permute.xlu0 %999
          %v1009 = vadd.f32 %v958, %v986
          %v1010 = vadd.f32 %v959, %v988
          %v1011 = vadd.f32 %v960, %v990
          %v1012 = vadd.f32 %v961, %v992
          %v1013 = vadd.f32 %v962, %v994
          %v1014 = vadd.f32 %v963, %v996
          %v1015 = vadd.f32 %v964, %v998
          %v1016 = vadd.f32 %v965, %v1000
          %s1017 = sadd.s32 %s500, 12
          %s1018 = sld [smem:[#allocation6 + %s1017]]
          %v1019 = vld [vmem:[%s889 + $0x1] sm:$0xff]
          %v1020 = vld [vmem:[%s889 + $0x9] sm:$0xff]
          %v1021 = vld [vmem:[%s889 + $0x11] sm:$0xff]
          %v1022 = vld [vmem:[%s889 + $0x19] sm:$0xff]
          %v1023 = vld [vmem:[%s889 + $0x21] sm:$0xff]
          %v1024 = vld [vmem:[%s889 + $0x29] sm:$0xff]
          %v1025 = vld [vmem:[%s889 + $0x31] sm:$0xff]
          %v1026 = vld [vmem:[%s889 + $0x39] sm:$0xff]
          %v1027 = vstv %s1018
          %v1028 = vmul.f32 %v1027, %v1019
          %v1029 = vmul.f32 %v1027, %v1020
          %v1030 = vmul.f32 %v1027, %v1021
          %v1031 = vmul.f32 %v1027, %v1022
          %v1032 = vmul.f32 %v1027, %v1023
          %v1033 = vmul.f32 %v1027, %v1024
          %v1034 = vmul.f32 %v1027, %v1025
          %v1035 = vmul.f32 %v1027, %v1026
          %v1036 = vadd.f32 %v1009, %v1028
          %v1037 = vadd.f32 %v1010, %v1029
          %v1038 = vadd.f32 %v1011, %v1030
          %v1039 = vadd.f32 %v1012, %v1031
          %v1040 = vadd.f32 %v1013, %v1032
          %v1041 = vadd.f32 %v1014, %v1033
          %v1042 = vadd.f32 %v1015, %v1034
          %v1043 = vadd.f32 %v1016, %v1035
          %s1044 = sadd.s32 %s500, 13
          %s1045 = sld [smem:[#allocation6 + %s1044]]
          %v1046 = vstv %s1045
          %v1047 = vmul.f32 %v1046, %v1019
          %v1048 = vmul.f32 %v1046, %v1020
          %v1049 = vmul.f32 %v1046, %v1021
          %v1050 = vmul.f32 %v1046, %v1022
          %v1051 = vmul.f32 %v1046, %v1023
          %v1052 = vmul.f32 %v1046, %v1024
          %v1053 = vmul.f32 %v1046, %v1025
          %v1054 = vmul.f32 %v1046, %v1026
          %1063 = vrot.lane.b32.xlu0 %v1047, 127
          %v1064 = vpop.permute.xlu0 %1063
          %1065 = vrot.lane.b32.xlu0 %v1048, 127
          %v1066 = vpop.permute.xlu0 %1065
          %1067 = vrot.lane.b32.xlu0 %v1049, 127
          %v1068 = vpop.permute.xlu0 %1067
          %1069 = vrot.lane.b32.xlu0 %v1050, 127
          %v1070 = vpop.permute.xlu0 %1069
          %1071 = vrot.lane.b32.xlu0 %v1051, 127
          %v1072 = vpop.permute.xlu0 %1071
          %1073 = vrot.lane.b32.xlu0 %v1052, 127
          %v1074 = vpop.permute.xlu0 %1073
          %1075 = vrot.lane.b32.xlu0 %v1053, 127
          %v1076 = vpop.permute.xlu0 %1075
          %1077 = vrot.lane.b32.xlu0 %v1054, 127
          %v1078 = vpop.permute.xlu0 %1077
          %v1087 = vadd.f32 %v1036, %v1064
          %v1088 = vadd.f32 %v1037, %v1066
          %v1089 = vadd.f32 %v1038, %v1068
          %v1090 = vadd.f32 %v1039, %v1070
          %v1091 = vadd.f32 %v1040, %v1072
          %v1092 = vadd.f32 %v1041, %v1074
          %v1093 = vadd.f32 %v1042, %v1076
          %v1094 = vadd.f32 %v1043, %v1078
          %s1095 = sadd.s32 %s500, 14
          %s1096 = sld [smem:[#allocation6 + %s1095]]
          %v1097 = vstv %s1096
          %v1098 = vmul.f32 %v1097, %v1019
          %v1099 = vmul.f32 %v1097, %v1020
          %v1100 = vmul.f32 %v1097, %v1021
          %v1101 = vmul.f32 %v1097, %v1022
          %v1102 = vmul.f32 %v1097, %v1023
          %v1103 = vmul.f32 %v1097, %v1024
          %v1104 = vmul.f32 %v1097, %v1025
          %v1105 = vmul.f32 %v1097, %v1026
          %1114 = vrot.lane.b32.xlu0 %v1098, 126
          %v1115 = vpop.permute.xlu0 %1114
          %1116 = vrot.lane.b32.xlu0 %v1099, 126
          %v1117 = vpop.permute.xlu0 %1116
          %1118 = vrot.lane.b32.xlu0 %v1100, 126
          %v1119 = vpop.permute.xlu0 %1118
          %1120 = vrot.lane.b32.xlu0 %v1101, 126
          %v1121 = vpop.permute.xlu0 %1120
          %1122 = vrot.lane.b32.xlu0 %v1102, 126
          %v1123 = vpop.permute.xlu0 %1122
          %1124 = vrot.lane.b32.xlu0 %v1103, 126
          %v1125 = vpop.permute.xlu0 %1124
          %1126 = vrot.lane.b32.xlu0 %v1104, 126
          %v1127 = vpop.permute.xlu0 %1126
          %1128 = vrot.lane.b32.xlu0 %v1105, 126
          %v1129 = vpop.permute.xlu0 %1128
          %v1138 = vadd.f32 %v1087, %v1115
          %v1139 = vadd.f32 %v1088, %v1117
          %v1140 = vadd.f32 %v1089, %v1119
          %v1141 = vadd.f32 %v1090, %v1121
          %v1142 = vadd.f32 %v1091, %v1123
          %v1143 = vadd.f32 %v1092, %v1125
          %v1144 = vadd.f32 %v1093, %v1127
          %v1145 = vadd.f32 %v1094, %v1129
          %s1146 = sadd.s32 %s500, 15
          %s1147 = sld [smem:[#allocation6 + %s1146]]
          %v1148 = vld [vmem:[%s889 + $0x2] sm:$0xff]
          %v1149 = vld [vmem:[%s889 + $0xa] sm:$0xff]
          %v1150 = vld [vmem:[%s889 + $0x12] sm:$0xff]
          %v1151 = vld [vmem:[%s889 + $0x1a] sm:$0xff]
          %v1152 = vld [vmem:[%s889 + $0x22] sm:$0xff]
          %v1153 = vld [vmem:[%s889 + $0x2a] sm:$0xff]
          %v1154 = vld [vmem:[%s889 + $0x32] sm:$0xff]
          %v1155 = vld [vmem:[%s889 + $0x3a] sm:$0xff]
          %v1156 = vstv %s1147
          %v1157 = vmul.f32 %v1156, %v1148
          %v1158 = vmul.f32 %v1156, %v1149
          %v1159 = vmul.f32 %v1156, %v1150
          %v1160 = vmul.f32 %v1156, %v1151
          %v1161 = vmul.f32 %v1156, %v1152
          %v1162 = vmul.f32 %v1156, %v1153
          %v1163 = vmul.f32 %v1156, %v1154
          %v1164 = vmul.f32 %v1156, %v1155
          %v1165 = vadd.f32 %v1138, %v1157
          %v1166 = vadd.f32 %v1139, %v1158
          %v1167 = vadd.f32 %v1140, %v1159
          %v1168 = vadd.f32 %v1141, %v1160
          %v1169 = vadd.f32 %v1142, %v1161
          %v1170 = vadd.f32 %v1143, %v1162
          %v1171 = vadd.f32 %v1144, %v1163
          %v1172 = vadd.f32 %v1145, %v1164
          %s1173 = sadd.s32 %s500, 16
          %s1174 = sld [smem:[#allocation6 + %s1173]]
          %v1175 = vstv %s1174
          %v1176 = vmul.f32 %v1175, %v1148
          %v1177 = vmul.f32 %v1175, %v1149
          %v1178 = vmul.f32 %v1175, %v1150
          %v1179 = vmul.f32 %v1175, %v1151
          %v1180 = vmul.f32 %v1175, %v1152
          %v1181 = vmul.f32 %v1175, %v1153
          %v1182 = vmul.f32 %v1175, %v1154
          %v1183 = vmul.f32 %v1175, %v1155
          %1192 = vrot.lane.b32.xlu0 %v1176, 127
          %v1193 = vpop.permute.xlu0 %1192
          %1194 = vrot.lane.b32.xlu0 %v1177, 127
          %v1195 = vpop.permute.xlu0 %1194
          %1196 = vrot.lane.b32.xlu0 %v1178, 127
          %v1197 = vpop.permute.xlu0 %1196
          %1198 = vrot.lane.b32.xlu0 %v1179, 127
          %v1199 = vpop.permute.xlu0 %1198
          %1200 = vrot.lane.b32.xlu0 %v1180, 127
          %v1201 = vpop.permute.xlu0 %1200
          %1202 = vrot.lane.b32.xlu0 %v1181, 127
          %v1203 = vpop.permute.xlu0 %1202
          %1204 = vrot.lane.b32.xlu0 %v1182, 127
          %v1205 = vpop.permute.xlu0 %1204
          %1206 = vrot.lane.b32.xlu0 %v1183, 127
          %v1207 = vpop.permute.xlu0 %1206
          %v1216 = vadd.f32 %v1165, %v1193
          %v1217 = vadd.f32 %v1166, %v1195
          %v1218 = vadd.f32 %v1167, %v1197
          %v1219 = vadd.f32 %v1168, %v1199
          %v1220 = vadd.f32 %v1169, %v1201
          %v1221 = vadd.f32 %v1170, %v1203
          %v1222 = vadd.f32 %v1171, %v1205
          %v1223 = vadd.f32 %v1172, %v1207
          %s1224 = sadd.s32 %s500, 17
          %s1225 = sld [smem:[#allocation6 + %s1224]]
          %v1226 = vstv %s1225
          %v1227 = vmul.f32 %v1226, %v1148
          %v1228 = vmul.f32 %v1226, %v1149
          %v1229 = vmul.f32 %v1226, %v1150
          %v1230 = vmul.f32 %v1226, %v1151
          %v1231 = vmul.f32 %v1226, %v1152
          %v1232 = vmul.f32 %v1226, %v1153
          %v1233 = vmul.f32 %v1226, %v1154
          %v1234 = vmul.f32 %v1226, %v1155
          %1243 = vrot.lane.b32.xlu0 %v1227, 126
          %v1244 = vpop.permute.xlu0 %1243
          %1245 = vrot.lane.b32.xlu0 %v1228, 126
          %v1246 = vpop.permute.xlu0 %1245
          %1247 = vrot.lane.b32.xlu0 %v1229, 126
          %v1248 = vpop.permute.xlu0 %1247
          %1249 = vrot.lane.b32.xlu0 %v1230, 126
          %v1250 = vpop.permute.xlu0 %1249
          %1251 = vrot.lane.b32.xlu0 %v1231, 126
          %v1252 = vpop.permute.xlu0 %1251
          %1253 = vrot.lane.b32.xlu0 %v1232, 126
          %v1254 = vpop.permute.xlu0 %1253
          %1255 = vrot.lane.b32.xlu0 %v1233, 126
          %v1256 = vpop.permute.xlu0 %1255
          %1257 = vrot.lane.b32.xlu0 %v1234, 126
          %v1258 = vpop.permute.xlu0 %1257
          %v1267 = vadd.f32 %v1216, %v1244
          %v1268 = vadd.f32 %v1217, %v1246
          %v1269 = vadd.f32 %v1218, %v1248
          %v1270 = vadd.f32 %v1219, %v1250
          %v1271 = vadd.f32 %v1220, %v1252
          %v1272 = vadd.f32 %v1221, %v1254
          %v1273 = vadd.f32 %v1222, %v1256
          %v1274 = vadd.f32 %v1223, %v1258
          %s1275 = sadd.s32 %s500, 18
          %s1276 = sld [smem:[#allocation6 + %s1275]]
          %s1277 = scalar_lea.vmem [#allocation2], 144
          %v1278 = vld [vmem:[%s1277] sm:$0xff]
          %v1279 = vld [vmem:[%s1277 + $0x8] sm:$0xff]
          %v1280 = vld [vmem:[%s1277 + $0x10] sm:$0xff]
          %v1281 = vld [vmem:[%s1277 + $0x18] sm:$0xff]
          %v1282 = vld [vmem:[%s1277 + $0x20] sm:$0xff]
          %v1283 = vld [vmem:[%s1277 + $0x28] sm:$0xff]
          %v1284 = vld [vmem:[%s1277 + $0x30] sm:$0xff]
          %v1285 = vld [vmem:[%s1277 + $0x38] sm:$0xff]
          %v1286 = vstv %s1276
          %v1287 = vmul.f32 %v1286, %v1278
          %v1288 = vmul.f32 %v1286, %v1279
          %v1289 = vmul.f32 %v1286, %v1280
          %v1290 = vmul.f32 %v1286, %v1281
          %v1291 = vmul.f32 %v1286, %v1282
          %v1292 = vmul.f32 %v1286, %v1283
          %v1293 = vmul.f32 %v1286, %v1284
          %v1294 = vmul.f32 %v1286, %v1285
          %v1295 = vadd.f32 %v1267, %v1287
          %v1296 = vadd.f32 %v1268, %v1288
          %v1297 = vadd.f32 %v1269, %v1289
          %v1298 = vadd.f32 %v1270, %v1290
          %v1299 = vadd.f32 %v1271, %v1291
          %v1300 = vadd.f32 %v1272, %v1292
          %v1301 = vadd.f32 %v1273, %v1293
          %v1302 = vadd.f32 %v1274, %v1294
          %s1303 = sadd.s32 %s500, 19
          %s1304 = sld [smem:[#allocation6 + %s1303]]
          %v1305 = vstv %s1304
          %v1306 = vmul.f32 %v1305, %v1278
          %v1307 = vmul.f32 %v1305, %v1279
          %v1308 = vmul.f32 %v1305, %v1280
          %v1309 = vmul.f32 %v1305, %v1281
          %v1310 = vmul.f32 %v1305, %v1282
          %v1311 = vmul.f32 %v1305, %v1283
          %v1312 = vmul.f32 %v1305, %v1284
          %v1313 = vmul.f32 %v1305, %v1285
          %1322 = vrot.lane.b32.xlu0 %v1306, 127
          %v1323 = vpop.permute.xlu0 %1322
          %1324 = vrot.lane.b32.xlu0 %v1307, 127
          %v1325 = vpop.permute.xlu0 %1324
          %1326 = vrot.lane.b32.xlu0 %v1308, 127
          %v1327 = vpop.permute.xlu0 %1326
          %1328 = vrot.lane.b32.xlu0 %v1309, 127
          %v1329 = vpop.permute.xlu0 %1328
          %1330 = vrot.lane.b32.xlu0 %v1310, 127
          %v1331 = vpop.permute.xlu0 %1330
          %1332 = vrot.lane.b32.xlu0 %v1311, 127
          %v1333 = vpop.permute.xlu0 %1332
          %1334 = vrot.lane.b32.xlu0 %v1312, 127
          %v1335 = vpop.permute.xlu0 %1334
          %1336 = vrot.lane.b32.xlu0 %v1313, 127
          %v1337 = vpop.permute.xlu0 %1336
          %v1346 = vadd.f32 %v1295, %v1323
          %v1347 = vadd.f32 %v1296, %v1325
          %v1348 = vadd.f32 %v1297, %v1327
          %v1349 = vadd.f32 %v1298, %v1329
          %v1350 = vadd.f32 %v1299, %v1331
          %v1351 = vadd.f32 %v1300, %v1333
          %v1352 = vadd.f32 %v1301, %v1335
          %v1353 = vadd.f32 %v1302, %v1337
          %s1354 = sadd.s32 %s500, 20
          %s1355 = sld [smem:[#allocation6 + %s1354]]
          %v1356 = vstv %s1355
          %v1357 = vmul.f32 %v1356, %v1278
          %v1358 = vmul.f32 %v1356, %v1279
          %v1359 = vmul.f32 %v1356, %v1280
          %v1360 = vmul.f32 %v1356, %v1281
          %v1361 = vmul.f32 %v1356, %v1282
          %v1362 = vmul.f32 %v1356, %v1283
          %v1363 = vmul.f32 %v1356, %v1284
          %v1364 = vmul.f32 %v1356, %v1285
          %1373 = vrot.lane.b32.xlu0 %v1357, 126
          %v1374 = vpop.permute.xlu0 %1373
          %1375 = vrot.lane.b32.xlu0 %v1358, 126
          %v1376 = vpop.permute.xlu0 %1375
          %1377 = vrot.lane.b32.xlu0 %v1359, 126
          %v1378 = vpop.permute.xlu0 %1377
          %1379 = vrot.lane.b32.xlu0 %v1360, 126
          %v1380 = vpop.permute.xlu0 %1379
          %1381 = vrot.lane.b32.xlu0 %v1361, 126
          %v1382 = vpop.permute.xlu0 %1381
          %1383 = vrot.lane.b32.xlu0 %v1362, 126
          %v1384 = vpop.permute.xlu0 %1383
          %1385 = vrot.lane.b32.xlu0 %v1363, 126
          %v1386 = vpop.permute.xlu0 %1385
          %1387 = vrot.lane.b32.xlu0 %v1364, 126
          %v1388 = vpop.permute.xlu0 %1387
          %v1397 = vadd.f32 %v1346, %v1374
          %v1398 = vadd.f32 %v1347, %v1376
          %v1399 = vadd.f32 %v1348, %v1378
          %v1400 = vadd.f32 %v1349, %v1380
          %v1401 = vadd.f32 %v1350, %v1382
          %v1402 = vadd.f32 %v1351, %v1384
          %v1403 = vadd.f32 %v1352, %v1386
          %v1404 = vadd.f32 %v1353, %v1388
          %s1405 = sadd.s32 %s500, 21
          %s1406 = sld [smem:[#allocation6 + %s1405]]
          %v1407 = vld [vmem:[%s1277 + $0x1] sm:$0xff]
          %v1408 = vld [vmem:[%s1277 + $0x9] sm:$0xff]
          %v1409 = vld [vmem:[%s1277 + $0x11] sm:$0xff]
          %v1410 = vld [vmem:[%s1277 + $0x19] sm:$0xff]
          %v1411 = vld [vmem:[%s1277 + $0x21] sm:$0xff]
          %v1412 = vld [vmem:[%s1277 + $0x29] sm:$0xff]
          %v1413 = vld [vmem:[%s1277 + $0x31] sm:$0xff]
          %v1414 = vld [vmem:[%s1277 + $0x39] sm:$0xff]
          %v1415 = vstv %s1406
          %v1416 = vmul.f32 %v1415, %v1407
          %v1417 = vmul.f32 %v1415, %v1408
          %v1418 = vmul.f32 %v1415, %v1409
          %v1419 = vmul.f32 %v1415, %v1410
          %v1420 = vmul.f32 %v1415, %v1411
          %v1421 = vmul.f32 %v1415, %v1412
          %v1422 = vmul.f32 %v1415, %v1413
          %v1423 = vmul.f32 %v1415, %v1414
          %v1424 = vadd.f32 %v1397, %v1416
          %v1425 = vadd.f32 %v1398, %v1417
          %v1426 = vadd.f32 %v1399, %v1418
          %v1427 = vadd.f32 %v1400, %v1419
          %v1428 = vadd.f32 %v1401, %v1420
          %v1429 = vadd.f32 %v1402, %v1421
          %v1430 = vadd.f32 %v1403, %v1422
          %v1431 = vadd.f32 %v1404, %v1423
          %s1432 = sadd.s32 %s500, 22
          %s1433 = sld [smem:[#allocation6 + %s1432]]
          %v1434 = vstv %s1433
          %v1435 = vmul.f32 %v1434, %v1407
          %v1436 = vmul.f32 %v1434, %v1408
          %v1437 = vmul.f32 %v1434, %v1409
          %v1438 = vmul.f32 %v1434, %v1410
          %v1439 = vmul.f32 %v1434, %v1411
          %v1440 = vmul.f32 %v1434, %v1412
          %v1441 = vmul.f32 %v1434, %v1413
          %v1442 = vmul.f32 %v1434, %v1414
          %1451 = vrot.lane.b32.xlu0 %v1435, 127
          %v1452 = vpop.permute.xlu0 %1451
          %1453 = vrot.lane.b32.xlu0 %v1436, 127
          %v1454 = vpop.permute.xlu0 %1453
          %1455 = vrot.lane.b32.xlu0 %v1437, 127
          %v1456 = vpop.permute.xlu0 %1455
          %1457 = vrot.lane.b32.xlu0 %v1438, 127
          %v1458 = vpop.permute.xlu0 %1457
          %1459 = vrot.lane.b32.xlu0 %v1439, 127
          %v1460 = vpop.permute.xlu0 %1459
          %1461 = vrot.lane.b32.xlu0 %v1440, 127
          %v1462 = vpop.permute.xlu0 %1461
          %1463 = vrot.lane.b32.xlu0 %v1441, 127
          %v1464 = vpop.permute.xlu0 %1463
          %1465 = vrot.lane.b32.xlu0 %v1442, 127
          %v1466 = vpop.permute.xlu0 %1465
          %v1475 = vadd.f32 %v1424, %v1452
          %v1476 = vadd.f32 %v1425, %v1454
          %v1477 = vadd.f32 %v1426, %v1456
          %v1478 = vadd.f32 %v1427, %v1458
          %v1479 = vadd.f32 %v1428, %v1460
          %v1480 = vadd.f32 %v1429, %v1462
          %v1481 = vadd.f32 %v1430, %v1464
          %v1482 = vadd.f32 %v1431, %v1466
          %s1483 = sadd.s32 %s500, 23
          %s1484 = sld [smem:[#allocation6 + %s1483]]
          %v1485 = vstv %s1484
          %v1486 = vmul.f32 %v1485, %v1407
          %v1487 = vmul.f32 %v1485, %v1408
          %v1488 = vmul.f32 %v1485, %v1409
          %v1489 = vmul.f32 %v1485, %v1410
          %v1490 = vmul.f32 %v1485, %v1411
          %v1491 = vmul.f32 %v1485, %v1412
          %v1492 = vmul.f32 %v1485, %v1413
          %v1493 = vmul.f32 %v1485, %v1414
          %1502 = vrot.lane.b32.xlu0 %v1486, 126
          %v1503 = vpop.permute.xlu0 %1502
          %1504 = vrot.lane.b32.xlu0 %v1487, 126
          %v1505 = vpop.permute.xlu0 %1504
          %1506 = vrot.lane.b32.xlu0 %v1488, 126
          %v1507 = vpop.permute.xlu0 %1506
          %1508 = vrot.lane.b32.xlu0 %v1489, 126
          %v1509 = vpop.permute.xlu0 %1508
          %1510 = vrot.lane.b32.xlu0 %v1490, 126
          %v1511 = vpop.permute.xlu0 %1510
          %1512 = vrot.lane.b32.xlu0 %v1491, 126
          %v1513 = vpop.permute.xlu0 %1512
          %1514 = vrot.lane.b32.xlu0 %v1492, 126
          %v1515 = vpop.permute.xlu0 %1514
          %1516 = vrot.lane.b32.xlu0 %v1493, 126
          %v1517 = vpop.permute.xlu0 %1516
          %v1526 = vadd.f32 %v1475, %v1503
          %v1527 = vadd.f32 %v1476, %v1505
          %v1528 = vadd.f32 %v1477, %v1507
          %v1529 = vadd.f32 %v1478, %v1509
          %v1530 = vadd.f32 %v1479, %v1511
          %v1531 = vadd.f32 %v1480, %v1513
          %v1532 = vadd.f32 %v1481, %v1515
          %v1533 = vadd.f32 %v1482, %v1517
          %s1534 = sadd.s32 %s500, 24
          %s1535 = sld [smem:[#allocation6 + %s1534]]
          %v1536 = vld [vmem:[%s1277 + $0x2] sm:$0xff]
          %v1537 = vld [vmem:[%s1277 + $0xa] sm:$0xff]
          %v1538 = vld [vmem:[%s1277 + $0x12] sm:$0xff]
          %v1539 = vld [vmem:[%s1277 + $0x1a] sm:$0xff]
          %v1540 = vld [vmem:[%s1277 + $0x22] sm:$0xff]
          %v1541 = vld [vmem:[%s1277 + $0x2a] sm:$0xff]
          %v1542 = vld [vmem:[%s1277 + $0x32] sm:$0xff]
          %v1543 = vld [vmem:[%s1277 + $0x3a] sm:$0xff]
          %v1544 = vstv %s1535
          %v1545 = vmul.f32 %v1544, %v1536
          %v1546 = vmul.f32 %v1544, %v1537
          %v1547 = vmul.f32 %v1544, %v1538
          %v1548 = vmul.f32 %v1544, %v1539
          %v1549 = vmul.f32 %v1544, %v1540
          %v1550 = vmul.f32 %v1544, %v1541
          %v1551 = vmul.f32 %v1544, %v1542
          %v1552 = vmul.f32 %v1544, %v1543
          %v1553 = vadd.f32 %v1526, %v1545
          %v1554 = vadd.f32 %v1527, %v1546
          %v1555 = vadd.f32 %v1528, %v1547
          %v1556 = vadd.f32 %v1529, %v1548
          %v1557 = vadd.f32 %v1530, %v1549
          %v1558 = vadd.f32 %v1531, %v1550
          %v1559 = vadd.f32 %v1532, %v1551
          %v1560 = vadd.f32 %v1533, %v1552
          %s1561 = sadd.s32 %s500, 25
          %s1562 = sld [smem:[#allocation6 + %s1561]]
          %v1563 = vstv %s1562
          %v1564 = vmul.f32 %v1563, %v1536
          %v1565 = vmul.f32 %v1563, %v1537
          %v1566 = vmul.f32 %v1563, %v1538
          %v1567 = vmul.f32 %v1563, %v1539
          %v1568 = vmul.f32 %v1563, %v1540
          %v1569 = vmul.f32 %v1563, %v1541
          %v1570 = vmul.f32 %v1563, %v1542
          %v1571 = vmul.f32 %v1563, %v1543
          %1580 = vrot.lane.b32.xlu0 %v1564, 127
          %v1581 = vpop.permute.xlu0 %1580
          %1582 = vrot.lane.b32.xlu0 %v1565, 127
          %v1583 = vpop.permute.xlu0 %1582
          %1584 = vrot.lane.b32.xlu0 %v1566, 127
          %v1585 = vpop.permute.xlu0 %1584
          %1586 = vrot.lane.b32.xlu0 %v1567, 127
          %v1587 = vpop.permute.xlu0 %1586
          %1588 = vrot.lane.b32.xlu0 %v1568, 127
          %v1589 = vpop.permute.xlu0 %1588
          %1590 = vrot.lane.b32.xlu0 %v1569, 127
          %v1591 = vpop.permute.xlu0 %1590
          %1592 = vrot.lane.b32.xlu0 %v1570, 127
          %v1593 = vpop.permute.xlu0 %1592
          %1594 = vrot.lane.b32.xlu0 %v1571, 127
          %v1595 = vpop.permute.xlu0 %1594
          %v1604 = vadd.f32 %v1553, %v1581
          %v1605 = vadd.f32 %v1554, %v1583
          %v1606 = vadd.f32 %v1555, %v1585
          %v1607 = vadd.f32 %v1556, %v1587
          %v1608 = vadd.f32 %v1557, %v1589
          %v1609 = vadd.f32 %v1558, %v1591
          %v1610 = vadd.f32 %v1559, %v1593
          %v1611 = vadd.f32 %v1560, %v1595
          %s1612 = sadd.s32 %s500, 26
          %s1613 = sld [smem:[#allocation6 + %s1612]]
          %v1614 = vstv %s1613
          %v1615 = vmul.f32 %v1614, %v1536
          %v1616 = vmul.f32 %v1614, %v1537
          %v1617 = vmul.f32 %v1614, %v1538
          %v1618 = vmul.f32 %v1614, %v1539
          %v1619 = vmul.f32 %v1614, %v1540
          %v1620 = vmul.f32 %v1614, %v1541
          %v1621 = vmul.f32 %v1614, %v1542
          %v1622 = vmul.f32 %v1614, %v1543
          %1631 = vrot.lane.b32.xlu0 %v1615, 126
          %v1632 = vpop.permute.xlu0 %1631
          %1633 = vrot.lane.b32.xlu0 %v1616, 126
          %v1634 = vpop.permute.xlu0 %1633
          %1635 = vrot.lane.b32.xlu0 %v1617, 126
          %v1636 = vpop.permute.xlu0 %1635
          %1637 = vrot.lane.b32.xlu0 %v1618, 126
          %v1638 = vpop.permute.xlu0 %1637
          %1639 = vrot.lane.b32.xlu0 %v1619, 126
          %v1640 = vpop.permute.xlu0 %1639
          %1641 = vrot.lane.b32.xlu0 %v1620, 126
          %v1642 = vpop.permute.xlu0 %1641
          %1643 = vrot.lane.b32.xlu0 %v1621, 126
          %v1644 = vpop.permute.xlu0 %1643
          %1645 = vrot.lane.b32.xlu0 %v1622, 126
          %v1646 = vpop.permute.xlu0 %1645
          %v1655 = vadd.f32 %v1604, %v1632
          %v1656 = vadd.f32 %v1605, %v1634
          %v1657 = vadd.f32 %v1606, %v1636
          %v1658 = vadd.f32 %v1607, %v1638
          %v1659 = vadd.f32 %v1608, %v1640
          %v1660 = vadd.f32 %v1609, %v1642
          %v1661 = vadd.f32 %v1610, %v1644
          %v1662 = vadd.f32 %v1611, %v1646
          %s1663 = sadd.s32 %s495, 216
          %s1664 = sld [smem:[#allocation6 + %s1663]]
          %v1665 = vstv %s1664
          %v1666 = vadd.f32 %v1655, %v1665
          %v1667 = vadd.f32 %v1656, %v1665
          %v1668 = vadd.f32 %v1657, %v1665
          %v1669 = vadd.f32 %v1658, %v1665
          %v1670 = vadd.f32 %v1659, %v1665
          %v1671 = vadd.f32 %v1660, %v1665
          %v1672 = vadd.f32 %v1661, %v1665
          %v1673 = vadd.f32 %v1662, %v1665
          %v1674 = vmax.f32 %v1666, 0.0
          %v1675 = vmax.f32 %v1667, 0.0
          %v1676 = vmax.f32 %v1668, 0.0
          %v1677 = vmax.f32 %v1669, 0.0
          %v1678 = vmax.f32 %v1670, 0.0
          %v1679 = vmax.f32 %v1671, 0.0
          %v1680 = vmax.f32 %v1672, 0.0
          %v1681 = vmax.f32 %v1673, 0.0
          %1690 = vrot.lane.b32.xlu0 %v1674, 1
          %v1691 = vpop.permute.xlu0 %1690
          %1692 = vrot.lane.b32.xlu0 %v1675, 1
          %v1693 = vpop.permute.xlu0 %1692
          %1694 = vrot.lane.b32.xlu0 %v1676, 1
          %v1695 = vpop.permute.xlu0 %1694
          %1696 = vrot.lane.b32.xlu0 %v1677, 1
          %v1697 = vpop.permute.xlu0 %1696
          %1698 = vrot.lane.b32.xlu0 %v1678, 1
          %v1699 = vpop.permute.xlu0 %1698
          %1700 = vrot.lane.b32.xlu0 %v1679, 1
          %v1701 = vpop.permute.xlu0 %1700
          %1702 = vrot.lane.b32.xlu0 %v1680, 1
          %v1703 = vpop.permute.xlu0 %1702
          %1704 = vrot.lane.b32.xlu0 %v1681, 1
          %v1705 = vpop.permute.xlu0 %1704
          %s1714 = smul.u32 %s495, 72
          %s1715 = scalar_lea.vmem [#allocation3], %s1714
          %1716 = vst.msk [vmem:[%s1715 + $0x1] sm:$0xff] %vm469, %v1691
          %1717 = vst.msk [vmem:[%s1715 + $0x9] sm:$0xff] %vm469, %v1693
          %1718 = vst.msk [vmem:[%s1715 + $0x11] sm:$0xff] %vm469, %v1695
          %1719 = vst.msk [vmem:[%s1715 + $0x19] sm:$0xff] %vm469, %v1697
          %1720 = vst.msk [vmem:[%s1715 + $0x21] sm:$0xff] %vm469, %v1699
          %1721 = vst.msk [vmem:[%s1715 + $0x29] sm:$0xff] %vm469, %v1701
          %1722 = vst.msk [vmem:[%s1715 + $0x31] sm:$0xff] %vm469, %v1703
          %1723 = vst.msk [vmem:[%s1715 + $0x39] sm:$0xff] %vm469, %v1705
        $region49: #{discriminator_forward.1} parent=31 // loop_footer
          %s499 = sadd.s32 1, %s495
        $region50: #{discriminator_forward.1} parent=31 // loop_footer_branch
          %494 = sbr.rel target = $region46
        $region51: #{discriminator_forward.1} parent=31 // loop_exit
          _
        loop: start=0, step=1, limit=8
        $region52: #{discriminator_forward.1} parent=31 // loop_pre_header
          _
        $region53: #{discriminator_forward.1} parent=31 // loop_header
          %s1725 = sphi 0, %s1729
          %p1726 = scmp.ge.s32.totalorder %s1725, 8
        $region54: #{discriminator_forward.1} parent=31 // loop_header_branch
          %1728 = sbr.rel (%p1726) target = $region58
        $region55: #{discriminator_forward.1} parent=31 // loop_body
          %s1730 = smul.u32 %s1725, 72
          %s1731 = sadd.s32 %s1730, 224
          %s1732 = sld [smem:[#allocation6 + %s1731]]
          %v1733 = vld [vmem:[#allocation3] sm:$0xff]
          %v1734 = vld [vmem:[#allocation3 + $0x8] sm:$0xff]
          %v1735 = vld [vmem:[#allocation3 + $0x10] sm:$0xff]
          %v1736 = vld [vmem:[#allocation3 + $0x18] sm:$0xff]
          %v1737 = vld [vmem:[#allocation3 + $0x20] sm:$0xff]
          %v1738 = vld [vmem:[#allocation3 + $0x28] sm:$0xff]
          %v1739 = vld [vmem:[#allocation3 + $0x30] sm:$0xff]
          %v1740 = vld [vmem:[#allocation3 + $0x38] sm:$0xff]
          %v1741 = vstv %s1732
          %v1742 = vmul.f32 %v1741, %v1733
          %v1743 = vmul.f32 %v1741, %v1734
          %v1744 = vmul.f32 %v1741, %v1735
          %v1745 = vmul.f32 %v1741, %v1736
          %v1746 = vmul.f32 %v1741, %v1737
          %v1747 = vmul.f32 %v1741, %v1738
          %v1748 = vmul.f32 %v1741, %v1739
          %v1749 = vmul.f32 %v1741, %v1740
          %v1750 = vadd.f32 %v1742, 0.0
          %v1751 = vadd.f32 %v1743, 0.0
          %v1752 = vadd.f32 %v1744, 0.0
          %v1753 = vadd.f32 %v1745, 0.0
          %v1754 = vadd.f32 %v1746, 0.0
          %v1755 = vadd.f32 %v1747, 0.0
          %v1756 = vadd.f32 %v1748, 0.0
          %v1757 = vadd.f32 %v1749, 0.0
          %s1758 = sadd.s32 %s1730, 225
          %s1759 = sld [smem:[#allocation6 + %s1758]]
          %v1760 = vstv %s1759
          %v1761 = vmul.f32 %v1760, %v1733
          %v1762 = vmul.f32 %v1760, %v1734
          %v1763 = vmul.f32 %v1760, %v1735
          %v1764 = vmul.f32 %v1760, %v1736
          %v1765 = vmul.f32 %v1760, %v1737
          %v1766 = vmul.f32 %v1760, %v1738
          %v1767 = vmul.f32 %v1760, %v1739
          %v1768 = vmul.f32 %v1760, %v1740
          %1777 = vrot.lane.b32.xlu0 %v1761, 127
          %v1778 = vpop.permute.xlu0 %1777
          %1779 = vrot.lane.b32.xlu0 %v1762, 127
          %v1780 = vpop.permute.xlu0 %1779
          %1781 = vrot.lane.b32.xlu0 %v1763, 127
          %v1782 = vpop.permute.xlu0 %1781
          %1783 = vrot.lane.b32.xlu0 %v1764, 127
          %v1784 = vpop.permute.xlu0 %1783
          %1785 = vrot.lane.b32.xlu0 %v1765, 127
          %v1786 = vpop.permute.xlu0 %1785
          %1787 = vrot.lane.b32.xlu0 %v1766, 127
          %v1788 = vpop.permute.xlu0 %1787
          %1789 = vrot.lane.b32.xlu0 %v1767, 127
          %v1790 = vpop.permute.xlu0 %1789
          %1791 = vrot.lane.b32.xlu0 %v1768, 127
          %v1792 = vpop.permute.xlu0 %1791
          %v1801 = vadd.f32 %v1750, %v1778
          %v1802 = vadd.f32 %v1751, %v1780
          %v1803 = vadd.f32 %v1752, %v1782
          %v1804 = vadd.f32 %v1753, %v1784
          %v1805 = vadd.f32 %v1754, %v1786
          %v1806 = vadd.f32 %v1755, %v1788
          %v1807 = vadd.f32 %v1756, %v1790
          %v1808 = vadd.f32 %v1757, %v1792
          %s1809 = sadd.s32 %s1730, 226
          %s1810 = sld [smem:[#allocation6 + %s1809]]
          %v1811 = vstv %s1810
          %v1812 = vmul.f32 %v1811, %v1733
          %v1813 = vmul.f32 %v1811, %v1734
          %v1814 = vmul.f32 %v1811, %v1735
          %v1815 = vmul.f32 %v1811, %v1736
          %v1816 = vmul.f32 %v1811, %v1737
          %v1817 = vmul.f32 %v1811, %v1738
          %v1818 = vmul.f32 %v1811, %v1739
          %v1819 = vmul.f32 %v1811, %v1740
          %1828 = vrot.lane.b32.xlu0 %v1812, 126
          %v1829 = vpop.permute.xlu0 %1828
          %1830 = vrot.lane.b32.xlu0 %v1813, 126
          %v1831 = vpop.permute.xlu0 %1830
          %1832 = vrot.lane.b32.xlu0 %v1814, 126
          %v1833 = vpop.permute.xlu0 %1832
          %1834 = vrot.lane.b32.xlu0 %v1815, 126
          %v1835 = vpop.permute.xlu0 %1834
          %1836 = vrot.lane.b32.xlu0 %v1816, 126
          %v1837 = vpop.permute.xlu0 %1836
          %1838 = vrot.lane.b32.xlu0 %v1817, 126
          %v1839 = vpop.permute.xlu0 %1838
          %1840 = vrot.lane.b32.xlu0 %v1818, 126
          %v1841 = vpop.permute.xlu0 %1840
          %1842 = vrot.lane.b32.xlu0 %v1819, 126
          %v1843 = vpop.permute.xlu0 %1842
          %v1852 = vadd.f32 %v1801, %v1829
          %v1853 = vadd.f32 %v1802, %v1831
          %v1854 = vadd.f32 %v1803, %v1833
          %v1855 = vadd.f32 %v1804, %v1835
          %v1856 = vadd.f32 %v1805, %v1837
          %v1857 = vadd.f32 %v1806, %v1839
          %v1858 = vadd.f32 %v1807, %v1841
          %v1859 = vadd.f32 %v1808, %v1843
          %s1860 = sadd.s32 %s1730, 227
          %s1861 = sld [smem:[#allocation6 + %s1860]]
          %v1862 = vld [vmem:[#allocation3 + $0x1] sm:$0xff]
          %v1863 = vld [vmem:[#allocation3 + $0x9] sm:$0xff]
          %v1864 = vld [vmem:[#allocation3 + $0x11] sm:$0xff]
          %v1865 = vld [vmem:[#allocation3 + $0x19] sm:$0xff]
          %v1866 = vld [vmem:[#allocation3 + $0x21] sm:$0xff]
          %v1867 = vld [vmem:[#allocation3 + $0x29] sm:$0xff]
          %v1868 = vld [vmem:[#allocation3 + $0x31] sm:$0xff]
          %v1869 = vld [vmem:[#allocation3 + $0x39] sm:$0xff]
          %v1870 = vstv %s1861
          %v1871 = vmul.f32 %v1870, %v1862
          %v1872 = vmul.f32 %v1870, %v1863
          %v1873 = vmul.f32 %v1870, %v1864
          %v1874 = vmul.f32 %v1870, %v1865
          %v1875 = vmul.f32 %v1870, %v1866
          %v1876 = vmul.f32 %v1870, %v1867
          %v1877 = vmul.f32 %v1870, %v1868
          %v1878 = vmul.f32 %v1870, %v1869
          %v1879 = vadd.f32 %v1852, %v1871
          %v1880 = vadd.f32 %v1853, %v1872
          %v1881 = vadd.f32 %v1854, %v1873
          %v1882 = vadd.f32 %v1855, %v1874
          %v1883 = vadd.f32 %v1856, %v1875
          %v1884 = vadd.f32 %v1857, %v1876
          %v1885 = vadd.f32 %v1858, %v1877
          %v1886 = vadd.f32 %v1859, %v1878
          %s1887 = sadd.s32 %s1730, 228
          %s1888 = sld [smem:[#allocation6 + %s1887]]
          %v1889 = vstv %s1888
          %v1890 = vmul.f32 %v1889, %v1862
          %v1891 = vmul.f32 %v1889, %v1863
          %v1892 = vmul.f32 %v1889, %v1864
          %v1893 = vmul.f32 %v1889, %v1865
          %v1894 = vmul.f32 %v1889, %v1866
          %v1895 = vmul.f32 %v1889, %v1867
          %v1896 = vmul.f32 %v1889, %v1868
          %v1897 = vmul.f32 %v1889, %v1869
          %1906 = vrot.lane.b32.xlu0 %v1890, 127
          %v1907 = vpop.permute.xlu0 %1906
          %1908 = vrot.lane.b32.xlu0 %v1891, 127
          %v1909 = vpop.permute.xlu0 %1908
          %1910 = vrot.lane.b32.xlu0 %v1892, 127
          %v1911 = vpop.permute.xlu0 %1910
          %1912 = vrot.lane.b32.xlu0 %v1893, 127
          %v1913 = vpop.permute.xlu0 %1912
          %1914 = vrot.lane.b32.xlu0 %v1894, 127
          %v1915 = vpop.permute.xlu0 %1914
          %1916 = vrot.lane.b32.xlu0 %v1895, 127
          %v1917 = vpop.permute.xlu0 %1916
          %1918 = vrot.lane.b32.xlu0 %v1896, 127
          %v1919 = vpop.permute.xlu0 %1918
          %1920 = vrot.lane.b32.xlu0 %v1897, 127
          %v1921 = vpop.permute.xlu0 %1920
          %v1930 = vadd.f32 %v1879, %v1907
          %v1931 = vadd.f32 %v1880, %v1909
          %v1932 = vadd.f32 %v1881, %v1911
          %v1933 = vadd.f32 %v1882, %v1913
          %v1934 = vadd.f32 %v1883, %v1915
          %v1935 = vadd.f32 %v1884, %v1917
          %v1936 = vadd.f32 %v1885, %v1919
          %v1937 = vadd.f32 %v1886, %v1921
          %s1938 = sadd.s32 %s1730, 229
          %s1939 = sld [smem:[#allocation6 + %s1938]]
          %v1940 = vstv %s1939
          %v1941 = vmul.f32 %v1940, %v1862
          %v1942 = vmul.f32 %v1940, %v1863
          %v1943 = vmul.f32 %v1940, %v1864
          %v1944 = vmul.f32 %v1940, %v1865
          %v1945 = vmul.f32 %v1940, %v1866
          %v1946 = vmul.f32 %v1940, %v1867
          %v1947 = vmul.f32 %v1940, %v1868
          %v1948 = vmul.f32 %v1940, %v1869
          %1957 = vrot.lane.b32.xlu0 %v1941, 126
          %v1958 = vpop.permute.xlu0 %1957
          %1959 = vrot.lane.b32.xlu0 %v1942, 126
          %v1960 = vpop.permute.xlu0 %1959
          %1961 = vrot.lane.b32.xlu0 %v1943, 126
          %v1962 = vpop.permute.xlu0 %1961
          %1963 = vrot.lane.b32.xlu0 %v1944, 126
          %v1964 = vpop.permute.xlu0 %1963
          %1965 = vrot.lane.b32.xlu0 %v1945, 126
          %v1966 = vpop.permute.xlu0 %1965
          %1967 = vrot.lane.b32.xlu0 %v1946, 126
          %v1968 = vpop.permute.xlu0 %1967
          %1969 = vrot.lane.b32.xlu0 %v1947, 126
          %v1970 = vpop.permute.xlu0 %1969
          %1971 = vrot.lane.b32.xlu0 %v1948, 126
          %v1972 = vpop.permute.xlu0 %1971
          %v1981 = vadd.f32 %v1930, %v1958
          %v1982 = vadd.f32 %v1931, %v1960
          %v1983 = vadd.f32 %v1932, %v1962
          %v1984 = vadd.f32 %v1933, %v1964
          %v1985 = vadd.f32 %v1934, %v1966
          %v1986 = vadd.f32 %v1935, %v1968
          %v1987 = vadd.f32 %v1936, %v1970
          %v1988 = vadd.f32 %v1937, %v1972
          %s1989 = sadd.s32 %s1730, 230
          %s1990 = sld [smem:[#allocation6 + %s1989]]
          %v1991 = vld [vmem:[#allocation3 + $0x2] sm:$0xff]
          %v1992 = vld [vmem:[#allocation3 + $0xa] sm:$0xff]
          %v1993 = vld [vmem:[#allocation3 + $0x12] sm:$0xff]
          %v1994 = vld [vmem:[#allocation3 + $0x1a] sm:$0xff]
          %v1995 = vld [vmem:[#allocation3 + $0x22] sm:$0xff]
          %v1996 = vld [vmem:[#allocation3 + $0x2a] sm:$0xff]
          %v1997 = vld [vmem:[#allocation3 + $0x32] sm:$0xff]
          %v1998 = vld [vmem:[#allocation3 + $0x3a] sm:$0xff]
          %v1999 = vstv %s1990
          %v2000 = vmul.f32 %v1999, %v1991
          %v2001 = vmul.f32 %v1999, %v1992
          %v2002 = vmul.f32 %v1999, %v1993
          %v2003 = vmul.f32 %v1999, %v1994
          %v2004 = vmul.f32 %v1999, %v1995
          %v2005 = vmul.f32 %v1999, %v1996
          %v2006 = vmul.f32 %v1999, %v1997
          %v2007 = vmul.f32 %v1999, %v1998
          %v2008 = vadd.f32 %v1981, %v2000
          %v2009 = vadd.f32 %v1982, %v2001
          %v2010 = vadd.f32 %v1983, %v2002
          %v2011 = vadd.f32 %v1984, %v2003
          %v2012 = vadd.f32 %v1985, %v2004
          %v2013 = vadd.f32 %v1986, %v2005
          %v2014 = vadd.f32 %v1987, %v2006
          %v2015 = vadd.f32 %v1988, %v2007
          %s2016 = sadd.s32 %s1730, 231
          %s2017 = sld [smem:[#allocation6 + %s2016]]
          %v2018 = vstv %s2017
          %v2019 = vmul.f32 %v2018, %v1991
          %v2020 = vmul.f32 %v2018, %v1992
          %v2021 = vmul.f32 %v2018, %v1993
          %v2022 = vmul.f32 %v2018, %v1994
          %v2023 = vmul.f32 %v2018, %v1995
          %v2024 = vmul.f32 %v2018, %v1996
          %v2025 = vmul.f32 %v2018, %v1997
          %v2026 = vmul.f32 %v2018, %v1998
          %2035 = vrot.lane.b32.xlu0 %v2019, 127
          %v2036 = vpop.permute.xlu0 %2035
          %2037 = vrot.lane.b32.xlu0 %v2020, 127
          %v2038 = vpop.permute.xlu0 %2037
          %2039 = vrot.lane.b32.xlu0 %v2021, 127
          %v2040 = vpop.permute.xlu0 %2039
          %2041 = vrot.lane.b32.xlu0 %v2022, 127
          %v2042 = vpop.permute.xlu0 %2041
          %2043 = vrot.lane.b32.xlu0 %v2023, 127
          %v2044 = vpop.permute.xlu0 %2043
          %2045 = vrot.lane.b32.xlu0 %v2024, 127
          %v2046 = vpop.permute.xlu0 %2045
          %2047 = vrot.lane.b32.xlu0 %v2025, 127
          %v2048 = vpop.permute.xlu0 %2047
          %2049 = vrot.lane.b32.xlu0 %v2026, 127
          %v2050 = vpop.permute.xlu0 %2049
          %v2059 = vadd.f32 %v2008, %v2036
          %v2060 = vadd.f32 %v2009, %v2038
          %v2061 = vadd.f32 %v2010, %v2040
          %v2062 = vadd.f32 %v2011, %v2042
          %v2063 = vadd.f32 %v2012, %v2044
          %v2064 = vadd.f32 %v2013, %v2046
          %v2065 = vadd.f32 %v2014, %v2048
          %v2066 = vadd.f32 %v2015, %v2050
          %s2067 = sadd.s32 %s1730, 232
          %s2068 = sld [smem:[#allocation6 + %s2067]]
          %v2069 = vstv %s2068
          %v2070 = vmul.f32 %v2069, %v1991
          %v2071 = vmul.f32 %v2069, %v1992
          %v2072 = vmul.f32 %v2069, %v1993
          %v2073 = vmul.f32 %v2069, %v1994
          %v2074 = vmul.f32 %v2069, %v1995
          %v2075 = vmul.f32 %v2069, %v1996
          %v2076 = vmul.f32 %v2069, %v1997
          %v2077 = vmul.f32 %v2069, %v1998
          %2086 = vrot.lane.b32.xlu0 %v2070, 126
          %v2087 = vpop.permute.xlu0 %2086
          %2088 = vrot.lane.b32.xlu0 %v2071, 126
          %v2089 = vpop.permute.xlu0 %2088
          %2090 = vrot.lane.b32.xlu0 %v2072, 126
          %v2091 = vpop.permute.xlu0 %2090
          %2092 = vrot.lane.b32.xlu0 %v2073, 126
          %v2093 = vpop.permute.xlu0 %2092
          %2094 = vrot.lane.b32.xlu0 %v2074, 126
          %v2095 = vpop.permute.xlu0 %2094
          %2096 = vrot.lane.b32.xlu0 %v2075, 126
          %v2097 = vpop.permute.xlu0 %2096
          %2098 = vrot.lane.b32.xlu0 %v2076, 126
          %v2099 = vpop.permute.xlu0 %2098
          %2100 = vrot.lane.b32.xlu0 %v2077, 126
          %v2101 = vpop.permute.xlu0 %2100
          %v2110 = vadd.f32 %v2059, %v2087
          %v2111 = vadd.f32 %v2060, %v2089
          %v2112 = vadd.f32 %v2061, %v2091
          %v2113 = vadd.f32 %v2062, %v2093
          %v2114 = vadd.f32 %v2063, %v2095
          %v2115 = vadd.f32 %v2064, %v2097
          %v2116 = vadd.f32 %v2065, %v2099
          %v2117 = vadd.f32 %v2066, %v2101
          %s2118 = sadd.s32 %s1730, 233
          %s2119 = sld [smem:[#allocation6 + %s2118]]
          %s2120 = scalar_lea.vmem [#allocation3], 72
          %v2121 = vld [vmem:[%s2120] sm:$0xff]
          %v2122 = vld [vmem:[%s2120 + $0x8] sm:$0xff]
          %v2123 = vld [vmem:[%s2120 + $0x10] sm:$0xff]
          %v2124 = vld [vmem:[%s2120 + $0x18] sm:$0xff]
          %v2125 = vld [vmem:[%s2120 + $0x20] sm:$0xff]
          %v2126 = vld [vmem:[%s2120 + $0x28] sm:$0xff]
          %v2127 = vld [vmem:[%s2120 + $0x30] sm:$0xff]
          %v2128 = vld [vmem:[%s2120 + $0x38] sm:$0xff]
          %v2129 = vstv %s2119
          %v2130 = vmul.f32 %v2129, %v2121
          %v2131 = vmul.f32 %v2129, %v2122
          %v2132 = vmul.f32 %v2129, %v2123
          %v2133 = vmul.f32 %v2129, %v2124
          %v2134 = vmul.f32 %v2129, %v2125
          %v2135 = vmul.f32 %v2129, %v2126
          %v2136 = vmul.f32 %v2129, %v2127
          %v2137 = vmul.f32 %v2129, %v2128
          %v2138 = vadd.f32 %v2110, %v2130
          %v2139 = vadd.f32 %v2111, %v2131
          %v2140 = vadd.f32 %v2112, %v2132
          %v2141 = vadd.f32 %v2113, %v2133
          %v2142 = vadd.f32 %v2114, %v2134
          %v2143 = vadd.f32 %v2115, %v2135
          %v2144 = vadd.f32 %v2116, %v2136
          %v2145 = vadd.f32 %v2117, %v2137
          %s2146 = sadd.s32 %s1730, 234
          %s2147 = sld [smem:[#allocation6 + %s2146]]
          %v2148 = vstv %s2147
          %v2149 = vmul.f32 %v2148, %v2121
          %v2150 = vmul.f32 %v2148, %v2122
          %v2151 = vmul.f32 %v2148, %v2123
          %v2152 = vmul.f32 %v2148, %v2124
          %v2153 = vmul.f32 %v2148, %v2125
          %v2154 = vmul.f32 %v2148, %v2126
          %v2155 = vmul.f32 %v2148, %v2127
          %v2156 = vmul.f32 %v2148, %v2128
          %2165 = vrot.lane.b32.xlu0 %v2149, 127
          %v2166 = vpop.permute.xlu0 %2165
          %2167 = vrot.lane.b32.xlu0 %v2150, 127
          %v2168 = vpop.permute.xlu0 %2167
          %2169 = vrot.lane.b32.xlu0 %v2151, 127
          %v2170 = vpop.permute.xlu0 %2169
          %2171 = vrot.lane.b32.xlu0 %v2152, 127
          %v2172 = vpop.permute.xlu0 %2171
          %2173 = vrot.lane.b32.xlu0 %v2153, 127
          %v2174 = vpop.permute.xlu0 %2173
          %2175 = vrot.lane.b32.xlu0 %v2154, 127
          %v2176 = vpop.permute.xlu0 %2175
          %2177 = vrot.lane.b32.xlu0 %v2155, 127
          %v2178 = vpop.permute.xlu0 %2177
          %2179 = vrot.lane.b32.xlu0 %v2156, 127
          %v2180 = vpop.permute.xlu0 %2179
          %v2189 = vadd.f32 %v2138, %v2166
          %v2190 = vadd.f32 %v2139, %v2168
          %v2191 = vadd.f32 %v2140, %v2170
          %v2192 = vadd.f32 %v2141, %v2172
          %v2193 = vadd.f32 %v2142, %v2174
          %v2194 = vadd.f32 %v2143, %v2176
          %v2195 = vadd.f32 %v2144, %v2178
          %v2196 = vadd.f32 %v2145, %v2180
          %s2197 = sadd.s32 %s1730, 235
          %s2198 = sld [smem:[#allocation6 + %s2197]]
          %v2199 = vstv %s2198
          %v2200 = vmul.f32 %v2199, %v2121
          %v2201 = vmul.f32 %v2199, %v2122
          %v2202 = vmul.f32 %v2199, %v2123
          %v2203 = vmul.f32 %v2199, %v2124
          %v2204 = vmul.f32 %v2199, %v2125
          %v2205 = vmul.f32 %v2199, %v2126
          %v2206 = vmul.f32 %v2199, %v2127
          %v2207 = vmul.f32 %v2199, %v2128
          %2216 = vrot.lane.b32.xlu0 %v2200, 126
          %v2217 = vpop.permute.xlu0 %2216
          %2218 = vrot.lane.b32.xlu0 %v2201, 126
          %v2219 = vpop.permute.xlu0 %2218
          %2220 = vrot.lane.b32.xlu0 %v2202, 126
          %v2221 = vpop.permute.xlu0 %2220
          %2222 = vrot.lane.b32.xlu0 %v2203, 126
          %v2223 = vpop.permute.xlu0 %2222
          %2224 = vrot.lane.b32.xlu0 %v2204, 126
          %v2225 = vpop.permute.xlu0 %2224
          %2226 = vrot.lane.b32.xlu0 %v2205, 126
          %v2227 = vpop.permute.xlu0 %2226
          %2228 = vrot.lane.b32.xlu0 %v2206, 126
          %v2229 = vpop.permute.xlu0 %2228
          %2230 = vrot.lane.b32.xlu0 %v2207, 126
          %v2231 = vpop.permute.xlu0 %2230
          %v2240 = vadd.f32 %v2189, %v2217
          %v2241 = vadd.f32 %v2190, %v2219
          %v2242 = vadd.f32 %v2191, %v2221
          %v2243 = vadd.f32 %v2192, %v2223
          %v2244 = vadd.f32 %v2193, %v2225
          %v2245 = vadd.f32 %v2194, %v2227
          %v2246 = vadd.f32 %v2195, %v2229
          %v2247 = vadd.f32 %v2196, %v2231
          %s2248 = sadd.s32 %s1730, 236
          %s2249 = sld [smem:[#allocation6 + %s2248]]
          %v2250 = vld [vmem:[%s2120 + $0x1] sm:$0xff]
          %v2251 = vld [vmem:[%s2120 + $0x9] sm:$0xff]
          %v2252 = vld [vmem:[%s2120 + $0x11] sm:$0xff]
          %v2253 = vld [vmem:[%s2120 + $0x19] sm:$0xff]
          %v2254 = vld [vmem:[%s2120 + $0x21] sm:$0xff]
          %v2255 = vld [vmem:[%s2120 + $0x29] sm:$0xff]
          %v2256 = vld [vmem:[%s2120 + $0x31] sm:$0xff]
          %v2257 = vld [vmem:[%s2120 + $0x39] sm:$0xff]
          %v2258 = vstv %s2249
          %v2259 = vmul.f32 %v2258, %v2250
          %v2260 = vmul.f32 %v2258, %v2251
          %v2261 = vmul.f32 %v2258, %v2252
          %v2262 = vmul.f32 %v2258, %v2253
          %v2263 = vmul.f32 %v2258, %v2254
          %v2264 = vmul.f32 %v2258, %v2255
          %v2265 = vmul.f32 %v2258, %v2256
          %v2266 = vmul.f32 %v2258, %v2257
          %v2267 = vadd.f32 %v2240, %v2259
          %v2268 = vadd.f32 %v2241, %v2260
          %v2269 = vadd.f32 %v2242, %v2261
          %v2270 = vadd.f32 %v2243, %v2262
          %v2271 = vadd.f32 %v2244, %v2263
          %v2272 = vadd.f32 %v2245, %v2264
          %v2273 = vadd.f32 %v2246, %v2265
          %v2274 = vadd.f32 %v2247, %v2266
          %s2275 = sadd.s32 %s1730, 237
          %s2276 = sld [smem:[#allocation6 + %s2275]]
          %v2277 = vstv %s2276
          %v2278 = vmul.f32 %v2277, %v2250
          %v2279 = vmul.f32 %v2277, %v2251
          %v2280 = vmul.f32 %v2277, %v2252
          %v2281 = vmul.f32 %v2277, %v2253
          %v2282 = vmul.f32 %v2277, %v2254
          %v2283 = vmul.f32 %v2277, %v2255
          %v2284 = vmul.f32 %v2277, %v2256
          %v2285 = vmul.f32 %v2277, %v2257
          %2294 = vrot.lane.b32.xlu0 %v2278, 127
          %v2295 = vpop.permute.xlu0 %2294
          %2296 = vrot.lane.b32.xlu0 %v2279, 127
          %v2297 = vpop.permute.xlu0 %2296
          %2298 = vrot.lane.b32.xlu0 %v2280, 127
          %v2299 = vpop.permute.xlu0 %2298
          %2300 = vrot.lane.b32.xlu0 %v2281, 127
          %v2301 = vpop.permute.xlu0 %2300
          %2302 = vrot.lane.b32.xlu0 %v2282, 127
          %v2303 = vpop.permute.xlu0 %2302
          %2304 = vrot.lane.b32.xlu0 %v2283, 127
          %v2305 = vpop.permute.xlu0 %2304
          %2306 = vrot.lane.b32.xlu0 %v2284, 127
          %v2307 = vpop.permute.xlu0 %2306
          %2308 = vrot.lane.b32.xlu0 %v2285, 127
          %v2309 = vpop.permute.xlu0 %2308
          %v2318 = vadd.f32 %v2267, %v2295
          %v2319 = vadd.f32 %v2268, %v2297
          %v2320 = vadd.f32 %v2269, %v2299
          %v2321 = vadd.f32 %v2270, %v2301
          %v2322 = vadd.f32 %v2271, %v2303
          %v2323 = vadd.f32 %v2272, %v2305
          %v2324 = vadd.f32 %v2273, %v2307
          %v2325 = vadd.f32 %v2274, %v2309
          %s2326 = sadd.s32 %s1730, 238
          %s2327 = sld [smem:[#allocation6 + %s2326]]
          %v2328 = vstv %s2327
          %v2329 = vmul.f32 %v2328, %v2250
          %v2330 = vmul.f32 %v2328, %v2251
          %v2331 = vmul.f32 %v2328, %v2252
          %v2332 = vmul.f32 %v2328, %v2253
          %v2333 = vmul.f32 %v2328, %v2254
          %v2334 = vmul.f32 %v2328, %v2255
          %v2335 = vmul.f32 %v2328, %v2256
          %v2336 = vmul.f32 %v2328, %v2257
          %2345 = vrot.lane.b32.xlu0 %v2329, 126
          %v2346 = vpop.permute.xlu0 %2345
          %2347 = vrot.lane.b32.xlu0 %v2330, 126
          %v2348 = vpop.permute.xlu0 %2347
          %2349 = vrot.lane.b32.xlu0 %v2331, 126
          %v2350 = vpop.permute.xlu0 %2349
          %2351 = vrot.lane.b32.xlu0 %v2332, 126
          %v2352 = vpop.permute.xlu0 %2351
          %2353 = vrot.lane.b32.xlu0 %v2333, 126
          %v2354 = vpop.permute.xlu0 %2353
          %2355 = vrot.lane.b32.xlu0 %v2334, 126
          %v2356 = vpop.permute.xlu0 %2355
          %2357 = vrot.lane.b32.xlu0 %v2335, 126
          %v2358 = vpop.permute.xlu0 %2357
          %2359 = vrot.lane.b32.xlu0 %v2336, 126
          %v2360 = vpop.permute.xlu0 %2359
          %v2369 = vadd.f32 %v2318, %v2346
          %v2370 = vadd.f32 %v2319, %v2348
          %v2371 = vadd.f32 %v2320, %v2350
          %v2372 = vadd.f32 %v2321, %v2352
          %v2373 = vadd.f32 %v2322, %v2354
          %v2374 = vadd.f32 %v2323, %v2356
          %v2375 = vadd.f32 %v2324, %v2358
          %v2376 = vadd.f32 %v2325, %v2360
          %s2377 = sadd.s32 %s1730, 239
          %s2378 = sld [smem:[#allocation6 + %s2377]]
          %v2379 = vld [vmem:[%s2120 + $0x2] sm:$0xff]
          %v2380 = vld [vmem:[%s2120 + $0xa] sm:$0xff]
          %v2381 = vld [vmem:[%s2120 + $0x12] sm:$0xff]
          %v2382 = vld [vmem:[%s2120 + $0x1a] sm:$0xff]
          %v2383 = vld [vmem:[%s2120 + $0x22] sm:$0xff]
          %v2384 = vld [vmem:[%s2120 + $0x2a] sm:$0xff]
          %v2385 = vld [vmem:[%s2120 + $0x32] sm:$0xff]
          %v2386 = vld [vmem:[%s2120 + $0x3a] sm:$0xff]
          %v2387 = vstv %s2378
          %v2388 = vmul.f32 %v2387, %v2379
          %v2389 = vmul.f32 %v2387, %v2380
          %v2390 = vmul.f32 %v2387, %v2381
          %v2391 = vmul.f32 %v2387, %v2382
          %v2392 = vmul.f32 %v2387, %v2383
          %v2393 = vmul.f32 %v2387, %v2384
          %v2394 = vmul.f32 %v2387, %v2385
          %v2395 = vmul.f32 %v2387, %v2386
          %v2396 = vadd.f32 %v2369, %v2388
          %v2397 = vadd.f32 %v2370, %v2389
          %v2398 = vadd.f32 %v2371, %v2390
          %v2399 = vadd.f32 %v2372, %v2391
          %v2400 = vadd.f32 %v2373, %v2392
          %v2401 = vadd.f32 %v2374, %v2393
          %v2402 = vadd.f32 %v2375, %v2394
          %v2403 = vadd.f32 %v2376, %v2395
          %s2404 = sadd.s32 %s1730, 240
          %s2405 = sld [smem:[#allocation6 + %s2404]]
          %v2406 = vstv %s2405
          %v2407 = vmul.f32 %v2406, %v2379
          %v2408 = vmul.f32 %v2406, %v2380
          %v2409 = vmul.f32 %v2406, %v2381
          %v2410 = vmul.f32 %v2406, %v2382
          %v2411 = vmul.f32 %v2406, %v2383
          %v2412 = vmul.f32 %v2406, %v2384
          %v2413 = vmul.f32 %v2406, %v2385
          %v2414 = vmul.f32 %v2406, %v2386
          %2423 = vrot.lane.b32.xlu0 %v2407, 127
          %v2424 = vpop.permute.xlu0 %2423
          %2425 = vrot.lane.b32.xlu0 %v2408, 127
          %v2426 = vpop.permute.xlu0 %2425
          %2427 = vrot.lane.b32.xlu0 %v2409, 127
          %v2428 = vpop.permute.xlu0 %2427
          %2429 = vrot.lane.b32.xlu0 %v2410, 127
          %v2430 = vpop.permute.xlu0 %2429
          %2431 = vrot.lane.b32.xlu0 %v2411, 127
          %v2432 = vpop.permute.xlu0 %2431
          %2433 = vrot.lane.b32.xlu0 %v2412, 127
          %v2434 = vpop.permute.xlu0 %2433
          %2435 = vrot.lane.b32.xlu0 %v2413, 127
          %v2436 = vpop.permute.xlu0 %2435
          %2437 = vrot.lane.b32.xlu0 %v2414, 127
          %v2438 = vpop.permute.xlu0 %2437
          %v2447 = vadd.f32 %v2396, %v2424
          %v2448 = vadd.f32 %v2397, %v2426
          %v2449 = vadd.f32 %v2398, %v2428
          %v2450 = vadd.f32 %v2399, %v2430
          %v2451 = vadd.f32 %v2400, %v2432
          %v2452 = vadd.f32 %v2401, %v2434
          %v2453 = vadd.f32 %v2402, %v2436
          %v2454 = vadd.f32 %v2403, %v2438
          %s2455 = sadd.s32 %s1730, 241
          %s2456 = sld [smem:[#allocation6 + %s2455]]
          %v2457 = vstv %s2456
          %v2458 = vmul.f32 %v2457, %v2379
          %v2459 = vmul.f32 %v2457, %v2380
          %v2460 = vmul.f32 %v2457, %v2381
          %v2461 = vmul.f32 %v2457, %v2382
          %v2462 = vmul.f32 %v2457, %v2383
          %v2463 = vmul.f32 %v2457, %v2384
          %v2464 = vmul.f32 %v2457, %v2385
          %v2465 = vmul.f32 %v2457, %v2386
          %2474 = vrot.lane.b32.xlu0 %v2458, 126
          %v2475 = vpop.permute.xlu0 %2474
          %2476 = vrot.lane.b32.xlu0 %v2459, 126
          %v2477 = vpop.permute.xlu0 %2476
          %2478 = vrot.lane.b32.xlu0 %v2460, 126
          %v2479 = vpop.permute.xlu0 %2478
          %2480 = vrot.lane.b32.xlu0 %v2461, 126
          %v2481 = vpop.permute.xlu0 %2480
          %2482 = vrot.lane.b32.xlu0 %v2462, 126
          %v2483 = vpop.permute.xlu0 %2482
          %2484 = vrot.lane.b32.xlu0 %v2463, 126
          %v2485 = vpop.permute.xlu0 %2484
          %2486 = vrot.lane.b32.xlu0 %v2464, 126
          %v2487 = vpop.permute.xlu0 %2486
          %2488 = vrot.lane.b32.xlu0 %v2465, 126
          %v2489 = vpop.permute.xlu0 %2488
          %v2498 = vadd.f32 %v2447, %v2475
          %v2499 = vadd.f32 %v2448, %v2477
          %v2500 = vadd.f32 %v2449, %v2479
          %v2501 = vadd.f32 %v2450, %v2481
          %v2502 = vadd.f32 %v2451, %v2483
          %v2503 = vadd.f32 %v2452, %v2485
          %v2504 = vadd.f32 %v2453, %v2487
          %v2505 = vadd.f32 %v2454, %v2489
          %s2506 = sadd.s32 %s1730, 242
          %s2507 = sld [smem:[#allocation6 + %s2506]]
          %s2508 = scalar_lea.vmem [#allocation3], 144
          %v2509 = vld [vmem:[%s2508] sm:$0xff]
          %v2510 = vld [vmem:[%s2508 + $0x8] sm:$0xff]
          %v2511 = vld [vmem:[%s2508 + $0x10] sm:$0xff]
          %v2512 = vld [vmem:[%s2508 + $0x18] sm:$0xff]
          %v2513 = vld [vmem:[%s2508 + $0x20] sm:$0xff]
          %v2514 = vld [vmem:[%s2508 + $0x28] sm:$0xff]
          %v2515 = vld [vmem:[%s2508 + $0x30] sm:$0xff]
          %v2516 = vld [vmem:[%s2508 + $0x38] sm:$0xff]
          %v2517 = vstv %s2507
          %v2518 = vmul.f32 %v2517, %v2509
          %v2519 = vmul.f32 %v2517, %v2510
          %v2520 = vmul.f32 %v2517, %v2511
          %v2521 = vmul.f32 %v2517, %v2512
          %v2522 = vmul.f32 %v2517, %v2513
          %v2523 = vmul.f32 %v2517, %v2514
          %v2524 = vmul.f32 %v2517, %v2515
          %v2525 = vmul.f32 %v2517, %v2516
          %v2526 = vadd.f32 %v2498, %v2518
          %v2527 = vadd.f32 %v2499, %v2519
          %v2528 = vadd.f32 %v2500, %v2520
          %v2529 = vadd.f32 %v2501, %v2521
          %v2530 = vadd.f32 %v2502, %v2522
          %v2531 = vadd.f32 %v2503, %v2523
          %v2532 = vadd.f32 %v2504, %v2524
          %v2533 = vadd.f32 %v2505, %v2525
          %s2534 = sadd.s32 %s1730, 243
          %s2535 = sld [smem:[#allocation6 + %s2534]]
          %v2536 = vstv %s2535
          %v2537 = vmul.f32 %v2536, %v2509
          %v2538 = vmul.f32 %v2536, %v2510
          %v2539 = vmul.f32 %v2536, %v2511
          %v2540 = vmul.f32 %v2536, %v2512
          %v2541 = vmul.f32 %v2536, %v2513
          %v2542 = vmul.f32 %v2536, %v2514
          %v2543 = vmul.f32 %v2536, %v2515
          %v2544 = vmul.f32 %v2536, %v2516
          %2553 = vrot.lane.b32.xlu0 %v2537, 127
          %v2554 = vpop.permute.xlu0 %2553
          %2555 = vrot.lane.b32.xlu0 %v2538, 127
          %v2556 = vpop.permute.xlu0 %2555
          %2557 = vrot.lane.b32.xlu0 %v2539, 127
          %v2558 = vpop.permute.xlu0 %2557
          %2559 = vrot.lane.b32.xlu0 %v2540, 127
          %v2560 = vpop.permute.xlu0 %2559
          %2561 = vrot.lane.b32.xlu0 %v2541, 127
          %v2562 = vpop.permute.xlu0 %2561
          %2563 = vrot.lane.b32.xlu0 %v2542, 127
          %v2564 = vpop.permute.xlu0 %2563
          %2565 = vrot.lane.b32.xlu0 %v2543, 127
          %v2566 = vpop.permute.xlu0 %2565
          %2567 = vrot.lane.b32.xlu0 %v2544, 127
          %v2568 = vpop.permute.xlu0 %2567
          %v2577 = vadd.f32 %v2526, %v2554
          %v2578 = vadd.f32 %v2527, %v2556
          %v2579 = vadd.f32 %v2528, %v2558
          %v2580 = vadd.f32 %v2529, %v2560
          %v2581 = vadd.f32 %v2530, %v2562
          %v2582 = vadd.f32 %v2531, %v2564
          %v2583 = vadd.f32 %v2532, %v2566
          %v2584 = vadd.f32 %v2533, %v2568
          %s2585 = sadd.s32 %s1730, 244
          %s2586 = sld [smem:[#allocation6 + %s2585]]
          %v2587 = vstv %s2586
          %v2588 = vmul.f32 %v2587, %v2509
          %v2589 = vmul.f32 %v2587, %v2510
          %v2590 = vmul.f32 %v2587, %v2511
          %v2591 = vmul.f32 %v2587, %v2512
          %v2592 = vmul.f32 %v2587, %v2513
          %v2593 = vmul.f32 %v2587, %v2514
          %v2594 = vmul.f32 %v2587, %v2515
          %v2595 = vmul.f32 %v2587, %v2516
          %2604 = vrot.lane.b32.xlu0 %v2588, 126
          %v2605 = vpop.permute.xlu0 %2604
          %2606 = vrot.lane.b32.xlu0 %v2589, 126
          %v2607 = vpop.permute.xlu0 %2606
          %2608 = vrot.lane.b32.xlu0 %v2590, 126
          %v2609 = vpop.permute.xlu0 %2608
          %2610 = vrot.lane.b32.xlu0 %v2591, 126
          %v2611 = vpop.permute.xlu0 %2610
          %2612 = vrot.lane.b32.xlu0 %v2592, 126
          %v2613 = vpop.permute.xlu0 %2612
          %2614 = vrot.lane.b32.xlu0 %v2593, 126
          %v2615 = vpop.permute.xlu0 %2614
          %2616 = vrot.lane.b32.xlu0 %v2594, 126
          %v2617 = vpop.permute.xlu0 %2616
          %2618 = vrot.lane.b32.xlu0 %v2595, 126
          %v2619 = vpop.permute.xlu0 %2618
          %v2628 = vadd.f32 %v2577, %v2605
          %v2629 = vadd.f32 %v2578, %v2607
          %v2630 = vadd.f32 %v2579, %v2609
          %v2631 = vadd.f32 %v2580, %v2611
          %v2632 = vadd.f32 %v2581, %v2613
          %v2633 = vadd.f32 %v2582, %v2615
          %v2634 = vadd.f32 %v2583, %v2617
          %v2635 = vadd.f32 %v2584, %v2619
          %s2636 = sadd.s32 %s1730, 245
          %s2637 = sld [smem:[#allocation6 + %s2636]]
          %v2638 = vld [vmem:[%s2508 + $0x1] sm:$0xff]
          %v2639 = vld [vmem:[%s2508 + $0x9] sm:$0xff]
          %v2640 = vld [vmem:[%s2508 + $0x11] sm:$0xff]
          %v2641 = vld [vmem:[%s2508 + $0x19] sm:$0xff]
          %v2642 = vld [vmem:[%s2508 + $0x21] sm:$0xff]
          %v2643 = vld [vmem:[%s2508 + $0x29] sm:$0xff]
          %v2644 = vld [vmem:[%s2508 + $0x31] sm:$0xff]
          %v2645 = vld [vmem:[%s2508 + $0x39] sm:$0xff]
          %v2646 = vstv %s2637
          %v2647 = vmul.f32 %v2646, %v2638
          %v2648 = vmul.f32 %v2646, %v2639
          %v2649 = vmul.f32 %v2646, %v2640
          %v2650 = vmul.f32 %v2646, %v2641
          %v2651 = vmul.f32 %v2646, %v2642
          %v2652 = vmul.f32 %v2646, %v2643
          %v2653 = vmul.f32 %v2646, %v2644
          %v2654 = vmul.f32 %v2646, %v2645
          %v2655 = vadd.f32 %v2628, %v2647
          %v2656 = vadd.f32 %v2629, %v2648
          %v2657 = vadd.f32 %v2630, %v2649
          %v2658 = vadd.f32 %v2631, %v2650
          %v2659 = vadd.f32 %v2632, %v2651
          %v2660 = vadd.f32 %v2633, %v2652
          %v2661 = vadd.f32 %v2634, %v2653
          %v2662 = vadd.f32 %v2635, %v2654
          %s2663 = sadd.s32 %s1730, 246
          %s2664 = sld [smem:[#allocation6 + %s2663]]
          %v2665 = vstv %s2664
          %v2666 = vmul.f32 %v2665, %v2638
          %v2667 = vmul.f32 %v2665, %v2639
          %v2668 = vmul.f32 %v2665, %v2640
          %v2669 = vmul.f32 %v2665, %v2641
          %v2670 = vmul.f32 %v2665, %v2642
          %v2671 = vmul.f32 %v2665, %v2643
          %v2672 = vmul.f32 %v2665, %v2644
          %v2673 = vmul.f32 %v2665, %v2645
          %2682 = vrot.lane.b32.xlu0 %v2666, 127
          %v2683 = vpop.permute.xlu0 %2682
          %2684 = vrot.lane.b32.xlu0 %v2667, 127
          %v2685 = vpop.permute.xlu0 %2684
          %2686 = vrot.lane.b32.xlu0 %v2668, 127
          %v2687 = vpop.permute.xlu0 %2686
          %2688 = vrot.lane.b32.xlu0 %v2669, 127
          %v2689 = vpop.permute.xlu0 %2688
          %2690 = vrot.lane.b32.xlu0 %v2670, 127
          %v2691 = vpop.permute.xlu0 %2690
          %2692 = vrot.lane.b32.xlu0 %v2671, 127
          %v2693 = vpop.permute.xlu0 %2692
          %2694 = vrot.lane.b32.xlu0 %v2672, 127
          %v2695 = vpop.permute.xlu0 %2694
          %2696 = vrot.lane.b32.xlu0 %v2673, 127
          %v2697 = vpop.permute.xlu0 %2696
          %v2706 = vadd.f32 %v2655, %v2683
          %v2707 = vadd.f32 %v2656, %v2685
          %v2708 = vadd.f32 %v2657, %v2687
          %v2709 = vadd.f32 %v2658, %v2689
          %v2710 = vadd.f32 %v2659, %v2691
          %v2711 = vadd.f32 %v2660, %v2693
          %v2712 = vadd.f32 %v2661, %v2695
          %v2713 = vadd.f32 %v2662, %v2697
          %s2714 = sadd.s32 %s1730, 247
          %s2715 = sld [smem:[#allocation6 + %s2714]]
          %v2716 = vstv %s2715
          %v2717 = vmul.f32 %v2716, %v2638
          %v2718 = vmul.f32 %v2716, %v2639
          %v2719 = vmul.f32 %v2716, %v2640
          %v2720 = vmul.f32 %v2716, %v2641
          %v2721 = vmul.f32 %v2716, %v2642
          %v2722 = vmul.f32 %v2716, %v2643
          %v2723 = vmul.f32 %v2716, %v2644
          %v2724 = vmul.f32 %v2716, %v2645
          %2733 = vrot.lane.b32.xlu0 %v2717, 126
          %v2734 = vpop.permute.xlu0 %2733
          %2735 = vrot.lane.b32.xlu0 %v2718, 126
          %v2736 = vpop.permute.xlu0 %2735
          %2737 = vrot.lane.b32.xlu0 %v2719, 126
          %v2738 = vpop.permute.xlu0 %2737
          %2739 = vrot.lane.b32.xlu0 %v2720, 126
          %v2740 = vpop.permute.xlu0 %2739
          %2741 = vrot.lane.b32.xlu0 %v2721, 126
          %v2742 = vpop.permute.xlu0 %2741
          %2743 = vrot.lane.b32.xlu0 %v2722, 126
          %v2744 = vpop.permute.xlu0 %2743
          %2745 = vrot.lane.b32.xlu0 %v2723, 126
          %v2746 = vpop.permute.xlu0 %2745
          %2747 = vrot.lane.b32.xlu0 %v2724, 126
          %v2748 = vpop.permute.xlu0 %2747
          %v2757 = vadd.f32 %v2706, %v2734
          %v2758 = vadd.f32 %v2707, %v2736
          %v2759 = vadd.f32 %v2708, %v2738
          %v2760 = vadd.f32 %v2709, %v2740
          %v2761 = vadd.f32 %v2710, %v2742
          %v2762 = vadd.f32 %v2711, %v2744
          %v2763 = vadd.f32 %v2712, %v2746
          %v2764 = vadd.f32 %v2713, %v2748
          %s2765 = sadd.s32 %s1730, 248
          %s2766 = sld [smem:[#allocation6 + %s2765]]
          %v2767 = vld [vmem:[%s2508 + $0x2] sm:$0xff]
          %v2768 = vld [vmem:[%s2508 + $0xa] sm:$0xff]
          %v2769 = vld [vmem:[%s2508 + $0x12] sm:$0xff]
          %v2770 = vld [vmem:[%s2508 + $0x1a] sm:$0xff]
          %v2771 = vld [vmem:[%s2508 + $0x22] sm:$0xff]
          %v2772 = vld [vmem:[%s2508 + $0x2a] sm:$0xff]
          %v2773 = vld [vmem:[%s2508 + $0x32] sm:$0xff]
          %v2774 = vld [vmem:[%s2508 + $0x3a] sm:$0xff]
          %v2775 = vstv %s2766
          %v2776 = vmul.f32 %v2775, %v2767
          %v2777 = vmul.f32 %v2775, %v2768
          %v2778 = vmul.f32 %v2775, %v2769
          %v2779 = vmul.f32 %v2775, %v2770
          %v2780 = vmul.f32 %v2775, %v2771
          %v2781 = vmul.f32 %v2775, %v2772
          %v2782 = vmul.f32 %v2775, %v2773
          %v2783 = vmul.f32 %v2775, %v2774
          %v2784 = vadd.f32 %v2757, %v2776
          %v2785 = vadd.f32 %v2758, %v2777
          %v2786 = vadd.f32 %v2759, %v2778
          %v2787 = vadd.f32 %v2760, %v2779
          %v2788 = vadd.f32 %v2761, %v2780
          %v2789 = vadd.f32 %v2762, %v2781
          %v2790 = vadd.f32 %v2763, %v2782
          %v2791 = vadd.f32 %v2764, %v2783
          %s2792 = sadd.s32 %s1730, 249
          %s2793 = sld [smem:[#allocation6 + %s2792]]
          %v2794 = vstv %s2793
          %v2795 = vmul.f32 %v2794, %v2767
          %v2796 = vmul.f32 %v2794, %v2768
          %v2797 = vmul.f32 %v2794, %v2769
          %v2798 = vmul.f32 %v2794, %v2770
          %v2799 = vmul.f32 %v2794, %v2771
          %v2800 = vmul.f32 %v2794, %v2772
          %v2801 = vmul.f32 %v2794, %v2773
          %v2802 = vmul.f32 %v2794, %v2774
          %2811 = vrot.lane.b32.xlu0 %v2795, 127
          %v2812 = vpop.permute.xlu0 %2811
          %2813 = vrot.lane.b32.xlu0 %v2796, 127
          %v2814 = vpop.permute.xlu0 %2813
          %2815 = vrot.lane.b32.xlu0 %v2797, 127
          %v2816 = vpop.permute.xlu0 %2815
          %2817 = vrot.lane.b32.xlu0 %v2798, 127
          %v2818 = vpop.permute.xlu0 %2817
          %2819 = vrot.lane.b32.xlu0 %v2799, 127
          %v2820 = vpop.permute.xlu0 %2819
          %2821 = vrot.lane.b32.xlu0 %v2800, 127
          %v2822 = vpop.permute.xlu0 %2821
          %2823 = vrot.lane.b32.xlu0 %v2801, 127
          %v2824 = vpop.permute.xlu0 %2823
          %2825 = vrot.lane.b32.xlu0 %v2802, 127
          %v2826 = vpop.permute.xlu0 %2825
          %v2835 = vadd.f32 %v2784, %v2812
          %v2836 = vadd.f32 %v2785, %v2814
          %v2837 = vadd.f32 %v2786, %v2816
          %v2838 = vadd.f32 %v2787, %v2818
          %v2839 = vadd.f32 %v2788, %v2820
          %v2840 = vadd.f32 %v2789, %v2822
          %v2841 = vadd.f32 %v2790, %v2824
          %v2842 = vadd.f32 %v2791, %v2826
          %s2843 = sadd.s32 %s1730, 250
          %s2844 = sld [smem:[#allocation6 + %s2843]]
          %v2845 = vstv %s2844
          %v2846 = vmul.f32 %v2845, %v2767
          %v2847 = vmul.f32 %v2845, %v2768
          %v2848 = vmul.f32 %v2845, %v2769
          %v2849 = vmul.f32 %v2845, %v2770
          %v2850 = vmul.f32 %v2845, %v2771
          %v2851 = vmul.f32 %v2845, %v2772
          %v2852 = vmul.f32 %v2845, %v2773
          %v2853 = vmul.f32 %v2845, %v2774
          %2862 = vrot.lane.b32.xlu0 %v2846, 126
          %v2863 = vpop.permute.xlu0 %2862
          %2864 = vrot.lane.b32.xlu0 %v2847, 126
          %v2865 = vpop.permute.xlu0 %2864
          %2866 = vrot.lane.b32.xlu0 %v2848, 126
          %v2867 = vpop.permute.xlu0 %2866
          %2868 = vrot.lane.b32.xlu0 %v2849, 126
          %v2869 = vpop.permute.xlu0 %2868
          %2870 = vrot.lane.b32.xlu0 %v2850, 126
          %v2871 = vpop.permute.xlu0 %2870
          %2872 = vrot.lane.b32.xlu0 %v2851, 126
          %v2873 = vpop.permute.xlu0 %2872
          %2874 = vrot.lane.b32.xlu0 %v2852, 126
          %v2875 = vpop.permute.xlu0 %2874
          %2876 = vrot.lane.b32.xlu0 %v2853, 126
          %v2877 = vpop.permute.xlu0 %2876
          %v2886 = vadd.f32 %v2835, %v2863
          %v2887 = vadd.f32 %v2836, %v2865
          %v2888 = vadd.f32 %v2837, %v2867
          %v2889 = vadd.f32 %v2838, %v2869
          %v2890 = vadd.f32 %v2839, %v2871
          %v2891 = vadd.f32 %v2840, %v2873
          %v2892 = vadd.f32 %v2841, %v2875
          %v2893 = vadd.f32 %v2842, %v2877
          %s2894 = sadd.s32 %s1730, 251
          %s2895 = sld [smem:[#allocation6 + %s2894]]
          %s2896 = scalar_lea.vmem [#allocation3], 216
          %v2897 = vld [vmem:[%s2896] sm:$0xff]
          %v2898 = vld [vmem:[%s2896 + $0x8] sm:$0xff]
          %v2899 = vld [vmem:[%s2896 + $0x10] sm:$0xff]
          %v2900 = vld [vmem:[%s2896 + $0x18] sm:$0xff]
          %v2901 = vld [vmem:[%s2896 + $0x20] sm:$0xff]
          %v2902 = vld [vmem:[%s2896 + $0x28] sm:$0xff]
          %v2903 = vld [vmem:[%s2896 + $0x30] sm:$0xff]
          %v2904 = vld [vmem:[%s2896 + $0x38] sm:$0xff]
          %v2905 = vstv %s2895
          %v2906 = vmul.f32 %v2905, %v2897
          %v2907 = vmul.f32 %v2905, %v2898
          %v2908 = vmul.f32 %v2905, %v2899
          %v2909 = vmul.f32 %v2905, %v2900
          %v2910 = vmul.f32 %v2905, %v2901
          %v2911 = vmul.f32 %v2905, %v2902
          %v2912 = vmul.f32 %v2905, %v2903
          %v2913 = vmul.f32 %v2905, %v2904
          %v2914 = vadd.f32 %v2886, %v2906
          %v2915 = vadd.f32 %v2887, %v2907
          %v2916 = vadd.f32 %v2888, %v2908
          %v2917 = vadd.f32 %v2889, %v2909
          %v2918 = vadd.f32 %v2890, %v2910
          %v2919 = vadd.f32 %v2891, %v2911
          %v2920 = vadd.f32 %v2892, %v2912
          %v2921 = vadd.f32 %v2893, %v2913
          %s2922 = sadd.s32 %s1730, 252
          %s2923 = sld [smem:[#allocation6 + %s2922]]
          %v2924 = vstv %s2923
          %v2925 = vmul.f32 %v2924, %v2897
          %v2926 = vmul.f32 %v2924, %v2898
          %v2927 = vmul.f32 %v2924, %v2899
          %v2928 = vmul.f32 %v2924, %v2900
          %v2929 = vmul.f32 %v2924, %v2901
          %v2930 = vmul.f32 %v2924, %v2902
          %v2931 = vmul.f32 %v2924, %v2903
          %v2932 = vmul.f32 %v2924, %v2904
          %2941 = vrot.lane.b32.xlu0 %v2925, 127
          %v2942 = vpop.permute.xlu0 %2941
          %2943 = vrot.lane.b32.xlu0 %v2926, 127
          %v2944 = vpop.permute.xlu0 %2943
          %2945 = vrot.lane.b32.xlu0 %v2927, 127
          %v2946 = vpop.permute.xlu0 %2945
          %2947 = vrot.lane.b32.xlu0 %v2928, 127
          %v2948 = vpop.permute.xlu0 %2947
          %2949 = vrot.lane.b32.xlu0 %v2929, 127
          %v2950 = vpop.permute.xlu0 %2949
          %2951 = vrot.lane.b32.xlu0 %v2930, 127
          %v2952 = vpop.permute.xlu0 %2951
          %2953 = vrot.lane.b32.xlu0 %v2931, 127
          %v2954 = vpop.permute.xlu0 %2953
          %2955 = vrot.lane.b32.xlu0 %v2932, 127
          %v2956 = vpop.permute.xlu0 %2955
          %v2965 = vadd.f32 %v2914, %v2942
          %v2966 = vadd.f32 %v2915, %v2944
          %v2967 = vadd.f32 %v2916, %v2946
          %v2968 = vadd.f32 %v2917, %v2948
          %v2969 = vadd.f32 %v2918, %v2950
          %v2970 = vadd.f32 %v2919, %v2952
          %v2971 = vadd.f32 %v2920, %v2954
          %v2972 = vadd.f32 %v2921, %v2956
          %s2973 = sadd.s32 %s1730, 253
          %s2974 = sld [smem:[#allocation6 + %s2973]]
          %v2975 = vstv %s2974
          %v2976 = vmul.f32 %v2975, %v2897
          %v2977 = vmul.f32 %v2975, %v2898
          %v2978 = vmul.f32 %v2975, %v2899
          %v2979 = vmul.f32 %v2975, %v2900
          %v2980 = vmul.f32 %v2975, %v2901
          %v2981 = vmul.f32 %v2975, %v2902
          %v2982 = vmul.f32 %v2975, %v2903
          %v2983 = vmul.f32 %v2975, %v2904
          %2992 = vrot.lane.b32.xlu0 %v2976, 126
          %v2993 = vpop.permute.xlu0 %2992
          %2994 = vrot.lane.b32.xlu0 %v2977, 126
          %v2995 = vpop.permute.xlu0 %2994
          %2996 = vrot.lane.b32.xlu0 %v2978, 126
          %v2997 = vpop.permute.xlu0 %2996
          %2998 = vrot.lane.b32.xlu0 %v2979, 126
          %v2999 = vpop.permute.xlu0 %2998
          %3000 = vrot.lane.b32.xlu0 %v2980, 126
          %v3001 = vpop.permute.xlu0 %3000
          %3002 = vrot.lane.b32.xlu0 %v2981, 126
          %v3003 = vpop.permute.xlu0 %3002
          %3004 = vrot.lane.b32.xlu0 %v2982, 126
          %v3005 = vpop.permute.xlu0 %3004
          %3006 = vrot.lane.b32.xlu0 %v2983, 126
          %v3007 = vpop.permute.xlu0 %3006
          %v3016 = vadd.f32 %v2965, %v2993
          %v3017 = vadd.f32 %v2966, %v2995
          %v3018 = vadd.f32 %v2967, %v2997
          %v3019 = vadd.f32 %v2968, %v2999
          %v3020 = vadd.f32 %v2969, %v3001
          %v3021 = vadd.f32 %v2970, %v3003
          %v3022 = vadd.f32 %v2971, %v3005
          %v3023 = vadd.f32 %v2972, %v3007
          %s3024 = sadd.s32 %s1730, 254
          %s3025 = sld [smem:[#allocation6 + %s3024]]
          %v3026 = vld [vmem:[%s2896 + $0x1] sm:$0xff]
          %v3027 = vld [vmem:[%s2896 + $0x9] sm:$0xff]
          %v3028 = vld [vmem:[%s2896 + $0x11] sm:$0xff]
          %v3029 = vld [vmem:[%s2896 + $0x19] sm:$0xff]
          %v3030 = vld [vmem:[%s2896 + $0x21] sm:$0xff]
          %v3031 = vld [vmem:[%s2896 + $0x29] sm:$0xff]
          %v3032 = vld [vmem:[%s2896 + $0x31] sm:$0xff]
          %v3033 = vld [vmem:[%s2896 + $0x39] sm:$0xff]
          %v3034 = vstv %s3025
          %v3035 = vmul.f32 %v3034, %v3026
          %v3036 = vmul.f32 %v3034, %v3027
          %v3037 = vmul.f32 %v3034, %v3028
          %v3038 = vmul.f32 %v3034, %v3029
          %v3039 = vmul.f32 %v3034, %v3030
          %v3040 = vmul.f32 %v3034, %v3031
          %v3041 = vmul.f32 %v3034, %v3032
          %v3042 = vmul.f32 %v3034, %v3033
          %v3043 = vadd.f32 %v3016, %v3035
          %v3044 = vadd.f32 %v3017, %v3036
          %v3045 = vadd.f32 %v3018, %v3037
          %v3046 = vadd.f32 %v3019, %v3038
          %v3047 = vadd.f32 %v3020, %v3039
          %v3048 = vadd.f32 %v3021, %v3040
          %v3049 = vadd.f32 %v3022, %v3041
          %v3050 = vadd.f32 %v3023, %v3042
          %s3051 = sadd.s32 %s1730, 255
          %s3052 = sld [smem:[#allocation6 + %s3051]]
          %v3053 = vstv %s3052
          %v3054 = vmul.f32 %v3053, %v3026
          %v3055 = vmul.f32 %v3053, %v3027
          %v3056 = vmul.f32 %v3053, %v3028
          %v3057 = vmul.f32 %v3053, %v3029
          %v3058 = vmul.f32 %v3053, %v3030
          %v3059 = vmul.f32 %v3053, %v3031
          %v3060 = vmul.f32 %v3053, %v3032
          %v3061 = vmul.f32 %v3053, %v3033
          %3070 = vrot.lane.b32.xlu0 %v3054, 127
          %v3071 = vpop.permute.xlu0 %3070
          %3072 = vrot.lane.b32.xlu0 %v3055, 127
          %v3073 = vpop.permute.xlu0 %3072
          %3074 = vrot.lane.b32.xlu0 %v3056, 127
          %v3075 = vpop.permute.xlu0 %3074
          %3076 = vrot.lane.b32.xlu0 %v3057, 127
          %v3077 = vpop.permute.xlu0 %3076
          %3078 = vrot.lane.b32.xlu0 %v3058, 127
          %v3079 = vpop.permute.xlu0 %3078
          %3080 = vrot.lane.b32.xlu0 %v3059, 127
          %v3081 = vpop.permute.xlu0 %3080
          %3082 = vrot.lane.b32.xlu0 %v3060, 127
          %v3083 = vpop.permute.xlu0 %3082
          %3084 = vrot.lane.b32.xlu0 %v3061, 127
          %v3085 = vpop.permute.xlu0 %3084
          %v3094 = vadd.f32 %v3043, %v3071
          %v3095 = vadd.f32 %v3044, %v3073
          %v3096 = vadd.f32 %v3045, %v3075
          %v3097 = vadd.f32 %v3046, %v3077
          %v3098 = vadd.f32 %v3047, %v3079
          %v3099 = vadd.f32 %v3048, %v3081
          %v3100 = vadd.f32 %v3049, %v3083
          %v3101 = vadd.f32 %v3050, %v3085
          %s3102 = sadd.s32 %s1730, 256
          %s3103 = sld [smem:[#allocation6 + %s3102]]
          %v3104 = vstv %s3103
          %v3105 = vmul.f32 %v3104, %v3026
          %v3106 = vmul.f32 %v3104, %v3027
          %v3107 = vmul.f32 %v3104, %v3028
          %v3108 = vmul.f32 %v3104, %v3029
          %v3109 = vmul.f32 %v3104, %v3030
          %v3110 = vmul.f32 %v3104, %v3031
          %v3111 = vmul.f32 %v3104, %v3032
          %v3112 = vmul.f32 %v3104, %v3033
          %3121 = vrot.lane.b32.xlu0 %v3105, 126
          %v3122 = vpop.permute.xlu0 %3121
          %3123 = vrot.lane.b32.xlu0 %v3106, 126
          %v3124 = vpop.permute.xlu0 %3123
          %3125 = vrot.lane.b32.xlu0 %v3107, 126
          %v3126 = vpop.permute.xlu0 %3125
          %3127 = vrot.lane.b32.xlu0 %v3108, 126
          %v3128 = vpop.permute.xlu0 %3127
          %3129 = vrot.lane.b32.xlu0 %v3109, 126
          %v3130 = vpop.permute.xlu0 %3129
          %3131 = vrot.lane.b32.xlu0 %v3110, 126
          %v3132 = vpop.permute.xlu0 %3131
          %3133 = vrot.lane.b32.xlu0 %v3111, 126
          %v3134 = vpop.permute.xlu0 %3133
          %3135 = vrot.lane.b32.xlu0 %v3112, 126
          %v3136 = vpop.permute.xlu0 %3135
          %v3145 = vadd.f32 %v3094, %v3122
          %v3146 = vadd.f32 %v3095, %v3124
          %v3147 = vadd.f32 %v3096, %v3126
          %v3148 = vadd.f32 %v3097, %v3128
          %v3149 = vadd.f32 %v3098, %v3130
          %v3150 = vadd.f32 %v3099, %v3132
          %v3151 = vadd.f32 %v3100, %v3134
          %v3152 = vadd.f32 %v3101, %v3136
          %s3153 = sadd.s32 %s1730, 257
          %s3154 = sld [smem:[#allocation6 + %s3153]]
          %v3155 = vld [vmem:[%s2896 + $0x2] sm:$0xff]
          %v3156 = vld [vmem:[%s2896 + $0xa] sm:$0xff]
          %v3157 = vld [vmem:[%s2896 + $0x12] sm:$0xff]
          %v3158 = vld [vmem:[%s2896 + $0x1a] sm:$0xff]
          %v3159 = vld [vmem:[%s2896 + $0x22] sm:$0xff]
          %v3160 = vld [vmem:[%s2896 + $0x2a] sm:$0xff]
          %v3161 = vld [vmem:[%s2896 + $0x32] sm:$0xff]
          %v3162 = vld [vmem:[%s2896 + $0x3a] sm:$0xff]
          %v3163 = vstv %s3154
          %v3164 = vmul.f32 %v3163, %v3155
          %v3165 = vmul.f32 %v3163, %v3156
          %v3166 = vmul.f32 %v3163, %v3157
          %v3167 = vmul.f32 %v3163, %v3158
          %v3168 = vmul.f32 %v3163, %v3159
          %v3169 = vmul.f32 %v3163, %v3160
          %v3170 = vmul.f32 %v3163, %v3161
          %v3171 = vmul.f32 %v3163, %v3162
          %v3172 = vadd.f32 %v3145, %v3164
          %v3173 = vadd.f32 %v3146, %v3165
          %v3174 = vadd.f32 %v3147, %v3166
          %v3175 = vadd.f32 %v3148, %v3167
          %v3176 = vadd.f32 %v3149, %v3168
          %v3177 = vadd.f32 %v3150, %v3169
          %v3178 = vadd.f32 %v3151, %v3170
          %v3179 = vadd.f32 %v3152, %v3171
          %s3180 = sadd.s32 %s1730, 258
          %s3181 = sld [smem:[#allocation6 + %s3180]]
          %v3182 = vstv %s3181
          %v3183 = vmul.f32 %v3182, %v3155
          %v3184 = vmul.f32 %v3182, %v3156
          %v3185 = vmul.f32 %v3182, %v3157
          %v3186 = vmul.f32 %v3182, %v3158
          %v3187 = vmul.f32 %v3182, %v3159
          %v3188 = vmul.f32 %v3182, %v3160
          %v3189 = vmul.f32 %v3182, %v3161
          %v3190 = vmul.f32 %v3182, %v3162
          %3199 = vrot.lane.b32.xlu0 %v3183, 127
          %v3200 = vpop.permute.xlu0 %3199
          %3201 = vrot.lane.b32.xlu0 %v3184, 127
          %v3202 = vpop.permute.xlu0 %3201
          %3203 = vrot.lane.b32.xlu0 %v3185, 127
          %v3204 = vpop.permute.xlu0 %3203
          %3205 = vrot.lane.b32.xlu0 %v3186, 127
          %v3206 = vpop.permute.xlu0 %3205
          %3207 = vrot.lane.b32.xlu0 %v3187, 127
          %v3208 = vpop.permute.xlu0 %3207
          %3209 = vrot.lane.b32.xlu0 %v3188, 127
          %v3210 = vpop.permute.xlu0 %3209
          %3211 = vrot.lane.b32.xlu0 %v3189, 127
          %v3212 = vpop.permute.xlu0 %3211
          %3213 = vrot.lane.b32.xlu0 %v3190, 127
          %v3214 = vpop.permute.xlu0 %3213
          %v3223 = vadd.f32 %v3172, %v3200
          %v3224 = vadd.f32 %v3173, %v3202
          %v3225 = vadd.f32 %v3174, %v3204
          %v3226 = vadd.f32 %v3175, %v3206
          %v3227 = vadd.f32 %v3176, %v3208
          %v3228 = vadd.f32 %v3177, %v3210
          %v3229 = vadd.f32 %v3178, %v3212
          %v3230 = vadd.f32 %v3179, %v3214
          %s3231 = sadd.s32 %s1730, 259
          %s3232 = sld [smem:[#allocation6 + %s3231]]
          %v3233 = vstv %s3232
          %v3234 = vmul.f32 %v3233, %v3155
          %v3235 = vmul.f32 %v3233, %v3156
          %v3236 = vmul.f32 %v3233, %v3157
          %v3237 = vmul.f32 %v3233, %v3158
          %v3238 = vmul.f32 %v3233, %v3159
          %v3239 = vmul.f32 %v3233, %v3160
          %v3240 = vmul.f32 %v3233, %v3161
          %v3241 = vmul.f32 %v3233, %v3162
          %3250 = vrot.lane.b32.xlu0 %v3234, 126
          %v3251 = vpop.permute.xlu0 %3250
          %3252 = vrot.lane.b32.xlu0 %v3235, 126
          %v3253 = vpop.permute.xlu0 %3252
          %3254 = vrot.lane.b32.xlu0 %v3236, 126
          %v3255 = vpop.permute.xlu0 %3254
          %3256 = vrot.lane.b32.xlu0 %v3237, 126
          %v3257 = vpop.permute.xlu0 %3256
          %3258 = vrot.lane.b32.xlu0 %v3238, 126
          %v3259 = vpop.permute.xlu0 %3258
          %3260 = vrot.lane.b32.xlu0 %v3239, 126
          %v3261 = vpop.permute.xlu0 %3260
          %3262 = vrot.lane.b32.xlu0 %v3240, 126
          %v3263 = vpop.permute.xlu0 %3262
          %3264 = vrot.lane.b32.xlu0 %v3241, 126
          %v3265 = vpop.permute.xlu0 %3264
          %v3274 = vadd.f32 %v3223, %v3251
          %v3275 = vadd.f32 %v3224, %v3253
          %v3276 = vadd.f32 %v3225, %v3255
          %v3277 = vadd.f32 %v3226, %v3257
          %v3278 = vadd.f32 %v3227, %v3259
          %v3279 = vadd.f32 %v3228, %v3261
          %v3280 = vadd.f32 %v3229, %v3263
          %v3281 = vadd.f32 %v3230, %v3265
          %s3282 = sadd.s32 %s1730, 260
          %s3283 = sld [smem:[#allocation6 + %s3282]]
          %s3284 = scalar_lea.vmem [#allocation3], 288
          %v3285 = vld [vmem:[%s3284] sm:$0xff]
          %v3286 = vld [vmem:[%s3284 + $0x8] sm:$0xff]
          %v3287 = vld [vmem:[%s3284 + $0x10] sm:$0xff]
          %v3288 = vld [vmem:[%s3284 + $0x18] sm:$0xff]
          %v3289 = vld [vmem:[%s3284 + $0x20] sm:$0xff]
          %v3290 = vld [vmem:[%s3284 + $0x28] sm:$0xff]
          %v3291 = vld [vmem:[%s3284 + $0x30] sm:$0xff]
          %v3292 = vld [vmem:[%s3284 + $0x38] sm:$0xff]
          %v3293 = vstv %s3283
          %v3294 = vmul.f32 %v3293, %v3285
          %v3295 = vmul.f32 %v3293, %v3286
          %v3296 = vmul.f32 %v3293, %v3287
          %v3297 = vmul.f32 %v3293, %v3288
          %v3298 = vmul.f32 %v3293, %v3289
          %v3299 = vmul.f32 %v3293, %v3290
          %v3300 = vmul.f32 %v3293, %v3291
          %v3301 = vmul.f32 %v3293, %v3292
          %v3302 = vadd.f32 %v3274, %v3294
          %v3303 = vadd.f32 %v3275, %v3295
          %v3304 = vadd.f32 %v3276, %v3296
          %v3305 = vadd.f32 %v3277, %v3297
          %v3306 = vadd.f32 %v3278, %v3298
          %v3307 = vadd.f32 %v3279, %v3299
          %v3308 = vadd.f32 %v3280, %v3300
          %v3309 = vadd.f32 %v3281, %v3301
          %s3310 = sadd.s32 %s1730, 261
          %s3311 = sld [smem:[#allocation6 + %s3310]]
          %v3312 = vstv %s3311
          %v3313 = vmul.f32 %v3312, %v3285
          %v3314 = vmul.f32 %v3312, %v3286
          %v3315 = vmul.f32 %v3312, %v3287
          %v3316 = vmul.f32 %v3312, %v3288
          %v3317 = vmul.f32 %v3312, %v3289
          %v3318 = vmul.f32 %v3312, %v3290
          %v3319 = vmul.f32 %v3312, %v3291
          %v3320 = vmul.f32 %v3312, %v3292
          %3329 = vrot.lane.b32.xlu0 %v3313, 127
          %v3330 = vpop.permute.xlu0 %3329
          %3331 = vrot.lane.b32.xlu0 %v3314, 127
          %v3332 = vpop.permute.xlu0 %3331
          %3333 = vrot.lane.b32.xlu0 %v3315, 127
          %v3334 = vpop.permute.xlu0 %3333
          %3335 = vrot.lane.b32.xlu0 %v3316, 127
          %v3336 = vpop.permute.xlu0 %3335
          %3337 = vrot.lane.b32.xlu0 %v3317, 127
          %v3338 = vpop.permute.xlu0 %3337
          %3339 = vrot.lane.b32.xlu0 %v3318, 127
          %v3340 = vpop.permute.xlu0 %3339
          %3341 = vrot.lane.b32.xlu0 %v3319, 127
          %v3342 = vpop.permute.xlu0 %3341
          %3343 = vrot.lane.b32.xlu0 %v3320, 127
          %v3344 = vpop.permute.xlu0 %3343
          %v3353 = vadd.f32 %v3302, %v3330
          %v3354 = vadd.f32 %v3303, %v3332
          %v3355 = vadd.f32 %v3304, %v3334
          %v3356 = vadd.f32 %v3305, %v3336
          %v3357 = vadd.f32 %v3306, %v3338
          %v3358 = vadd.f32 %v3307, %v3340
          %v3359 = vadd.f32 %v3308, %v3342
          %v3360 = vadd.f32 %v3309, %v3344
          %s3361 = sadd.s32 %s1730, 262
          %s3362 = sld [smem:[#allocation6 + %s3361]]
          %v3363 = vstv %s3362
          %v3364 = vmul.f32 %v3363, %v3285
          %v3365 = vmul.f32 %v3363, %v3286
          %v3366 = vmul.f32 %v3363, %v3287
          %v3367 = vmul.f32 %v3363, %v3288
          %v3368 = vmul.f32 %v3363, %v3289
          %v3369 = vmul.f32 %v3363, %v3290
          %v3370 = vmul.f32 %v3363, %v3291
          %v3371 = vmul.f32 %v3363, %v3292
          %3380 = vrot.lane.b32.xlu0 %v3364, 126
          %v3381 = vpop.permute.xlu0 %3380
          %3382 = vrot.lane.b32.xlu0 %v3365, 126
          %v3383 = vpop.permute.xlu0 %3382
          %3384 = vrot.lane.b32.xlu0 %v3366, 126
          %v3385 = vpop.permute.xlu0 %3384
          %3386 = vrot.lane.b32.xlu0 %v3367, 126
          %v3387 = vpop.permute.xlu0 %3386
          %3388 = vrot.lane.b32.xlu0 %v3368, 126
          %v3389 = vpop.permute.xlu0 %3388
          %3390 = vrot.lane.b32.xlu0 %v3369, 126
          %v3391 = vpop.permute.xlu0 %3390
          %3392 = vrot.lane.b32.xlu0 %v3370, 126
          %v3393 = vpop.permute.xlu0 %3392
          %3394 = vrot.lane.b32.xlu0 %v3371, 126
          %v3395 = vpop.permute.xlu0 %3394
          %v3404 = vadd.f32 %v3353, %v3381
          %v3405 = vadd.f32 %v3354, %v3383
          %v3406 = vadd.f32 %v3355, %v3385
          %v3407 = vadd.f32 %v3356, %v3387
          %v3408 = vadd.f32 %v3357, %v3389
          %v3409 = vadd.f32 %v3358, %v3391
          %v3410 = vadd.f32 %v3359, %v3393
          %v3411 = vadd.f32 %v3360, %v3395
          %s3412 = sadd.s32 %s1730, 263
          %s3413 = sld [smem:[#allocation6 + %s3412]]
          %v3414 = vld [vmem:[%s3284 + $0x1] sm:$0xff]
          %v3415 = vld [vmem:[%s3284 + $0x9] sm:$0xff]
          %v3416 = vld [vmem:[%s3284 + $0x11] sm:$0xff]
          %v3417 = vld [vmem:[%s3284 + $0x19] sm:$0xff]
          %v3418 = vld [vmem:[%s3284 + $0x21] sm:$0xff]
          %v3419 = vld [vmem:[%s3284 + $0x29] sm:$0xff]
          %v3420 = vld [vmem:[%s3284 + $0x31] sm:$0xff]
          %v3421 = vld [vmem:[%s3284 + $0x39] sm:$0xff]
          %v3422 = vstv %s3413
          %v3423 = vmul.f32 %v3422, %v3414
          %v3424 = vmul.f32 %v3422, %v3415
          %v3425 = vmul.f32 %v3422, %v3416
          %v3426 = vmul.f32 %v3422, %v3417
          %v3427 = vmul.f32 %v3422, %v3418
          %v3428 = vmul.f32 %v3422, %v3419
          %v3429 = vmul.f32 %v3422, %v3420
          %v3430 = vmul.f32 %v3422, %v3421
          %v3431 = vadd.f32 %v3404, %v3423
          %v3432 = vadd.f32 %v3405, %v3424
          %v3433 = vadd.f32 %v3406, %v3425
          %v3434 = vadd.f32 %v3407, %v3426
          %v3435 = vadd.f32 %v3408, %v3427
          %v3436 = vadd.f32 %v3409, %v3428
          %v3437 = vadd.f32 %v3410, %v3429
          %v3438 = vadd.f32 %v3411, %v3430
          %s3439 = sadd.s32 %s1730, 264
          %s3440 = sld [smem:[#allocation6 + %s3439]]
          %v3441 = vstv %s3440
          %v3442 = vmul.f32 %v3441, %v3414
          %v3443 = vmul.f32 %v3441, %v3415
          %v3444 = vmul.f32 %v3441, %v3416
          %v3445 = vmul.f32 %v3441, %v3417
          %v3446 = vmul.f32 %v3441, %v3418
          %v3447 = vmul.f32 %v3441, %v3419
          %v3448 = vmul.f32 %v3441, %v3420
          %v3449 = vmul.f32 %v3441, %v3421
          %3458 = vrot.lane.b32.xlu0 %v3442, 127
          %v3459 = vpop.permute.xlu0 %3458
          %3460 = vrot.lane.b32.xlu0 %v3443, 127
          %v3461 = vpop.permute.xlu0 %3460
          %3462 = vrot.lane.b32.xlu0 %v3444, 127
          %v3463 = vpop.permute.xlu0 %3462
          %3464 = vrot.lane.b32.xlu0 %v3445, 127
          %v3465 = vpop.permute.xlu0 %3464
          %3466 = vrot.lane.b32.xlu0 %v3446, 127
          %v3467 = vpop.permute.xlu0 %3466
          %3468 = vrot.lane.b32.xlu0 %v3447, 127
          %v3469 = vpop.permute.xlu0 %3468
          %3470 = vrot.lane.b32.xlu0 %v3448, 127
          %v3471 = vpop.permute.xlu0 %3470
          %3472 = vrot.lane.b32.xlu0 %v3449, 127
          %v3473 = vpop.permute.xlu0 %3472
          %v3482 = vadd.f32 %v3431, %v3459
          %v3483 = vadd.f32 %v3432, %v3461
          %v3484 = vadd.f32 %v3433, %v3463
          %v3485 = vadd.f32 %v3434, %v3465
          %v3486 = vadd.f32 %v3435, %v3467
          %v3487 = vadd.f32 %v3436, %v3469
          %v3488 = vadd.f32 %v3437, %v3471
          %v3489 = vadd.f32 %v3438, %v3473
          %s3490 = sadd.s32 %s1730, 265
          %s3491 = sld [smem:[#allocation6 + %s3490]]
          %v3492 = vstv %s3491
          %v3493 = vmul.f32 %v3492, %v3414
          %v3494 = vmul.f32 %v3492, %v3415
          %v3495 = vmul.f32 %v3492, %v3416
          %v3496 = vmul.f32 %v3492, %v3417
          %v3497 = vmul.f32 %v3492, %v3418
          %v3498 = vmul.f32 %v3492, %v3419
          %v3499 = vmul.f32 %v3492, %v3420
          %v3500 = vmul.f32 %v3492, %v3421
          %3509 = vrot.lane.b32.xlu0 %v3493, 126
          %v3510 = vpop.permute.xlu0 %3509
          %3511 = vrot.lane.b32.xlu0 %v3494, 126
          %v3512 = vpop.permute.xlu0 %3511
          %3513 = vrot.lane.b32.xlu0 %v3495, 126
          %v3514 = vpop.permute.xlu0 %3513
          %3515 = vrot.lane.b32.xlu0 %v3496, 126
          %v3516 = vpop.permute.xlu0 %3515
          %3517 = vrot.lane.b32.xlu0 %v3497, 126
          %v3518 = vpop.permute.xlu0 %3517
          %3519 = vrot.lane.b32.xlu0 %v3498, 126
          %v3520 = vpop.permute.xlu0 %3519
          %3521 = vrot.lane.b32.xlu0 %v3499, 126
          %v3522 = vpop.permute.xlu0 %3521
          %3523 = vrot.lane.b32.xlu0 %v3500, 126
          %v3524 = vpop.permute.xlu0 %3523
          %v3533 = vadd.f32 %v3482, %v3510
          %v3534 = vadd.f32 %v3483, %v3512
          %v3535 = vadd.f32 %v3484, %v3514
          %v3536 = vadd.f32 %v3485, %v3516
          %v3537 = vadd.f32 %v3486, %v3518
          %v3538 = vadd.f32 %v3487, %v3520
          %v3539 = vadd.f32 %v3488, %v3522
          %v3540 = vadd.f32 %v3489, %v3524
          %s3541 = sadd.s32 %s1730, 266
          %s3542 = sld [smem:[#allocation6 + %s3541]]
          %v3543 = vld [vmem:[%s3284 + $0x2] sm:$0xff]
          %v3544 = vld [vmem:[%s3284 + $0xa] sm:$0xff]
          %v3545 = vld [vmem:[%s3284 + $0x12] sm:$0xff]
          %v3546 = vld [vmem:[%s3284 + $0x1a] sm:$0xff]
          %v3547 = vld [vmem:[%s3284 + $0x22] sm:$0xff]
          %v3548 = vld [vmem:[%s3284 + $0x2a] sm:$0xff]
          %v3549 = vld [vmem:[%s3284 + $0x32] sm:$0xff]
          %v3550 = vld [vmem:[%s3284 + $0x3a] sm:$0xff]
          %v3551 = vstv %s3542
          %v3552 = vmul.f32 %v3551, %v3543
          %v3553 = vmul.f32 %v3551, %v3544
          %v3554 = vmul.f32 %v3551, %v3545
          %v3555 = vmul.f32 %v3551, %v3546
          %v3556 = vmul.f32 %v3551, %v3547
          %v3557 = vmul.f32 %v3551, %v3548
          %v3558 = vmul.f32 %v3551, %v3549
          %v3559 = vmul.f32 %v3551, %v3550
          %v3560 = vadd.f32 %v3533, %v3552
          %v3561 = vadd.f32 %v3534, %v3553
          %v3562 = vadd.f32 %v3535, %v3554
          %v3563 = vadd.f32 %v3536, %v3555
          %v3564 = vadd.f32 %v3537, %v3556
          %v3565 = vadd.f32 %v3538, %v3557
          %v3566 = vadd.f32 %v3539, %v3558
          %v3567 = vadd.f32 %v3540, %v3559
          %s3568 = sadd.s32 %s1730, 267
          %s3569 = sld [smem:[#allocation6 + %s3568]]
          %v3570 = vstv %s3569
          %v3571 = vmul.f32 %v3570, %v3543
          %v3572 = vmul.f32 %v3570, %v3544
          %v3573 = vmul.f32 %v3570, %v3545
          %v3574 = vmul.f32 %v3570, %v3546
          %v3575 = vmul.f32 %v3570, %v3547
          %v3576 = vmul.f32 %v3570, %v3548
          %v3577 = vmul.f32 %v3570, %v3549
          %v3578 = vmul.f32 %v3570, %v3550
          %3587 = vrot.lane.b32.xlu0 %v3571, 127
          %v3588 = vpop.permute.xlu0 %3587
          %3589 = vrot.lane.b32.xlu0 %v3572, 127
          %v3590 = vpop.permute.xlu0 %3589
          %3591 = vrot.lane.b32.xlu0 %v3573, 127
          %v3592 = vpop.permute.xlu0 %3591
          %3593 = vrot.lane.b32.xlu0 %v3574, 127
          %v3594 = vpop.permute.xlu0 %3593
          %3595 = vrot.lane.b32.xlu0 %v3575, 127
          %v3596 = vpop.permute.xlu0 %3595
          %3597 = vrot.lane.b32.xlu0 %v3576, 127
          %v3598 = vpop.permute.xlu0 %3597
          %3599 = vrot.lane.b32.xlu0 %v3577, 127
          %v3600 = vpop.permute.xlu0 %3599
          %3601 = vrot.lane.b32.xlu0 %v3578, 127
          %v3602 = vpop.permute.xlu0 %3601
          %v3611 = vadd.f32 %v3560, %v3588
          %v3612 = vadd.f32 %v3561, %v3590
          %v3613 = vadd.f32 %v3562, %v3592
          %v3614 = vadd.f32 %v3563, %v3594
          %v3615 = vadd.f32 %v3564, %v3596
          %v3616 = vadd.f32 %v3565, %v3598
          %v3617 = vadd.f32 %v3566, %v3600
          %v3618 = vadd.f32 %v3567, %v3602
          %s3619 = sadd.s32 %s1730, 268
          %s3620 = sld [smem:[#allocation6 + %s3619]]
          %v3621 = vstv %s3620
          %v3622 = vmul.f32 %v3621, %v3543
          %v3623 = vmul.f32 %v3621, %v3544
          %v3624 = vmul.f32 %v3621, %v3545
          %v3625 = vmul.f32 %v3621, %v3546
          %v3626 = vmul.f32 %v3621, %v3547
          %v3627 = vmul.f32 %v3621, %v3548
          %v3628 = vmul.f32 %v3621, %v3549
          %v3629 = vmul.f32 %v3621, %v3550
          %3638 = vrot.lane.b32.xlu0 %v3622, 126
          %v3639 = vpop.permute.xlu0 %3638
          %3640 = vrot.lane.b32.xlu0 %v3623, 126
          %v3641 = vpop.permute.xlu0 %3640
          %3642 = vrot.lane.b32.xlu0 %v3624, 126
          %v3643 = vpop.permute.xlu0 %3642
          %3644 = vrot.lane.b32.xlu0 %v3625, 126
          %v3645 = vpop.permute.xlu0 %3644
          %3646 = vrot.lane.b32.xlu0 %v3626, 126
          %v3647 = vpop.permute.xlu0 %3646
          %3648 = vrot.lane.b32.xlu0 %v3627, 126
          %v3649 = vpop.permute.xlu0 %3648
          %3650 = vrot.lane.b32.xlu0 %v3628, 126
          %v3651 = vpop.permute.xlu0 %3650
          %3652 = vrot.lane.b32.xlu0 %v3629, 126
          %v3653 = vpop.permute.xlu0 %3652
          %v3662 = vadd.f32 %v3611, %v3639
          %v3663 = vadd.f32 %v3612, %v3641
          %v3664 = vadd.f32 %v3613, %v3643
          %v3665 = vadd.f32 %v3614, %v3645
          %v3666 = vadd.f32 %v3615, %v3647
          %v3667 = vadd.f32 %v3616, %v3649
          %v3668 = vadd.f32 %v3617, %v3651
          %v3669 = vadd.f32 %v3618, %v3653
          %s3670 = sadd.s32 %s1730, 269
          %s3671 = sld [smem:[#allocation6 + %s3670]]
          %s3672 = scalar_lea.vmem [#allocation3], 360
          %v3673 = vld [vmem:[%s3672] sm:$0xff]
          %v3674 = vld [vmem:[%s3672 + $0x8] sm:$0xff]
          %v3675 = vld [vmem:[%s3672 + $0x10] sm:$0xff]
          %v3676 = vld [vmem:[%s3672 + $0x18] sm:$0xff]
          %v3677 = vld [vmem:[%s3672 + $0x20] sm:$0xff]
          %v3678 = vld [vmem:[%s3672 + $0x28] sm:$0xff]
          %v3679 = vld [vmem:[%s3672 + $0x30] sm:$0xff]
          %v3680 = vld [vmem:[%s3672 + $0x38] sm:$0xff]
          %v3681 = vstv %s3671
          %v3682 = vmul.f32 %v3681, %v3673
          %v3683 = vmul.f32 %v3681, %v3674
          %v3684 = vmul.f32 %v3681, %v3675
          %v3685 = vmul.f32 %v3681, %v3676
          %v3686 = vmul.f32 %v3681, %v3677
          %v3687 = vmul.f32 %v3681, %v3678
          %v3688 = vmul.f32 %v3681, %v3679
          %v3689 = vmul.f32 %v3681, %v3680
          %v3690 = vadd.f32 %v3662, %v3682
          %v3691 = vadd.f32 %v3663, %v3683
          %v3692 = vadd.f32 %v3664, %v3684
          %v3693 = vadd.f32 %v3665, %v3685
          %v3694 = vadd.f32 %v3666, %v3686
          %v3695 = vadd.f32 %v3667, %v3687
          %v3696 = vadd.f32 %v3668, %v3688
          %v3697 = vadd.f32 %v3669, %v3689
          %s3698 = sadd.s32 %s1730, 270
          %s3699 = sld [smem:[#allocation6 + %s3698]]
          %v3700 = vstv %s3699
          %v3701 = vmul.f32 %v3700, %v3673
          %v3702 = vmul.f32 %v3700, %v3674
          %v3703 = vmul.f32 %v3700, %v3675
          %v3704 = vmul.f32 %v3700, %v3676
          %v3705 = vmul.f32 %v3700, %v3677
          %v3706 = vmul.f32 %v3700, %v3678
          %v3707 = vmul.f32 %v3700, %v3679
          %v3708 = vmul.f32 %v3700, %v3680
          %3717 = vrot.lane.b32.xlu0 %v3701, 127
          %v3718 = vpop.permute.xlu0 %3717
          %3719 = vrot.lane.b32.xlu0 %v3702, 127
          %v3720 = vpop.permute.xlu0 %3719
          %3721 = vrot.lane.b32.xlu0 %v3703, 127
          %v3722 = vpop.permute.xlu0 %3721
          %3723 = vrot.lane.b32.xlu0 %v3704, 127
          %v3724 = vpop.permute.xlu0 %3723
          %3725 = vrot.lane.b32.xlu0 %v3705, 127
          %v3726 = vpop.permute.xlu0 %3725
          %3727 = vrot.lane.b32.xlu0 %v3706, 127
          %v3728 = vpop.permute.xlu0 %3727
          %3729 = vrot.lane.b32.xlu0 %v3707, 127
          %v3730 = vpop.permute.xlu0 %3729
          %3731 = vrot.lane.b32.xlu0 %v3708, 127
          %v3732 = vpop.permute.xlu0 %3731
          %v3741 = vadd.f32 %v3690, %v3718
          %v3742 = vadd.f32 %v3691, %v3720
          %v3743 = vadd.f32 %v3692, %v3722
          %v3744 = vadd.f32 %v3693, %v3724
          %v3745 = vadd.f32 %v3694, %v3726
          %v3746 = vadd.f32 %v3695, %v3728
          %v3747 = vadd.f32 %v3696, %v3730
          %v3748 = vadd.f32 %v3697, %v3732
          %s3749 = sadd.s32 %s1730, 271
          %s3750 = sld [smem:[#allocation6 + %s3749]]
          %v3751 = vstv %s3750
          %v3752 = vmul.f32 %v3751, %v3673
          %v3753 = vmul.f32 %v3751, %v3674
          %v3754 = vmul.f32 %v3751, %v3675
          %v3755 = vmul.f32 %v3751, %v3676
          %v3756 = vmul.f32 %v3751, %v3677
          %v3757 = vmul.f32 %v3751, %v3678
          %v3758 = vmul.f32 %v3751, %v3679
          %v3759 = vmul.f32 %v3751, %v3680
          %3768 = vrot.lane.b32.xlu0 %v3752, 126
          %v3769 = vpop.permute.xlu0 %3768
          %3770 = vrot.lane.b32.xlu0 %v3753, 126
          %v3771 = vpop.permute.xlu0 %3770
          %3772 = vrot.lane.b32.xlu0 %v3754, 126
          %v3773 = vpop.permute.xlu0 %3772
          %3774 = vrot.lane.b32.xlu0 %v3755, 126
          %v3775 = vpop.permute.xlu0 %3774
          %3776 = vrot.lane.b32.xlu0 %v3756, 126
          %v3777 = vpop.permute.xlu0 %3776
          %3778 = vrot.lane.b32.xlu0 %v3757, 126
          %v3779 = vpop.permute.xlu0 %3778
          %3780 = vrot.lane.b32.xlu0 %v3758, 126
          %v3781 = vpop.permute.xlu0 %3780
          %3782 = vrot.lane.b32.xlu0 %v3759, 126
          %v3783 = vpop.permute.xlu0 %3782
          %v3792 = vadd.f32 %v3741, %v3769
          %v3793 = vadd.f32 %v3742, %v3771
          %v3794 = vadd.f32 %v3743, %v3773
          %v3795 = vadd.f32 %v3744, %v3775
          %v3796 = vadd.f32 %v3745, %v3777
          %v3797 = vadd.f32 %v3746, %v3779
          %v3798 = vadd.f32 %v3747, %v3781
          %v3799 = vadd.f32 %v3748, %v3783
          %s3800 = sadd.s32 %s1730, 272
          %s3801 = sld [smem:[#allocation6 + %s3800]]
          %v3802 = vld [vmem:[%s3672 + $0x1] sm:$0xff]
          %v3803 = vld [vmem:[%s3672 + $0x9] sm:$0xff]
          %v3804 = vld [vmem:[%s3672 + $0x11] sm:$0xff]
          %v3805 = vld [vmem:[%s3672 + $0x19] sm:$0xff]
          %v3806 = vld [vmem:[%s3672 + $0x21] sm:$0xff]
          %v3807 = vld [vmem:[%s3672 + $0x29] sm:$0xff]
          %v3808 = vld [vmem:[%s3672 + $0x31] sm:$0xff]
          %v3809 = vld [vmem:[%s3672 + $0x39] sm:$0xff]
          %v3810 = vstv %s3801
          %v3811 = vmul.f32 %v3810, %v3802
          %v3812 = vmul.f32 %v3810, %v3803
          %v3813 = vmul.f32 %v3810, %v3804
          %v3814 = vmul.f32 %v3810, %v3805
          %v3815 = vmul.f32 %v3810, %v3806
          %v3816 = vmul.f32 %v3810, %v3807
          %v3817 = vmul.f32 %v3810, %v3808
          %v3818 = vmul.f32 %v3810, %v3809
          %v3819 = vadd.f32 %v3792, %v3811
          %v3820 = vadd.f32 %v3793, %v3812
          %v3821 = vadd.f32 %v3794, %v3813
          %v3822 = vadd.f32 %v3795, %v3814
          %v3823 = vadd.f32 %v3796, %v3815
          %v3824 = vadd.f32 %v3797, %v3816
          %v3825 = vadd.f32 %v3798, %v3817
          %v3826 = vadd.f32 %v3799, %v3818
          %s3827 = sadd.s32 %s1730, 273
          %s3828 = sld [smem:[#allocation6 + %s3827]]
          %v3829 = vstv %s3828
          %v3830 = vmul.f32 %v3829, %v3802
          %v3831 = vmul.f32 %v3829, %v3803
          %v3832 = vmul.f32 %v3829, %v3804
          %v3833 = vmul.f32 %v3829, %v3805
          %v3834 = vmul.f32 %v3829, %v3806
          %v3835 = vmul.f32 %v3829, %v3807
          %v3836 = vmul.f32 %v3829, %v3808
          %v3837 = vmul.f32 %v3829, %v3809
          %3846 = vrot.lane.b32.xlu0 %v3830, 127
          %v3847 = vpop.permute.xlu0 %3846
          %3848 = vrot.lane.b32.xlu0 %v3831, 127
          %v3849 = vpop.permute.xlu0 %3848
          %3850 = vrot.lane.b32.xlu0 %v3832, 127
          %v3851 = vpop.permute.xlu0 %3850
          %3852 = vrot.lane.b32.xlu0 %v3833, 127
          %v3853 = vpop.permute.xlu0 %3852
          %3854 = vrot.lane.b32.xlu0 %v3834, 127
          %v3855 = vpop.permute.xlu0 %3854
          %3856 = vrot.lane.b32.xlu0 %v3835, 127
          %v3857 = vpop.permute.xlu0 %3856
          %3858 = vrot.lane.b32.xlu0 %v3836, 127
          %v3859 = vpop.permute.xlu0 %3858
          %3860 = vrot.lane.b32.xlu0 %v3837, 127
          %v3861 = vpop.permute.xlu0 %3860
          %v3870 = vadd.f32 %v3819, %v3847
          %v3871 = vadd.f32 %v3820, %v3849
          %v3872 = vadd.f32 %v3821, %v3851
          %v3873 = vadd.f32 %v3822, %v3853
          %v3874 = vadd.f32 %v3823, %v3855
          %v3875 = vadd.f32 %v3824, %v3857
          %v3876 = vadd.f32 %v3825, %v3859
          %v3877 = vadd.f32 %v3826, %v3861
          %s3878 = sadd.s32 %s1730, 274
          %s3879 = sld [smem:[#allocation6 + %s3878]]
          %v3880 = vstv %s3879
          %v3881 = vmul.f32 %v3880, %v3802
          %v3882 = vmul.f32 %v3880, %v3803
          %v3883 = vmul.f32 %v3880, %v3804
          %v3884 = vmul.f32 %v3880, %v3805
          %v3885 = vmul.f32 %v3880, %v3806
          %v3886 = vmul.f32 %v3880, %v3807
          %v3887 = vmul.f32 %v3880, %v3808
          %v3888 = vmul.f32 %v3880, %v3809
          %3897 = vrot.lane.b32.xlu0 %v3881, 126
          %v3898 = vpop.permute.xlu0 %3897
          %3899 = vrot.lane.b32.xlu0 %v3882, 126
          %v3900 = vpop.permute.xlu0 %3899
          %3901 = vrot.lane.b32.xlu0 %v3883, 126
          %v3902 = vpop.permute.xlu0 %3901
          %3903 = vrot.lane.b32.xlu0 %v3884, 126
          %v3904 = vpop.permute.xlu0 %3903
          %3905 = vrot.lane.b32.xlu0 %v3885, 126
          %v3906 = vpop.permute.xlu0 %3905
          %3907 = vrot.lane.b32.xlu0 %v3886, 126
          %v3908 = vpop.permute.xlu0 %3907
          %3909 = vrot.lane.b32.xlu0 %v3887, 126
          %v3910 = vpop.permute.xlu0 %3909
          %3911 = vrot.lane.b32.xlu0 %v3888, 126
          %v3912 = vpop.permute.xlu0 %3911
          %v3921 = vadd.f32 %v3870, %v3898
          %v3922 = vadd.f32 %v3871, %v3900
          %v3923 = vadd.f32 %v3872, %v3902
          %v3924 = vadd.f32 %v3873, %v3904
          %v3925 = vadd.f32 %v3874, %v3906
          %v3926 = vadd.f32 %v3875, %v3908
          %v3927 = vadd.f32 %v3876, %v3910
          %v3928 = vadd.f32 %v3877, %v3912
          %s3929 = sadd.s32 %s1730, 275
          %s3930 = sld [smem:[#allocation6 + %s3929]]
          %v3931 = vld [vmem:[%s3672 + $0x2] sm:$0xff]
          %v3932 = vld [vmem:[%s3672 + $0xa] sm:$0xff]
          %v3933 = vld [vmem:[%s3672 + $0x12] sm:$0xff]
          %v3934 = vld [vmem:[%s3672 + $0x1a] sm:$0xff]
          %v3935 = vld [vmem:[%s3672 + $0x22] sm:$0xff]
          %v3936 = vld [vmem:[%s3672 + $0x2a] sm:$0xff]
          %v3937 = vld [vmem:[%s3672 + $0x32] sm:$0xff]
          %v3938 = vld [vmem:[%s3672 + $0x3a] sm:$0xff]
          %v3939 = vstv %s3930
          %v3940 = vmul.f32 %v3939, %v3931
          %v3941 = vmul.f32 %v3939, %v3932
          %v3942 = vmul.f32 %v3939, %v3933
          %v3943 = vmul.f32 %v3939, %v3934
          %v3944 = vmul.f32 %v3939, %v3935
          %v3945 = vmul.f32 %v3939, %v3936
          %v3946 = vmul.f32 %v3939, %v3937
          %v3947 = vmul.f32 %v3939, %v3938
          %v3948 = vadd.f32 %v3921, %v3940
          %v3949 = vadd.f32 %v3922, %v3941
          %v3950 = vadd.f32 %v3923, %v3942
          %v3951 = vadd.f32 %v3924, %v3943
          %v3952 = vadd.f32 %v3925, %v3944
          %v3953 = vadd.f32 %v3926, %v3945
          %v3954 = vadd.f32 %v3927, %v3946
          %v3955 = vadd.f32 %v3928, %v3947
          %s3956 = sadd.s32 %s1730, 276
          %s3957 = sld [smem:[#allocation6 + %s3956]]
          %v3958 = vstv %s3957
          %v3959 = vmul.f32 %v3958, %v3931
          %v3960 = vmul.f32 %v3958, %v3932
          %v3961 = vmul.f32 %v3958, %v3933
          %v3962 = vmul.f32 %v3958, %v3934
          %v3963 = vmul.f32 %v3958, %v3935
          %v3964 = vmul.f32 %v3958, %v3936
          %v3965 = vmul.f32 %v3958, %v3937
          %v3966 = vmul.f32 %v3958, %v3938
          %3975 = vrot.lane.b32.xlu0 %v3959, 127
          %v3976 = vpop.permute.xlu0 %3975
          %3977 = vrot.lane.b32.xlu0 %v3960, 127
          %v3978 = vpop.permute.xlu0 %3977
          %3979 = vrot.lane.b32.xlu0 %v3961, 127
          %v3980 = vpop.permute.xlu0 %3979
          %3981 = vrot.lane.b32.xlu0 %v3962, 127
          %v3982 = vpop.permute.xlu0 %3981
          %3983 = vrot.lane.b32.xlu0 %v3963, 127
          %v3984 = vpop.permute.xlu0 %3983
          %3985 = vrot.lane.b32.xlu0 %v3964, 127
          %v3986 = vpop.permute.xlu0 %3985
          %3987 = vrot.lane.b32.xlu0 %v3965, 127
          %v3988 = vpop.permute.xlu0 %3987
          %3989 = vrot.lane.b32.xlu0 %v3966, 127
          %v3990 = vpop.permute.xlu0 %3989
          %v3999 = vadd.f32 %v3948, %v3976
          %v4000 = vadd.f32 %v3949, %v3978
          %v4001 = vadd.f32 %v3950, %v3980
          %v4002 = vadd.f32 %v3951, %v3982
          %v4003 = vadd.f32 %v3952, %v3984
          %v4004 = vadd.f32 %v3953, %v3986
          %v4005 = vadd.f32 %v3954, %v3988
          %v4006 = vadd.f32 %v3955, %v3990
          %s4007 = sadd.s32 %s1730, 277
          %s4008 = sld [smem:[#allocation6 + %s4007]]
          %v4009 = vstv %s4008
          %v4010 = vmul.f32 %v4009, %v3931
          %v4011 = vmul.f32 %v4009, %v3932
          %v4012 = vmul.f32 %v4009, %v3933
          %v4013 = vmul.f32 %v4009, %v3934
          %v4014 = vmul.f32 %v4009, %v3935
          %v4015 = vmul.f32 %v4009, %v3936
          %v4016 = vmul.f32 %v4009, %v3937
          %v4017 = vmul.f32 %v4009, %v3938
          %4026 = vrot.lane.b32.xlu0 %v4010, 126
          %v4027 = vpop.permute.xlu0 %4026
          %4028 = vrot.lane.b32.xlu0 %v4011, 126
          %v4029 = vpop.permute.xlu0 %4028
          %4030 = vrot.lane.b32.xlu0 %v4012, 126
          %v4031 = vpop.permute.xlu0 %4030
          %4032 = vrot.lane.b32.xlu0 %v4013, 126
          %v4033 = vpop.permute.xlu0 %4032
          %4034 = vrot.lane.b32.xlu0 %v4014, 126
          %v4035 = vpop.permute.xlu0 %4034
          %4036 = vrot.lane.b32.xlu0 %v4015, 126
          %v4037 = vpop.permute.xlu0 %4036
          %4038 = vrot.lane.b32.xlu0 %v4016, 126
          %v4039 = vpop.permute.xlu0 %4038
          %4040 = vrot.lane.b32.xlu0 %v4017, 126
          %v4041 = vpop.permute.xlu0 %4040
          %v4050 = vadd.f32 %v3999, %v4027
          %v4051 = vadd.f32 %v4000, %v4029
          %v4052 = vadd.f32 %v4001, %v4031
          %v4053 = vadd.f32 %v4002, %v4033
          %v4054 = vadd.f32 %v4003, %v4035
          %v4055 = vadd.f32 %v4004, %v4037
          %v4056 = vadd.f32 %v4005, %v4039
          %v4057 = vadd.f32 %v4006, %v4041
          %s4058 = sadd.s32 %s1730, 278
          %s4059 = sld [smem:[#allocation6 + %s4058]]
          %s4060 = scalar_lea.vmem [#allocation3], 432
          %v4061 = vld [vmem:[%s4060] sm:$0xff]
          %v4062 = vld [vmem:[%s4060 + $0x8] sm:$0xff]
          %v4063 = vld [vmem:[%s4060 + $0x10] sm:$0xff]
          %v4064 = vld [vmem:[%s4060 + $0x18] sm:$0xff]
          %v4065 = vld [vmem:[%s4060 + $0x20] sm:$0xff]
          %v4066 = vld [vmem:[%s4060 + $0x28] sm:$0xff]
          %v4067 = vld [vmem:[%s4060 + $0x30] sm:$0xff]
          %v4068 = vld [vmem:[%s4060 + $0x38] sm:$0xff]
          %v4069 = vstv %s4059
          %v4070 = vmul.f32 %v4069, %v4061
          %v4071 = vmul.f32 %v4069, %v4062
          %v4072 = vmul.f32 %v4069, %v4063
          %v4073 = vmul.f32 %v4069, %v4064
          %v4074 = vmul.f32 %v4069, %v4065
          %v4075 = vmul.f32 %v4069, %v4066
          %v4076 = vmul.f32 %v4069, %v4067
          %v4077 = vmul.f32 %v4069, %v4068
          %v4078 = vadd.f32 %v4050, %v4070
          %v4079 = vadd.f32 %v4051, %v4071
          %v4080 = vadd.f32 %v4052, %v4072
          %v4081 = vadd.f32 %v4053, %v4073
          %v4082 = vadd.f32 %v4054, %v4074
          %v4083 = vadd.f32 %v4055, %v4075
          %v4084 = vadd.f32 %v4056, %v4076
          %v4085 = vadd.f32 %v4057, %v4077
          %s4086 = sadd.s32 %s1730, 279
          %s4087 = sld [smem:[#allocation6 + %s4086]]
          %v4088 = vstv %s4087
          %v4089 = vmul.f32 %v4088, %v4061
          %v4090 = vmul.f32 %v4088, %v4062
          %v4091 = vmul.f32 %v4088, %v4063
          %v4092 = vmul.f32 %v4088, %v4064
          %v4093 = vmul.f32 %v4088, %v4065
          %v4094 = vmul.f32 %v4088, %v4066
          %v4095 = vmul.f32 %v4088, %v4067
          %v4096 = vmul.f32 %v4088, %v4068
          %4105 = vrot.lane.b32.xlu0 %v4089, 127
          %v4106 = vpop.permute.xlu0 %4105
          %4107 = vrot.lane.b32.xlu0 %v4090, 127
          %v4108 = vpop.permute.xlu0 %4107
          %4109 = vrot.lane.b32.xlu0 %v4091, 127
          %v4110 = vpop.permute.xlu0 %4109
          %4111 = vrot.lane.b32.xlu0 %v4092, 127
          %v4112 = vpop.permute.xlu0 %4111
          %4113 = vrot.lane.b32.xlu0 %v4093, 127
          %v4114 = vpop.permute.xlu0 %4113
          %4115 = vrot.lane.b32.xlu0 %v4094, 127
          %v4116 = vpop.permute.xlu0 %4115
          %4117 = vrot.lane.b32.xlu0 %v4095, 127
          %v4118 = vpop.permute.xlu0 %4117
          %4119 = vrot.lane.b32.xlu0 %v4096, 127
          %v4120 = vpop.permute.xlu0 %4119
          %v4129 = vadd.f32 %v4078, %v4106
          %v4130 = vadd.f32 %v4079, %v4108
          %v4131 = vadd.f32 %v4080, %v4110
          %v4132 = vadd.f32 %v4081, %v4112
          %v4133 = vadd.f32 %v4082, %v4114
          %v4134 = vadd.f32 %v4083, %v4116
          %v4135 = vadd.f32 %v4084, %v4118
          %v4136 = vadd.f32 %v4085, %v4120
          %s4137 = sadd.s32 %s1730, 280
          %s4138 = sld [smem:[#allocation6 + %s4137]]
          %v4139 = vstv %s4138
          %v4140 = vmul.f32 %v4139, %v4061
          %v4141 = vmul.f32 %v4139, %v4062
          %v4142 = vmul.f32 %v4139, %v4063
          %v4143 = vmul.f32 %v4139, %v4064
          %v4144 = vmul.f32 %v4139, %v4065
          %v4145 = vmul.f32 %v4139, %v4066
          %v4146 = vmul.f32 %v4139, %v4067
          %v4147 = vmul.f32 %v4139, %v4068
          %4156 = vrot.lane.b32.xlu0 %v4140, 126
          %v4157 = vpop.permute.xlu0 %4156
          %4158 = vrot.lane.b32.xlu0 %v4141, 126
          %v4159 = vpop.permute.xlu0 %4158
          %4160 = vrot.lane.b32.xlu0 %v4142, 126
          %v4161 = vpop.permute.xlu0 %4160
          %4162 = vrot.lane.b32.xlu0 %v4143, 126
          %v4163 = vpop.permute.xlu0 %4162
          %4164 = vrot.lane.b32.xlu0 %v4144, 126
          %v4165 = vpop.permute.xlu0 %4164
          %4166 = vrot.lane.b32.xlu0 %v4145, 126
          %v4167 = vpop.permute.xlu0 %4166
          %4168 = vrot.lane.b32.xlu0 %v4146, 126
          %v4169 = vpop.permute.xlu0 %4168
          %4170 = vrot.lane.b32.xlu0 %v4147, 126
          %v4171 = vpop.permute.xlu0 %4170
          %v4180 = vadd.f32 %v4129, %v4157
          %v4181 = vadd.f32 %v4130, %v4159
          %v4182 = vadd.f32 %v4131, %v4161
          %v4183 = vadd.f32 %v4132, %v4163
          %v4184 = vadd.f32 %v4133, %v4165
          %v4185 = vadd.f32 %v4134, %v4167
          %v4186 = vadd.f32 %v4135, %v4169
          %v4187 = vadd.f32 %v4136, %v4171
          %s4188 = sadd.s32 %s1730, 281
          %s4189 = sld [smem:[#allocation6 + %s4188]]
          %v4190 = vld [vmem:[%s4060 + $0x1] sm:$0xff]
          %v4191 = vld [vmem:[%s4060 + $0x9] sm:$0xff]
          %v4192 = vld [vmem:[%s4060 + $0x11] sm:$0xff]
          %v4193 = vld [vmem:[%s4060 + $0x19] sm:$0xff]
          %v4194 = vld [vmem:[%s4060 + $0x21] sm:$0xff]
          %v4195 = vld [vmem:[%s4060 + $0x29] sm:$0xff]
          %v4196 = vld [vmem:[%s4060 + $0x31] sm:$0xff]
          %v4197 = vld [vmem:[%s4060 + $0x39] sm:$0xff]
          %v4198 = vstv %s4189
          %v4199 = vmul.f32 %v4198, %v4190
          %v4200 = vmul.f32 %v4198, %v4191
          %v4201 = vmul.f32 %v4198, %v4192
          %v4202 = vmul.f32 %v4198, %v4193
          %v4203 = vmul.f32 %v4198, %v4194
          %v4204 = vmul.f32 %v4198, %v4195
          %v4205 = vmul.f32 %v4198, %v4196
          %v4206 = vmul.f32 %v4198, %v4197
          %v4207 = vadd.f32 %v4180, %v4199
          %v4208 = vadd.f32 %v4181, %v4200
          %v4209 = vadd.f32 %v4182, %v4201
          %v4210 = vadd.f32 %v4183, %v4202
          %v4211 = vadd.f32 %v4184, %v4203
          %v4212 = vadd.f32 %v4185, %v4204
          %v4213 = vadd.f32 %v4186, %v4205
          %v4214 = vadd.f32 %v4187, %v4206
          %s4215 = sadd.s32 %s1730, 282
          %s4216 = sld [smem:[#allocation6 + %s4215]]
          %v4217 = vstv %s4216
          %v4218 = vmul.f32 %v4217, %v4190
          %v4219 = vmul.f32 %v4217, %v4191
          %v4220 = vmul.f32 %v4217, %v4192
          %v4221 = vmul.f32 %v4217, %v4193
          %v4222 = vmul.f32 %v4217, %v4194
          %v4223 = vmul.f32 %v4217, %v4195
          %v4224 = vmul.f32 %v4217, %v4196
          %v4225 = vmul.f32 %v4217, %v4197
          %4234 = vrot.lane.b32.xlu0 %v4218, 127
          %v4235 = vpop.permute.xlu0 %4234
          %4236 = vrot.lane.b32.xlu0 %v4219, 127
          %v4237 = vpop.permute.xlu0 %4236
          %4238 = vrot.lane.b32.xlu0 %v4220, 127
          %v4239 = vpop.permute.xlu0 %4238
          %4240 = vrot.lane.b32.xlu0 %v4221, 127
          %v4241 = vpop.permute.xlu0 %4240
          %4242 = vrot.lane.b32.xlu0 %v4222, 127
          %v4243 = vpop.permute.xlu0 %4242
          %4244 = vrot.lane.b32.xlu0 %v4223, 127
          %v4245 = vpop.permute.xlu0 %4244
          %4246 = vrot.lane.b32.xlu0 %v4224, 127
          %v4247 = vpop.permute.xlu0 %4246
          %4248 = vrot.lane.b32.xlu0 %v4225, 127
          %v4249 = vpop.permute.xlu0 %4248
          %v4258 = vadd.f32 %v4207, %v4235
          %v4259 = vadd.f32 %v4208, %v4237
          %v4260 = vadd.f32 %v4209, %v4239
          %v4261 = vadd.f32 %v4210, %v4241
          %v4262 = vadd.f32 %v4211, %v4243
          %v4263 = vadd.f32 %v4212, %v4245
          %v4264 = vadd.f32 %v4213, %v4247
          %v4265 = vadd.f32 %v4214, %v4249
          %s4266 = sadd.s32 %s1730, 283
          %s4267 = sld [smem:[#allocation6 + %s4266]]
          %v4268 = vstv %s4267
          %v4269 = vmul.f32 %v4268, %v4190
          %v4270 = vmul.f32 %v4268, %v4191
          %v4271 = vmul.f32 %v4268, %v4192
          %v4272 = vmul.f32 %v4268, %v4193
          %v4273 = vmul.f32 %v4268, %v4194
          %v4274 = vmul.f32 %v4268, %v4195
          %v4275 = vmul.f32 %v4268, %v4196
          %v4276 = vmul.f32 %v4268, %v4197
          %4285 = vrot.lane.b32.xlu0 %v4269, 126
          %v4286 = vpop.permute.xlu0 %4285
          %4287 = vrot.lane.b32.xlu0 %v4270, 126
          %v4288 = vpop.permute.xlu0 %4287
          %4289 = vrot.lane.b32.xlu0 %v4271, 126
          %v4290 = vpop.permute.xlu0 %4289
          %4291 = vrot.lane.b32.xlu0 %v4272, 126
          %v4292 = vpop.permute.xlu0 %4291
          %4293 = vrot.lane.b32.xlu0 %v4273, 126
          %v4294 = vpop.permute.xlu0 %4293
          %4295 = vrot.lane.b32.xlu0 %v4274, 126
          %v4296 = vpop.permute.xlu0 %4295
          %4297 = vrot.lane.b32.xlu0 %v4275, 126
          %v4298 = vpop.permute.xlu0 %4297
          %4299 = vrot.lane.b32.xlu0 %v4276, 126
          %v4300 = vpop.permute.xlu0 %4299
          %v4309 = vadd.f32 %v4258, %v4286
          %v4310 = vadd.f32 %v4259, %v4288
          %v4311 = vadd.f32 %v4260, %v4290
          %v4312 = vadd.f32 %v4261, %v4292
          %v4313 = vadd.f32 %v4262, %v4294
          %v4314 = vadd.f32 %v4263, %v4296
          %v4315 = vadd.f32 %v4264, %v4298
          %v4316 = vadd.f32 %v4265, %v4300
          %s4317 = sadd.s32 %s1730, 284
          %s4318 = sld [smem:[#allocation6 + %s4317]]
          %v4319 = vld [vmem:[%s4060 + $0x2] sm:$0xff]
          %v4320 = vld [vmem:[%s4060 + $0xa] sm:$0xff]
          %v4321 = vld [vmem:[%s4060 + $0x12] sm:$0xff]
          %v4322 = vld [vmem:[%s4060 + $0x1a] sm:$0xff]
          %v4323 = vld [vmem:[%s4060 + $0x22] sm:$0xff]
          %v4324 = vld [vmem:[%s4060 + $0x2a] sm:$0xff]
          %v4325 = vld [vmem:[%s4060 + $0x32] sm:$0xff]
          %v4326 = vld [vmem:[%s4060 + $0x3a] sm:$0xff]
          %v4327 = vstv %s4318
          %v4328 = vmul.f32 %v4327, %v4319
          %v4329 = vmul.f32 %v4327, %v4320
          %v4330 = vmul.f32 %v4327, %v4321
          %v4331 = vmul.f32 %v4327, %v4322
          %v4332 = vmul.f32 %v4327, %v4323
          %v4333 = vmul.f32 %v4327, %v4324
          %v4334 = vmul.f32 %v4327, %v4325
          %v4335 = vmul.f32 %v4327, %v4326
          %v4336 = vadd.f32 %v4309, %v4328
          %v4337 = vadd.f32 %v4310, %v4329
          %v4338 = vadd.f32 %v4311, %v4330
          %v4339 = vadd.f32 %v4312, %v4331
          %v4340 = vadd.f32 %v4313, %v4332
          %v4341 = vadd.f32 %v4314, %v4333
          %v4342 = vadd.f32 %v4315, %v4334
          %v4343 = vadd.f32 %v4316, %v4335
          %s4344 = sadd.s32 %s1730, 285
          %s4345 = sld [smem:[#allocation6 + %s4344]]
          %v4346 = vstv %s4345
          %v4347 = vmul.f32 %v4346, %v4319
          %v4348 = vmul.f32 %v4346, %v4320
          %v4349 = vmul.f32 %v4346, %v4321
          %v4350 = vmul.f32 %v4346, %v4322
          %v4351 = vmul.f32 %v4346, %v4323
          %v4352 = vmul.f32 %v4346, %v4324
          %v4353 = vmul.f32 %v4346, %v4325
          %v4354 = vmul.f32 %v4346, %v4326
          %4363 = vrot.lane.b32.xlu0 %v4347, 127
          %v4364 = vpop.permute.xlu0 %4363
          %4365 = vrot.lane.b32.xlu0 %v4348, 127
          %v4366 = vpop.permute.xlu0 %4365
          %4367 = vrot.lane.b32.xlu0 %v4349, 127
          %v4368 = vpop.permute.xlu0 %4367
          %4369 = vrot.lane.b32.xlu0 %v4350, 127
          %v4370 = vpop.permute.xlu0 %4369
          %4371 = vrot.lane.b32.xlu0 %v4351, 127
          %v4372 = vpop.permute.xlu0 %4371
          %4373 = vrot.lane.b32.xlu0 %v4352, 127
          %v4374 = vpop.permute.xlu0 %4373
          %4375 = vrot.lane.b32.xlu0 %v4353, 127
          %v4376 = vpop.permute.xlu0 %4375
          %4377 = vrot.lane.b32.xlu0 %v4354, 127
          %v4378 = vpop.permute.xlu0 %4377
          %v4387 = vadd.f32 %v4336, %v4364
          %v4388 = vadd.f32 %v4337, %v4366
          %v4389 = vadd.f32 %v4338, %v4368
          %v4390 = vadd.f32 %v4339, %v4370
          %v4391 = vadd.f32 %v4340, %v4372
          %v4392 = vadd.f32 %v4341, %v4374
          %v4393 = vadd.f32 %v4342, %v4376
          %v4394 = vadd.f32 %v4343, %v4378
          %s4395 = sadd.s32 %s1730, 286
          %s4396 = sld [smem:[#allocation6 + %s4395]]
          %v4397 = vstv %s4396
          %v4398 = vmul.f32 %v4397, %v4319
          %v4399 = vmul.f32 %v4397, %v4320
          %v4400 = vmul.f32 %v4397, %v4321
          %v4401 = vmul.f32 %v4397, %v4322
          %v4402 = vmul.f32 %v4397, %v4323
          %v4403 = vmul.f32 %v4397, %v4324
          %v4404 = vmul.f32 %v4397, %v4325
          %v4405 = vmul.f32 %v4397, %v4326
          %4414 = vrot.lane.b32.xlu0 %v4398, 126
          %v4415 = vpop.permute.xlu0 %4414
          %4416 = vrot.lane.b32.xlu0 %v4399, 126
          %v4417 = vpop.permute.xlu0 %4416
          %4418 = vrot.lane.b32.xlu0 %v4400, 126
          %v4419 = vpop.permute.xlu0 %4418
          %4420 = vrot.lane.b32.xlu0 %v4401, 126
          %v4421 = vpop.permute.xlu0 %4420
          %4422 = vrot.lane.b32.xlu0 %v4402, 126
          %v4423 = vpop.permute.xlu0 %4422
          %4424 = vrot.lane.b32.xlu0 %v4403, 126
          %v4425 = vpop.permute.xlu0 %4424
          %4426 = vrot.lane.b32.xlu0 %v4404, 126
          %v4427 = vpop.permute.xlu0 %4426
          %4428 = vrot.lane.b32.xlu0 %v4405, 126
          %v4429 = vpop.permute.xlu0 %4428
          %v4438 = vadd.f32 %v4387, %v4415
          %v4439 = vadd.f32 %v4388, %v4417
          %v4440 = vadd.f32 %v4389, %v4419
          %v4441 = vadd.f32 %v4390, %v4421
          %v4442 = vadd.f32 %v4391, %v4423
          %v4443 = vadd.f32 %v4392, %v4425
          %v4444 = vadd.f32 %v4393, %v4427
          %v4445 = vadd.f32 %v4394, %v4429
          %s4446 = sadd.s32 %s1730, 287
          %s4447 = sld [smem:[#allocation6 + %s4446]]
          %s4448 = scalar_lea.vmem [#allocation3], 504
          %v4449 = vld [vmem:[%s4448] sm:$0xff]
          %v4450 = vld [vmem:[%s4448 + $0x8] sm:$0xff]
          %v4451 = vld [vmem:[%s4448 + $0x10] sm:$0xff]
          %v4452 = vld [vmem:[%s4448 + $0x18] sm:$0xff]
          %v4453 = vld [vmem:[%s4448 + $0x20] sm:$0xff]
          %v4454 = vld [vmem:[%s4448 + $0x28] sm:$0xff]
          %v4455 = vld [vmem:[%s4448 + $0x30] sm:$0xff]
          %v4456 = vld [vmem:[%s4448 + $0x38] sm:$0xff]
          %v4457 = vstv %s4447
          %v4458 = vmul.f32 %v4457, %v4449
          %v4459 = vmul.f32 %v4457, %v4450
          %v4460 = vmul.f32 %v4457, %v4451
          %v4461 = vmul.f32 %v4457, %v4452
          %v4462 = vmul.f32 %v4457, %v4453
          %v4463 = vmul.f32 %v4457, %v4454
          %v4464 = vmul.f32 %v4457, %v4455
          %v4465 = vmul.f32 %v4457, %v4456
          %v4466 = vadd.f32 %v4438, %v4458
          %v4467 = vadd.f32 %v4439, %v4459
          %v4468 = vadd.f32 %v4440, %v4460
          %v4469 = vadd.f32 %v4441, %v4461
          %v4470 = vadd.f32 %v4442, %v4462
          %v4471 = vadd.f32 %v4443, %v4463
          %v4472 = vadd.f32 %v4444, %v4464
          %v4473 = vadd.f32 %v4445, %v4465
          %s4474 = sadd.s32 %s1730, 288
          %s4475 = sld [smem:[#allocation6 + %s4474]]
          %v4476 = vstv %s4475
          %v4477 = vmul.f32 %v4476, %v4449
          %v4478 = vmul.f32 %v4476, %v4450
          %v4479 = vmul.f32 %v4476, %v4451
          %v4480 = vmul.f32 %v4476, %v4452
          %v4481 = vmul.f32 %v4476, %v4453
          %v4482 = vmul.f32 %v4476, %v4454
          %v4483 = vmul.f32 %v4476, %v4455
          %v4484 = vmul.f32 %v4476, %v4456
          %4493 = vrot.lane.b32.xlu0 %v4477, 127
          %v4494 = vpop.permute.xlu0 %4493
          %4495 = vrot.lane.b32.xlu0 %v4478, 127
          %v4496 = vpop.permute.xlu0 %4495
          %4497 = vrot.lane.b32.xlu0 %v4479, 127
          %v4498 = vpop.permute.xlu0 %4497
          %4499 = vrot.lane.b32.xlu0 %v4480, 127
          %v4500 = vpop.permute.xlu0 %4499
          %4501 = vrot.lane.b32.xlu0 %v4481, 127
          %v4502 = vpop.permute.xlu0 %4501
          %4503 = vrot.lane.b32.xlu0 %v4482, 127
          %v4504 = vpop.permute.xlu0 %4503
          %4505 = vrot.lane.b32.xlu0 %v4483, 127
          %v4506 = vpop.permute.xlu0 %4505
          %4507 = vrot.lane.b32.xlu0 %v4484, 127
          %v4508 = vpop.permute.xlu0 %4507
          %v4517 = vadd.f32 %v4466, %v4494
          %v4518 = vadd.f32 %v4467, %v4496
          %v4519 = vadd.f32 %v4468, %v4498
          %v4520 = vadd.f32 %v4469, %v4500
          %v4521 = vadd.f32 %v4470, %v4502
          %v4522 = vadd.f32 %v4471, %v4504
          %v4523 = vadd.f32 %v4472, %v4506
          %v4524 = vadd.f32 %v4473, %v4508
          %s4525 = sadd.s32 %s1730, 289
          %s4526 = sld [smem:[#allocation6 + %s4525]]
          %v4527 = vstv %s4526
          %v4528 = vmul.f32 %v4527, %v4449
          %v4529 = vmul.f32 %v4527, %v4450
          %v4530 = vmul.f32 %v4527, %v4451
          %v4531 = vmul.f32 %v4527, %v4452
          %v4532 = vmul.f32 %v4527, %v4453
          %v4533 = vmul.f32 %v4527, %v4454
          %v4534 = vmul.f32 %v4527, %v4455
          %v4535 = vmul.f32 %v4527, %v4456
          %4544 = vrot.lane.b32.xlu0 %v4528, 126
          %v4545 = vpop.permute.xlu0 %4544
          %4546 = vrot.lane.b32.xlu0 %v4529, 126
          %v4547 = vpop.permute.xlu0 %4546
          %4548 = vrot.lane.b32.xlu0 %v4530, 126
          %v4549 = vpop.permute.xlu0 %4548
          %4550 = vrot.lane.b32.xlu0 %v4531, 126
          %v4551 = vpop.permute.xlu0 %4550
          %4552 = vrot.lane.b32.xlu0 %v4532, 126
          %v4553 = vpop.permute.xlu0 %4552
          %4554 = vrot.lane.b32.xlu0 %v4533, 126
          %v4555 = vpop.permute.xlu0 %4554
          %4556 = vrot.lane.b32.xlu0 %v4534, 126
          %v4557 = vpop.permute.xlu0 %4556
          %4558 = vrot.lane.b32.xlu0 %v4535, 126
          %v4559 = vpop.permute.xlu0 %4558
          %v4568 = vadd.f32 %v4517, %v4545
          %v4569 = vadd.f32 %v4518, %v4547
          %v4570 = vadd.f32 %v4519, %v4549
          %v4571 = vadd.f32 %v4520, %v4551
          %v4572 = vadd.f32 %v4521, %v4553
          %v4573 = vadd.f32 %v4522, %v4555
          %v4574 = vadd.f32 %v4523, %v4557
          %v4575 = vadd.f32 %v4524, %v4559
          %s4576 = sadd.s32 %s1730, 290
          %s4577 = sld [smem:[#allocation6 + %s4576]]
          %v4578 = vld [vmem:[%s4448 + $0x1] sm:$0xff]
          %v4579 = vld [vmem:[%s4448 + $0x9] sm:$0xff]
          %v4580 = vld [vmem:[%s4448 + $0x11] sm:$0xff]
          %v4581 = vld [vmem:[%s4448 + $0x19] sm:$0xff]
          %v4582 = vld [vmem:[%s4448 + $0x21] sm:$0xff]
          %v4583 = vld [vmem:[%s4448 + $0x29] sm:$0xff]
          %v4584 = vld [vmem:[%s4448 + $0x31] sm:$0xff]
          %v4585 = vld [vmem:[%s4448 + $0x39] sm:$0xff]
          %v4586 = vstv %s4577
          %v4587 = vmul.f32 %v4586, %v4578
          %v4588 = vmul.f32 %v4586, %v4579
          %v4589 = vmul.f32 %v4586, %v4580
          %v4590 = vmul.f32 %v4586, %v4581
          %v4591 = vmul.f32 %v4586, %v4582
          %v4592 = vmul.f32 %v4586, %v4583
          %v4593 = vmul.f32 %v4586, %v4584
          %v4594 = vmul.f32 %v4586, %v4585
          %v4595 = vadd.f32 %v4568, %v4587
          %v4596 = vadd.f32 %v4569, %v4588
          %v4597 = vadd.f32 %v4570, %v4589
          %v4598 = vadd.f32 %v4571, %v4590
          %v4599 = vadd.f32 %v4572, %v4591
          %v4600 = vadd.f32 %v4573, %v4592
          %v4601 = vadd.f32 %v4574, %v4593
          %v4602 = vadd.f32 %v4575, %v4594
          %s4603 = sadd.s32 %s1730, 291
          %s4604 = sld [smem:[#allocation6 + %s4603]]
          %v4605 = vstv %s4604
          %v4606 = vmul.f32 %v4605, %v4578
          %v4607 = vmul.f32 %v4605, %v4579
          %v4608 = vmul.f32 %v4605, %v4580
          %v4609 = vmul.f32 %v4605, %v4581
          %v4610 = vmul.f32 %v4605, %v4582
          %v4611 = vmul.f32 %v4605, %v4583
          %v4612 = vmul.f32 %v4605, %v4584
          %v4613 = vmul.f32 %v4605, %v4585
          %4622 = vrot.lane.b32.xlu0 %v4606, 127
          %v4623 = vpop.permute.xlu0 %4622
          %4624 = vrot.lane.b32.xlu0 %v4607, 127
          %v4625 = vpop.permute.xlu0 %4624
          %4626 = vrot.lane.b32.xlu0 %v4608, 127
          %v4627 = vpop.permute.xlu0 %4626
          %4628 = vrot.lane.b32.xlu0 %v4609, 127
          %v4629 = vpop.permute.xlu0 %4628
          %4630 = vrot.lane.b32.xlu0 %v4610, 127
          %v4631 = vpop.permute.xlu0 %4630
          %4632 = vrot.lane.b32.xlu0 %v4611, 127
          %v4633 = vpop.permute.xlu0 %4632
          %4634 = vrot.lane.b32.xlu0 %v4612, 127
          %v4635 = vpop.permute.xlu0 %4634
          %4636 = vrot.lane.b32.xlu0 %v4613, 127
          %v4637 = vpop.permute.xlu0 %4636
          %v4646 = vadd.f32 %v4595, %v4623
          %v4647 = vadd.f32 %v4596, %v4625
          %v4648 = vadd.f32 %v4597, %v4627
          %v4649 = vadd.f32 %v4598, %v4629
          %v4650 = vadd.f32 %v4599, %v4631
          %v4651 = vadd.f32 %v4600, %v4633
          %v4652 = vadd.f32 %v4601, %v4635
          %v4653 = vadd.f32 %v4602, %v4637
          %s4654 = sadd.s32 %s1730, 292
          %s4655 = sld [smem:[#allocation6 + %s4654]]
          %v4656 = vstv %s4655
          %v4657 = vmul.f32 %v4656, %v4578
          %v4658 = vmul.f32 %v4656, %v4579
          %v4659 = vmul.f32 %v4656, %v4580
          %v4660 = vmul.f32 %v4656, %v4581
          %v4661 = vmul.f32 %v4656, %v4582
          %v4662 = vmul.f32 %v4656, %v4583
          %v4663 = vmul.f32 %v4656, %v4584
          %v4664 = vmul.f32 %v4656, %v4585
          %4673 = vrot.lane.b32.xlu0 %v4657, 126
          %v4674 = vpop.permute.xlu0 %4673
          %4675 = vrot.lane.b32.xlu0 %v4658, 126
          %v4676 = vpop.permute.xlu0 %4675
          %4677 = vrot.lane.b32.xlu0 %v4659, 126
          %v4678 = vpop.permute.xlu0 %4677
          %4679 = vrot.lane.b32.xlu0 %v4660, 126
          %v4680 = vpop.permute.xlu0 %4679
          %4681 = vrot.lane.b32.xlu0 %v4661, 126
          %v4682 = vpop.permute.xlu0 %4681
          %4683 = vrot.lane.b32.xlu0 %v4662, 126
          %v4684 = vpop.permute.xlu0 %4683
          %4685 = vrot.lane.b32.xlu0 %v4663, 126
          %v4686 = vpop.permute.xlu0 %4685
          %4687 = vrot.lane.b32.xlu0 %v4664, 126
          %v4688 = vpop.permute.xlu0 %4687
          %v4697 = vadd.f32 %v4646, %v4674
          %v4698 = vadd.f32 %v4647, %v4676
          %v4699 = vadd.f32 %v4648, %v4678
          %v4700 = vadd.f32 %v4649, %v4680
          %v4701 = vadd.f32 %v4650, %v4682
          %v4702 = vadd.f32 %v4651, %v4684
          %v4703 = vadd.f32 %v4652, %v4686
          %v4704 = vadd.f32 %v4653, %v4688
          %s4705 = sadd.s32 %s1730, 293
          %s4706 = sld [smem:[#allocation6 + %s4705]]
          %v4707 = vld [vmem:[%s4448 + $0x2] sm:$0xff]
          %v4708 = vld [vmem:[%s4448 + $0xa] sm:$0xff]
          %v4709 = vld [vmem:[%s4448 + $0x12] sm:$0xff]
          %v4710 = vld [vmem:[%s4448 + $0x1a] sm:$0xff]
          %v4711 = vld [vmem:[%s4448 + $0x22] sm:$0xff]
          %v4712 = vld [vmem:[%s4448 + $0x2a] sm:$0xff]
          %v4713 = vld [vmem:[%s4448 + $0x32] sm:$0xff]
          %v4714 = vld [vmem:[%s4448 + $0x3a] sm:$0xff]
          %v4715 = vstv %s4706
          %v4716 = vmul.f32 %v4715, %v4707
          %v4717 = vmul.f32 %v4715, %v4708
          %v4718 = vmul.f32 %v4715, %v4709
          %v4719 = vmul.f32 %v4715, %v4710
          %v4720 = vmul.f32 %v4715, %v4711
          %v4721 = vmul.f32 %v4715, %v4712
          %v4722 = vmul.f32 %v4715, %v4713
          %v4723 = vmul.f32 %v4715, %v4714
          %v4724 = vadd.f32 %v4697, %v4716
          %v4725 = vadd.f32 %v4698, %v4717
          %v4726 = vadd.f32 %v4699, %v4718
          %v4727 = vadd.f32 %v4700, %v4719
          %v4728 = vadd.f32 %v4701, %v4720
          %v4729 = vadd.f32 %v4702, %v4721
          %v4730 = vadd.f32 %v4703, %v4722
          %v4731 = vadd.f32 %v4704, %v4723
          %s4732 = sadd.s32 %s1730, 294
          %s4733 = sld [smem:[#allocation6 + %s4732]]
          %v4734 = vstv %s4733
          %v4735 = vmul.f32 %v4734, %v4707
          %v4736 = vmul.f32 %v4734, %v4708
          %v4737 = vmul.f32 %v4734, %v4709
          %v4738 = vmul.f32 %v4734, %v4710
          %v4739 = vmul.f32 %v4734, %v4711
          %v4740 = vmul.f32 %v4734, %v4712
          %v4741 = vmul.f32 %v4734, %v4713
          %v4742 = vmul.f32 %v4734, %v4714
          %4751 = vrot.lane.b32.xlu0 %v4735, 127
          %v4752 = vpop.permute.xlu0 %4751
          %4753 = vrot.lane.b32.xlu0 %v4736, 127
          %v4754 = vpop.permute.xlu0 %4753
          %4755 = vrot.lane.b32.xlu0 %v4737, 127
          %v4756 = vpop.permute.xlu0 %4755
          %4757 = vrot.lane.b32.xlu0 %v4738, 127
          %v4758 = vpop.permute.xlu0 %4757
          %4759 = vrot.lane.b32.xlu0 %v4739, 127
          %v4760 = vpop.permute.xlu0 %4759
          %4761 = vrot.lane.b32.xlu0 %v4740, 127
          %v4762 = vpop.permute.xlu0 %4761
          %4763 = vrot.lane.b32.xlu0 %v4741, 127
          %v4764 = vpop.permute.xlu0 %4763
          %4765 = vrot.lane.b32.xlu0 %v4742, 127
          %v4766 = vpop.permute.xlu0 %4765
          %v4775 = vadd.f32 %v4724, %v4752
          %v4776 = vadd.f32 %v4725, %v4754
          %v4777 = vadd.f32 %v4726, %v4756
          %v4778 = vadd.f32 %v4727, %v4758
          %v4779 = vadd.f32 %v4728, %v4760
          %v4780 = vadd.f32 %v4729, %v4762
          %v4781 = vadd.f32 %v4730, %v4764
          %v4782 = vadd.f32 %v4731, %v4766
          %s4783 = sadd.s32 %s1730, 295
          %s4784 = sld [smem:[#allocation6 + %s4783]]
          %v4785 = vstv %s4784
          %v4786 = vmul.f32 %v4785, %v4707
          %v4787 = vmul.f32 %v4785, %v4708
          %v4788 = vmul.f32 %v4785, %v4709
          %v4789 = vmul.f32 %v4785, %v4710
          %v4790 = vmul.f32 %v4785, %v4711
          %v4791 = vmul.f32 %v4785, %v4712
          %v4792 = vmul.f32 %v4785, %v4713
          %v4793 = vmul.f32 %v4785, %v4714
          %4802 = vrot.lane.b32.xlu0 %v4786, 126
          %v4803 = vpop.permute.xlu0 %4802
          %4804 = vrot.lane.b32.xlu0 %v4787, 126
          %v4805 = vpop.permute.xlu0 %4804
          %4806 = vrot.lane.b32.xlu0 %v4788, 126
          %v4807 = vpop.permute.xlu0 %4806
          %4808 = vrot.lane.b32.xlu0 %v4789, 126
          %v4809 = vpop.permute.xlu0 %4808
          %4810 = vrot.lane.b32.xlu0 %v4790, 126
          %v4811 = vpop.permute.xlu0 %4810
          %4812 = vrot.lane.b32.xlu0 %v4791, 126
          %v4813 = vpop.permute.xlu0 %4812
          %4814 = vrot.lane.b32.xlu0 %v4792, 126
          %v4815 = vpop.permute.xlu0 %4814
          %4816 = vrot.lane.b32.xlu0 %v4793, 126
          %v4817 = vpop.permute.xlu0 %4816
          %v4826 = vadd.f32 %v4775, %v4803
          %v4827 = vadd.f32 %v4776, %v4805
          %v4828 = vadd.f32 %v4777, %v4807
          %v4829 = vadd.f32 %v4778, %v4809
          %v4830 = vadd.f32 %v4779, %v4811
          %v4831 = vadd.f32 %v4780, %v4813
          %v4832 = vadd.f32 %v4781, %v4815
          %v4833 = vadd.f32 %v4782, %v4817
          %s4834 = sadd.s32 %s1725, 800
          %s4835 = sld [smem:[#allocation6 + %s4834]]
          %v4836 = vstv %s4835
          %v4837 = vadd.f32 %v4826, %v4836
          %v4838 = vadd.f32 %v4827, %v4836
          %v4839 = vadd.f32 %v4828, %v4836
          %v4840 = vadd.f32 %v4829, %v4836
          %v4841 = vadd.f32 %v4830, %v4836
          %v4842 = vadd.f32 %v4831, %v4836
          %v4843 = vadd.f32 %v4832, %v4836
          %v4844 = vadd.f32 %v4833, %v4836
          %v4845 = vmax.f32 %v4837, 0.0
          %v4846 = vmax.f32 %v4838, 0.0
          %v4847 = vmax.f32 %v4839, 0.0
          %v4848 = vmax.f32 %v4840, 0.0
          %v4849 = vmax.f32 %v4841, 0.0
          %v4850 = vmax.f32 %v4842, 0.0
          %v4851 = vmax.f32 %v4843, 0.0
          %v4852 = vmax.f32 %v4844, 0.0
          %vm4853 = vcmask 521216
          %v4854 = vsel %vm4853, %v4845, 0.0
          %v4855 = vrot.slane %v4854, 4
          %v4856 = vadd.f32 %v4854, %v4855
          %v4857 = vrot.slane %v4856, 2
          %v4858 = vadd.f32 %v4856, %v4857
          %v4859 = vrot.slane %v4858, 1
          %v4860 = vadd.f32 %v4858, %v4859
          %v4861 = vmul.f32 %v4860, 0.16666667
          %vm4864 = vcmask 1042432
          %v4865 = vrot.slane %v4845, 5
          %v4866 = vrot.slane %v4846, 5
          %v4867 = vsel %vm4864, %v4865, %v4866
          %v4869 = vsel %vm4853, %v4867, 0.0
          %v4870 = vrot.slane %v4869, 4
          %v4871 = vadd.f32 %v4869, %v4870
          %v4872 = vrot.slane %v4871, 2
          %v4873 = vadd.f32 %v4871, %v4872
          %v4874 = vrot.slane %v4873, 1
          %v4875 = vadd.f32 %v4873, %v4874
          %v4876 = vmul.f32 %v4875, 0.16666667
          %v4877 = vrot.slane %v4846, 2
          %v4879 = vsel %vm4853, %v4877, 0.0
          %v4880 = vrot.slane %v4879, 4
          %v4881 = vadd.f32 %v4879, %v4880
          %v4882 = vrot.slane %v4881, 2
          %v4883 = vadd.f32 %v4881, %v4882
          %v4884 = vrot.slane %v4883, 1
          %v4885 = vadd.f32 %v4883, %v4884
          %v4886 = vmul.f32 %v4885, 0.16666667
          %v4887 = vsel %vm4853, %v4847, 0.0
          %v4888 = vrot.slane %v4887, 4
          %v4889 = vadd.f32 %v4887, %v4888
          %v4890 = vrot.slane %v4889, 2
          %v4891 = vadd.f32 %v4889, %v4890
          %v4892 = vrot.slane %v4891, 1
          %v4893 = vadd.f32 %v4891, %v4892
          %v4894 = vmul.f32 %v4893, 0.16666667
          %v4897 = vrot.slane %v4847, 5
          %v4898 = vrot.slane %v4848, 5
          %v4899 = vsel %vm4864, %v4897, %v4898
          %v4901 = vsel %vm4853, %v4899, 0.0
          %v4902 = vrot.slane %v4901, 4
          %v4903 = vadd.f32 %v4901, %v4902
          %v4904 = vrot.slane %v4903, 2
          %v4905 = vadd.f32 %v4903, %v4904
          %v4906 = vrot.slane %v4905, 1
          %v4907 = vadd.f32 %v4905, %v4906
          %v4908 = vmul.f32 %v4907, 0.16666667
          %v4909 = vrot.slane %v4848, 2
          %v4911 = vsel %vm4853, %v4909, 0.0
          %v4912 = vrot.slane %v4911, 4
          %v4913 = vadd.f32 %v4911, %v4912
          %v4914 = vrot.slane %v4913, 2
          %v4915 = vadd.f32 %v4913, %v4914
          %v4916 = vrot.slane %v4915, 1
          %v4917 = vadd.f32 %v4915, %v4916
          %v4918 = vmul.f32 %v4917, 0.16666667
          %v4919 = vsel %vm4853, %v4849, 0.0
          %v4920 = vrot.slane %v4919, 4
          %v4921 = vadd.f32 %v4919, %v4920
          %v4922 = vrot.slane %v4921, 2
          %v4923 = vadd.f32 %v4921, %v4922
          %v4924 = vrot.slane %v4923, 1
          %v4925 = vadd.f32 %v4923, %v4924
          %v4926 = vmul.f32 %v4925, 0.16666667
          %v4929 = vrot.slane %v4849, 5
          %v4930 = vrot.slane %v4850, 5
          %v4931 = vsel %vm4864, %v4929, %v4930
          %v4933 = vsel %vm4853, %v4931, 0.0
          %v4934 = vrot.slane %v4933, 4
          %v4935 = vadd.f32 %v4933, %v4934
          %v4936 = vrot.slane %v4935, 2
          %v4937 = vadd.f32 %v4935, %v4936
          %v4938 = vrot.slane %v4937, 1
          %v4939 = vadd.f32 %v4937, %v4938
          %v4940 = vmul.f32 %v4939, 0.16666667
          %v4941 = vrot.slane %v4850, 2
          %v4943 = vsel %vm4853, %v4941, 0.0
          %v4944 = vrot.slane %v4943, 4
          %v4945 = vadd.f32 %v4943, %v4944
          %v4946 = vrot.slane %v4945, 2
          %v4947 = vadd.f32 %v4945, %v4946
          %v4948 = vrot.slane %v4947, 1
          %v4949 = vadd.f32 %v4947, %v4948
          %v4950 = vmul.f32 %v4949, 0.16666667
          %v4951 = vsel %vm4853, %v4851, 0.0
          %v4952 = vrot.slane %v4951, 4
          %v4953 = vadd.f32 %v4951, %v4952
          %v4954 = vrot.slane %v4953, 2
          %v4955 = vadd.f32 %v4953, %v4954
          %v4956 = vrot.slane %v4955, 1
          %v4957 = vadd.f32 %v4955, %v4956
          %v4958 = vmul.f32 %v4957, 0.16666667
          %v4961 = vrot.slane %v4851, 5
          %v4962 = vrot.slane %v4852, 5
          %v4963 = vsel %vm4864, %v4961, %v4962
          %v4965 = vsel %vm4853, %v4963, 0.0
          %v4966 = vrot.slane %v4965, 4
          %v4967 = vadd.f32 %v4965, %v4966
          %v4968 = vrot.slane %v4967, 2
          %v4969 = vadd.f32 %v4967, %v4968
          %v4970 = vrot.slane %v4969, 1
          %v4971 = vadd.f32 %v4969, %v4970
          %v4972 = vmul.f32 %v4971, 0.16666667
          %v4973 = vrot.slane %v4852, 2
          %v4975 = vsel %vm4853, %v4973, 0.0
          %v4976 = vrot.slane %v4975, 4
          %v4977 = vadd.f32 %v4975, %v4976
          %v4978 = vrot.slane %v4977, 2
          %v4979 = vadd.f32 %v4977, %v4978
          %v4980 = vrot.slane %v4979, 1
          %v4981 = vadd.f32 %v4979, %v4980
          %v4982 = vmul.f32 %v4981, 0.16666667
          %vm4983 = vcmask 1040384
          %v4984 = vsel %vm4983, %v4861, %v4876
          %vm4985 = vcmask 1041408
          %v4986 = vsel %vm4985, %v4984, %v4886
          %v4987 = vsel %vm4864, %v4986, %v4894
          %vm4988 = vcmask 1043456
          %v4989 = vsel %vm4988, %v4987, %v4908
          %vm4990 = vcmask 1044480
          %v4991 = vsel %vm4990, %v4989, %v4918
          %vm4992 = vcmask 1045504
          %v4993 = vsel %vm4992, %v4991, %v4926
          %vm4994 = vcmask 1046528
          %v4995 = vsel %vm4994, %v4993, %v4940
          %v4996 = vsel %vm4983, %v4950, %v4958
          %v4997 = vsel %vm4985, %v4996, %v4972
          %v4998 = vsel %vm4864, %v4997, %v4982
          %vm4999 = vcmask 48128
          %v5000 = vsel %vm4999, %v4995, 0.0
          %5001 = vadd.xlane.f32.xlu0 %v5000
          %v5002 = vpop.xlane.xlu0 %5001
          %vm5003 = vcmask 44032
          %v5004 = vsel %vm5003, %v4998, 0.0
          %5005 = vadd.xlane.f32.xlu0 %v5004
          %v5006 = vpop.xlane.xlu0 %5005
          %v5007 = vmul.f32 %v5002, 0.16666667
          %v5008 = vmul.f32 %v5006, 0.16666667
          %5011 = vrot.lane.b32.xlu0 %v4995, 123
          %v5012 = vpop.permute.xlu0 %5011
          %5013 = vrot.lane.b32.xlu0 %v4998, 123
          %v5014 = vpop.permute.xlu0 %5013
          %v5017 = vsel %vm4999, %v5012, 0.0
          %5018 = vadd.xlane.f32.xlu0 %v5017
          %v5019 = vpop.xlane.xlu0 %5018
          %v5020 = vsel %vm5003, %v5014, 0.0
          %5021 = vadd.xlane.f32.xlu0 %v5020
          %v5022 = vpop.xlane.xlu0 %5021
          %v5023 = vmul.f32 %v5019, 0.16666667
          %v5024 = vmul.f32 %v5022, 0.16666667
          %5025 = vrot.lane.b32.xlu0 %v4995, 118
          %v5026 = vpop.permute.xlu0 %5025
          %5027 = vrot.lane.b32.xlu0 %v4998, 118
          %v5028 = vpop.permute.xlu0 %5027
          %v5031 = vsel %vm4999, %v5026, 0.0
          %5032 = vadd.xlane.f32.xlu0 %v5031
          %v5033 = vpop.xlane.xlu0 %5032
          %v5034 = vsel %vm5003, %v5028, 0.0
          %5035 = vadd.xlane.f32.xlu0 %v5034
          %v5036 = vpop.xlane.xlu0 %5035
          %v5037 = vmul.f32 %v5033, 0.16666667
          %v5038 = vmul.f32 %v5036, 0.16666667
          %5039 = vrot.lane.b32.xlu0 %v4995, 112
          %v5040 = vpop.permute.xlu0 %5039
          %5041 = vrot.lane.b32.xlu0 %v4998, 112
          %v5042 = vpop.permute.xlu0 %5041
          %v5045 = vsel %vm4999, %v5040, 0.0
          %5046 = vadd.xlane.f32.xlu0 %v5045
          %v5047 = vpop.xlane.xlu0 %5046
          %v5048 = vsel %vm5003, %v5042, 0.0
          %5049 = vadd.xlane.f32.xlu0 %v5048
          %v5050 = vpop.xlane.xlu0 %5049
          %v5051 = vmul.f32 %v5047, 0.16666667
          %v5052 = vmul.f32 %v5050, 0.16666667
          %5053 = vrot.lane.b32.xlu0 %v4995, 107
          %v5054 = vpop.permute.xlu0 %5053
          %5055 = vrot.lane.b32.xlu0 %v4998, 107
          %v5056 = vpop.permute.xlu0 %5055
          %v5059 = vsel %vm4999, %v5054, 0.0
          %5060 = vadd.xlane.f32.xlu0 %v5059
          %v5061 = vpop.xlane.xlu0 %5060
          %v5062 = vsel %vm5003, %v5056, 0.0
          %5063 = vadd.xlane.f32.xlu0 %v5062
          %v5064 = vpop.xlane.xlu0 %5063
          %v5065 = vmul.f32 %v5061, 0.16666667
          %v5066 = vmul.f32 %v5064, 0.16666667
          %5067 = vrot.lane.b32.xlu0 %v4995, 102
          %v5068 = vpop.permute.xlu0 %5067
          %5069 = vrot.lane.b32.xlu0 %v4998, 102
          %v5070 = vpop.permute.xlu0 %5069
          %v5073 = vsel %vm4999, %v5068, 0.0
          %5074 = vadd.xlane.f32.xlu0 %v5073
          %v5075 = vpop.xlane.xlu0 %5074
          %v5076 = vsel %vm5003, %v5070, 0.0
          %5077 = vadd.xlane.f32.xlu0 %v5076
          %v5078 = vpop.xlane.xlu0 %5077
          %v5079 = vmul.f32 %v5075, 0.16666667
          %v5080 = vmul.f32 %v5078, 0.16666667
          %5081 = vrot.lane.b32.xlu0 %v4995, 96
          %v5082 = vpop.permute.xlu0 %5081
          %5083 = vrot.lane.b32.xlu0 %v4998, 96
          %v5084 = vpop.permute.xlu0 %5083
          %v5087 = vsel %vm4999, %v5082, 0.0
          %5088 = vadd.xlane.f32.xlu0 %v5087
          %v5089 = vpop.xlane.xlu0 %5088
          %v5090 = vsel %vm5003, %v5084, 0.0
          %5091 = vadd.xlane.f32.xlu0 %v5090
          %v5092 = vpop.xlane.xlu0 %5091
          %v5093 = vmul.f32 %v5089, 0.16666667
          %v5094 = vmul.f32 %v5092, 0.16666667
          %5095 = vrot.lane.b32.xlu0 %v4995, 91
          %v5096 = vpop.permute.xlu0 %5095
          %5097 = vrot.lane.b32.xlu0 %v4998, 91
          %v5098 = vpop.permute.xlu0 %5097
          %v5101 = vsel %vm4999, %v5096, 0.0
          %5102 = vadd.xlane.f32.xlu0 %v5101
          %v5103 = vpop.xlane.xlu0 %5102
          %v5104 = vsel %vm5003, %v5098, 0.0
          %5105 = vadd.xlane.f32.xlu0 %v5104
          %v5106 = vpop.xlane.xlu0 %5105
          %v5107 = vmul.f32 %v5103, 0.16666667
          %v5108 = vmul.f32 %v5106, 0.16666667
          %5109 = vrot.lane.b32.xlu0 %v4995, 86
          %v5110 = vpop.permute.xlu0 %5109
          %5111 = vrot.lane.b32.xlu0 %v4998, 86
          %v5112 = vpop.permute.xlu0 %5111
          %v5115 = vsel %vm4999, %v5110, 0.0
          %5116 = vadd.xlane.f32.xlu0 %v5115
          %v5117 = vpop.xlane.xlu0 %5116
          %v5118 = vsel %vm5003, %v5112, 0.0
          %5119 = vadd.xlane.f32.xlu0 %v5118
          %v5120 = vpop.xlane.xlu0 %5119
          %v5121 = vmul.f32 %v5117, 0.16666667
          %v5122 = vmul.f32 %v5120, 0.16666667
          %5123 = vrot.lane.b32.xlu0 %v4995, 80
          %v5124 = vpop.permute.xlu0 %5123
          %5125 = vrot.lane.b32.xlu0 %v4998, 80
          %v5126 = vpop.permute.xlu0 %5125
          %v5129 = vsel %vm4999, %v5124, 0.0
          %5130 = vadd.xlane.f32.xlu0 %v5129
          %v5131 = vpop.xlane.xlu0 %5130
          %v5132 = vsel %vm5003, %v5126, 0.0
          %5133 = vadd.xlane.f32.xlu0 %v5132
          %v5134 = vpop.xlane.xlu0 %5133
          %v5135 = vmul.f32 %v5131, 0.16666667
          %v5136 = vmul.f32 %v5134, 0.16666667
          %5137 = vrot.lane.b32.xlu0 %v4995, 75
          %v5138 = vpop.permute.xlu0 %5137
          %5139 = vrot.lane.b32.xlu0 %v4998, 75
          %v5140 = vpop.permute.xlu0 %5139
          %v5143 = vsel %vm4999, %v5138, 0.0
          %5144 = vadd.xlane.f32.xlu0 %v5143
          %v5145 = vpop.xlane.xlu0 %5144
          %v5146 = vsel %vm5003, %v5140, 0.0
          %5147 = vadd.xlane.f32.xlu0 %v5146
          %v5148 = vpop.xlane.xlu0 %5147
          %v5149 = vmul.f32 %v5145, 0.16666667
          %v5150 = vmul.f32 %v5148, 0.16666667
          %5151 = vrot.lane.b32.xlu0 %v4995, 70
          %v5152 = vpop.permute.xlu0 %5151
          %5153 = vrot.lane.b32.xlu0 %v4998, 70
          %v5154 = vpop.permute.xlu0 %5153
          %v5157 = vsel %vm4999, %v5152, 0.0
          %5158 = vadd.xlane.f32.xlu0 %v5157
          %v5159 = vpop.xlane.xlu0 %5158
          %v5160 = vsel %vm5003, %v5154, 0.0
          %5161 = vadd.xlane.f32.xlu0 %v5160
          %v5162 = vpop.xlane.xlu0 %5161
          %v5163 = vmul.f32 %v5159, 0.16666667
          %v5164 = vmul.f32 %v5162, 0.16666667
          %vm5165 = vcmask 7168
          %v5166 = vsel %vm5165, %v5007, %v5023
          %v5167 = vsel %vm5165, %v5008, %v5024
          %vm5168 = vcmask 15360
          %v5169 = vsel %vm5168, %v5166, %v5037
          %v5170 = vsel %vm5168, %v5167, %v5038
          %vm5171 = vcmask 23552
          %v5172 = vsel %vm5171, %v5169, %v5051
          %v5173 = vsel %vm5171, %v5170, %v5052
          %vm5174 = vcmask 31744
          %v5175 = vsel %vm5174, %v5172, %v5065
          %v5176 = vsel %vm5174, %v5173, %v5066
          %vm5177 = vcmask 39936
          %v5178 = vsel %vm5177, %v5175, %v5079
          %v5179 = vsel %vm5177, %v5176, %v5080
          %v5180 = vsel %vm4999, %v5178, %v5093
          %v5181 = vsel %vm4999, %v5179, %v5094
          %vm5182 = vcmask 56320
          %v5183 = vsel %vm5182, %v5180, %v5107
          %v5184 = vsel %vm5182, %v5181, %v5108
          %vm5185 = vcmask 64512
          %v5186 = vsel %vm5185, %v5183, %v5121
          %v5187 = vsel %vm5185, %v5184, %v5122
          %vm5188 = vcmask 72704
          %v5189 = vsel %vm5188, %v5186, %v5135
          %v5190 = vsel %vm5188, %v5187, %v5136
          %v5191 = vsel %vm331, %v5189, %v5149
          %v5192 = vsel %vm331, %v5190, %v5150
          %vm5193 = vcmask 89088
          %v5194 = vsel %vm5193, %v5191, %v5163
          %v5195 = vsel %vm5193, %v5192, %v5164
          %5198 = vrot.lane.b32.xlu0 %v5194, 1
          %v5199 = vpop.permute.xlu0 %5198
          %5200 = vrot.lane.b32.xlu0 %v5195, 1
          %v5201 = vpop.permute.xlu0 %5200
          %s5204 = smul.u32 %s1725, 16
          %s5205 = scalar_lea.vmem [#allocation4], %s5204
          %vm5206 = vcmask 105480
          %5207 = vst.msk [vmem:[%s5205 + $0x1] sm:$0xff] %vm5206, %v5199
          %vm5208 = vcmask 101384
          %5209 = vst.msk [vmem:[%s5205 + $0x9] sm:$0xf] %vm5208, %v5201
        $region56: #{discriminator_forward.1} parent=31 // loop_footer
          %s1729 = sadd.s32 1, %s1725
        $region57: #{discriminator_forward.1} parent=31 // loop_footer_branch
          %1724 = sbr.rel target = $region53
        $region58: #{discriminator_forward.1} parent=31 // loop_exit
          _
        loop: start=0, step=1, limit=8
        $region59: #{discriminator_forward.1} parent=31 // loop_pre_header
          _
        $region60: #{discriminator_forward.1} parent=31 // loop_header
          %s5211 = sphi 0, %s5215
          %p5212 = scmp.ge.s32.totalorder %s5211, 8
        $region61: #{discriminator_forward.1} parent=31 // loop_header_branch
          %5214 = sbr.rel (%p5212) target = $region65
        $region62: #{discriminator_forward.1} parent=31 // loop_body
          %s5216 = smul.u32 %s5211, 72
          %s5217 = sadd.s32 %s5216, 808
          %s5218 = sld [smem:[#allocation6 + %s5217]]
          %v5219 = vld [vmem:[#allocation4] sm:$0xff]
          %v5220 = vld [vmem:[#allocation4 + $0x8] sm:$0xf]
          %v5221 = vstv %s5218
          %v5222 = vmul.f32 %v5221, %v5219
          %v5223 = vmul.f32 %v5221, %v5220
          %v5224 = vadd.f32 %v5222, 0.0
          %v5225 = vadd.f32 %v5223, 0.0
          %s5226 = sadd.s32 %s5216, 809
          %s5227 = sld [smem:[#allocation6 + %s5226]]
          %v5228 = vstv %s5227
          %v5229 = vmul.f32 %v5228, %v5219
          %v5230 = vmul.f32 %v5228, %v5220
          %5233 = vrot.lane.b32.xlu0 %v5229, 127
          %v5234 = vpop.permute.xlu0 %5233
          %5235 = vrot.lane.b32.xlu0 %v5230, 127
          %v5236 = vpop.permute.xlu0 %5235
          %v5239 = vadd.f32 %v5224, %v5234
          %v5240 = vadd.f32 %v5225, %v5236
          %s5241 = sadd.s32 %s5216, 810
          %s5242 = sld [smem:[#allocation6 + %s5241]]
          %v5243 = vstv %s5242
          %v5244 = vmul.f32 %v5243, %v5219
          %v5245 = vmul.f32 %v5243, %v5220
          %5248 = vrot.lane.b32.xlu0 %v5244, 126
          %v5249 = vpop.permute.xlu0 %5248
          %5250 = vrot.lane.b32.xlu0 %v5245, 126
          %v5251 = vpop.permute.xlu0 %5250
          %v5254 = vadd.f32 %v5239, %v5249
          %v5255 = vadd.f32 %v5240, %v5251
          %s5256 = sadd.s32 %s5216, 811
          %s5257 = sld [smem:[#allocation6 + %s5256]]
          %v5258 = vld [vmem:[#allocation4 + $0x1] sm:$0xff]
          %v5259 = vld [vmem:[#allocation4 + $0x9] sm:$0xf]
          %v5260 = vstv %s5257
          %v5261 = vmul.f32 %v5260, %v5258
          %v5262 = vmul.f32 %v5260, %v5259
          %v5263 = vadd.f32 %v5254, %v5261
          %v5264 = vadd.f32 %v5255, %v5262
          %s5265 = sadd.s32 %s5216, 812
          %s5266 = sld [smem:[#allocation6 + %s5265]]
          %v5267 = vstv %s5266
          %v5268 = vmul.f32 %v5267, %v5258
          %v5269 = vmul.f32 %v5267, %v5259
          %5272 = vrot.lane.b32.xlu0 %v5268, 127
          %v5273 = vpop.permute.xlu0 %5272
          %5274 = vrot.lane.b32.xlu0 %v5269, 127
          %v5275 = vpop.permute.xlu0 %5274
          %v5278 = vadd.f32 %v5263, %v5273
          %v5279 = vadd.f32 %v5264, %v5275
          %s5280 = sadd.s32 %s5216, 813
          %s5281 = sld [smem:[#allocation6 + %s5280]]
          %v5282 = vstv %s5281
          %v5283 = vmul.f32 %v5282, %v5258
          %v5284 = vmul.f32 %v5282, %v5259
          %5287 = vrot.lane.b32.xlu0 %v5283, 126
          %v5288 = vpop.permute.xlu0 %5287
          %5289 = vrot.lane.b32.xlu0 %v5284, 126
          %v5290 = vpop.permute.xlu0 %5289
          %v5293 = vadd.f32 %v5278, %v5288
          %v5294 = vadd.f32 %v5279, %v5290
          %s5295 = sadd.s32 %s5216, 814
          %s5296 = sld [smem:[#allocation6 + %s5295]]
          %v5297 = vld [vmem:[#allocation4 + $0x2] sm:$0xff]
          %v5298 = vld [vmem:[#allocation4 + $0xa] sm:$0xf]
          %v5299 = vstv %s5296
          %v5300 = vmul.f32 %v5299, %v5297
          %v5301 = vmul.f32 %v5299, %v5298
          %v5302 = vadd.f32 %v5293, %v5300
          %v5303 = vadd.f32 %v5294, %v5301
          %s5304 = sadd.s32 %s5216, 815
          %s5305 = sld [smem:[#allocation6 + %s5304]]
          %v5306 = vstv %s5305
          %v5307 = vmul.f32 %v5306, %v5297
          %v5308 = vmul.f32 %v5306, %v5298
          %5311 = vrot.lane.b32.xlu0 %v5307, 127
          %v5312 = vpop.permute.xlu0 %5311
          %5313 = vrot.lane.b32.xlu0 %v5308, 127
          %v5314 = vpop.permute.xlu0 %5313
          %v5317 = vadd.f32 %v5302, %v5312
          %v5318 = vadd.f32 %v5303, %v5314
          %s5319 = sadd.s32 %s5216, 816
          %s5320 = sld [smem:[#allocation6 + %s5319]]
          %v5321 = vstv %s5320
          %v5322 = vmul.f32 %v5321, %v5297
          %v5323 = vmul.f32 %v5321, %v5298
          %5326 = vrot.lane.b32.xlu0 %v5322, 126
          %v5327 = vpop.permute.xlu0 %5326
          %5328 = vrot.lane.b32.xlu0 %v5323, 126
          %v5329 = vpop.permute.xlu0 %5328
          %v5332 = vadd.f32 %v5317, %v5327
          %v5333 = vadd.f32 %v5318, %v5329
          %s5334 = sadd.s32 %s5216, 817
          %s5335 = sld [smem:[#allocation6 + %s5334]]
          %s5336 = scalar_lea.vmem [#allocation4], 16
          %v5337 = vld [vmem:[%s5336] sm:$0xff]
          %v5338 = vld [vmem:[%s5336 + $0x8] sm:$0xf]
          %v5339 = vstv %s5335
          %v5340 = vmul.f32 %v5339, %v5337
          %v5341 = vmul.f32 %v5339, %v5338
          %v5342 = vadd.f32 %v5332, %v5340
          %v5343 = vadd.f32 %v5333, %v5341
          %s5344 = sadd.s32 %s5216, 818
          %s5345 = sld [smem:[#allocation6 + %s5344]]
          %v5346 = vstv %s5345
          %v5347 = vmul.f32 %v5346, %v5337
          %v5348 = vmul.f32 %v5346, %v5338
          %5351 = vrot.lane.b32.xlu0 %v5347, 127
          %v5352 = vpop.permute.xlu0 %5351
          %5353 = vrot.lane.b32.xlu0 %v5348, 127
          %v5354 = vpop.permute.xlu0 %5353
          %v5357 = vadd.f32 %v5342, %v5352
          %v5358 = vadd.f32 %v5343, %v5354
          %s5359 = sadd.s32 %s5216, 819
          %s5360 = sld [smem:[#allocation6 + %s5359]]
          %v5361 = vstv %s5360
          %v5362 = vmul.f32 %v5361, %v5337
          %v5363 = vmul.f32 %v5361, %v5338
          %5366 = vrot.lane.b32.xlu0 %v5362, 126
          %v5367 = vpop.permute.xlu0 %5366
          %5368 = vrot.lane.b32.xlu0 %v5363, 126
          %v5369 = vpop.permute.xlu0 %5368
          %v5372 = vadd.f32 %v5357, %v5367
          %v5373 = vadd.f32 %v5358, %v5369
          %s5374 = sadd.s32 %s5216, 820
          %s5375 = sld [smem:[#allocation6 + %s5374]]
          %v5376 = vld [vmem:[%s5336 + $0x1] sm:$0xff]
          %v5377 = vld [vmem:[%s5336 + $0x9] sm:$0xf]
          %v5378 = vstv %s5375
          %v5379 = vmul.f32 %v5378, %v5376
          %v5380 = vmul.f32 %v5378, %v5377
          %v5381 = vadd.f32 %v5372, %v5379
          %v5382 = vadd.f32 %v5373, %v5380
          %s5383 = sadd.s32 %s5216, 821
          %s5384 = sld [smem:[#allocation6 + %s5383]]
          %v5385 = vstv %s5384
          %v5386 = vmul.f32 %v5385, %v5376
          %v5387 = vmul.f32 %v5385, %v5377
          %5390 = vrot.lane.b32.xlu0 %v5386, 127
          %v5391 = vpop.permute.xlu0 %5390
          %5392 = vrot.lane.b32.xlu0 %v5387, 127
          %v5393 = vpop.permute.xlu0 %5392
          %v5396 = vadd.f32 %v5381, %v5391
          %v5397 = vadd.f32 %v5382, %v5393
          %s5398 = sadd.s32 %s5216, 822
          %s5399 = sld [smem:[#allocation6 + %s5398]]
          %v5400 = vstv %s5399
          %v5401 = vmul.f32 %v5400, %v5376
          %v5402 = vmul.f32 %v5400, %v5377
          %5405 = vrot.lane.b32.xlu0 %v5401, 126
          %v5406 = vpop.permute.xlu0 %5405
          %5407 = vrot.lane.b32.xlu0 %v5402, 126
          %v5408 = vpop.permute.xlu0 %5407
          %v5411 = vadd.f32 %v5396, %v5406
          %v5412 = vadd.f32 %v5397, %v5408
          %s5413 = sadd.s32 %s5216, 823
          %s5414 = sld [smem:[#allocation6 + %s5413]]
          %v5415 = vld [vmem:[%s5336 + $0x2] sm:$0xff]
          %v5416 = vld [vmem:[%s5336 + $0xa] sm:$0xf]
          %v5417 = vstv %s5414
          %v5418 = vmul.f32 %v5417, %v5415
          %v5419 = vmul.f32 %v5417, %v5416
          %v5420 = vadd.f32 %v5411, %v5418
          %v5421 = vadd.f32 %v5412, %v5419
          %s5422 = sadd.s32 %s5216, 824
          %s5423 = sld [smem:[#allocation6 + %s5422]]
          %v5424 = vstv %s5423
          %v5425 = vmul.f32 %v5424, %v5415
          %v5426 = vmul.f32 %v5424, %v5416
          %5429 = vrot.lane.b32.xlu0 %v5425, 127
          %v5430 = vpop.permute.xlu0 %5429
          %5431 = vrot.lane.b32.xlu0 %v5426, 127
          %v5432 = vpop.permute.xlu0 %5431
          %v5435 = vadd.f32 %v5420, %v5430
          %v5436 = vadd.f32 %v5421, %v5432
          %s5437 = sadd.s32 %s5216, 825
          %s5438 = sld [smem:[#allocation6 + %s5437]]
          %v5439 = vstv %s5438
          %v5440 = vmul.f32 %v5439, %v5415
          %v5441 = vmul.f32 %v5439, %v5416
          %5444 = vrot.lane.b32.xlu0 %v5440, 126
          %v5445 = vpop.permute.xlu0 %5444
          %5446 = vrot.lane.b32.xlu0 %v5441, 126
          %v5447 = vpop.permute.xlu0 %5446
          %v5450 = vadd.f32 %v5435, %v5445
          %v5451 = vadd.f32 %v5436, %v5447
          %s5452 = sadd.s32 %s5216, 826
          %s5453 = sld [smem:[#allocation6 + %s5452]]
          %s5454 = scalar_lea.vmem [#allocation4], 32
          %v5455 = vld [vmem:[%s5454] sm:$0xff]
          %v5456 = vld [vmem:[%s5454 + $0x8] sm:$0xf]
          %v5457 = vstv %s5453
          %v5458 = vmul.f32 %v5457, %v5455
          %v5459 = vmul.f32 %v5457, %v5456
          %v5460 = vadd.f32 %v5450, %v5458
          %v5461 = vadd.f32 %v5451, %v5459
          %s5462 = sadd.s32 %s5216, 827
          %s5463 = sld [smem:[#allocation6 + %s5462]]
          %v5464 = vstv %s5463
          %v5465 = vmul.f32 %v5464, %v5455
          %v5466 = vmul.f32 %v5464, %v5456
          %5469 = vrot.lane.b32.xlu0 %v5465, 127
          %v5470 = vpop.permute.xlu0 %5469
          %5471 = vrot.lane.b32.xlu0 %v5466, 127
          %v5472 = vpop.permute.xlu0 %5471
          %v5475 = vadd.f32 %v5460, %v5470
          %v5476 = vadd.f32 %v5461, %v5472
          %s5477 = sadd.s32 %s5216, 828
          %s5478 = sld [smem:[#allocation6 + %s5477]]
          %v5479 = vstv %s5478
          %v5480 = vmul.f32 %v5479, %v5455
          %v5481 = vmul.f32 %v5479, %v5456
          %5484 = vrot.lane.b32.xlu0 %v5480, 126
          %v5485 = vpop.permute.xlu0 %5484
          %5486 = vrot.lane.b32.xlu0 %v5481, 126
          %v5487 = vpop.permute.xlu0 %5486
          %v5490 = vadd.f32 %v5475, %v5485
          %v5491 = vadd.f32 %v5476, %v5487
          %s5492 = sadd.s32 %s5216, 829
          %s5493 = sld [smem:[#allocation6 + %s5492]]
          %v5494 = vld [vmem:[%s5454 + $0x1] sm:$0xff]
          %v5495 = vld [vmem:[%s5454 + $0x9] sm:$0xf]
          %v5496 = vstv %s5493
          %v5497 = vmul.f32 %v5496, %v5494
          %v5498 = vmul.f32 %v5496, %v5495
          %v5499 = vadd.f32 %v5490, %v5497
          %v5500 = vadd.f32 %v5491, %v5498
          %s5501 = sadd.s32 %s5216, 830
          %s5502 = sld [smem:[#allocation6 + %s5501]]
          %v5503 = vstv %s5502
          %v5504 = vmul.f32 %v5503, %v5494
          %v5505 = vmul.f32 %v5503, %v5495
          %5508 = vrot.lane.b32.xlu0 %v5504, 127
          %v5509 = vpop.permute.xlu0 %5508
          %5510 = vrot.lane.b32.xlu0 %v5505, 127
          %v5511 = vpop.permute.xlu0 %5510
          %v5514 = vadd.f32 %v5499, %v5509
          %v5515 = vadd.f32 %v5500, %v5511
          %s5516 = sadd.s32 %s5216, 831
          %s5517 = sld [smem:[#allocation6 + %s5516]]
          %v5518 = vstv %s5517
          %v5519 = vmul.f32 %v5518, %v5494
          %v5520 = vmul.f32 %v5518, %v5495
          %5523 = vrot.lane.b32.xlu0 %v5519, 126
          %v5524 = vpop.permute.xlu0 %5523
          %5525 = vrot.lane.b32.xlu0 %v5520, 126
          %v5526 = vpop.permute.xlu0 %5525
          %v5529 = vadd.f32 %v5514, %v5524
          %v5530 = vadd.f32 %v5515, %v5526
          %s5531 = sadd.s32 %s5216, 832
          %s5532 = sld [smem:[#allocation6 + %s5531]]
          %v5533 = vld [vmem:[%s5454 + $0x2] sm:$0xff]
          %v5534 = vld [vmem:[%s5454 + $0xa] sm:$0xf]
          %v5535 = vstv %s5532
          %v5536 = vmul.f32 %v5535, %v5533
          %v5537 = vmul.f32 %v5535, %v5534
          %v5538 = vadd.f32 %v5529, %v5536
          %v5539 = vadd.f32 %v5530, %v5537
          %s5540 = sadd.s32 %s5216, 833
          %s5541 = sld [smem:[#allocation6 + %s5540]]
          %v5542 = vstv %s5541
          %v5543 = vmul.f32 %v5542, %v5533
          %v5544 = vmul.f32 %v5542, %v5534
          %5547 = vrot.lane.b32.xlu0 %v5543, 127
          %v5548 = vpop.permute.xlu0 %5547
          %5549 = vrot.lane.b32.xlu0 %v5544, 127
          %v5550 = vpop.permute.xlu0 %5549
          %v5553 = vadd.f32 %v5538, %v5548
          %v5554 = vadd.f32 %v5539, %v5550
          %s5555 = sadd.s32 %s5216, 834
          %s5556 = sld [smem:[#allocation6 + %s5555]]
          %v5557 = vstv %s5556
          %v5558 = vmul.f32 %v5557, %v5533
          %v5559 = vmul.f32 %v5557, %v5534
          %5562 = vrot.lane.b32.xlu0 %v5558, 126
          %v5563 = vpop.permute.xlu0 %5562
          %5564 = vrot.lane.b32.xlu0 %v5559, 126
          %v5565 = vpop.permute.xlu0 %5564
          %v5568 = vadd.f32 %v5553, %v5563
          %v5569 = vadd.f32 %v5554, %v5565
          %s5570 = sadd.s32 %s5216, 835
          %s5571 = sld [smem:[#allocation6 + %s5570]]
          %s5572 = scalar_lea.vmem [#allocation4], 48
          %v5573 = vld [vmem:[%s5572] sm:$0xff]
          %v5574 = vld [vmem:[%s5572 + $0x8] sm:$0xf]
          %v5575 = vstv %s5571
          %v5576 = vmul.f32 %v5575, %v5573
          %v5577 = vmul.f32 %v5575, %v5574
          %v5578 = vadd.f32 %v5568, %v5576
          %v5579 = vadd.f32 %v5569, %v5577
          %s5580 = sadd.s32 %s5216, 836
          %s5581 = sld [smem:[#allocation6 + %s5580]]
          %v5582 = vstv %s5581
          %v5583 = vmul.f32 %v5582, %v5573
          %v5584 = vmul.f32 %v5582, %v5574
          %5587 = vrot.lane.b32.xlu0 %v5583, 127
          %v5588 = vpop.permute.xlu0 %5587
          %5589 = vrot.lane.b32.xlu0 %v5584, 127
          %v5590 = vpop.permute.xlu0 %5589
          %v5593 = vadd.f32 %v5578, %v5588
          %v5594 = vadd.f32 %v5579, %v5590
          %s5595 = sadd.s32 %s5216, 837
          %s5596 = sld [smem:[#allocation6 + %s5595]]
          %v5597 = vstv %s5596
          %v5598 = vmul.f32 %v5597, %v5573
          %v5599 = vmul.f32 %v5597, %v5574
          %5602 = vrot.lane.b32.xlu0 %v5598, 126
          %v5603 = vpop.permute.xlu0 %5602
          %5604 = vrot.lane.b32.xlu0 %v5599, 126
          %v5605 = vpop.permute.xlu0 %5604
          %v5608 = vadd.f32 %v5593, %v5603
          %v5609 = vadd.f32 %v5594, %v5605
          %s5610 = sadd.s32 %s5216, 838
          %s5611 = sld [smem:[#allocation6 + %s5610]]
          %v5612 = vld [vmem:[%s5572 + $0x1] sm:$0xff]
          %v5613 = vld [vmem:[%s5572 + $0x9] sm:$0xf]
          %v5614 = vstv %s5611
          %v5615 = vmul.f32 %v5614, %v5612
          %v5616 = vmul.f32 %v5614, %v5613
          %v5617 = vadd.f32 %v5608, %v5615
          %v5618 = vadd.f32 %v5609, %v5616
          %s5619 = sadd.s32 %s5216, 839
          %s5620 = sld [smem:[#allocation6 + %s5619]]
          %v5621 = vstv %s5620
          %v5622 = vmul.f32 %v5621, %v5612
          %v5623 = vmul.f32 %v5621, %v5613
          %5626 = vrot.lane.b32.xlu0 %v5622, 127
          %v5627 = vpop.permute.xlu0 %5626
          %5628 = vrot.lane.b32.xlu0 %v5623, 127
          %v5629 = vpop.permute.xlu0 %5628
          %v5632 = vadd.f32 %v5617, %v5627
          %v5633 = vadd.f32 %v5618, %v5629
          %s5634 = sadd.s32 %s5216, 840
          %s5635 = sld [smem:[#allocation6 + %s5634]]
          %v5636 = vstv %s5635
          %v5637 = vmul.f32 %v5636, %v5612
          %v5638 = vmul.f32 %v5636, %v5613
          %5641 = vrot.lane.b32.xlu0 %v5637, 126
          %v5642 = vpop.permute.xlu0 %5641
          %5643 = vrot.lane.b32.xlu0 %v5638, 126
          %v5644 = vpop.permute.xlu0 %5643
          %v5647 = vadd.f32 %v5632, %v5642
          %v5648 = vadd.f32 %v5633, %v5644
          %s5649 = sadd.s32 %s5216, 841
          %s5650 = sld [smem:[#allocation6 + %s5649]]
          %v5651 = vld [vmem:[%s5572 + $0x2] sm:$0xff]
          %v5652 = vld [vmem:[%s5572 + $0xa] sm:$0xf]
          %v5653 = vstv %s5650
          %v5654 = vmul.f32 %v5653, %v5651
          %v5655 = vmul.f32 %v5653, %v5652
          %v5656 = vadd.f32 %v5647, %v5654
          %v5657 = vadd.f32 %v5648, %v5655
          %s5658 = sadd.s32 %s5216, 842
          %s5659 = sld [smem:[#allocation6 + %s5658]]
          %v5660 = vstv %s5659
          %v5661 = vmul.f32 %v5660, %v5651
          %v5662 = vmul.f32 %v5660, %v5652
          %5665 = vrot.lane.b32.xlu0 %v5661, 127
          %v5666 = vpop.permute.xlu0 %5665
          %5667 = vrot.lane.b32.xlu0 %v5662, 127
          %v5668 = vpop.permute.xlu0 %5667
          %v5671 = vadd.f32 %v5656, %v5666
          %v5672 = vadd.f32 %v5657, %v5668
          %s5673 = sadd.s32 %s5216, 843
          %s5674 = sld [smem:[#allocation6 + %s5673]]
          %v5675 = vstv %s5674
          %v5676 = vmul.f32 %v5675, %v5651
          %v5677 = vmul.f32 %v5675, %v5652
          %5680 = vrot.lane.b32.xlu0 %v5676, 126
          %v5681 = vpop.permute.xlu0 %5680
          %5682 = vrot.lane.b32.xlu0 %v5677, 126
          %v5683 = vpop.permute.xlu0 %5682
          %v5686 = vadd.f32 %v5671, %v5681
          %v5687 = vadd.f32 %v5672, %v5683
          %s5688 = sadd.s32 %s5216, 844
          %s5689 = sld [smem:[#allocation6 + %s5688]]
          %s5690 = scalar_lea.vmem [#allocation4], 64
          %v5691 = vld [vmem:[%s5690] sm:$0xff]
          %v5692 = vld [vmem:[%s5690 + $0x8] sm:$0xf]
          %v5693 = vstv %s5689
          %v5694 = vmul.f32 %v5693, %v5691
          %v5695 = vmul.f32 %v5693, %v5692
          %v5696 = vadd.f32 %v5686, %v5694
          %v5697 = vadd.f32 %v5687, %v5695
          %s5698 = sadd.s32 %s5216, 845
          %s5699 = sld [smem:[#allocation6 + %s5698]]
          %v5700 = vstv %s5699
          %v5701 = vmul.f32 %v5700, %v5691
          %v5702 = vmul.f32 %v5700, %v5692
          %5705 = vrot.lane.b32.xlu0 %v5701, 127
          %v5706 = vpop.permute.xlu0 %5705
          %5707 = vrot.lane.b32.xlu0 %v5702, 127
          %v5708 = vpop.permute.xlu0 %5707
          %v5711 = vadd.f32 %v5696, %v5706
          %v5712 = vadd.f32 %v5697, %v5708
          %s5713 = sadd.s32 %s5216, 846
          %s5714 = sld [smem:[#allocation6 + %s5713]]
          %v5715 = vstv %s5714
          %v5716 = vmul.f32 %v5715, %v5691
          %v5717 = vmul.f32 %v5715, %v5692
          %5720 = vrot.lane.b32.xlu0 %v5716, 126
          %v5721 = vpop.permute.xlu0 %5720
          %5722 = vrot.lane.b32.xlu0 %v5717, 126
          %v5723 = vpop.permute.xlu0 %5722
          %v5726 = vadd.f32 %v5711, %v5721
          %v5727 = vadd.f32 %v5712, %v5723
          %s5728 = sadd.s32 %s5216, 847
          %s5729 = sld [smem:[#allocation6 + %s5728]]
          %v5730 = vld [vmem:[%s5690 + $0x1] sm:$0xff]
          %v5731 = vld [vmem:[%s5690 + $0x9] sm:$0xf]
          %v5732 = vstv %s5729
          %v5733 = vmul.f32 %v5732, %v5730
          %v5734 = vmul.f32 %v5732, %v5731
          %v5735 = vadd.f32 %v5726, %v5733
          %v5736 = vadd.f32 %v5727, %v5734
          %s5737 = sadd.s32 %s5216, 848
          %s5738 = sld [smem:[#allocation6 + %s5737]]
          %v5739 = vstv %s5738
          %v5740 = vmul.f32 %v5739, %v5730
          %v5741 = vmul.f32 %v5739, %v5731
          %5744 = vrot.lane.b32.xlu0 %v5740, 127
          %v5745 = vpop.permute.xlu0 %5744
          %5746 = vrot.lane.b32.xlu0 %v5741, 127
          %v5747 = vpop.permute.xlu0 %5746
          %v5750 = vadd.f32 %v5735, %v5745
          %v5751 = vadd.f32 %v5736, %v5747
          %s5752 = sadd.s32 %s5216, 849
          %s5753 = sld [smem:[#allocation6 + %s5752]]
          %v5754 = vstv %s5753
          %v5755 = vmul.f32 %v5754, %v5730
          %v5756 = vmul.f32 %v5754, %v5731
          %5759 = vrot.lane.b32.xlu0 %v5755, 126
          %v5760 = vpop.permute.xlu0 %5759
          %5761 = vrot.lane.b32.xlu0 %v5756, 126
          %v5762 = vpop.permute.xlu0 %5761
          %v5765 = vadd.f32 %v5750, %v5760
          %v5766 = vadd.f32 %v5751, %v5762
          %s5767 = sadd.s32 %s5216, 850
          %s5768 = sld [smem:[#allocation6 + %s5767]]
          %v5769 = vld [vmem:[%s5690 + $0x2] sm:$0xff]
          %v5770 = vld [vmem:[%s5690 + $0xa] sm:$0xf]
          %v5771 = vstv %s5768
          %v5772 = vmul.f32 %v5771, %v5769
          %v5773 = vmul.f32 %v5771, %v5770
          %v5774 = vadd.f32 %v5765, %v5772
          %v5775 = vadd.f32 %v5766, %v5773
          %s5776 = sadd.s32 %s5216, 851
          %s5777 = sld [smem:[#allocation6 + %s5776]]
          %v5778 = vstv %s5777
          %v5779 = vmul.f32 %v5778, %v5769
          %v5780 = vmul.f32 %v5778, %v5770
          %5783 = vrot.lane.b32.xlu0 %v5779, 127
          %v5784 = vpop.permute.xlu0 %5783
          %5785 = vrot.lane.b32.xlu0 %v5780, 127
          %v5786 = vpop.permute.xlu0 %5785
          %v5789 = vadd.f32 %v5774, %v5784
          %v5790 = vadd.f32 %v5775, %v5786
          %s5791 = sadd.s32 %s5216, 852
          %s5792 = sld [smem:[#allocation6 + %s5791]]
          %v5793 = vstv %s5792
          %v5794 = vmul.f32 %v5793, %v5769
          %v5795 = vmul.f32 %v5793, %v5770
          %5798 = vrot.lane.b32.xlu0 %v5794, 126
          %v5799 = vpop.permute.xlu0 %5798
          %5800 = vrot.lane.b32.xlu0 %v5795, 126
          %v5801 = vpop.permute.xlu0 %5800
          %v5804 = vadd.f32 %v5789, %v5799
          %v5805 = vadd.f32 %v5790, %v5801
          %s5806 = sadd.s32 %s5216, 853
          %s5807 = sld [smem:[#allocation6 + %s5806]]
          %s5808 = scalar_lea.vmem [#allocation4], 80
          %v5809 = vld [vmem:[%s5808] sm:$0xff]
          %v5810 = vld [vmem:[%s5808 + $0x8] sm:$0xf]
          %v5811 = vstv %s5807
          %v5812 = vmul.f32 %v5811, %v5809
          %v5813 = vmul.f32 %v5811, %v5810
          %v5814 = vadd.f32 %v5804, %v5812
          %v5815 = vadd.f32 %v5805, %v5813
          %s5816 = sadd.s32 %s5216, 854
          %s5817 = sld [smem:[#allocation6 + %s5816]]
          %v5818 = vstv %s5817
          %v5819 = vmul.f32 %v5818, %v5809
          %v5820 = vmul.f32 %v5818, %v5810
          %5823 = vrot.lane.b32.xlu0 %v5819, 127
          %v5824 = vpop.permute.xlu0 %5823
          %5825 = vrot.lane.b32.xlu0 %v5820, 127
          %v5826 = vpop.permute.xlu0 %5825
          %v5829 = vadd.f32 %v5814, %v5824
          %v5830 = vadd.f32 %v5815, %v5826
          %s5831 = sadd.s32 %s5216, 855
          %s5832 = sld [smem:[#allocation6 + %s5831]]
          %v5833 = vstv %s5832
          %v5834 = vmul.f32 %v5833, %v5809
          %v5835 = vmul.f32 %v5833, %v5810
          %5838 = vrot.lane.b32.xlu0 %v5834, 126
          %v5839 = vpop.permute.xlu0 %5838
          %5840 = vrot.lane.b32.xlu0 %v5835, 126
          %v5841 = vpop.permute.xlu0 %5840
          %v5844 = vadd.f32 %v5829, %v5839
          %v5845 = vadd.f32 %v5830, %v5841
          %s5846 = sadd.s32 %s5216, 856
          %s5847 = sld [smem:[#allocation6 + %s5846]]
          %v5848 = vld [vmem:[%s5808 + $0x1] sm:$0xff]
          %v5849 = vld [vmem:[%s5808 + $0x9] sm:$0xf]
          %v5850 = vstv %s5847
          %v5851 = vmul.f32 %v5850, %v5848
          %v5852 = vmul.f32 %v5850, %v5849
          %v5853 = vadd.f32 %v5844, %v5851
          %v5854 = vadd.f32 %v5845, %v5852
          %s5855 = sadd.s32 %s5216, 857
          %s5856 = sld [smem:[#allocation6 + %s5855]]
          %v5857 = vstv %s5856
          %v5858 = vmul.f32 %v5857, %v5848
          %v5859 = vmul.f32 %v5857, %v5849
          %5862 = vrot.lane.b32.xlu0 %v5858, 127
          %v5863 = vpop.permute.xlu0 %5862
          %5864 = vrot.lane.b32.xlu0 %v5859, 127
          %v5865 = vpop.permute.xlu0 %5864
          %v5868 = vadd.f32 %v5853, %v5863
          %v5869 = vadd.f32 %v5854, %v5865
          %s5870 = sadd.s32 %s5216, 858
          %s5871 = sld [smem:[#allocation6 + %s5870]]
          %v5872 = vstv %s5871
          %v5873 = vmul.f32 %v5872, %v5848
          %v5874 = vmul.f32 %v5872, %v5849
          %5877 = vrot.lane.b32.xlu0 %v5873, 126
          %v5878 = vpop.permute.xlu0 %5877
          %5879 = vrot.lane.b32.xlu0 %v5874, 126
          %v5880 = vpop.permute.xlu0 %5879
          %v5883 = vadd.f32 %v5868, %v5878
          %v5884 = vadd.f32 %v5869, %v5880
          %s5885 = sadd.s32 %s5216, 859
          %s5886 = sld [smem:[#allocation6 + %s5885]]
          %v5887 = vld [vmem:[%s5808 + $0x2] sm:$0xff]
          %v5888 = vld [vmem:[%s5808 + $0xa] sm:$0xf]
          %v5889 = vstv %s5886
          %v5890 = vmul.f32 %v5889, %v5887
          %v5891 = vmul.f32 %v5889, %v5888
          %v5892 = vadd.f32 %v5883, %v5890
          %v5893 = vadd.f32 %v5884, %v5891
          %s5894 = sadd.s32 %s5216, 860
          %s5895 = sld [smem:[#allocation6 + %s5894]]
          %v5896 = vstv %s5895
          %v5897 = vmul.f32 %v5896, %v5887
          %v5898 = vmul.f32 %v5896, %v5888
          %5901 = vrot.lane.b32.xlu0 %v5897, 127
          %v5902 = vpop.permute.xlu0 %5901
          %5903 = vrot.lane.b32.xlu0 %v5898, 127
          %v5904 = vpop.permute.xlu0 %5903
          %v5907 = vadd.f32 %v5892, %v5902
          %v5908 = vadd.f32 %v5893, %v5904
          %s5909 = sadd.s32 %s5216, 861
          %s5910 = sld [smem:[#allocation6 + %s5909]]
          %v5911 = vstv %s5910
          %v5912 = vmul.f32 %v5911, %v5887
          %v5913 = vmul.f32 %v5911, %v5888
          %5916 = vrot.lane.b32.xlu0 %v5912, 126
          %v5917 = vpop.permute.xlu0 %5916
          %5918 = vrot.lane.b32.xlu0 %v5913, 126
          %v5919 = vpop.permute.xlu0 %5918
          %v5922 = vadd.f32 %v5907, %v5917
          %v5923 = vadd.f32 %v5908, %v5919
          %s5924 = sadd.s32 %s5216, 862
          %s5925 = sld [smem:[#allocation6 + %s5924]]
          %s5926 = scalar_lea.vmem [#allocation4], 96
          %v5927 = vld [vmem:[%s5926] sm:$0xff]
          %v5928 = vld [vmem:[%s5926 + $0x8] sm:$0xf]
          %v5929 = vstv %s5925
          %v5930 = vmul.f32 %v5929, %v5927
          %v5931 = vmul.f32 %v5929, %v5928
          %v5932 = vadd.f32 %v5922, %v5930
          %v5933 = vadd.f32 %v5923, %v5931
          %s5934 = sadd.s32 %s5216, 863
          %s5935 = sld [smem:[#allocation6 + %s5934]]
          %v5936 = vstv %s5935
          %v5937 = vmul.f32 %v5936, %v5927
          %v5938 = vmul.f32 %v5936, %v5928
          %5941 = vrot.lane.b32.xlu0 %v5937, 127
          %v5942 = vpop.permute.xlu0 %5941
          %5943 = vrot.lane.b32.xlu0 %v5938, 127
          %v5944 = vpop.permute.xlu0 %5943
          %v5947 = vadd.f32 %v5932, %v5942
          %v5948 = vadd.f32 %v5933, %v5944
          %s5949 = sadd.s32 %s5216, 864
          %s5950 = sld [smem:[#allocation6 + %s5949]]
          %v5951 = vstv %s5950
          %v5952 = vmul.f32 %v5951, %v5927
          %v5953 = vmul.f32 %v5951, %v5928
          %5956 = vrot.lane.b32.xlu0 %v5952, 126
          %v5957 = vpop.permute.xlu0 %5956
          %5958 = vrot.lane.b32.xlu0 %v5953, 126
          %v5959 = vpop.permute.xlu0 %5958
          %v5962 = vadd.f32 %v5947, %v5957
          %v5963 = vadd.f32 %v5948, %v5959
          %s5964 = sadd.s32 %s5216, 865
          %s5965 = sld [smem:[#allocation6 + %s5964]]
          %v5966 = vld [vmem:[%s5926 + $0x1] sm:$0xff]
          %v5967 = vld [vmem:[%s5926 + $0x9] sm:$0xf]
          %v5968 = vstv %s5965
          %v5969 = vmul.f32 %v5968, %v5966
          %v5970 = vmul.f32 %v5968, %v5967
          %v5971 = vadd.f32 %v5962, %v5969
          %v5972 = vadd.f32 %v5963, %v5970
          %s5973 = sadd.s32 %s5216, 866
          %s5974 = sld [smem:[#allocation6 + %s5973]]
          %v5975 = vstv %s5974
          %v5976 = vmul.f32 %v5975, %v5966
          %v5977 = vmul.f32 %v5975, %v5967
          %5980 = vrot.lane.b32.xlu0 %v5976, 127
          %v5981 = vpop.permute.xlu0 %5980
          %5982 = vrot.lane.b32.xlu0 %v5977, 127
          %v5983 = vpop.permute.xlu0 %5982
          %v5986 = vadd.f32 %v5971, %v5981
          %v5987 = vadd.f32 %v5972, %v5983
          %s5988 = sadd.s32 %s5216, 867
          %s5989 = sld [smem:[#allocation6 + %s5988]]
          %v5990 = vstv %s5989
          %v5991 = vmul.f32 %v5990, %v5966
          %v5992 = vmul.f32 %v5990, %v5967
          %5995 = vrot.lane.b32.xlu0 %v5991, 126
          %v5996 = vpop.permute.xlu0 %5995
          %5997 = vrot.lane.b32.xlu0 %v5992, 126
          %v5998 = vpop.permute.xlu0 %5997
          %v6001 = vadd.f32 %v5986, %v5996
          %v6002 = vadd.f32 %v5987, %v5998
          %s6003 = sadd.s32 %s5216, 868
          %s6004 = sld [smem:[#allocation6 + %s6003]]
          %v6005 = vld [vmem:[%s5926 + $0x2] sm:$0xff]
          %v6006 = vld [vmem:[%s5926 + $0xa] sm:$0xf]
          %v6007 = vstv %s6004
          %v6008 = vmul.f32 %v6007, %v6005
          %v6009 = vmul.f32 %v6007, %v6006
          %v6010 = vadd.f32 %v6001, %v6008
          %v6011 = vadd.f32 %v6002, %v6009
          %s6012 = sadd.s32 %s5216, 869
          %s6013 = sld [smem:[#allocation6 + %s6012]]
          %v6014 = vstv %s6013
          %v6015 = vmul.f32 %v6014, %v6005
          %v6016 = vmul.f32 %v6014, %v6006
          %6019 = vrot.lane.b32.xlu0 %v6015, 127
          %v6020 = vpop.permute.xlu0 %6019
          %6021 = vrot.lane.b32.xlu0 %v6016, 127
          %v6022 = vpop.permute.xlu0 %6021
          %v6025 = vadd.f32 %v6010, %v6020
          %v6026 = vadd.f32 %v6011, %v6022
          %s6027 = sadd.s32 %s5216, 870
          %s6028 = sld [smem:[#allocation6 + %s6027]]
          %v6029 = vstv %s6028
          %v6030 = vmul.f32 %v6029, %v6005
          %v6031 = vmul.f32 %v6029, %v6006
          %6034 = vrot.lane.b32.xlu0 %v6030, 126
          %v6035 = vpop.permute.xlu0 %6034
          %6036 = vrot.lane.b32.xlu0 %v6031, 126
          %v6037 = vpop.permute.xlu0 %6036
          %v6040 = vadd.f32 %v6025, %v6035
          %v6041 = vadd.f32 %v6026, %v6037
          %s6042 = sadd.s32 %s5216, 871
          %s6043 = sld [smem:[#allocation6 + %s6042]]
          %s6044 = scalar_lea.vmem [#allocation4], 112
          %v6045 = vld [vmem:[%s6044] sm:$0xff]
          %v6046 = vld [vmem:[%s6044 + $0x8] sm:$0xf]
          %v6047 = vstv %s6043
          %v6048 = vmul.f32 %v6047, %v6045
          %v6049 = vmul.f32 %v6047, %v6046
          %v6050 = vadd.f32 %v6040, %v6048
          %v6051 = vadd.f32 %v6041, %v6049
          %s6052 = sadd.s32 %s5216, 872
          %s6053 = sld [smem:[#allocation6 + %s6052]]
          %v6054 = vstv %s6053
          %v6055 = vmul.f32 %v6054, %v6045
          %v6056 = vmul.f32 %v6054, %v6046
          %6059 = vrot.lane.b32.xlu0 %v6055, 127
          %v6060 = vpop.permute.xlu0 %6059
          %6061 = vrot.lane.b32.xlu0 %v6056, 127
          %v6062 = vpop.permute.xlu0 %6061
          %v6065 = vadd.f32 %v6050, %v6060
          %v6066 = vadd.f32 %v6051, %v6062
          %s6067 = sadd.s32 %s5216, 873
          %s6068 = sld [smem:[#allocation6 + %s6067]]
          %v6069 = vstv %s6068
          %v6070 = vmul.f32 %v6069, %v6045
          %v6071 = vmul.f32 %v6069, %v6046
          %6074 = vrot.lane.b32.xlu0 %v6070, 126
          %v6075 = vpop.permute.xlu0 %6074
          %6076 = vrot.lane.b32.xlu0 %v6071, 126
          %v6077 = vpop.permute.xlu0 %6076
          %v6080 = vadd.f32 %v6065, %v6075
          %v6081 = vadd.f32 %v6066, %v6077
          %s6082 = sadd.s32 %s5216, 874
          %s6083 = sld [smem:[#allocation6 + %s6082]]
          %v6084 = vld [vmem:[%s6044 + $0x1] sm:$0xff]
          %v6085 = vld [vmem:[%s6044 + $0x9] sm:$0xf]
          %v6086 = vstv %s6083
          %v6087 = vmul.f32 %v6086, %v6084
          %v6088 = vmul.f32 %v6086, %v6085
          %v6089 = vadd.f32 %v6080, %v6087
          %v6090 = vadd.f32 %v6081, %v6088
          %s6091 = sadd.s32 %s5216, 875
          %s6092 = sld [smem:[#allocation6 + %s6091]]
          %v6093 = vstv %s6092
          %v6094 = vmul.f32 %v6093, %v6084
          %v6095 = vmul.f32 %v6093, %v6085
          %6098 = vrot.lane.b32.xlu0 %v6094, 127
          %v6099 = vpop.permute.xlu0 %6098
          %6100 = vrot.lane.b32.xlu0 %v6095, 127
          %v6101 = vpop.permute.xlu0 %6100
          %v6104 = vadd.f32 %v6089, %v6099
          %v6105 = vadd.f32 %v6090, %v6101
          %s6106 = sadd.s32 %s5216, 876
          %s6107 = sld [smem:[#allocation6 + %s6106]]
          %v6108 = vstv %s6107
          %v6109 = vmul.f32 %v6108, %v6084
          %v6110 = vmul.f32 %v6108, %v6085
          %6113 = vrot.lane.b32.xlu0 %v6109, 126
          %v6114 = vpop.permute.xlu0 %6113
          %6115 = vrot.lane.b32.xlu0 %v6110, 126
          %v6116 = vpop.permute.xlu0 %6115
          %v6119 = vadd.f32 %v6104, %v6114
          %v6120 = vadd.f32 %v6105, %v6116
          %s6121 = sadd.s32 %s5216, 877
          %s6122 = sld [smem:[#allocation6 + %s6121]]
          %v6123 = vld [vmem:[%s6044 + $0x2] sm:$0xff]
          %v6124 = vld [vmem:[%s6044 + $0xa] sm:$0xf]
          %v6125 = vstv %s6122
          %v6126 = vmul.f32 %v6125, %v6123
          %v6127 = vmul.f32 %v6125, %v6124
          %v6128 = vadd.f32 %v6119, %v6126
          %v6129 = vadd.f32 %v6120, %v6127
          %s6130 = sadd.s32 %s5216, 878
          %s6131 = sld [smem:[#allocation6 + %s6130]]
          %v6132 = vstv %s6131
          %v6133 = vmul.f32 %v6132, %v6123
          %v6134 = vmul.f32 %v6132, %v6124
          %6137 = vrot.lane.b32.xlu0 %v6133, 127
          %v6138 = vpop.permute.xlu0 %6137
          %6139 = vrot.lane.b32.xlu0 %v6134, 127
          %v6140 = vpop.permute.xlu0 %6139
          %v6143 = vadd.f32 %v6128, %v6138
          %v6144 = vadd.f32 %v6129, %v6140
          %s6145 = sadd.s32 %s5216, 879
          %s6146 = sld [smem:[#allocation6 + %s6145]]
          %v6147 = vstv %s6146
          %v6148 = vmul.f32 %v6147, %v6123
          %v6149 = vmul.f32 %v6147, %v6124
          %6152 = vrot.lane.b32.xlu0 %v6148, 126
          %v6153 = vpop.permute.xlu0 %6152
          %6154 = vrot.lane.b32.xlu0 %v6149, 126
          %v6155 = vpop.permute.xlu0 %6154
          %v6158 = vadd.f32 %v6143, %v6153
          %v6159 = vadd.f32 %v6144, %v6155
          %s6160 = sadd.s32 %s5211, 1384
          %s6161 = sld [smem:[#allocation6 + %s6160]]
          %v6162 = vstv %s6161
          %v6163 = vadd.f32 %v6158, %v6162
          %v6164 = vadd.f32 %v6159, %v6162
          %v6165 = vmax.f32 %v6163, 0.0
          %v6166 = vmax.f32 %v6164, 0.0
          %vm6167 = vcmask 91136
          %v6168 = vsel %vm6167, %v6165, 0.0
          %v6169 = vrot.slane %v6168, 4
          %v6170 = vadd.f32 %v6168, %v6169
          %v6171 = vrot.slane %v6170, 2
          %v6172 = vadd.f32 %v6170, %v6171
          %v6173 = vrot.slane %v6172, 1
          %v6174 = vadd.f32 %v6172, %v6173
          %v6175 = vmul.f32 %v6174, 0.5
          %v6177 = vrot.slane %v6165, 1
          %v6179 = vsel %vm6167, %v6177, 0.0
          %v6180 = vrot.slane %v6179, 4
          %v6181 = vadd.f32 %v6179, %v6180
          %v6182 = vrot.slane %v6181, 2
          %v6183 = vadd.f32 %v6181, %v6182
          %v6184 = vrot.slane %v6183, 1
          %v6185 = vadd.f32 %v6183, %v6184
          %v6186 = vmul.f32 %v6185, 0.5
          %v6187 = vrot.slane %v6165, 3
          %v6189 = vsel %vm6167, %v6187, 0.0
          %v6190 = vrot.slane %v6189, 4
          %v6191 = vadd.f32 %v6189, %v6190
          %v6192 = vrot.slane %v6191, 2
          %v6193 = vadd.f32 %v6191, %v6192
          %v6194 = vrot.slane %v6193, 1
          %v6195 = vadd.f32 %v6193, %v6194
          %v6196 = vmul.f32 %v6195, 0.5
          %v6197 = vrot.slane %v6165, 4
          %v6199 = vsel %vm6167, %v6197, 0.0
          %v6200 = vrot.slane %v6199, 4
          %v6201 = vadd.f32 %v6199, %v6200
          %v6202 = vrot.slane %v6201, 2
          %v6203 = vadd.f32 %v6201, %v6202
          %v6204 = vrot.slane %v6203, 1
          %v6205 = vadd.f32 %v6203, %v6204
          %v6206 = vmul.f32 %v6205, 0.5
          %v6207 = vrot.slane %v6165, 6
          %v6209 = vsel %vm6167, %v6207, 0.0
          %v6210 = vrot.slane %v6209, 4
          %v6211 = vadd.f32 %v6209, %v6210
          %v6212 = vrot.slane %v6211, 2
          %v6213 = vadd.f32 %v6211, %v6212
          %v6214 = vrot.slane %v6213, 1
          %v6215 = vadd.f32 %v6213, %v6214
          %v6216 = vmul.f32 %v6215, 0.5
          %vm6218 = vcmask 1040384
          %v6219 = vrot.slane %v6165, 7
          %v6220 = vrot.slane %v6166, 7
          %v6221 = vsel %vm6218, %v6219, %v6220
          %v6223 = vsel %vm6167, %v6221, 0.0
          %v6224 = vrot.slane %v6223, 4
          %v6225 = vadd.f32 %v6223, %v6224
          %v6226 = vrot.slane %v6225, 2
          %v6227 = vadd.f32 %v6225, %v6226
          %v6228 = vrot.slane %v6227, 1
          %v6229 = vadd.f32 %v6227, %v6228
          %v6230 = vmul.f32 %v6229, 0.5
          %v6231 = vrot.slane %v6166, 1
          %v6233 = vsel %vm6167, %v6231, 0.0
          %v6234 = vrot.slane %v6233, 4
          %v6235 = vadd.f32 %v6233, %v6234
          %v6236 = vrot.slane %v6235, 2
          %v6237 = vadd.f32 %v6235, %v6236
          %v6238 = vrot.slane %v6237, 1
          %v6239 = vadd.f32 %v6237, %v6238
          %v6240 = vmul.f32 %v6239, 0.5
          %v6241 = vrot.slane %v6166, 2
          %v6243 = vsel %vm6167, %v6241, 0.0
          %v6244 = vrot.slane %v6243, 4
          %v6245 = vadd.f32 %v6243, %v6244
          %v6246 = vrot.slane %v6245, 2
          %v6247 = vadd.f32 %v6245, %v6246
          %v6248 = vrot.slane %v6247, 1
          %v6249 = vadd.f32 %v6247, %v6248
          %v6250 = vmul.f32 %v6249, 0.5
          %v6251 = vsel %vm6218, %v6175, %v6186
          %vm6252 = vcmask 1041408
          %v6253 = vsel %vm6252, %v6251, %v6196
          %vm6254 = vcmask 1042432
          %v6255 = vsel %vm6254, %v6253, %v6206
          %vm6256 = vcmask 1043456
          %v6257 = vsel %vm6256, %v6255, %v6216
          %vm6258 = vcmask 1044480
          %v6259 = vsel %vm6258, %v6257, %v6230
          %vm6260 = vcmask 1045504
          %v6261 = vsel %vm6260, %v6259, %v6240
          %vm6262 = vcmask 1046528
          %v6263 = vsel %vm6262, %v6261, %v6250
          %vm6264 = vcmask 15360
          %v6265 = vsel %vm6264, %v6263, 0.0
          %6266 = vadd.xlane.f32.xlu0 %v6265
          %v6267 = vpop.xlane.xlu0 %6266
          %v6268 = vmul.f32 %v6267, 0.5
          %6270 = vrot.lane.b32.xlu0 %v6263, 127
          %v6271 = vpop.permute.xlu0 %6270
          %v6273 = vsel %vm6264, %v6271, 0.0
          %6274 = vadd.xlane.f32.xlu0 %v6273
          %v6275 = vpop.xlane.xlu0 %6274
          %v6276 = vmul.f32 %v6275, 0.5
          %6277 = vrot.lane.b32.xlu0 %v6263, 125
          %v6278 = vpop.permute.xlu0 %6277
          %v6280 = vsel %vm6264, %v6278, 0.0
          %6281 = vadd.xlane.f32.xlu0 %v6280
          %v6282 = vpop.xlane.xlu0 %6281
          %v6283 = vmul.f32 %v6282, 0.5
          %6284 = vrot.lane.b32.xlu0 %v6263, 124
          %v6285 = vpop.permute.xlu0 %6284
          %v6287 = vsel %vm6264, %v6285, 0.0
          %6288 = vadd.xlane.f32.xlu0 %v6287
          %v6289 = vpop.xlane.xlu0 %6288
          %v6290 = vmul.f32 %v6289, 0.5
          %6291 = vrot.lane.b32.xlu0 %v6263, 122
          %v6292 = vpop.permute.xlu0 %6291
          %v6294 = vsel %vm6264, %v6292, 0.0
          %6295 = vadd.xlane.f32.xlu0 %v6294
          %v6296 = vpop.xlane.xlu0 %6295
          %v6297 = vmul.f32 %v6296, 0.5
          %6298 = vrot.lane.b32.xlu0 %v6263, 121
          %v6299 = vpop.permute.xlu0 %6298
          %v6301 = vsel %vm6264, %v6299, 0.0
          %6302 = vadd.xlane.f32.xlu0 %v6301
          %v6303 = vpop.xlane.xlu0 %6302
          %v6304 = vmul.f32 %v6303, 0.5
          %6305 = vrot.lane.b32.xlu0 %v6263, 119
          %v6306 = vpop.permute.xlu0 %6305
          %v6308 = vsel %vm6264, %v6306, 0.0
          %6309 = vadd.xlane.f32.xlu0 %v6308
          %v6310 = vpop.xlane.xlu0 %6309
          %v6311 = vmul.f32 %v6310, 0.5
          %6312 = vrot.lane.b32.xlu0 %v6263, 118
          %v6313 = vpop.permute.xlu0 %6312
          %v6315 = vsel %vm6264, %v6313, 0.0
          %6316 = vadd.xlane.f32.xlu0 %v6315
          %v6317 = vpop.xlane.xlu0 %6316
          %v6318 = vmul.f32 %v6317, 0.5
          %vm6319 = vcmask 7168
          %v6320 = vsel %vm6319, %v6268, %v6276
          %v6321 = vsel %vm6264, %v6320, %v6283
          %vm6322 = vcmask 23552
          %v6323 = vsel %vm6322, %v6321, %v6290
          %vm6324 = vcmask 31744
          %v6325 = vsel %vm6324, %v6323, %v6297
          %vm6326 = vcmask 39936
          %v6327 = vsel %vm6326, %v6325, %v6304
          %vm6328 = vcmask 48128
          %v6329 = vsel %vm6328, %v6327, %v6311
          %vm6330 = vcmask 56320
          %v6331 = vsel %vm6330, %v6329, %v6318
          %6333 = vrot.lane.b32.xlu0 %v6331, 1
          %v6334 = vpop.permute.xlu0 %6333
          %s6336 = smul.u32 %s5211, 16
          %s6337 = scalar_lea.vmem [#allocation5], %s6336
          %vm6338 = vcmask 72712
          %6339 = vst.msk [vmem:[%s6337 + $0x1] sm:$0xff] %vm6338, %v6334
        $region63: #{discriminator_forward.1} parent=31 // loop_footer
          %s5215 = sadd.s32 1, %s5211
        $region64: #{discriminator_forward.1} parent=31 // loop_footer_branch
          %5210 = sbr.rel target = $region60
        $region65: #{discriminator_forward.1} parent=31 // loop_exit
          _
        %s6340 = sld [smem:[#allocation6 + $0x570]]
        %v6341 = vld [vmem:[#allocation5] sm:$0xff]
        %v6342 = vstv %s6340
        %v6343 = vmul.f32 %v6342, %v6341
        %v6344 = vadd.f32 %v6343, 0.0
        %s6345 = sld [smem:[#allocation6 + $0x571]]
        %v6346 = vstv %s6345
        %v6347 = vmul.f32 %v6346, %v6341
        %6349 = vrot.lane.b32.xlu0 %v6347, 127
        %v6350 = vpop.permute.xlu0 %6349
        %v6352 = vadd.f32 %v6344, %v6350
        %s6353 = sld [smem:[#allocation6 + $0x572]]
        %v6354 = vstv %s6353
        %v6355 = vmul.f32 %v6354, %v6341
        %6357 = vrot.lane.b32.xlu0 %v6355, 126
        %v6358 = vpop.permute.xlu0 %6357
        %v6360 = vadd.f32 %v6352, %v6358
        %s6361 = sld [smem:[#allocation6 + $0x573]]
        %v6362 = vld [vmem:[#allocation5 + $0x1] sm:$0xff]
        %v6363 = vstv %s6361
        %v6364 = vmul.f32 %v6363, %v6362
        %v6365 = vadd.f32 %v6360, %v6364
        %s6366 = sld [smem:[#allocation6 + $0x574]]
        %v6367 = vstv %s6366
        %v6368 = vmul.f32 %v6367, %v6362
        %6370 = vrot.lane.b32.xlu0 %v6368, 127
        %v6371 = vpop.permute.xlu0 %6370
        %v6373 = vadd.f32 %v6365, %v6371
        %s6374 = sld [smem:[#allocation6 + $0x575]]
        %v6375 = vstv %s6374
        %v6376 = vmul.f32 %v6375, %v6362
        %6378 = vrot.lane.b32.xlu0 %v6376, 126
        %v6379 = vpop.permute.xlu0 %6378
        %v6381 = vadd.f32 %v6373, %v6379
        %s6382 = sld [smem:[#allocation6 + $0x576]]
        %v6383 = vld [vmem:[#allocation5 + $0x2] sm:$0xff]
        %v6384 = vstv %s6382
        %v6385 = vmul.f32 %v6384, %v6383
        %v6386 = vadd.f32 %v6381, %v6385
        %s6387 = sld [smem:[#allocation6 + $0x577]]
        %v6388 = vstv %s6387
        %v6389 = vmul.f32 %v6388, %v6383
        %6391 = vrot.lane.b32.xlu0 %v6389, 127
        %v6392 = vpop.permute.xlu0 %6391
        %v6394 = vadd.f32 %v6386, %v6392
        %s6395 = sld [smem:[#allocation6 + $0x578]]
        %v6396 = vstv %s6395
        %v6397 = vmul.f32 %v6396, %v6383
        %6399 = vrot.lane.b32.xlu0 %v6397, 126
        %v6400 = vpop.permute.xlu0 %6399
        %v6402 = vadd.f32 %v6394, %v6400
        %s6403 = sld [smem:[#allocation6 + $0x579]]
        %s6404 = scalar_lea.vmem [#allocation5], 16
        %v6405 = vld [vmem:[%s6404] sm:$0xff]
        %v6406 = vstv %s6403
        %v6407 = vmul.f32 %v6406, %v6405
        %v6408 = vadd.f32 %v6402, %v6407
        %s6409 = sld [smem:[#allocation6 + $0x57a]]
        %v6410 = vstv %s6409
        %v6411 = vmul.f32 %v6410, %v6405
        %6413 = vrot.lane.b32.xlu0 %v6411, 127
        %v6414 = vpop.permute.xlu0 %6413
        %v6416 = vadd.f32 %v6408, %v6414
        %s6417 = sld [smem:[#allocation6 + $0x57b]]
        %v6418 = vstv %s6417
        %v6419 = vmul.f32 %v6418, %v6405
        %6421 = vrot.lane.b32.xlu0 %v6419, 126
        %v6422 = vpop.permute.xlu0 %6421
        %v6424 = vadd.f32 %v6416, %v6422
        %s6425 = sld [smem:[#allocation6 + $0x57c]]
        %v6426 = vld [vmem:[%s6404 + $0x1] sm:$0xff]
        %v6427 = vstv %s6425
        %v6428 = vmul.f32 %v6427, %v6426
        %v6429 = vadd.f32 %v6424, %v6428
        %s6430 = sld [smem:[#allocation6 + $0x57d]]
        %v6431 = vstv %s6430
        %v6432 = vmul.f32 %v6431, %v6426
        %6434 = vrot.lane.b32.xlu0 %v6432, 127
        %v6435 = vpop.permute.xlu0 %6434
        %v6437 = vadd.f32 %v6429, %v6435
        %s6438 = sld [smem:[#allocation6 + $0x57e]]
        %v6439 = vstv %s6438
        %v6440 = vmul.f32 %v6439, %v6426
        %6442 = vrot.lane.b32.xlu0 %v6440, 126
        %v6443 = vpop.permute.xlu0 %6442
        %v6445 = vadd.f32 %v6437, %v6443
        %s6446 = sld [smem:[#allocation6 + $0x57f]]
        %v6447 = vld [vmem:[%s6404 + $0x2] sm:$0xff]
        %v6448 = vstv %s6446
        %v6449 = vmul.f32 %v6448, %v6447
        %v6450 = vadd.f32 %v6445, %v6449
        %s6451 = sld [smem:[#allocation6 + $0x580]]
        %v6452 = vstv %s6451
        %v6453 = vmul.f32 %v6452, %v6447
        %6455 = vrot.lane.b32.xlu0 %v6453, 127
        %v6456 = vpop.permute.xlu0 %6455
        %v6458 = vadd.f32 %v6450, %v6456
        %s6459 = sld [smem:[#allocation6 + $0x581]]
        %v6460 = vstv %s6459
        %v6461 = vmul.f32 %v6460, %v6447
        %6463 = vrot.lane.b32.xlu0 %v6461, 126
        %v6464 = vpop.permute.xlu0 %6463
        %v6466 = vadd.f32 %v6458, %v6464
        %s6467 = sld [smem:[#allocation6 + $0x582]]
        %s6468 = scalar_lea.vmem [#allocation5], 32
        %v6469 = vld [vmem:[%s6468] sm:$0xff]
        %v6470 = vstv %s6467
        %v6471 = vmul.f32 %v6470, %v6469
        %v6472 = vadd.f32 %v6466, %v6471
        %s6473 = sld [smem:[#allocation6 + $0x583]]
        %v6474 = vstv %s6473
        %v6475 = vmul.f32 %v6474, %v6469
        %6477 = vrot.lane.b32.xlu0 %v6475, 127
        %v6478 = vpop.permute.xlu0 %6477
        %v6480 = vadd.f32 %v6472, %v6478
        %s6481 = sld [smem:[#allocation6 + $0x584]]
        %v6482 = vstv %s6481
        %v6483 = vmul.f32 %v6482, %v6469
        %6485 = vrot.lane.b32.xlu0 %v6483, 126
        %v6486 = vpop.permute.xlu0 %6485
        %v6488 = vadd.f32 %v6480, %v6486
        %s6489 = sld [smem:[#allocation6 + $0x585]]
        %v6490 = vld [vmem:[%s6468 + $0x1] sm:$0xff]
        %v6491 = vstv %s6489
        %v6492 = vmul.f32 %v6491, %v6490
        %v6493 = vadd.f32 %v6488, %v6492
        %s6494 = sld [smem:[#allocation6 + $0x586]]
        %v6495 = vstv %s6494
        %v6496 = vmul.f32 %v6495, %v6490
        %6498 = vrot.lane.b32.xlu0 %v6496, 127
        %v6499 = vpop.permute.xlu0 %6498
        %v6501 = vadd.f32 %v6493, %v6499
        %s6502 = sld [smem:[#allocation6 + $0x587]]
        %v6503 = vstv %s6502
        %v6504 = vmul.f32 %v6503, %v6490
        %6506 = vrot.lane.b32.xlu0 %v6504, 126
        %v6507 = vpop.permute.xlu0 %6506
        %v6509 = vadd.f32 %v6501, %v6507
        %s6510 = sld [smem:[#allocation6 + $0x588]]
        %v6511 = vld [vmem:[%s6468 + $0x2] sm:$0xff]
        %v6512 = vstv %s6510
        %v6513 = vmul.f32 %v6512, %v6511
        %v6514 = vadd.f32 %v6509, %v6513
        %s6515 = sld [smem:[#allocation6 + $0x589]]
        %v6516 = vstv %s6515
        %v6517 = vmul.f32 %v6516, %v6511
        %6519 = vrot.lane.b32.xlu0 %v6517, 127
        %v6520 = vpop.permute.xlu0 %6519
        %v6522 = vadd.f32 %v6514, %v6520
        %s6523 = sld [smem:[#allocation6 + $0x58a]]
        %v6524 = vstv %s6523
        %v6525 = vmul.f32 %v6524, %v6511
        %6527 = vrot.lane.b32.xlu0 %v6525, 126
        %v6528 = vpop.permute.xlu0 %6527
        %v6530 = vadd.f32 %v6522, %v6528
        %s6531 = sld [smem:[#allocation6 + $0x58b]]
        %s6532 = scalar_lea.vmem [#allocation5], 48
        %v6533 = vld [vmem:[%s6532] sm:$0xff]
        %v6534 = vstv %s6531
        %v6535 = vmul.f32 %v6534, %v6533
        %v6536 = vadd.f32 %v6530, %v6535
        %s6537 = sld [smem:[#allocation6 + $0x58c]]
        %v6538 = vstv %s6537
        %v6539 = vmul.f32 %v6538, %v6533
        %6541 = vrot.lane.b32.xlu0 %v6539, 127
        %v6542 = vpop.permute.xlu0 %6541
        %v6544 = vadd.f32 %v6536, %v6542
        %s6545 = sld [smem:[#allocation6 + $0x58d]]
        %v6546 = vstv %s6545
        %v6547 = vmul.f32 %v6546, %v6533
        %6549 = vrot.lane.b32.xlu0 %v6547, 126
        %v6550 = vpop.permute.xlu0 %6549
        %v6552 = vadd.f32 %v6544, %v6550
        %s6553 = sld [smem:[#allocation6 + $0x58e]]
        %v6554 = vld [vmem:[%s6532 + $0x1] sm:$0xff]
        %v6555 = vstv %s6553
        %v6556 = vmul.f32 %v6555, %v6554
        %v6557 = vadd.f32 %v6552, %v6556
        %s6558 = sld [smem:[#allocation6 + $0x58f]]
        %v6559 = vstv %s6558
        %v6560 = vmul.f32 %v6559, %v6554
        %6562 = vrot.lane.b32.xlu0 %v6560, 127
        %v6563 = vpop.permute.xlu0 %6562
        %v6565 = vadd.f32 %v6557, %v6563
        %s6566 = sld [smem:[#allocation6 + $0x590]]
        %v6567 = vstv %s6566
        %v6568 = vmul.f32 %v6567, %v6554
        %6570 = vrot.lane.b32.xlu0 %v6568, 126
        %v6571 = vpop.permute.xlu0 %6570
        %v6573 = vadd.f32 %v6565, %v6571
        %s6574 = sld [smem:[#allocation6 + $0x591]]
        %v6575 = vld [vmem:[%s6532 + $0x2] sm:$0xff]
        %v6576 = vstv %s6574
        %v6577 = vmul.f32 %v6576, %v6575
        %v6578 = vadd.f32 %v6573, %v6577
        %s6579 = sld [smem:[#allocation6 + $0x592]]
        %v6580 = vstv %s6579
        %v6581 = vmul.f32 %v6580, %v6575
        %6583 = vrot.lane.b32.xlu0 %v6581, 127
        %v6584 = vpop.permute.xlu0 %6583
        %v6586 = vadd.f32 %v6578, %v6584
        %s6587 = sld [smem:[#allocation6 + $0x593]]
        %v6588 = vstv %s6587
        %v6589 = vmul.f32 %v6588, %v6575
        %6591 = vrot.lane.b32.xlu0 %v6589, 126
        %v6592 = vpop.permute.xlu0 %6591
        %v6594 = vadd.f32 %v6586, %v6592
        %s6595 = sld [smem:[#allocation6 + $0x594]]
        %s6596 = scalar_lea.vmem [#allocation5], 64
        %v6597 = vld [vmem:[%s6596] sm:$0xff]
        %v6598 = vstv %s6595
        %v6599 = vmul.f32 %v6598, %v6597
        %v6600 = vadd.f32 %v6594, %v6599
        %s6601 = sld [smem:[#allocation6 + $0x595]]
        %v6602 = vstv %s6601
        %v6603 = vmul.f32 %v6602, %v6597
        %6605 = vrot.lane.b32.xlu0 %v6603, 127
        %v6606 = vpop.permute.xlu0 %6605
        %v6608 = vadd.f32 %v6600, %v6606
        %s6609 = sld [smem:[#allocation6 + $0x596]]
        %v6610 = vstv %s6609
        %v6611 = vmul.f32 %v6610, %v6597
        %6613 = vrot.lane.b32.xlu0 %v6611, 126
        %v6614 = vpop.permute.xlu0 %6613
        %v6616 = vadd.f32 %v6608, %v6614
        %s6617 = sld [smem:[#allocation6 + $0x597]]
        %v6618 = vld [vmem:[%s6596 + $0x1] sm:$0xff]
        %v6619 = vstv %s6617
        %v6620 = vmul.f32 %v6619, %v6618
        %v6621 = vadd.f32 %v6616, %v6620
        %s6622 = sld [smem:[#allocation6 + $0x598]]
        %v6623 = vstv %s6622
        %v6624 = vmul.f32 %v6623, %v6618
        %6626 = vrot.lane.b32.xlu0 %v6624, 127
        %v6627 = vpop.permute.xlu0 %6626
        %v6629 = vadd.f32 %v6621, %v6627
        %s6630 = sld [smem:[#allocation6 + $0x599]]
        %v6631 = vstv %s6630
        %v6632 = vmul.f32 %v6631, %v6618
        %6634 = vrot.lane.b32.xlu0 %v6632, 126
        %v6635 = vpop.permute.xlu0 %6634
        %v6637 = vadd.f32 %v6629, %v6635
        %s6638 = sld [smem:[#allocation6 + $0x59a]]
        %v6639 = vld [vmem:[%s6596 + $0x2] sm:$0xff]
        %v6640 = vstv %s6638
        %v6641 = vmul.f32 %v6640, %v6639
        %v6642 = vadd.f32 %v6637, %v6641
        %s6643 = sld [smem:[#allocation6 + $0x59b]]
        %v6644 = vstv %s6643
        %v6645 = vmul.f32 %v6644, %v6639
        %6647 = vrot.lane.b32.xlu0 %v6645, 127
        %v6648 = vpop.permute.xlu0 %6647
        %v6650 = vadd.f32 %v6642, %v6648
        %s6651 = sld [smem:[#allocation6 + $0x59c]]
        %v6652 = vstv %s6651
        %v6653 = vmul.f32 %v6652, %v6639
        %6655 = vrot.lane.b32.xlu0 %v6653, 126
        %v6656 = vpop.permute.xlu0 %6655
        %v6658 = vadd.f32 %v6650, %v6656
        %s6659 = sld [smem:[#allocation6 + $0x59d]]
        %s6660 = scalar_lea.vmem [#allocation5], 80
        %v6661 = vld [vmem:[%s6660] sm:$0xff]
        %v6662 = vstv %s6659
        %v6663 = vmul.f32 %v6662, %v6661
        %v6664 = vadd.f32 %v6658, %v6663
        %s6665 = sld [smem:[#allocation6 + $0x59e]]
        %v6666 = vstv %s6665
        %v6667 = vmul.f32 %v6666, %v6661
        %6669 = vrot.lane.b32.xlu0 %v6667, 127
        %v6670 = vpop.permute.xlu0 %6669
        %v6672 = vadd.f32 %v6664, %v6670
        %s6673 = sld [smem:[#allocation6 + $0x59f]]
        %v6674 = vstv %s6673
        %v6675 = vmul.f32 %v6674, %v6661
        %6677 = vrot.lane.b32.xlu0 %v6675, 126
        %v6678 = vpop.permute.xlu0 %6677
        %v6680 = vadd.f32 %v6672, %v6678
        %s6681 = sld [smem:[#allocation6 + $0x5a0]]
        %v6682 = vld [vmem:[%s6660 + $0x1] sm:$0xff]
        %v6683 = vstv %s6681
        %v6684 = vmul.f32 %v6683, %v6682
        %v6685 = vadd.f32 %v6680, %v6684
        %s6686 = sld [smem:[#allocation6 + $0x5a1]]
        %v6687 = vstv %s6686
        %v6688 = vmul.f32 %v6687, %v6682
        %6690 = vrot.lane.b32.xlu0 %v6688, 127
        %v6691 = vpop.permute.xlu0 %6690
        %v6693 = vadd.f32 %v6685, %v6691
        %s6694 = sld [smem:[#allocation6 + $0x5a2]]
        %v6695 = vstv %s6694
        %v6696 = vmul.f32 %v6695, %v6682
        %6698 = vrot.lane.b32.xlu0 %v6696, 126
        %v6699 = vpop.permute.xlu0 %6698
        %v6701 = vadd.f32 %v6693, %v6699
        %s6702 = sld [smem:[#allocation6 + $0x5a3]]
        %v6703 = vld [vmem:[%s6660 + $0x2] sm:$0xff]
        %v6704 = vstv %s6702
        %v6705 = vmul.f32 %v6704, %v6703
        %v6706 = vadd.f32 %v6701, %v6705
        %s6707 = sld [smem:[#allocation6 + $0x5a4]]
        %v6708 = vstv %s6707
        %v6709 = vmul.f32 %v6708, %v6703
        %6711 = vrot.lane.b32.xlu0 %v6709, 127
        %v6712 = vpop.permute.xlu0 %6711
        %v6714 = vadd.f32 %v6706, %v6712
        %s6715 = sld [smem:[#allocation6 + $0x5a5]]
        %v6716 = vstv %s6715
        %v6717 = vmul.f32 %v6716, %v6703
        %6719 = vrot.lane.b32.xlu0 %v6717, 126
        %v6720 = vpop.permute.xlu0 %6719
        %v6722 = vadd.f32 %v6714, %v6720
        %s6723 = sld [smem:[#allocation6 + $0x5a6]]
        %s6724 = scalar_lea.vmem [#allocation5], 96
        %v6725 = vld [vmem:[%s6724] sm:$0xff]
        %v6726 = vstv %s6723
        %v6727 = vmul.f32 %v6726, %v6725
        %v6728 = vadd.f32 %v6722, %v6727
        %s6729 = sld [smem:[#allocation6 + $0x5a7]]
        %v6730 = vstv %s6729
        %v6731 = vmul.f32 %v6730, %v6725
        %6733 = vrot.lane.b32.xlu0 %v6731, 127
        %v6734 = vpop.permute.xlu0 %6733
        %v6736 = vadd.f32 %v6728, %v6734
        %s6737 = sld [smem:[#allocation6 + $0x5a8]]
        %v6738 = vstv %s6737
        %v6739 = vmul.f32 %v6738, %v6725
        %6741 = vrot.lane.b32.xlu0 %v6739, 126
        %v6742 = vpop.permute.xlu0 %6741
        %v6744 = vadd.f32 %v6736, %v6742
        %s6745 = sld [smem:[#allocation6 + $0x5a9]]
        %v6746 = vld [vmem:[%s6724 + $0x1] sm:$0xff]
        %v6747 = vstv %s6745
        %v6748 = vmul.f32 %v6747, %v6746
        %v6749 = vadd.f32 %v6744, %v6748
        %s6750 = sld [smem:[#allocation6 + $0x5aa]]
        %v6751 = vstv %s6750
        %v6752 = vmul.f32 %v6751, %v6746
        %6754 = vrot.lane.b32.xlu0 %v6752, 127
        %v6755 = vpop.permute.xlu0 %6754
        %v6757 = vadd.f32 %v6749, %v6755
        %s6758 = sld [smem:[#allocation6 + $0x5ab]]
        %v6759 = vstv %s6758
        %v6760 = vmul.f32 %v6759, %v6746
        %6762 = vrot.lane.b32.xlu0 %v6760, 126
        %v6763 = vpop.permute.xlu0 %6762
        %v6765 = vadd.f32 %v6757, %v6763
        %s6766 = sld [smem:[#allocation6 + $0x5ac]]
        %v6767 = vld [vmem:[%s6724 + $0x2] sm:$0xff]
        %v6768 = vstv %s6766
        %v6769 = vmul.f32 %v6768, %v6767
        %v6770 = vadd.f32 %v6765, %v6769
        %s6771 = sld [smem:[#allocation6 + $0x5ad]]
        %v6772 = vstv %s6771
        %v6773 = vmul.f32 %v6772, %v6767
        %6775 = vrot.lane.b32.xlu0 %v6773, 127
        %v6776 = vpop.permute.xlu0 %6775
        %v6778 = vadd.f32 %v6770, %v6776
        %s6779 = sld [smem:[#allocation6 + $0x5ae]]
        %v6780 = vstv %s6779
        %v6781 = vmul.f32 %v6780, %v6767
        %6783 = vrot.lane.b32.xlu0 %v6781, 126
        %v6784 = vpop.permute.xlu0 %6783
        %v6786 = vadd.f32 %v6778, %v6784
        %s6787 = sld [smem:[#allocation6 + $0x5af]]
        %s6788 = scalar_lea.vmem [#allocation5], 112
        %v6789 = vld [vmem:[%s6788] sm:$0xff]
        %v6790 = vstv %s6787
        %v6791 = vmul.f32 %v6790, %v6789
        %v6792 = vadd.f32 %v6786, %v6791
        %s6793 = sld [smem:[#allocation6 + $0x5b0]]
        %v6794 = vstv %s6793
        %v6795 = vmul.f32 %v6794, %v6789
        %6797 = vrot.lane.b32.xlu0 %v6795, 127
        %v6798 = vpop.permute.xlu0 %6797
        %v6800 = vadd.f32 %v6792, %v6798
        %s6801 = sld [smem:[#allocation6 + $0x5b1]]
        %v6802 = vstv %s6801
        %v6803 = vmul.f32 %v6802, %v6789
        %6805 = vrot.lane.b32.xlu0 %v6803, 126
        %v6806 = vpop.permute.xlu0 %6805
        %v6808 = vadd.f32 %v6800, %v6806
        %s6809 = sld [smem:[#allocation6 + $0x5b2]]
        %v6810 = vld [vmem:[%s6788 + $0x1] sm:$0xff]
        %v6811 = vstv %s6809
        %v6812 = vmul.f32 %v6811, %v6810
        %v6813 = vadd.f32 %v6808, %v6812
        %s6814 = sld [smem:[#allocation6 + $0x5b3]]
        %v6815 = vstv %s6814
        %v6816 = vmul.f32 %v6815, %v6810
        %6818 = vrot.lane.b32.xlu0 %v6816, 127
        %v6819 = vpop.permute.xlu0 %6818
        %v6821 = vadd.f32 %v6813, %v6819
        %s6822 = sld [smem:[#allocation6 + $0x5b4]]
        %v6823 = vstv %s6822
        %v6824 = vmul.f32 %v6823, %v6810
        %6826 = vrot.lane.b32.xlu0 %v6824, 126
        %v6827 = vpop.permute.xlu0 %6826
        %v6829 = vadd.f32 %v6821, %v6827
        %s6830 = sld [smem:[#allocation6 + $0x5b5]]
        %v6831 = vld [vmem:[%s6788 + $0x2] sm:$0xff]
        %v6832 = vstv %s6830
        %v6833 = vmul.f32 %v6832, %v6831
        %v6834 = vadd.f32 %v6829, %v6833
        %s6835 = sld [smem:[#allocation6 + $0x5b6]]
        %v6836 = vstv %s6835
        %v6837 = vmul.f32 %v6836, %v6831
        %6839 = vrot.lane.b32.xlu0 %v6837, 127
        %v6840 = vpop.permute.xlu0 %6839
        %v6842 = vadd.f32 %v6834, %v6840
        %s6843 = sld [smem:[#allocation6 + $0x5b7]]
        %v6844 = vstv %s6843
        %v6845 = vmul.f32 %v6844, %v6831
        %6847 = vrot.lane.b32.xlu0 %v6845, 126
        %v6848 = vpop.permute.xlu0 %6847
        %v6850 = vadd.f32 %v6842, %v6848
        %s6851 = sld [smem:[#allocation6 + $0x5b8]]
        %v6852 = vstv %s6851
        %v6853 = vadd.f32 %v6850, %v6852
        %v6854 = vmax.f32 %v6853, 0.0
        %v6855 = vld [vmem:[#allocation10] sm:$0xff]
        %v6856 = vmul.f32 %v6854, %v6855
        %vm6857 = vcmask 64512
        %v6858 = vsel %vm6857, %v6856, 0.0
        %6859 = vadd.xlane.f32.xlu0 %v6858
        %v6860 = vpop.xlane.xlu0 %6859
        %v6861 = vrot.slane %v6860, 4
        %v6862 = vadd.f32 %v6860, %v6861
        %v6863 = vrot.slane %v6862, 2
        %v6864 = vadd.f32 %v6862, %v6863
        %v6865 = vrot.slane %v6864, 1
        %v6866 = vadd.f32 %v6864, %v6865
        %s6867 = sld [smem:[#allocation6 + $0x5b9]]
        %v6868 = vstv %s6867
        %v6869 = vadd.f32 %v6866, %v6868
        %v6870 = vsub.f32 0.0, %v6869
        %v6871 = vmul.f32 %v6870, 1.442695
        %v6872 = vpow.pop %v6871
        %v6873 = vadd.f32 %v6872, 1.0
        %v6874 = vrcp.pop %v6873
        %v6875 = vmul.f32 1.0, %v6874
        %6876 = vst [vmem:[%s211] sm:$0x1] %v6875
        %p6877 = scmp.lt.s32.totalorder %s19, 1
        %s6878 = scalar_select %p6877, %s19, 1
        %s6879 = scalar_lea.vmem %s3, %s6878
        // Predicated region
        $region66: #{discriminator_forward.1} parent=31 // pred_check
          %p6880 = pneg %p105
        $region67: #{discriminator_forward.1} parent=31 // pred_check_branch
          %6882 = sbr.rel (%p6880) target = $region69
        $region68: #{discriminator_forward.1} parent=31 // pred_region
          _
        $region69: #{discriminator_forward.1} parent=31 // pred_fallthru
          _
      $region32: #{discriminator_forward.1} parent=5 // pred_fallthru
        _
      %p6883 = scmp.le.s32.totalorder 2, %s14
      // Predicated region
      $region70: #{discriminator_forward.1} parent=5 // pred_check
        %p6884 = pneg %p6883
      $region71: #{discriminator_forward.1} parent=5 // pred_check_branch
        %6886 = sbr.rel (%p6884) target = $region73
      $region72: #{discriminator_forward.1} parent=5 // pred_region
        %s6887 = ssub.s32 %s14, 2
        // Predicated region
        $region74: #{discriminator_forward.1} parent=72 // pred_check
          %p6888 = pneg %p111
        $region75: #{discriminator_forward.1} parent=72 // pred_check_branch
          %6890 = sbr.rel (%p6888) target = $region77
        $region76: #{discriminator_forward.1} parent=72 // pred_region
          %p6891 = scmp.lt.s32.totalorder %s20, 1
          %s6892 = scalar_select %p6891, %s20, 1
          %s6893 = scalar_lea.vmem %s3, %s6892
        $region77: #{discriminator_forward.1} parent=72 // pred_fallthru
          _
      $region73: #{discriminator_forward.1} parent=5 // pred_fallthru
        _
    $region6: #{discriminator_forward.1} parent=1 // loop_footer
      %s18 = sadd.s32 1, %s14
    $region7: #{discriminator_forward.1} parent=1 // loop_footer_branch
      %13 = sbr.rel target = $region3
    $region8: #{discriminator_forward.1} parent=1 // loop_exit
      _
    %6894 = vsyncpa [#allocation7], 1
    %s6895 = scalar_lea.sflag [#allocation7], 1
    %6896 = vsyncpa %s6895, 1
    %6897 = vsyncpa [#allocation11], 1
    %6898 = vsyncpa [#allocation8], 1
    %s6899 = scalar_lea.sflag [#allocation8], 1
    %6900 = vsyncpa %s6899, 1

</llo_original>
